<compile_context>
chip_gen: v5e
topology: v5e:2x2
jax: 0.10.0
libtpu: 0.0.40
codegen_flags: <defaults>
</compile_context>

<pallas_src>
import jax
import jax.numpy as jnp
from jax.experimental import pallas as pl
from jax.experimental.pallas import tpu as pltpu

# ---- model hyper-parameters (small, consistent with the PyTorch module) ----
N_NODES = 16                       # nodes per graph
LOG2_NODES = 4
assert N_NODES == 1 << LOG2_NODES
HIDDEN = 32                        # hidden_size
NUM_HEADS = 4
HEAD_DIM = HIDDEN // NUM_HEADS     # 8
SCALING = HEAD_DIM ** (-0.5)
NUM_LAYERS = 2
FFN_DIM = HIDDEN * 2
POS_ENC_SIZE = 2
POS_PAD = 8                        # pos-enc contraction dim zero-padded (sublane multiple)
OUT_SIZE = 4
OUT_PAD = 128                      # predictor kept 128 lanes wide -> lane-dense output store
NUM_ATOM_FEATS = 3                 # simplified OGB AtomEncoder: sum of per-feature embeddings
ATOM_VOCAB = 8
BN_EPS = 1e-5
NEG_INF = -1e30

# ---- batching: many graphs per kernel step so every matmul sees M = 128 rows ----
GSTEP = 8                          # graphs per grid step
M_ROWS = GSTEP * N_NODES           # 128 node rows per step
NUM_GRAPHS = 16
NUM_STEPS = NUM_GRAPHS // GSTEP    # 2

# ---- static row maps for the pre-concatenated parameter slabs ----
# slab32 (width 32): wpos | per layer: per head [wq|wk|wv|wo] (zero-padded 32x32) | w2
ROW_WPOS = 0
LAYER32_ROWS = NUM_HEADS * 4 * HIDDEN + FFN_DIM        # 576
R32 = POS_PAD + NUM_LAYERS * LAYER32_ROWS              # 1160
# slab64 (width 64): per layer w1
R64 = NUM_LAYERS * HIDDEN                              # 64
# slab128 (width 128): predictor weights zero-padded so activations stay 128 lanes wide
R128 = HIDDEN + OUT_PAD + OUT_PAD                      # 288
# bias slab (width 128): one row per bias / BN-affine vector
B_POS = 0
BIAS_PER_LAYER = NUM_HEADS + 7                         # bq(x4), bo_eff, g1, be1, bf1, bf2, g2, be2
B_PB1 = 1 + NUM_LAYERS * BIAS_PER_LAYER
B_PB2 = B_PB1 + 1
B_PB3 = B_PB1 + 2
BIAS_ROWS = 32                                         # padded to a sublane multiple


def _layer32_base(layer):
    return POS_PAD + layer * LAYER32_ROWS


def _bias_base(layer):
    return 1 + layer * BIAS_PER_LAYER


# ----------------------------------------------------------------------------
# Fused kernel: pos_linear + NUM_LAYERS x GTLayer + per-graph SumPool + MLP
# ----------------------------------------------------------------------------
def gt_forward_kernel(h0_ref, pos_ref, amask_ref, w32_ref, w64_ref, w128_ref,
                      b_ref, out_ref):
    f32 = jnp.float32

    def brow(r, width):                                   # (1, width) static bias-row slice
        return b_ref[r:r + 1, :width]

    # per-graph selector matrices (built once; push BN reductions, per-graph
    # broadcasts and SumPooling onto the MXU instead of cross-sublane XLU work)
    col_graph = jnp.right_shift(
        jax.lax.broadcasted_iota(jnp.int32, (GSTEP, M_ROWS), 1), LOG2_NODES)
    row_graph = jax.lax.broadcasted_iota(jnp.int32, (GSTEP, M_ROWS), 0)
    pool_mat = (col_graph == row_graph).astype(f32)        # (G, M): 1 on own-graph nodes
    mean_mat = pool_mat * (1.0 / N_NODES)
    rg = jnp.right_shift(
        jax.lax.broadcasted_iota(jnp.int32, (M_ROWS, GSTEP), 0), LOG2_NODES)
    cg = jax.lax.broadcasted_iota(jnp.int32, (M_ROWS, GSTEP), 1)
    expand_mat = (rg == cg).astype(f32)                    # (M, G): per-graph -> per-node

    amask = amask_ref[0]                                   # (M, M) block-diag additive mask

    def batchnorm(x, g_row, b_row):
        # training-mode batch stats, one pass (E[x^2]-mu^2), kept PER GRAPH
        mu = jnp.dot(mean_mat, x, preferred_element_type=f32)          # (G, H)
        ex2 = jnp.dot(mean_mat, x * x, preferred_element_type=f32)     # (G, H)
        var = jnp.maximum(ex2 - mu * mu, 0.0)
        inv = jax.lax.rsqrt(var + BN_EPS)
        mu_f = jnp.dot(expand_mat, mu, preferred_element_type=f32)     # (M, H)
        inv_f = jnp.dot(expand_mat, inv, preferred_element_type=f32)   # (M, H)
        return (x - mu_f) * inv_f * g_row + b_row

    # input embedding + positional-encoding linear (h stays in VMEM from here on)
    h = (h0_ref[...]
         + jnp.dot(pos_ref[...], w32_ref[ROW_WPOS:ROW_WPOS + POS_PAD, :],
                   preferred_element_type=f32)
         + brow(B_POS, HIDDEN))

    for l in range(NUM_LAYERS):                            # static unroll over layers
        base = _layer32_base(l)
        bb = _bias_base(l)

        # ---- SparseMHA, per head (static unroll). All operands start at lane
        # 0 (no sub-lane slices); head-merge folded into per-head out-proj. ----
        mha = None
        for hd in range(NUM_HEADS):
            hb = base + hd * 4 * HIDDEN
            wq = w32_ref[hb:hb + HIDDEN, :]
            wk = w32_ref[hb + HIDDEN:hb + 2 * HIDDEN, :]
            wv = w32_ref[hb + 2 * HIDDEN:hb + 3 * HIDDEN, :]
            wo = w32_ref[hb + 3 * HIDDEN:hb + 4 * HIDDEN, :]
            q = jnp.dot(h, wq, preferred_element_type=f32) + brow(bb + hd, HIDDEN)
            k = jnp.dot(h, wk, preferred_element_type=f32)
            v = jnp.dot(h, wv, preferred_element_type=f32)
            # SDDMM (dense + additive block-diagonal edge mask; rows = dst)
            s = jax.lax.dot_general(q, k, (((1,), (1,)), ((), ())),
                                    preferred_element_type=f32) + amask
            # sparse row softmax (self-loops guarantee a non-empty row)
            p = jnp.exp(s - jnp.max(s, axis=-1, keepdims=True))
            attn = p * pl.reciprocal(jnp.sum(p, axis=-1, keepdims=True), approx=True)
            ctx = jnp.dot(attn, v, preferred_element_type=f32)          # SpMM
            t = jnp.dot(ctx, wo, preferred_element_type=f32)            # out-proj slice
            mha = t if mha is None else mha + t
        mha = mha + brow(bb + NUM_HEADS, HIDDEN)           # bo + bv @ wo (exact fold)

        # ---- residual + per-graph BatchNorm ----
        x = batchnorm(mha + h, brow(bb + NUM_HEADS + 1, HIDDEN),
                      brow(bb + NUM_HEADS + 2, HIDDEN))

        # ---- FFN ----
        w1 = w64_ref[l * HIDDEN:(l + 1) * HIDDEN, :]
        w2 = w32_ref[base + 4 * NUM_HEADS * HIDDEN:
                     base + 4 * NUM_HEADS * HIDDEN + FFN_DIM, :]
        f = jnp.maximum(jnp.dot(x, w1, preferred_element_type=f32)
                        + brow(bb + NUM_HEADS + 3, FFN_DIM), 0.0)
        f = jnp.dot(f, w2, preferred_element_type=f32) + brow(bb + NUM_HEADS + 4, HIDDEN)

        # ---- residual + per-graph BatchNorm ----
        h = batchnorm(x + f, brow(bb + NUM_HEADS + 5, HIDDEN),
                      brow(bb + NUM_HEADS + 6, HIDDEN))

    # ---- per-graph SumPooling + predictor MLP (kept 128 lanes wide so the
    # final store is one full, unmasked (8, 128) write) ----
    pooled = jnp.dot(pool_mat, h, preferred_element_type=f32)            # (G, H)
    z = jnp.maximum(jnp.dot(pooled, w128_ref[0:HIDDEN, :],
                            preferred_element_type=f32)
                    + b_ref[B_PB1:B_PB1 + 1, :], 0.0)
    z = jnp.maximum(jnp.dot(z, w128_ref[HIDDEN:HIDDEN + OUT_PAD, :],
                            preferred_element_type=f32)
                    + b_ref[B_PB2:B_PB2 + 1, :], 0.0)
    out_ref[...] = (jnp.dot(z, w128_ref[HIDDEN + OUT_PAD:HIDDEN + 2 * OUT_PAD, :],
                            preferred_element_type=f32)
                    + b_ref[B_PB3:B_PB3 + 1, :])


# ----------------------------------------------------------------------------
# pallas_call wrapper: grid over graph micro-batches; 4 parameter-slab DMAs
# ----------------------------------------------------------------------------
def run_gt_model(h0, pos_pad, masks, params):
    return pl.pallas_call(
        gt_forward_kernel,
        grid=(NUM_STEPS,),
        in_specs=[
            pl.BlockSpec((M_ROWS, HIDDEN), lambda s: (s, 0)),        # node features block
            pl.BlockSpec((M_ROWS, POS_PAD), lambda s: (s, 0)),       # pos-enc block
            pl.BlockSpec((1, M_ROWS, M_ROWS), lambda s: (s, 0, 0)),  # per-step edge mask
            # parameter slabs: constant index maps -> fetched once, stay resident
            pl.BlockSpec((R32, HIDDEN), lambda s: (0, 0)),
            pl.BlockSpec((R64, FFN_DIM), lambda s: (0, 0)),
            pl.BlockSpec((R128, OUT_PAD), lambda s: (0, 0)),
            pl.BlockSpec((BIAS_ROWS, OUT_PAD), lambda s: (0, 0)),
        ],
        out_specs=pl.BlockSpec((GSTEP, OUT_PAD), lambda s: (s, 0)),
        out_shape=jax.ShapeDtypeStruct((NUM_GRAPHS, OUT_PAD), jnp.float32),
        compiler_params=pltpu.CompilerParams(
            dimension_semantics=("parallel",)),   # v7x: steps split across TensorCores
    )(h0, pos_pad, masks,
      params["w32"], params["w64"], params["w128"], params["bias"])


# ----------------------------------------------------------------------------
# Parameter initialization (deterministic, synthetic) into the slabs
# ----------------------------------------------------------------------------
def init_params(key):
    keys = iter(jax.random.split(key, 64))

    def lin(fan_in, fan_out):
        w = jax.random.normal(next(keys), (fan_in, fan_out), jnp.float32) * fan_in ** -0.5
        b = jax.random.normal(next(keys), (1, fan_out), jnp.float32) * 0.01
        return w, b

    atom_emb = jax.random.normal(next(keys),
                                 (NUM_ATOM_FEATS, ATOM_VOCAB, HIDDEN), jnp.float32) * 0.1

    # column selection realizing the reference reshape(N, head_dim, num_heads):
    # head `hd` owns original hidden columns {d*NUM_HEADS + hd}
    head_cols = [jnp.array([d * NUM_HEADS + hd for d in range(HEAD_DIM)], jnp.int32)
                 for hd in range(NUM_HEADS)]

    w32 = jnp.zeros((R32, HIDDEN), jnp.float32)
    w64 = jnp.zeros((R64, FFN_DIM), jnp.float32)
    w128 = jnp.zeros((R128, OUT_PAD), jnp.float32)
    bias = jnp.zeros((BIAS_ROWS, OUT_PAD), jnp.float32)

    wpos, bpos = lin(POS_ENC_SIZE, HIDDEN)
    w32 = w32.at[ROW_WPOS:ROW_WPOS + POS_ENC_SIZE, :].set(wpos)   # rows 2..7 stay zero
    bias = bias.at[B_POS, :HIDDEN].set(bpos[0])

    for l in range(NUM_LAYERS):
        wq, bq = lin(HIDDEN, HIDDEN)
        wk, _bk = lin(HIDDEN, HIDDEN)      # k bias dropped: row softmax is shift-invariant
        wv, bv = lin(HIDDEN, HIDDEN)
        wo, bo = lin(HIDDEN, HIDDEN)
        w1, bf1 = lin(HIDDEN, FFN_DIM)
        w2, bf2 = lin(FFN_DIM, HIDDEN)
        base = _layer32_base(l)
        bb = _bias_base(l)
        for hd in range(NUM_HEADS):
            cols = head_cols[hd]
            hb = base + hd * 4 * HIDDEN
            # per-head weights, zero-padded to (32, 32): padded columns/rows are
            # zero so the padded contractions are mathematically identical
            w32 = w32.at[hb:hb + HIDDEN, :HEAD_DIM].set(wq[:, cols] * SCALING)
            w32 = w32.at[hb + HIDDEN:hb + 2 * HIDDEN, :HEAD_DIM].set(wk[:, cols])
            w32 = w32.at[hb + 2 * HIDDEN:hb + 3 * HIDDEN, :HEAD_DIM].set(wv[:, cols])
            w32 = w32.at[hb + 3 * HIDDEN:hb + 3 * HIDDEN + HEAD_DIM, :].set(wo[cols, :])
            bias = bias.at[bb + hd, :HEAD_DIM].set(bq[0, cols] * SCALING)
        w32 = w32.at[base + 4 * NUM_HEADS * HIDDEN:
                     base + 4 * NUM_HEADS * HIDDEN + FFN_DIM, :].set(w2)
        w64 = w64.at[l * HIDDEN:(l + 1) * HIDDEN, :].set(w1)
        bo_eff = bo + bv @ wo              # exact fold: attention rows sum to 1
        bias = bias.at[bb + NUM_HEADS, :HIDDEN].set(bo_eff[0])
        bias = bias.at[bb + NUM_HEADS + 1, :HIDDEN].set(jnp.ones((HIDDEN,), jnp.float32))
        bias = bias.at[bb + NUM_HEADS + 3, :FFN_DIM].set(bf1[0])
        bias = bias.at[bb + NUM_HEADS + 4, :HIDDEN].set(bf2[0])
        bias = bias.at[bb + NUM_HEADS + 5, :HIDDEN].set(jnp.ones((HIDDEN,), jnp.float32))
        # be1 (bb+NH+2) and be2 (bb+NH+6) stay zero (BatchNorm1d default affine)

    pw1, pb1 = lin(HIDDEN, HIDDEN // 2)
    pw2, pb2 = lin(HIDDEN // 2, HIDDEN // 4)
    pw3, pb3 = lin(HIDDEN // 4, OUT_SIZE)
    w128 = w128.at[0:HIDDEN, :HIDDEN // 2].set(pw1)
    w128 = w128.at[HIDDEN:HIDDEN + HIDDEN // 2, :HIDDEN // 4].set(pw2)
    w128 = w128.at[HIDDEN + OUT_PAD:HIDDEN + OUT_PAD + HIDDEN // 4, :OUT_SIZE].set(pw3)
    bias = bias.at[B_PB1, :HIDDEN // 2].set(pb1[0])
    bias = bias.at[B_PB2, :HIDDEN // 4].set(pb2[0])
    bias = bias.at[B_PB3, :OUT_SIZE].set(pb3[0])

    return {"atom_emb": atom_emb, "w32": w32, "w64": w64, "w128": w128, "bias": bias}


# ----------------------------------------------------------------------------
# Full model forward (JAX glue: embedding gather, padding, mask build)
# ----------------------------------------------------------------------------
def gt_model_forward(X, pos_enc, adj, params):
    # AtomEncoder: sum of per-feature embedding lookups (data-dependent gather
    # of tiny tables -> plain JAX glue, not a Pallas kernel)
    Xf = X.reshape(-1, NUM_ATOM_FEATS)
    h0 = jnp.zeros((Xf.shape[0], HIDDEN), jnp.float32)
    for f in range(NUM_ATOM_FEATS):
        h0 = h0 + jnp.take(params["atom_emb"][f], Xf[:, f], axis=0)

    # zero-pad the tiny pos-enc contraction dim (2 -> 8); mathematically identical
    pos = pos_enc.reshape(-1, POS_ENC_SIZE).astype(jnp.float32)
    pos_pad = jnp.zeros((pos.shape[0], POS_PAD), jnp.float32).at[:, :POS_ENC_SIZE].set(pos)

    # per-step block-diagonal additive edge mask: 0 on each graph's edges
    # (rows = dst), NEG_INF elsewhere and across graphs
    adj_steps = adj.reshape(NUM_STEPS, GSTEP, N_NODES, N_NODES)

    def step_mask(a):
        big = jnp.full((M_ROWS, M_ROWS), NEG_INF, jnp.float32)
        for g in range(GSTEP):
            blk = jnp.where(a[g] > 0, 0.0, NEG_INF).astype(jnp.float32)
            big = jax.lax.dynamic_update_slice(big, blk, (g * N_NODES, g * N_NODES))
        return big

    masks = jax.vmap(step_mask)(adj_steps)                 # (NUM_STEPS, M, M)

    out_pad = run_gt_model(h0, pos_pad, masks, params)     # (NUM_GRAPHS, 128)
    return out_pad[:, :OUT_SIZE]


# ----------------------------------------------------------------------------
if __name__ == "__main__":
    key = jax.random.PRNGKey(0)
    k_param, k_x, k_pos, k_edge = jax.random.split(key, 4)

    params = init_params(k_param)

    # categorical node features and positional encodings for a batch of graphs
    X = jax.random.randint(k_x, (NUM_GRAPHS, N_NODES, NUM_ATOM_FEATS),
                           0, ATOM_VOCAB, jnp.int32)
    pos_enc = jax.random.normal(k_pos, (NUM_GRAPHS, N_NODES, POS_ENC_SIZE), jnp.float32)

    # deterministic per-graph adjacency: self-loops + ring + random edges
    eye = jnp.eye(N_NODES, dtype=jnp.float32)
    ring = jnp.roll(eye, 1, axis=1)
    rnd = (jax.random.uniform(k_edge, (NUM_GRAPHS, N_NODES, N_NODES)) < 0.2
           ).astype(jnp.float32)
    adj = jnp.clip(eye[None] + ring[None] + rnd, 0.0, 1.0)   # every row has a self-loop

    fwd = jax.jit(gt_model_forward)
    out = jax.block_until_ready(fwd(X, pos_enc, adj, params))
    assert out.shape == (NUM_GRAPHS, OUT_SIZE)
    assert bool(jnp.all(jnp.isfinite(out)))
    print("KERNEL_OK")
</pallas_src>

<mosaic_0001>
module attributes {stable_mosaic.version = 11 : i64} {
  func.func @gt_forward_kernel(%arg0: i32, %arg1: memref<128x32xf32, #tpu.memory_space<vmem>>, %arg2: memref<128x8xf32, #tpu.memory_space<vmem>>, %arg3: memref<1x128x128xf32, #tpu.memory_space<vmem>>, %arg4: memref<1160x32xf32, #tpu.memory_space<vmem>>, %arg5: memref<64x64xf32, #tpu.memory_space<vmem>>, %arg6: memref<288x128xf32, #tpu.memory_space<vmem>>, %arg7: memref<32x128xf32, #tpu.memory_space<vmem>>, %arg8: memref<8x128xf32, #tpu.memory_space<vmem>>) attributes {dimension_semantics = [#tpu.dimension_semantics<parallel>], iteration_bounds = array<i64: 2>, scalar_prefetch = 0 : i64, scratch_operands = 0 : i64, tpu.core_type = #tpu.core_type<tc>, window_params = [{transform_indices = @transform_0, window_bounds = array<i64: 128, 32>}, {transform_indices = @transform_1, window_bounds = array<i64: 128, 8>}, {transform_indices = @transform_2, window_bounds = array<i64: 1, 128, 128>}, {pipeline_mode = #tpu.pipeline_mode<synchronous>, transform_indices = @transform_3, window_bounds = array<i64: 1160, 32>}, {pipeline_mode = #tpu.pipeline_mode<synchronous>, transform_indices = @transform_4, window_bounds = array<i64: 64, 64>}, {pipeline_mode = #tpu.pipeline_mode<synchronous>, transform_indices = @transform_5, window_bounds = array<i64: 288, 128>}, {pipeline_mode = #tpu.pipeline_mode<synchronous>, transform_indices = @transform_6, window_bounds = array<i64: 32, 128>}, {transform_indices = @transform_7, window_bounds = array<i64: 8, 128>}]} {
    %0 = tpu.iota {dimensions = array<i32: 1>} : vector<8x128xi32>
    %c4_i32 = arith.constant 4 : i32
    %1 = vector.broadcast %c4_i32 : i32 to vector<8x128xi32>
    %2 = arith.shrsi %0, %1 : vector<8x128xi32>
    %3 = tpu.iota {dimensions = array<i32: 0>} : vector<8x128xi32>
    %4 = arith.cmpi eq, %2, %3 : vector<8x128xi32>
    %5 = arith.extui %4 : vector<8x128xi1> to vector<8x128xi32>
    %6 = arith.sitofp %5 : vector<8x128xi32> to vector<8x128xf32>
    %cst = arith.constant 6.250000e-02 : f32
    %7 = vector.broadcast %cst : f32 to vector<8x128xf32>
    %8 = arith.mulf %6, %7 : vector<8x128xf32>
    %9 = tpu.iota {dimensions = array<i32: 0>} : vector<128x8xi32>
    %c4_i32_0 = arith.constant 4 : i32
    %10 = vector.broadcast %c4_i32_0 : i32 to vector<128x8xi32>
    %11 = arith.shrsi %9, %10 : vector<128x8xi32>
    %12 = tpu.iota {dimensions = array<i32: 1>} : vector<128x8xi32>
    %13 = arith.cmpi eq, %11, %12 : vector<128x8xi32>
    %14 = arith.extui %13 : vector<128x8xi1> to vector<128x8xi32>
    %15 = arith.sitofp %14 : vector<128x8xi32> to vector<128x8xf32>
    %c0 = arith.constant 0 : index
    %c0_1 = arith.constant 0 : index
    %c0_2 = arith.constant 0 : index
    %16 = vector.load %arg3[%c0, %c0_1, %c0_2] : memref<1x128x128xf32, #tpu.memory_space<vmem>>, vector<1x128x128xf32>
    %17 = vector.shape_cast %16 : vector<1x128x128xf32> to vector<128x128xf32>
    %c0_3 = arith.constant 0 : index
    %c0_4 = arith.constant 0 : index
    %18 = vector.load %arg1[%c0_3, %c0_4] : memref<128x32xf32, #tpu.memory_space<vmem>>, vector<128x32xf32>
    %c0_5 = arith.constant 0 : index
    %c0_6 = arith.constant 0 : index
    %19 = vector.load %arg2[%c0_5, %c0_6] : memref<128x8xf32, #tpu.memory_space<vmem>>, vector<128x8xf32>
    %c0_7 = arith.constant 0 : index
    %c0_8 = arith.constant 0 : index
    %20 = vector.load %arg4[%c0_7, %c0_8] : memref<1160x32xf32, #tpu.memory_space<vmem>>, vector<8x32xf32>
    %cst_9 = arith.constant dense<0.000000e+00> : vector<128x32xf32>
    %21 = tpu.matmul %19, %20, %cst_9 {dimension_numbers = #tpu.dot_dimension_numbers<[1], [0], [0], [1], [0, 0, 1, 1], [], []>} : vector<128x8xf32>, vector<8x32xf32>, vector<128x32xf32> -> vector<128x32xf32>
    %22 = arith.addf %18, %21 : vector<128x32xf32>
    %c0_10 = arith.constant 0 : index
    %c0_11 = arith.constant 0 : index
    %23 = vector.load %arg7[%c0_10, %c0_11] : memref<32x128xf32, #tpu.memory_space<vmem>>, vector<1x32xf32>
    %24 = vector.broadcast %23 : vector<1x32xf32> to vector<128x32xf32>
    %25 = arith.addf %22, %24 : vector<128x32xf32>
    %c8 = arith.constant 8 : index
    %c0_12 = arith.constant 0 : index
    %26 = vector.load %arg4[%c8, %c0_12] : memref<1160x32xf32, #tpu.memory_space<vmem>>, vector<32x32xf32>
    %c40 = arith.constant 40 : index
    %c0_13 = arith.constant 0 : index
    %27 = vector.load %arg4[%c40, %c0_13] : memref<1160x32xf32, #tpu.memory_space<vmem>>, vector<32x32xf32>
    %c72 = arith.constant 72 : index
    %c0_14 = arith.constant 0 : index
    %28 = vector.load %arg4[%c72, %c0_14] : memref<1160x32xf32, #tpu.memory_space<vmem>>, vector<32x32xf32>
    %c104 = arith.constant 104 : index
    %c0_15 = arith.constant 0 : index
    %29 = vector.load %arg4[%c104, %c0_15] : memref<1160x32xf32, #tpu.memory_space<vmem>>, vector<32x32xf32>
    %cst_16 = arith.constant dense<0.000000e+00> : vector<128x32xf32>
    %30 = tpu.matmul %25, %26, %cst_16 {dimension_numbers = #tpu.dot_dimension_numbers<[1], [0], [0], [1], [0, 0, 1, 1], [], []>} : vector<128x32xf32>, vector<32x32xf32>, vector<128x32xf32> -> vector<128x32xf32>
    %c1 = arith.constant 1 : index
    %c0_17 = arith.constant 0 : index
    %31 = vector.load %arg7[%c1, %c0_17] : memref<32x128xf32, #tpu.memory_space<vmem>>, vector<1x32xf32>
    %32 = vector.broadcast %31 : vector<1x32xf32> to vector<128x32xf32>
    %33 = arith.addf %30, %32 : vector<128x32xf32>
    %cst_18 = arith.constant dense<0.000000e+00> : vector<128x32xf32>
    %34 = tpu.matmul %25, %27, %cst_18 {dimension_numbers = #tpu.dot_dimension_numbers<[1], [0], [0], [1], [0, 0, 1, 1], [], []>} : vector<128x32xf32>, vector<32x32xf32>, vector<128x32xf32> -> vector<128x32xf32>
    %cst_19 = arith.constant dense<0.000000e+00> : vector<128x32xf32>
    %35 = tpu.matmul %25, %28, %cst_19 {dimension_numbers = #tpu.dot_dimension_numbers<[1], [0], [0], [1], [0, 0, 1, 1], [], []>} : vector<128x32xf32>, vector<32x32xf32>, vector<128x32xf32> -> vector<128x32xf32>
    %cst_20 = arith.constant dense<0.000000e+00> : vector<128x128xf32>
    %36 = tpu.matmul %33, %34, %cst_20 {dimension_numbers = #tpu.dot_dimension_numbers<[1], [1], [0], [0], [0, 0, 1, 0], [], []>} : vector<128x32xf32>, vector<128x32xf32>, vector<128x128xf32> -> vector<128x128xf32>
    %37 = arith.addf %36, %17 : vector<128x128xf32>
    %cst_21 = arith.constant dense<0xFF800000> : vector<128xf32>
    %38 = vector.multi_reduction <maximumf>, %37, %cst_21 [1] : vector<128x128xf32> to vector<128xf32>
    %39 = vector.shape_cast %38 : vector<128xf32> to vector<128x1xf32>
    %40 = vector.broadcast %39 : vector<128x1xf32> to vector<128x128xf32>
    %41 = arith.subf %37, %40 : vector<128x128xf32>
    %42 = math.exp %41 : vector<128x128xf32>
    %cst_22 = arith.constant dense<0.000000e+00> : vector<128xf32>
    %43 = vector.multi_reduction <add>, %42, %cst_22 [1] : vector<128x128xf32> to vector<128xf32>
    %44 = vector.shape_cast %43 : vector<128xf32> to vector<128x1xf32>
    %45 = tpu.reciprocal %44 {approx = true} : vector<128x1xf32> -> vector<128x1xf32>
    %46 = vector.broadcast %45 : vector<128x1xf32> to vector<128x128xf32>
    %47 = arith.mulf %42, %46 : vector<128x128xf32>
    %cst_23 = arith.constant dense<0.000000e+00> : vector<128x32xf32>
    %48 = tpu.matmul %47, %35, %cst_23 {dimension_numbers = #tpu.dot_dimension_numbers<[1], [0], [0], [1], [0, 0, 1, 1], [], []>} : vector<128x128xf32>, vector<128x32xf32>, vector<128x32xf32> -> vector<128x32xf32>
    %cst_24 = arith.constant dense<0.000000e+00> : vector<128x32xf32>
    %49 = tpu.matmul %48, %29, %cst_24 {dimension_numbers = #tpu.dot_dimension_numbers<[1], [0], [0], [1], [0, 0, 1, 1], [], []>} : vector<128x32xf32>, vector<32x32xf32>, vector<128x32xf32> -> vector<128x32xf32>
    %c136 = arith.constant 136 : index
    %c0_25 = arith.constant 0 : index
    %50 = vector.load %arg4[%c136, %c0_25] : memref<1160x32xf32, #tpu.memory_space<vmem>>, vector<32x32xf32>
    %c168 = arith.constant 168 : index
    %c0_26 = arith.constant 0 : index
    %51 = vector.load %arg4[%c168, %c0_26] : memref<1160x32xf32, #tpu.memory_space<vmem>>, vector<32x32xf32>
    %c200 = arith.constant 200 : index
    %c0_27 = arith.constant 0 : index
    %52 = vector.load %arg4[%c200, %c0_27] : memref<1160x32xf32, #tpu.memory_space<vmem>>, vector<32x32xf32>
    %c232 = arith.constant 232 : index
    %c0_28 = arith.constant 0 : index
    %53 = vector.load %arg4[%c232, %c0_28] : memref<1160x32xf32, #tpu.memory_space<vmem>>, vector<32x32xf32>
    %cst_29 = arith.constant dense<0.000000e+00> : vector<128x32xf32>
    %54 = tpu.matmul %25, %50, %cst_29 {dimension_numbers = #tpu.dot_dimension_numbers<[1], [0], [0], [1], [0, 0, 1, 1], [], []>} : vector<128x32xf32>, vector<32x32xf32>, vector<128x32xf32> -> vector<128x32xf32>
    %c2 = arith.constant 2 : index
    %c0_30 = arith.constant 0 : index
    %55 = vector.load %arg7[%c2, %c0_30] : memref<32x128xf32, #tpu.memory_space<vmem>>, vector<1x32xf32>
    %56 = vector.broadcast %55 : vector<1x32xf32> to vector<128x32xf32>
    %57 = arith.addf %54, %56 : vector<128x32xf32>
    %cst_31 = arith.constant dense<0.000000e+00> : vector<128x32xf32>
    %58 = tpu.matmul %25, %51, %cst_31 {dimension_numbers = #tpu.dot_dimension_numbers<[1], [0], [0], [1], [0, 0, 1, 1], [], []>} : vector<128x32xf32>, vector<32x32xf32>, vector<128x32xf32> -> vector<128x32xf32>
    %cst_32 = arith.constant dense<0.000000e+00> : vector<128x32xf32>
    %59 = tpu.matmul %25, %52, %cst_32 {dimension_numbers = #tpu.dot_dimension_numbers<[1], [0], [0], [1], [0, 0, 1, 1], [], []>} : vector<128x32xf32>, vector<32x32xf32>, vector<128x32xf32> -> vector<128x32xf32>
    %cst_33 = arith.constant dense<0.000000e+00> : vector<128x128xf32>
    %60 = tpu.matmul %57, %58, %cst_33 {dimension_numbers = #tpu.dot_dimension_numbers<[1], [1], [0], [0], [0, 0, 1, 0], [], []>} : vector<128x32xf32>, vector<128x32xf32>, vector<128x128xf32> -> vector<128x128xf32>
    %61 = arith.addf %60, %17 : vector<128x128xf32>
    %cst_34 = arith.constant dense<0xFF800000> : vector<128xf32>
    %62 = vector.multi_reduction <maximumf>, %61, %cst_34 [1] : vector<128x128xf32> to vector<128xf32>
    %63 = vector.shape_cast %62 : vector<128xf32> to vector<128x1xf32>
    %64 = vector.broadcast %63 : vector<128x1xf32> to vector<128x128xf32>
    %65 = arith.subf %61, %64 : vector<128x128xf32>
    %66 = math.exp %65 : vector<128x128xf32>
    %cst_35 = arith.constant dense<0.000000e+00> : vector<128xf32>
    %67 = vector.multi_reduction <add>, %66, %cst_35 [1] : vector<128x128xf32> to vector<128xf32>
    %68 = vector.shape_cast %67 : vector<128xf32> to vector<128x1xf32>
    %69 = tpu.reciprocal %68 {approx = true} : vector<128x1xf32> -> vector<128x1xf32>
    %70 = vector.broadcast %69 : vector<128x1xf32> to vector<128x128xf32>
    %71 = arith.mulf %66, %70 : vector<128x128xf32>
    %cst_36 = arith.constant dense<0.000000e+00> : vector<128x32xf32>
    %72 = tpu.matmul %71, %59, %cst_36 {dimension_numbers = #tpu.dot_dimension_numbers<[1], [0], [0], [1], [0, 0, 1, 1], [], []>} : vector<128x128xf32>, vector<128x32xf32>, vector<128x32xf32> -> vector<128x32xf32>
    %cst_37 = arith.constant dense<0.000000e+00> : vector<128x32xf32>
    %73 = tpu.matmul %72, %53, %cst_37 {dimension_numbers = #tpu.dot_dimension_numbers<[1], [0], [0], [1], [0, 0, 1, 1], [], []>} : vector<128x32xf32>, vector<32x32xf32>, vector<128x32xf32> -> vector<128x32xf32>
    %74 = arith.addf %49, %73 : vector<128x32xf32>
    %c264 = arith.constant 264 : index
    %c0_38 = arith.constant 0 : index
    %75 = vector.load %arg4[%c264, %c0_38] : memref<1160x32xf32, #tpu.memory_space<vmem>>, vector<32x32xf32>
    %c296 = arith.constant 296 : index
    %c0_39 = arith.constant 0 : index
    %76 = vector.load %arg4[%c296, %c0_39] : memref<1160x32xf32, #tpu.memory_space<vmem>>, vector<32x32xf32>
    %c328 = arith.constant 328 : index
    %c0_40 = arith.constant 0 : index
    %77 = vector.load %arg4[%c328, %c0_40] : memref<1160x32xf32, #tpu.memory_space<vmem>>, vector<32x32xf32>
    %c360 = arith.constant 360 : index
    %c0_41 = arith.constant 0 : index
    %78 = vector.load %arg4[%c360, %c0_41] : memref<1160x32xf32, #tpu.memory_space<vmem>>, vector<32x32xf32>
    %cst_42 = arith.constant dense<0.000000e+00> : vector<128x32xf32>
    %79 = tpu.matmul %25, %75, %cst_42 {dimension_numbers = #tpu.dot_dimension_numbers<[1], [0], [0], [1], [0, 0, 1, 1], [], []>} : vector<128x32xf32>, vector<32x32xf32>, vector<128x32xf32> -> vector<128x32xf32>
    %c3 = arith.constant 3 : index
    %c0_43 = arith.constant 0 : index
    %80 = vector.load %arg7[%c3, %c0_43] : memref<32x128xf32, #tpu.memory_space<vmem>>, vector<1x32xf32>
    %81 = vector.broadcast %80 : vector<1x32xf32> to vector<128x32xf32>
    %82 = arith.addf %79, %81 : vector<128x32xf32>
    %cst_44 = arith.constant dense<0.000000e+00> : vector<128x32xf32>
    %83 = tpu.matmul %25, %76, %cst_44 {dimension_numbers = #tpu.dot_dimension_numbers<[1], [0], [0], [1], [0, 0, 1, 1], [], []>} : vector<128x32xf32>, vector<32x32xf32>, vector<128x32xf32> -> vector<128x32xf32>
    %cst_45 = arith.constant dense<0.000000e+00> : vector<128x32xf32>
    %84 = tpu.matmul %25, %77, %cst_45 {dimension_numbers = #tpu.dot_dimension_numbers<[1], [0], [0], [1], [0, 0, 1, 1], [], []>} : vector<128x32xf32>, vector<32x32xf32>, vector<128x32xf32> -> vector<128x32xf32>
    %cst_46 = arith.constant dense<0.000000e+00> : vector<128x128xf32>
    %85 = tpu.matmul %82, %83, %cst_46 {dimension_numbers = #tpu.dot_dimension_numbers<[1], [1], [0], [0], [0, 0, 1, 0], [], []>} : vector<128x32xf32>, vector<128x32xf32>, vector<128x128xf32> -> vector<128x128xf32>
    %86 = arith.addf %85, %17 : vector<128x128xf32>
    %cst_47 = arith.constant dense<0xFF800000> : vector<128xf32>
    %87 = vector.multi_reduction <maximumf>, %86, %cst_47 [1] : vector<128x128xf32> to vector<128xf32>
    %88 = vector.shape_cast %87 : vector<128xf32> to vector<128x1xf32>
    %89 = vector.broadcast %88 : vector<128x1xf32> to vector<128x128xf32>
    %90 = arith.subf %86, %89 : vector<128x128xf32>
    %91 = math.exp %90 : vector<128x128xf32>
    %cst_48 = arith.constant dense<0.000000e+00> : vector<128xf32>
    %92 = vector.multi_reduction <add>, %91, %cst_48 [1] : vector<128x128xf32> to vector<128xf32>
    %93 = vector.shape_cast %92 : vector<128xf32> to vector<128x1xf32>
    %94 = tpu.reciprocal %93 {approx = true} : vector<128x1xf32> -> vector<128x1xf32>
    %95 = vector.broadcast %94 : vector<128x1xf32> to vector<128x128xf32>
    %96 = arith.mulf %91, %95 : vector<128x128xf32>
    %cst_49 = arith.constant dense<0.000000e+00> : vector<128x32xf32>
    %97 = tpu.matmul %96, %84, %cst_49 {dimension_numbers = #tpu.dot_dimension_numbers<[1], [0], [0], [1], [0, 0, 1, 1], [], []>} : vector<128x128xf32>, vector<128x32xf32>, vector<128x32xf32> -> vector<128x32xf32>
    %cst_50 = arith.constant dense<0.000000e+00> : vector<128x32xf32>
    %98 = tpu.matmul %97, %78, %cst_50 {dimension_numbers = #tpu.dot_dimension_numbers<[1], [0], [0], [1], [0, 0, 1, 1], [], []>} : vector<128x32xf32>, vector<32x32xf32>, vector<128x32xf32> -> vector<128x32xf32>
    %99 = arith.addf %74, %98 : vector<128x32xf32>
    %c392 = arith.constant 392 : index
    %c0_51 = arith.constant 0 : index
    %100 = vector.load %arg4[%c392, %c0_51] : memref<1160x32xf32, #tpu.memory_space<vmem>>, vector<32x32xf32>
    %c424 = arith.constant 424 : index
    %c0_52 = arith.constant 0 : index
    %101 = vector.load %arg4[%c424, %c0_52] : memref<1160x32xf32, #tpu.memory_space<vmem>>, vector<32x32xf32>
    %c456 = arith.constant 456 : index
    %c0_53 = arith.constant 0 : index
    %102 = vector.load %arg4[%c456, %c0_53] : memref<1160x32xf32, #tpu.memory_space<vmem>>, vector<32x32xf32>
    %c488 = arith.constant 488 : index
    %c0_54 = arith.constant 0 : index
    %103 = vector.load %arg4[%c488, %c0_54] : memref<1160x32xf32, #tpu.memory_space<vmem>>, vector<32x32xf32>
    %cst_55 = arith.constant dense<0.000000e+00> : vector<128x32xf32>
    %104 = tpu.matmul %25, %100, %cst_55 {dimension_numbers = #tpu.dot_dimension_numbers<[1], [0], [0], [1], [0, 0, 1, 1], [], []>} : vector<128x32xf32>, vector<32x32xf32>, vector<128x32xf32> -> vector<128x32xf32>
    %c4 = arith.constant 4 : index
    %c0_56 = arith.constant 0 : index
    %105 = vector.load %arg7[%c4, %c0_56] : memref<32x128xf32, #tpu.memory_space<vmem>>, vector<1x32xf32>
    %106 = vector.broadcast %105 : vector<1x32xf32> to vector<128x32xf32>
    %107 = arith.addf %104, %106 : vector<128x32xf32>
    %cst_57 = arith.constant dense<0.000000e+00> : vector<128x32xf32>
    %108 = tpu.matmul %25, %101, %cst_57 {dimension_numbers = #tpu.dot_dimension_numbers<[1], [0], [0], [1], [0, 0, 1, 1], [], []>} : vector<128x32xf32>, vector<32x32xf32>, vector<128x32xf32> -> vector<128x32xf32>
    %cst_58 = arith.constant dense<0.000000e+00> : vector<128x32xf32>
    %109 = tpu.matmul %25, %102, %cst_58 {dimension_numbers = #tpu.dot_dimension_numbers<[1], [0], [0], [1], [0, 0, 1, 1], [], []>} : vector<128x32xf32>, vector<32x32xf32>, vector<128x32xf32> -> vector<128x32xf32>
    %cst_59 = arith.constant dense<0.000000e+00> : vector<128x128xf32>
    %110 = tpu.matmul %107, %108, %cst_59 {dimension_numbers = #tpu.dot_dimension_numbers<[1], [1], [0], [0], [0, 0, 1, 0], [], []>} : vector<128x32xf32>, vector<128x32xf32>, vector<128x128xf32> -> vector<128x128xf32>
    %111 = arith.addf %110, %17 : vector<128x128xf32>
    %cst_60 = arith.constant dense<0xFF800000> : vector<128xf32>
    %112 = vector.multi_reduction <maximumf>, %111, %cst_60 [1] : vector<128x128xf32> to vector<128xf32>
    %113 = vector.shape_cast %112 : vector<128xf32> to vector<128x1xf32>
    %114 = vector.broadcast %113 : vector<128x1xf32> to vector<128x128xf32>
    %115 = arith.subf %111, %114 : vector<128x128xf32>
    %116 = math.exp %115 : vector<128x128xf32>
    %cst_61 = arith.constant dense<0.000000e+00> : vector<128xf32>
    %117 = vector.multi_reduction <add>, %116, %cst_61 [1] : vector<128x128xf32> to vector<128xf32>
    %118 = vector.shape_cast %117 : vector<128xf32> to vector<128x1xf32>
    %119 = tpu.reciprocal %118 {approx = true} : vector<128x1xf32> -> vector<128x1xf32>
    %120 = vector.broadcast %119 : vector<128x1xf32> to vector<128x128xf32>
    %121 = arith.mulf %116, %120 : vector<128x128xf32>
    %cst_62 = arith.constant dense<0.000000e+00> : vector<128x32xf32>
    %122 = tpu.matmul %121, %109, %cst_62 {dimension_numbers = #tpu.dot_dimension_numbers<[1], [0], [0], [1], [0, 0, 1, 1], [], []>} : vector<128x128xf32>, vector<128x32xf32>, vector<128x32xf32> -> vector<128x32xf32>
    %cst_63 = arith.constant dense<0.000000e+00> : vector<128x32xf32>
    %123 = tpu.matmul %122, %103, %cst_63 {dimension_numbers = #tpu.dot_dimension_numbers<[1], [0], [0], [1], [0, 0, 1, 1], [], []>} : vector<128x32xf32>, vector<32x32xf32>, vector<128x32xf32> -> vector<128x32xf32>
    %124 = arith.addf %99, %123 : vector<128x32xf32>
    %c5 = arith.constant 5 : index
    %c0_64 = arith.constant 0 : index
    %125 = vector.load %arg7[%c5, %c0_64] : memref<32x128xf32, #tpu.memory_space<vmem>>, vector<1x32xf32>
    %126 = vector.broadcast %125 : vector<1x32xf32> to vector<128x32xf32>
    %127 = arith.addf %124, %126 : vector<128x32xf32>
    %128 = arith.addf %127, %25 : vector<128x32xf32>
    %c6 = arith.constant 6 : index
    %c0_65 = arith.constant 0 : index
    %129 = vector.load %arg7[%c6, %c0_65] : memref<32x128xf32, #tpu.memory_space<vmem>>, vector<1x32xf32>
    %c7 = arith.constant 7 : index
    %c0_66 = arith.constant 0 : index
    %130 = vector.load %arg7[%c7, %c0_66] : memref<32x128xf32, #tpu.memory_space<vmem>>, vector<1x32xf32>
    %cst_67 = arith.constant dense<0.000000e+00> : vector<8x32xf32>
    %131 = tpu.matmul %8, %128, %cst_67 {dimension_numbers = #tpu.dot_dimension_numbers<[1], [0], [0], [1], [0, 0, 1, 1], [], []>} : vector<8x128xf32>, vector<128x32xf32>, vector<8x32xf32> -> vector<8x32xf32>
    %132 = arith.mulf %128, %128 : vector<128x32xf32>
    %cst_68 = arith.constant dense<0.000000e+00> : vector<8x32xf32>
    %133 = tpu.matmul %8, %132, %cst_68 {dimension_numbers = #tpu.dot_dimension_numbers<[1], [0], [0], [1], [0, 0, 1, 1], [], []>} : vector<8x128xf32>, vector<128x32xf32>, vector<8x32xf32> -> vector<8x32xf32>
    %134 = arith.mulf %131, %131 : vector<8x32xf32>
    %135 = arith.subf %133, %134 : vector<8x32xf32>
    %cst_69 = arith.constant 0.000000e+00 : f32
    %136 = vector.broadcast %cst_69 : f32 to vector<8x32xf32>
    %137 = arith.maximumf %135, %136 : vector<8x32xf32>
    %cst_70 = arith.constant 9.99999974E-6 : f32
    %138 = vector.broadcast %cst_70 : f32 to vector<8x32xf32>
    %139 = arith.addf %137, %138 : vector<8x32xf32>
    %140 = math.rsqrt %139 : vector<8x32xf32>
    %cst_71 = arith.constant dense<0.000000e+00> : vector<128x32xf32>
    %141 = tpu.matmul %15, %131, %cst_71 {dimension_numbers = #tpu.dot_dimension_numbers<[1], [0], [0], [1], [0, 0, 1, 1], [], []>} : vector<128x8xf32>, vector<8x32xf32>, vector<128x32xf32> -> vector<128x32xf32>
    %cst_72 = arith.constant dense<0.000000e+00> : vector<128x32xf32>
    %142 = tpu.matmul %15, %140, %cst_72 {dimension_numbers = #tpu.dot_dimension_numbers<[1], [0], [0], [1], [0, 0, 1, 1], [], []>} : vector<128x8xf32>, vector<8x32xf32>, vector<128x32xf32> -> vector<128x32xf32>
    %143 = arith.subf %128, %141 : vector<128x32xf32>
    %144 = arith.mulf %143, %142 : vector<128x32xf32>
    %145 = vector.broadcast %129 : vector<1x32xf32> to vector<128x32xf32>
    %146 = arith.mulf %144, %145 : vector<128x32xf32>
    %147 = vector.broadcast %130 : vector<1x32xf32> to vector<128x32xf32>
    %148 = arith.addf %146, %147 : vector<128x32xf32>
    %c0_73 = arith.constant 0 : index
    %c0_74 = arith.constant 0 : index
    %149 = vector.load %arg5[%c0_73, %c0_74] : memref<64x64xf32, #tpu.memory_space<vmem>>, vector<32x64xf32>
    %c520 = arith.constant 520 : index
    %c0_75 = arith.constant 0 : index
    %150 = vector.load %arg4[%c520, %c0_75] : memref<1160x32xf32, #tpu.memory_space<vmem>>, vector<64x32xf32>
    %cst_76 = arith.constant dense<0.000000e+00> : vector<128x64xf32>
    %151 = tpu.matmul %148, %149, %cst_76 {dimension_numbers = #tpu.dot_dimension_numbers<[1], [0], [0], [1], [0, 0, 1, 1], [], []>} : vector<128x32xf32>, vector<32x64xf32>, vector<128x64xf32> -> vector<128x64xf32>
    %c8_77 = arith.constant 8 : index
    %c0_78 = arith.constant 0 : index
    %152 = vector.load %arg7[%c8_77, %c0_78] : memref<32x128xf32, #tpu.memory_space<vmem>>, vector<1x64xf32>
    %153 = vector.broadcast %152 : vector<1x64xf32> to vector<128x64xf32>
    %154 = arith.addf %151, %153 : vector<128x64xf32>
    %cst_79 = arith.constant 0.000000e+00 : f32
    %155 = vector.broadcast %cst_79 : f32 to vector<128x64xf32>
    %156 = arith.maximumf %154, %155 : vector<128x64xf32>
    %cst_80 = arith.constant dense<0.000000e+00> : vector<128x32xf32>
    %157 = tpu.matmul %156, %150, %cst_80 {dimension_numbers = #tpu.dot_dimension_numbers<[1], [0], [0], [1], [0, 0, 1, 1], [], []>} : vector<128x64xf32>, vector<64x32xf32>, vector<128x32xf32> -> vector<128x32xf32>
    %c9 = arith.constant 9 : index
    %c0_81 = arith.constant 0 : index
    %158 = vector.load %arg7[%c9, %c0_81] : memref<32x128xf32, #tpu.memory_space<vmem>>, vector<1x32xf32>
    %159 = vector.broadcast %158 : vector<1x32xf32> to vector<128x32xf32>
    %160 = arith.addf %157, %159 : vector<128x32xf32>
    %161 = arith.addf %148, %160 : vector<128x32xf32>
    %c10 = arith.constant 10 : index
    %c0_82 = arith.constant 0 : index
    %162 = vector.load %arg7[%c10, %c0_82] : memref<32x128xf32, #tpu.memory_space<vmem>>, vector<1x32xf32>
    %c11 = arith.constant 11 : index
    %c0_83 = arith.constant 0 : index
    %163 = vector.load %arg7[%c11, %c0_83] : memref<32x128xf32, #tpu.memory_space<vmem>>, vector<1x32xf32>
    %cst_84 = arith.constant dense<0.000000e+00> : vector<8x32xf32>
    %164 = tpu.matmul %8, %161, %cst_84 {dimension_numbers = #tpu.dot_dimension_numbers<[1], [0], [0], [1], [0, 0, 1, 1], [], []>} : vector<8x128xf32>, vector<128x32xf32>, vector<8x32xf32> -> vector<8x32xf32>
    %165 = arith.mulf %161, %161 : vector<128x32xf32>
    %cst_85 = arith.constant dense<0.000000e+00> : vector<8x32xf32>
    %166 = tpu.matmul %8, %165, %cst_85 {dimension_numbers = #tpu.dot_dimension_numbers<[1], [0], [0], [1], [0, 0, 1, 1], [], []>} : vector<8x128xf32>, vector<128x32xf32>, vector<8x32xf32> -> vector<8x32xf32>
    %167 = arith.mulf %164, %164 : vector<8x32xf32>
    %168 = arith.subf %166, %167 : vector<8x32xf32>
    %cst_86 = arith.constant 0.000000e+00 : f32
    %169 = vector.broadcast %cst_86 : f32 to vector<8x32xf32>
    %170 = arith.maximumf %168, %169 : vector<8x32xf32>
    %cst_87 = arith.constant 9.99999974E-6 : f32
    %171 = vector.broadcast %cst_87 : f32 to vector<8x32xf32>
    %172 = arith.addf %170, %171 : vector<8x32xf32>
    %173 = math.rsqrt %172 : vector<8x32xf32>
    %cst_88 = arith.constant dense<0.000000e+00> : vector<128x32xf32>
    %174 = tpu.matmul %15, %164, %cst_88 {dimension_numbers = #tpu.dot_dimension_numbers<[1], [0], [0], [1], [0, 0, 1, 1], [], []>} : vector<128x8xf32>, vector<8x32xf32>, vector<128x32xf32> -> vector<128x32xf32>
    %cst_89 = arith.constant dense<0.000000e+00> : vector<128x32xf32>
    %175 = tpu.matmul %15, %173, %cst_89 {dimension_numbers = #tpu.dot_dimension_numbers<[1], [0], [0], [1], [0, 0, 1, 1], [], []>} : vector<128x8xf32>, vector<8x32xf32>, vector<128x32xf32> -> vector<128x32xf32>
    %176 = arith.subf %161, %174 : vector<128x32xf32>
    %177 = arith.mulf %176, %175 : vector<128x32xf32>
    %178 = vector.broadcast %162 : vector<1x32xf32> to vector<128x32xf32>
    %179 = arith.mulf %177, %178 : vector<128x32xf32>
    %180 = vector.broadcast %163 : vector<1x32xf32> to vector<128x32xf32>
    %181 = arith.addf %179, %180 : vector<128x32xf32>
    %c584 = arith.constant 584 : index
    %c0_90 = arith.constant 0 : index
    %182 = vector.load %arg4[%c584, %c0_90] : memref<1160x32xf32, #tpu.memory_space<vmem>>, vector<32x32xf32>
    %c616 = arith.constant 616 : index
    %c0_91 = arith.constant 0 : index
    %183 = vector.load %arg4[%c616, %c0_91] : memref<1160x32xf32, #tpu.memory_space<vmem>>, vector<32x32xf32>
    %c648 = arith.constant 648 : index
    %c0_92 = arith.constant 0 : index
    %184 = vector.load %arg4[%c648, %c0_92] : memref<1160x32xf32, #tpu.memory_space<vmem>>, vector<32x32xf32>
    %c680 = arith.constant 680 : index
    %c0_93 = arith.constant 0 : index
    %185 = vector.load %arg4[%c680, %c0_93] : memref<1160x32xf32, #tpu.memory_space<vmem>>, vector<32x32xf32>
    %cst_94 = arith.constant dense<0.000000e+00> : vector<128x32xf32>
    %186 = tpu.matmul %181, %182, %cst_94 {dimension_numbers = #tpu.dot_dimension_numbers<[1], [0], [0], [1], [0, 0, 1, 1], [], []>} : vector<128x32xf32>, vector<32x32xf32>, vector<128x32xf32> -> vector<128x32xf32>
    %c12 = arith.constant 12 : index
    %c0_95 = arith.constant 0 : index
    %187 = vector.load %arg7[%c12, %c0_95] : memref<32x128xf32, #tpu.memory_space<vmem>>, vector<1x32xf32>
    %188 = vector.broadcast %187 : vector<1x32xf32> to vector<128x32xf32>
    %189 = arith.addf %186, %188 : vector<128x32xf32>
    %cst_96 = arith.constant dense<0.000000e+00> : vector<128x32xf32>
    %190 = tpu.matmul %181, %183, %cst_96 {dimension_numbers = #tpu.dot_dimension_numbers<[1], [0], [0], [1], [0, 0, 1, 1], [], []>} : vector<128x32xf32>, vector<32x32xf32>, vector<128x32xf32> -> vector<128x32xf32>
    %cst_97 = arith.constant dense<0.000000e+00> : vector<128x32xf32>
    %191 = tpu.matmul %181, %184, %cst_97 {dimension_numbers = #tpu.dot_dimension_numbers<[1], [0], [0], [1], [0, 0, 1, 1], [], []>} : vector<128x32xf32>, vector<32x32xf32>, vector<128x32xf32> -> vector<128x32xf32>
    %cst_98 = arith.constant dense<0.000000e+00> : vector<128x128xf32>
    %192 = tpu.matmul %189, %190, %cst_98 {dimension_numbers = #tpu.dot_dimension_numbers<[1], [1], [0], [0], [0, 0, 1, 0], [], []>} : vector<128x32xf32>, vector<128x32xf32>, vector<128x128xf32> -> vector<128x128xf32>
    %193 = arith.addf %192, %17 : vector<128x128xf32>
    %cst_99 = arith.constant dense<0xFF800000> : vector<128xf32>
    %194 = vector.multi_reduction <maximumf>, %193, %cst_99 [1] : vector<128x128xf32> to vector<128xf32>
    %195 = vector.shape_cast %194 : vector<128xf32> to vector<128x1xf32>
    %196 = vector.broadcast %195 : vector<128x1xf32> to vector<128x128xf32>
    %197 = arith.subf %193, %196 : vector<128x128xf32>
    %198 = math.exp %197 : vector<128x128xf32>
    %cst_100 = arith.constant dense<0.000000e+00> : vector<128xf32>
    %199 = vector.multi_reduction <add>, %198, %cst_100 [1] : vector<128x128xf32> to vector<128xf32>
    %200 = vector.shape_cast %199 : vector<128xf32> to vector<128x1xf32>
    %201 = tpu.reciprocal %200 {approx = true} : vector<128x1xf32> -> vector<128x1xf32>
    %202 = vector.broadcast %201 : vector<128x1xf32> to vector<128x128xf32>
    %203 = arith.mulf %198, %202 : vector<128x128xf32>
    %cst_101 = arith.constant dense<0.000000e+00> : vector<128x32xf32>
    %204 = tpu.matmul %203, %191, %cst_101 {dimension_numbers = #tpu.dot_dimension_numbers<[1], [0], [0], [1], [0, 0, 1, 1], [], []>} : vector<128x128xf32>, vector<128x32xf32>, vector<128x32xf32> -> vector<128x32xf32>
    %cst_102 = arith.constant dense<0.000000e+00> : vector<128x32xf32>
    %205 = tpu.matmul %204, %185, %cst_102 {dimension_numbers = #tpu.dot_dimension_numbers<[1], [0], [0], [1], [0, 0, 1, 1], [], []>} : vector<128x32xf32>, vector<32x32xf32>, vector<128x32xf32> -> vector<128x32xf32>
    %c712 = arith.constant 712 : index
    %c0_103 = arith.constant 0 : index
    %206 = vector.load %arg4[%c712, %c0_103] : memref<1160x32xf32, #tpu.memory_space<vmem>>, vector<32x32xf32>
    %c744 = arith.constant 744 : index
    %c0_104 = arith.constant 0 : index
    %207 = vector.load %arg4[%c744, %c0_104] : memref<1160x32xf32, #tpu.memory_space<vmem>>, vector<32x32xf32>
    %c776 = arith.constant 776 : index
    %c0_105 = arith.constant 0 : index
    %208 = vector.load %arg4[%c776, %c0_105] : memref<1160x32xf32, #tpu.memory_space<vmem>>, vector<32x32xf32>
    %c808 = arith.constant 808 : index
    %c0_106 = arith.constant 0 : index
    %209 = vector.load %arg4[%c808, %c0_106] : memref<1160x32xf32, #tpu.memory_space<vmem>>, vector<32x32xf32>
    %cst_107 = arith.constant dense<0.000000e+00> : vector<128x32xf32>
    %210 = tpu.matmul %181, %206, %cst_107 {dimension_numbers = #tpu.dot_dimension_numbers<[1], [0], [0], [1], [0, 0, 1, 1], [], []>} : vector<128x32xf32>, vector<32x32xf32>, vector<128x32xf32> -> vector<128x32xf32>
    %c13 = arith.constant 13 : index
    %c0_108 = arith.constant 0 : index
    %211 = vector.load %arg7[%c13, %c0_108] : memref<32x128xf32, #tpu.memory_space<vmem>>, vector<1x32xf32>
    %212 = vector.broadcast %211 : vector<1x32xf32> to vector<128x32xf32>
    %213 = arith.addf %210, %212 : vector<128x32xf32>
    %cst_109 = arith.constant dense<0.000000e+00> : vector<128x32xf32>
    %214 = tpu.matmul %181, %207, %cst_109 {dimension_numbers = #tpu.dot_dimension_numbers<[1], [0], [0], [1], [0, 0, 1, 1], [], []>} : vector<128x32xf32>, vector<32x32xf32>, vector<128x32xf32> -> vector<128x32xf32>
    %cst_110 = arith.constant dense<0.000000e+00> : vector<128x32xf32>
    %215 = tpu.matmul %181, %208, %cst_110 {dimension_numbers = #tpu.dot_dimension_numbers<[1], [0], [0], [1], [0, 0, 1, 1], [], []>} : vector<128x32xf32>, vector<32x32xf32>, vector<128x32xf32> -> vector<128x32xf32>
    %cst_111 = arith.constant dense<0.000000e+00> : vector<128x128xf32>
    %216 = tpu.matmul %213, %214, %cst_111 {dimension_numbers = #tpu.dot_dimension_numbers<[1], [1], [0], [0], [0, 0, 1, 0], [], []>} : vector<128x32xf32>, vector<128x32xf32>, vector<128x128xf32> -> vector<128x128xf32>
    %217 = arith.addf %216, %17 : vector<128x128xf32>
    %cst_112 = arith.constant dense<0xFF800000> : vector<128xf32>
    %218 = vector.multi_reduction <maximumf>, %217, %cst_112 [1] : vector<128x128xf32> to vector<128xf32>
    %219 = vector.shape_cast %218 : vector<128xf32> to vector<128x1xf32>
    %220 = vector.broadcast %219 : vector<128x1xf32> to vector<128x128xf32>
    %221 = arith.subf %217, %220 : vector<128x128xf32>
    %222 = math.exp %221 : vector<128x128xf32>
    %cst_113 = arith.constant dense<0.000000e+00> : vector<128xf32>
    %223 = vector.multi_reduction <add>, %222, %cst_113 [1] : vector<128x128xf32> to vector<128xf32>
    %224 = vector.shape_cast %223 : vector<128xf32> to vector<128x1xf32>
    %225 = tpu.reciprocal %224 {approx = true} : vector<128x1xf32> -> vector<128x1xf32>
    %226 = vector.broadcast %225 : vector<128x1xf32> to vector<128x128xf32>
    %227 = arith.mulf %222, %226 : vector<128x128xf32>
    %cst_114 = arith.constant dense<0.000000e+00> : vector<128x32xf32>
    %228 = tpu.matmul %227, %215, %cst_114 {dimension_numbers = #tpu.dot_dimension_numbers<[1], [0], [0], [1], [0, 0, 1, 1], [], []>} : vector<128x128xf32>, vector<128x32xf32>, vector<128x32xf32> -> vector<128x32xf32>
    %cst_115 = arith.constant dense<0.000000e+00> : vector<128x32xf32>
    %229 = tpu.matmul %228, %209, %cst_115 {dimension_numbers = #tpu.dot_dimension_numbers<[1], [0], [0], [1], [0, 0, 1, 1], [], []>} : vector<128x32xf32>, vector<32x32xf32>, vector<128x32xf32> -> vector<128x32xf32>
    %230 = arith.addf %205, %229 : vector<128x32xf32>
    %c840 = arith.constant 840 : index
    %c0_116 = arith.constant 0 : index
    %231 = vector.load %arg4[%c840, %c0_116] : memref<1160x32xf32, #tpu.memory_space<vmem>>, vector<32x32xf32>
    %c872 = arith.constant 872 : index
    %c0_117 = arith.constant 0 : index
    %232 = vector.load %arg4[%c872, %c0_117] : memref<1160x32xf32, #tpu.memory_space<vmem>>, vector<32x32xf32>
    %c904 = arith.constant 904 : index
    %c0_118 = arith.constant 0 : index
    %233 = vector.load %arg4[%c904, %c0_118] : memref<1160x32xf32, #tpu.memory_space<vmem>>, vector<32x32xf32>
    %c936 = arith.constant 936 : index
    %c0_119 = arith.constant 0 : index
    %234 = vector.load %arg4[%c936, %c0_119] : memref<1160x32xf32, #tpu.memory_space<vmem>>, vector<32x32xf32>
    %cst_120 = arith.constant dense<0.000000e+00> : vector<128x32xf32>
    %235 = tpu.matmul %181, %231, %cst_120 {dimension_numbers = #tpu.dot_dimension_numbers<[1], [0], [0], [1], [0, 0, 1, 1], [], []>} : vector<128x32xf32>, vector<32x32xf32>, vector<128x32xf32> -> vector<128x32xf32>
    %c14 = arith.constant 14 : index
    %c0_121 = arith.constant 0 : index
    %236 = vector.load %arg7[%c14, %c0_121] : memref<32x128xf32, #tpu.memory_space<vmem>>, vector<1x32xf32>
    %237 = vector.broadcast %236 : vector<1x32xf32> to vector<128x32xf32>
    %238 = arith.addf %235, %237 : vector<128x32xf32>
    %cst_122 = arith.constant dense<0.000000e+00> : vector<128x32xf32>
    %239 = tpu.matmul %181, %232, %cst_122 {dimension_numbers = #tpu.dot_dimension_numbers<[1], [0], [0], [1], [0, 0, 1, 1], [], []>} : vector<128x32xf32>, vector<32x32xf32>, vector<128x32xf32> -> vector<128x32xf32>
    %cst_123 = arith.constant dense<0.000000e+00> : vector<128x32xf32>
    %240 = tpu.matmul %181, %233, %cst_123 {dimension_numbers = #tpu.dot_dimension_numbers<[1], [0], [0], [1], [0, 0, 1, 1], [], []>} : vector<128x32xf32>, vector<32x32xf32>, vector<128x32xf32> -> vector<128x32xf32>
    %cst_124 = arith.constant dense<0.000000e+00> : vector<128x128xf32>
    %241 = tpu.matmul %238, %239, %cst_124 {dimension_numbers = #tpu.dot_dimension_numbers<[1], [1], [0], [0], [0, 0, 1, 0], [], []>} : vector<128x32xf32>, vector<128x32xf32>, vector<128x128xf32> -> vector<128x128xf32>
    %242 = arith.addf %241, %17 : vector<128x128xf32>
    %cst_125 = arith.constant dense<0xFF800000> : vector<128xf32>
    %243 = vector.multi_reduction <maximumf>, %242, %cst_125 [1] : vector<128x128xf32> to vector<128xf32>
    %244 = vector.shape_cast %243 : vector<128xf32> to vector<128x1xf32>
    %245 = vector.broadcast %244 : vector<128x1xf32> to vector<128x128xf32>
    %246 = arith.subf %242, %245 : vector<128x128xf32>
    %247 = math.exp %246 : vector<128x128xf32>
    %cst_126 = arith.constant dense<0.000000e+00> : vector<128xf32>
    %248 = vector.multi_reduction <add>, %247, %cst_126 [1] : vector<128x128xf32> to vector<128xf32>
    %249 = vector.shape_cast %248 : vector<128xf32> to vector<128x1xf32>
    %250 = tpu.reciprocal %249 {approx = true} : vector<128x1xf32> -> vector<128x1xf32>
    %251 = vector.broadcast %250 : vector<128x1xf32> to vector<128x128xf32>
    %252 = arith.mulf %247, %251 : vector<128x128xf32>
    %cst_127 = arith.constant dense<0.000000e+00> : vector<128x32xf32>
    %253 = tpu.matmul %252, %240, %cst_127 {dimension_numbers = #tpu.dot_dimension_numbers<[1], [0], [0], [1], [0, 0, 1, 1], [], []>} : vector<128x128xf32>, vector<128x32xf32>, vector<128x32xf32> -> vector<128x32xf32>
    %cst_128 = arith.constant dense<0.000000e+00> : vector<128x32xf32>
    %254 = tpu.matmul %253, %234, %cst_128 {dimension_numbers = #tpu.dot_dimension_numbers<[1], [0], [0], [1], [0, 0, 1, 1], [], []>} : vector<128x32xf32>, vector<32x32xf32>, vector<128x32xf32> -> vector<128x32xf32>
    %255 = arith.addf %230, %254 : vector<128x32xf32>
    %c968 = arith.constant 968 : index
    %c0_129 = arith.constant 0 : index
    %256 = vector.load %arg4[%c968, %c0_129] : memref<1160x32xf32, #tpu.memory_space<vmem>>, vector<32x32xf32>
    %c1000 = arith.constant 1000 : index
    %c0_130 = arith.constant 0 : index
    %257 = vector.load %arg4[%c1000, %c0_130] : memref<1160x32xf32, #tpu.memory_space<vmem>>, vector<32x32xf32>
    %c1032 = arith.constant 1032 : index
    %c0_131 = arith.constant 0 : index
    %258 = vector.load %arg4[%c1032, %c0_131] : memref<1160x32xf32, #tpu.memory_space<vmem>>, vector<32x32xf32>
    %c1064 = arith.constant 1064 : index
    %c0_132 = arith.constant 0 : index
    %259 = vector.load %arg4[%c1064, %c0_132] : memref<1160x32xf32, #tpu.memory_space<vmem>>, vector<32x32xf32>
    %cst_133 = arith.constant dense<0.000000e+00> : vector<128x32xf32>
    %260 = tpu.matmul %181, %256, %cst_133 {dimension_numbers = #tpu.dot_dimension_numbers<[1], [0], [0], [1], [0, 0, 1, 1], [], []>} : vector<128x32xf32>, vector<32x32xf32>, vector<128x32xf32> -> vector<128x32xf32>
    %c15 = arith.constant 15 : index
    %c0_134 = arith.constant 0 : index
    %261 = vector.load %arg7[%c15, %c0_134] : memref<32x128xf32, #tpu.memory_space<vmem>>, vector<1x32xf32>
    %262 = vector.broadcast %261 : vector<1x32xf32> to vector<128x32xf32>
    %263 = arith.addf %260, %262 : vector<128x32xf32>
    %cst_135 = arith.constant dense<0.000000e+00> : vector<128x32xf32>
    %264 = tpu.matmul %181, %257, %cst_135 {dimension_numbers = #tpu.dot_dimension_numbers<[1], [0], [0], [1], [0, 0, 1, 1], [], []>} : vector<128x32xf32>, vector<32x32xf32>, vector<128x32xf32> -> vector<128x32xf32>
    %cst_136 = arith.constant dense<0.000000e+00> : vector<128x32xf32>
    %265 = tpu.matmul %181, %258, %cst_136 {dimension_numbers = #tpu.dot_dimension_numbers<[1], [0], [0], [1], [0, 0, 1, 1], [], []>} : vector<128x32xf32>, vector<32x32xf32>, vector<128x32xf32> -> vector<128x32xf32>
    %cst_137 = arith.constant dense<0.000000e+00> : vector<128x128xf32>
    %266 = tpu.matmul %263, %264, %cst_137 {dimension_numbers = #tpu.dot_dimension_numbers<[1], [1], [0], [0], [0, 0, 1, 0], [], []>} : vector<128x32xf32>, vector<128x32xf32>, vector<128x128xf32> -> vector<128x128xf32>
    %267 = arith.addf %266, %17 : vector<128x128xf32>
    %cst_138 = arith.constant dense<0xFF800000> : vector<128xf32>
    %268 = vector.multi_reduction <maximumf>, %267, %cst_138 [1] : vector<128x128xf32> to vector<128xf32>
    %269 = vector.shape_cast %268 : vector<128xf32> to vector<128x1xf32>
    %270 = vector.broadcast %269 : vector<128x1xf32> to vector<128x128xf32>
    %271 = arith.subf %267, %270 : vector<128x128xf32>
    %272 = math.exp %271 : vector<128x128xf32>
    %cst_139 = arith.constant dense<0.000000e+00> : vector<128xf32>
    %273 = vector.multi_reduction <add>, %272, %cst_139 [1] : vector<128x128xf32> to vector<128xf32>
    %274 = vector.shape_cast %273 : vector<128xf32> to vector<128x1xf32>
    %275 = tpu.reciprocal %274 {approx = true} : vector<128x1xf32> -> vector<128x1xf32>
    %276 = vector.broadcast %275 : vector<128x1xf32> to vector<128x128xf32>
    %277 = arith.mulf %272, %276 : vector<128x128xf32>
    %cst_140 = arith.constant dense<0.000000e+00> : vector<128x32xf32>
    %278 = tpu.matmul %277, %265, %cst_140 {dimension_numbers = #tpu.dot_dimension_numbers<[1], [0], [0], [1], [0, 0, 1, 1], [], []>} : vector<128x128xf32>, vector<128x32xf32>, vector<128x32xf32> -> vector<128x32xf32>
    %cst_141 = arith.constant dense<0.000000e+00> : vector<128x32xf32>
    %279 = tpu.matmul %278, %259, %cst_141 {dimension_numbers = #tpu.dot_dimension_numbers<[1], [0], [0], [1], [0, 0, 1, 1], [], []>} : vector<128x32xf32>, vector<32x32xf32>, vector<128x32xf32> -> vector<128x32xf32>
    %280 = arith.addf %255, %279 : vector<128x32xf32>
    %c16 = arith.constant 16 : index
    %c0_142 = arith.constant 0 : index
    %281 = vector.load %arg7[%c16, %c0_142] : memref<32x128xf32, #tpu.memory_space<vmem>>, vector<1x32xf32>
    %282 = vector.broadcast %281 : vector<1x32xf32> to vector<128x32xf32>
    %283 = arith.addf %280, %282 : vector<128x32xf32>
    %284 = arith.addf %283, %181 : vector<128x32xf32>
    %c17 = arith.constant 17 : index
    %c0_143 = arith.constant 0 : index
    %285 = vector.load %arg7[%c17, %c0_143] : memref<32x128xf32, #tpu.memory_space<vmem>>, vector<1x32xf32>
    %c18 = arith.constant 18 : index
    %c0_144 = arith.constant 0 : index
    %286 = vector.load %arg7[%c18, %c0_144] : memref<32x128xf32, #tpu.memory_space<vmem>>, vector<1x32xf32>
    %cst_145 = arith.constant dense<0.000000e+00> : vector<8x32xf32>
    %287 = tpu.matmul %8, %284, %cst_145 {dimension_numbers = #tpu.dot_dimension_numbers<[1], [0], [0], [1], [0, 0, 1, 1], [], []>} : vector<8x128xf32>, vector<128x32xf32>, vector<8x32xf32> -> vector<8x32xf32>
    %288 = arith.mulf %284, %284 : vector<128x32xf32>
    %cst_146 = arith.constant dense<0.000000e+00> : vector<8x32xf32>
    %289 = tpu.matmul %8, %288, %cst_146 {dimension_numbers = #tpu.dot_dimension_numbers<[1], [0], [0], [1], [0, 0, 1, 1], [], []>} : vector<8x128xf32>, vector<128x32xf32>, vector<8x32xf32> -> vector<8x32xf32>
    %290 = arith.mulf %287, %287 : vector<8x32xf32>
    %291 = arith.subf %289, %290 : vector<8x32xf32>
    %cst_147 = arith.constant 0.000000e+00 : f32
    %292 = vector.broadcast %cst_147 : f32 to vector<8x32xf32>
    %293 = arith.maximumf %291, %292 : vector<8x32xf32>
    %cst_148 = arith.constant 9.99999974E-6 : f32
    %294 = vector.broadcast %cst_148 : f32 to vector<8x32xf32>
    %295 = arith.addf %293, %294 : vector<8x32xf32>
    %296 = math.rsqrt %295 : vector<8x32xf32>
    %cst_149 = arith.constant dense<0.000000e+00> : vector<128x32xf32>
    %297 = tpu.matmul %15, %287, %cst_149 {dimension_numbers = #tpu.dot_dimension_numbers<[1], [0], [0], [1], [0, 0, 1, 1], [], []>} : vector<128x8xf32>, vector<8x32xf32>, vector<128x32xf32> -> vector<128x32xf32>
    %cst_150 = arith.constant dense<0.000000e+00> : vector<128x32xf32>
    %298 = tpu.matmul %15, %296, %cst_150 {dimension_numbers = #tpu.dot_dimension_numbers<[1], [0], [0], [1], [0, 0, 1, 1], [], []>} : vector<128x8xf32>, vector<8x32xf32>, vector<128x32xf32> -> vector<128x32xf32>
    %299 = arith.subf %284, %297 : vector<128x32xf32>
    %300 = arith.mulf %299, %298 : vector<128x32xf32>
    %301 = vector.broadcast %285 : vector<1x32xf32> to vector<128x32xf32>
    %302 = arith.mulf %300, %301 : vector<128x32xf32>
    %303 = vector.broadcast %286 : vector<1x32xf32> to vector<128x32xf32>
    %304 = arith.addf %302, %303 : vector<128x32xf32>
    %c32 = arith.constant 32 : index
    %c0_151 = arith.constant 0 : index
    %305 = vector.load %arg5[%c32, %c0_151] : memref<64x64xf32, #tpu.memory_space<vmem>>, vector<32x64xf32>
    %c1096 = arith.constant 1096 : index
    %c0_152 = arith.constant 0 : index
    %306 = vector.load %arg4[%c1096, %c0_152] : memref<1160x32xf32, #tpu.memory_space<vmem>>, vector<64x32xf32>
    %cst_153 = arith.constant dense<0.000000e+00> : vector<128x64xf32>
    %307 = tpu.matmul %304, %305, %cst_153 {dimension_numbers = #tpu.dot_dimension_numbers<[1], [0], [0], [1], [0, 0, 1, 1], [], []>} : vector<128x32xf32>, vector<32x64xf32>, vector<128x64xf32> -> vector<128x64xf32>
    %c19 = arith.constant 19 : index
    %c0_154 = arith.constant 0 : index
    %308 = vector.load %arg7[%c19, %c0_154] : memref<32x128xf32, #tpu.memory_space<vmem>>, vector<1x64xf32>
    %309 = vector.broadcast %308 : vector<1x64xf32> to vector<128x64xf32>
    %310 = arith.addf %307, %309 : vector<128x64xf32>
    %cst_155 = arith.constant 0.000000e+00 : f32
    %311 = vector.broadcast %cst_155 : f32 to vector<128x64xf32>
    %312 = arith.maximumf %310, %311 : vector<128x64xf32>
    %cst_156 = arith.constant dense<0.000000e+00> : vector<128x32xf32>
    %313 = tpu.matmul %312, %306, %cst_156 {dimension_numbers = #tpu.dot_dimension_numbers<[1], [0], [0], [1], [0, 0, 1, 1], [], []>} : vector<128x64xf32>, vector<64x32xf32>, vector<128x32xf32> -> vector<128x32xf32>
    %c20 = arith.constant 20 : index
    %c0_157 = arith.constant 0 : index
    %314 = vector.load %arg7[%c20, %c0_157] : memref<32x128xf32, #tpu.memory_space<vmem>>, vector<1x32xf32>
    %315 = vector.broadcast %314 : vector<1x32xf32> to vector<128x32xf32>
    %316 = arith.addf %313, %315 : vector<128x32xf32>
    %317 = arith.addf %304, %316 : vector<128x32xf32>
    %c21 = arith.constant 21 : index
    %c0_158 = arith.constant 0 : index
    %318 = vector.load %arg7[%c21, %c0_158] : memref<32x128xf32, #tpu.memory_space<vmem>>, vector<1x32xf32>
    %c22 = arith.constant 22 : index
    %c0_159 = arith.constant 0 : index
    %319 = vector.load %arg7[%c22, %c0_159] : memref<32x128xf32, #tpu.memory_space<vmem>>, vector<1x32xf32>
    %cst_160 = arith.constant dense<0.000000e+00> : vector<8x32xf32>
    %320 = tpu.matmul %8, %317, %cst_160 {dimension_numbers = #tpu.dot_dimension_numbers<[1], [0], [0], [1], [0, 0, 1, 1], [], []>} : vector<8x128xf32>, vector<128x32xf32>, vector<8x32xf32> -> vector<8x32xf32>
    %321 = arith.mulf %317, %317 : vector<128x32xf32>
    %cst_161 = arith.constant dense<0.000000e+00> : vector<8x32xf32>
    %322 = tpu.matmul %8, %321, %cst_161 {dimension_numbers = #tpu.dot_dimension_numbers<[1], [0], [0], [1], [0, 0, 1, 1], [], []>} : vector<8x128xf32>, vector<128x32xf32>, vector<8x32xf32> -> vector<8x32xf32>
    %323 = arith.mulf %320, %320 : vector<8x32xf32>
    %324 = arith.subf %322, %323 : vector<8x32xf32>
    %cst_162 = arith.constant 0.000000e+00 : f32
    %325 = vector.broadcast %cst_162 : f32 to vector<8x32xf32>
    %326 = arith.maximumf %324, %325 : vector<8x32xf32>
    %cst_163 = arith.constant 9.99999974E-6 : f32
    %327 = vector.broadcast %cst_163 : f32 to vector<8x32xf32>
    %328 = arith.addf %326, %327 : vector<8x32xf32>
    %329 = math.rsqrt %328 : vector<8x32xf32>
    %cst_164 = arith.constant dense<0.000000e+00> : vector<128x32xf32>
    %330 = tpu.matmul %15, %320, %cst_164 {dimension_numbers = #tpu.dot_dimension_numbers<[1], [0], [0], [1], [0, 0, 1, 1], [], []>} : vector<128x8xf32>, vector<8x32xf32>, vector<128x32xf32> -> vector<128x32xf32>
    %cst_165 = arith.constant dense<0.000000e+00> : vector<128x32xf32>
    %331 = tpu.matmul %15, %329, %cst_165 {dimension_numbers = #tpu.dot_dimension_numbers<[1], [0], [0], [1], [0, 0, 1, 1], [], []>} : vector<128x8xf32>, vector<8x32xf32>, vector<128x32xf32> -> vector<128x32xf32>
    %332 = arith.subf %317, %330 : vector<128x32xf32>
    %333 = arith.mulf %332, %331 : vector<128x32xf32>
    %334 = vector.broadcast %318 : vector<1x32xf32> to vector<128x32xf32>
    %335 = arith.mulf %333, %334 : vector<128x32xf32>
    %336 = vector.broadcast %319 : vector<1x32xf32> to vector<128x32xf32>
    %337 = arith.addf %335, %336 : vector<128x32xf32>
    %cst_166 = arith.constant dense<0.000000e+00> : vector<8x32xf32>
    %338 = tpu.matmul %6, %337, %cst_166 {dimension_numbers = #tpu.dot_dimension_numbers<[1], [0], [0], [1], [0, 0, 1, 1], [], []>} : vector<8x128xf32>, vector<128x32xf32>, vector<8x32xf32> -> vector<8x32xf32>
    %c0_167 = arith.constant 0 : index
    %c0_168 = arith.constant 0 : index
    %339 = vector.load %arg6[%c0_167, %c0_168] : memref<288x128xf32, #tpu.memory_space<vmem>>, vector<32x128xf32>
    %cst_169 = arith.constant dense<0.000000e+00> : vector<8x128xf32>
    %340 = tpu.matmul %338, %339, %cst_169 {dimension_numbers = #tpu.dot_dimension_numbers<[1], [0], [0], [1], [0, 0, 1, 1], [], []>} : vector<8x32xf32>, vector<32x128xf32>, vector<8x128xf32> -> vector<8x128xf32>
    %c23 = arith.constant 23 : index
    %c0_170 = arith.constant 0 : index
    %341 = vector.load %arg7[%c23, %c0_170] : memref<32x128xf32, #tpu.memory_space<vmem>>, vector<1x128xf32>
    %342 = vector.broadcast %341 : vector<1x128xf32> to vector<8x128xf32>
    %343 = arith.addf %340, %342 : vector<8x128xf32>
    %cst_171 = arith.constant 0.000000e+00 : f32
    %344 = vector.broadcast %cst_171 : f32 to vector<8x128xf32>
    %345 = arith.maximumf %343, %344 : vector<8x128xf32>
    %c32_172 = arith.constant 32 : index
    %c0_173 = arith.constant 0 : index
    %346 = vector.load %arg6[%c32_172, %c0_173] : memref<288x128xf32, #tpu.memory_space<vmem>>, vector<128x128xf32>
    %cst_174 = arith.constant dense<0.000000e+00> : vector<8x128xf32>
    %347 = tpu.matmul %345, %346, %cst_174 {dimension_numbers = #tpu.dot_dimension_numbers<[1], [0], [0], [1], [0, 0, 1, 1], [], []>} : vector<8x128xf32>, vector<128x128xf32>, vector<8x128xf32> -> vector<8x128xf32>
    %c24 = arith.constant 24 : index
    %c0_175 = arith.constant 0 : index
    %348 = vector.load %arg7[%c24, %c0_175] : memref<32x128xf32, #tpu.memory_space<vmem>>, vector<1x128xf32>
    %349 = vector.broadcast %348 : vector<1x128xf32> to vector<8x128xf32>
    %350 = arith.addf %347, %349 : vector<8x128xf32>
    %cst_176 = arith.constant 0.000000e+00 : f32
    %351 = vector.broadcast %cst_176 : f32 to vector<8x128xf32>
    %352 = arith.maximumf %350, %351 : vector<8x128xf32>
    %c160 = arith.constant 160 : index
    %c0_177 = arith.constant 0 : index
    %353 = vector.load %arg6[%c160, %c0_177] : memref<288x128xf32, #tpu.memory_space<vmem>>, vector<128x128xf32>
    %cst_178 = arith.constant dense<0.000000e+00> : vector<8x128xf32>
    %354 = tpu.matmul %352, %353, %cst_178 {dimension_numbers = #tpu.dot_dimension_numbers<[1], [0], [0], [1], [0, 0, 1, 1], [], []>} : vector<8x128xf32>, vector<128x128xf32>, vector<8x128xf32> -> vector<8x128xf32>
    %c25 = arith.constant 25 : index
    %c0_179 = arith.constant 0 : index
    %355 = vector.load %arg7[%c25, %c0_179] : memref<32x128xf32, #tpu.memory_space<vmem>>, vector<1x128xf32>
    %356 = vector.broadcast %355 : vector<1x128xf32> to vector<8x128xf32>
    %357 = arith.addf %354, %356 : vector<8x128xf32>
    %c0_180 = arith.constant 0 : index
    %c0_181 = arith.constant 0 : index
    %358 = vector.load %arg8[%c0_180, %c0_181] : memref<8x128xf32, #tpu.memory_space<vmem>>, vector<8x128xf32>
    tpu.vector_store %arg8[%c0_180, %c0_181], %357 {strides = array<i32>} : memref<8x128xf32, #tpu.memory_space<vmem>>, vector<8x128xf32>,
    return
  }
  func.func @transform_0(%arg0: i32) -> (i32, i32) {
    %c0_i32 = arith.constant 0 : i32
    %c0_i32_0 = arith.constant 0 : i32
    return %arg0, %c0_i32 : i32, i32
  }
  func.func @transform_1(%arg0: i32) -> (i32, i32) {
    %c0_i32 = arith.constant 0 : i32
    %c0_i32_0 = arith.constant 0 : i32
    return %arg0, %c0_i32 : i32, i32
  }
  func.func @transform_2(%arg0: i32) -> (i32, i32, i32) {
    %c0_i32 = arith.constant 0 : i32
    %c0_i32_0 = arith.constant 0 : i32
    %c0_i32_1 = arith.constant 0 : i32
    return %arg0, %c0_i32, %c0_i32_0 : i32, i32, i32
  }
  func.func @transform_3(%arg0: i32) -> (i32, i32) {
    %c0_i32 = arith.constant 0 : i32
    %c0_i32_0 = arith.constant 0 : i32
    %c0_i32_1 = arith.constant 0 : i32
    return %c0_i32, %c0_i32_0 : i32, i32
  }
  func.func @transform_4(%arg0: i32) -> (i32, i32) {
    %c0_i32 = arith.constant 0 : i32
    %c0_i32_0 = arith.constant 0 : i32
    %c0_i32_1 = arith.constant 0 : i32
    return %c0_i32, %c0_i32_0 : i32, i32
  }
  func.func @transform_5(%arg0: i32) -> (i32, i32) {
    %c0_i32 = arith.constant 0 : i32
    %c0_i32_0 = arith.constant 0 : i32
    %c0_i32_1 = arith.constant 0 : i32
    return %c0_i32, %c0_i32_0 : i32, i32
  }
  func.func @transform_6(%arg0: i32) -> (i32, i32) {
    %c0_i32 = arith.constant 0 : i32
    %c0_i32_0 = arith.constant 0 : i32
    %c0_i32_1 = arith.constant 0 : i32
    return %c0_i32, %c0_i32_0 : i32, i32
  }
  func.func @transform_7(%arg0: i32) -> (i32, i32) {
    %c0_i32 = arith.constant 0 : i32
    %c0_i32_0 = arith.constant 0 : i32
    return %arg0, %c0_i32 : i32, i32
  }
}

</mosaic_0001>

<llo_original>
// kernel: gt_model_forward.1
$region0: #{gt_model_forward.1}
  #allocation0 [shape = 'u32[]', space=smem, size = 0x4, offset = 0x4, fixed_abs, tag = 'smem constant byte address 0x4 - core index']
  #allocation1 [shape = 'u32[72,128]{1,0:T(1,128)}', space=vmem, size = 0x9000, scoped, tag = 'internal scratch']
  %s0 = inlined_call_operand.vmem [shape: f32[256,32], index: 0, kind: input, shape index: {}]
  %s1 = inlined_call_operand.vmem [shape: f32[256,8], index: 1, kind: input, shape index: {}]
  %s2 = inlined_call_operand.vmem [shape: f32[2,128,128], index: 2, kind: input, shape index: {}]
  %s3 = inlined_call_operand.vmem [shape: f32[1160,32], index: 3, kind: input, shape index: {}]
  %s4 = inlined_call_operand.vmem [shape: f32[64,64], index: 4, kind: input, shape index: {}]
  %s5 = inlined_call_operand.vmem [shape: f32[288,128], index: 5, kind: input, shape index: {}]
  %s6 = inlined_call_operand.vmem [shape: f32[32,128], index: 6, kind: input, shape index: {}]
  %s7 = inlined_call_operand.vmem [shape: f32[16,128], index: 7, kind: output, shape index: {}]
  %s8 = sld [smem:[#allocation0]]
  $region61: #{gt_model_forward.1} parent=0
    _
  %s10 = ssub.s32 1, %s8
  %s11 = scalar_select 0, %s10, %s8
  loop: start=0, step=1, limit=4
  $region2: #{gt_model_forward.1} parent=0 // loop_pre_header
    _
  $region3: #{gt_model_forward.1} parent=0 // loop_header
    %s13 = sphi 0, %s17
    %p14 = scmp.ge.s32.totalorder %s13, 4
    %s23 = sphi 0, %s25
    %s26 = sphi 0, %s23
    %s27 = sphi 0, %s26
    %s43 = sphi 0, %s27
    %s49 = sphi 0, %s51
    %s52 = sphi 0, %s49
    %s53 = sphi 0, %s52
    %s69 = sphi 0, %s53
    %s75 = sphi 0, %s77
    %s78 = sphi 0, %s75
    %s79 = sphi 0, %s78
    %s95 = sphi 0, %s79
    %s99 = sphi 0, %s99
    %s101 = sphi 0, %s99
    %s102 = sphi 0, %s101
    %s116 = sphi 0, %s102
    %s120 = sphi 0, %s120
    %s122 = sphi 0, %s120
    %s123 = sphi 0, %s122
    %s137 = sphi 0, %s123
    %s141 = sphi 0, %s141
    %s143 = sphi 0, %s141
    %s144 = sphi 0, %s143
    %s158 = sphi 0, %s144
    %s162 = sphi 0, %s162
    %s164 = sphi 0, %s162
    %s165 = sphi 0, %s164
    %s179 = sphi 0, %s165
    %s185 = sphi 0, %s187
    %s188 = sphi 0, %s185
    %s189 = sphi 0, %s188
    %s205 = sphi 0, %s189
  $region4: #{gt_model_forward.1} parent=0 // loop_header_branch
    %16 = sbr.rel (%p14) target = $region8
  $region5: #{gt_model_forward.1} parent=0 // loop_body
    %s18 = ssub.s32 %s13, 1
    %s19 = ssub.s32 %s13, 2
    %s20 = sadd.s32 %s13, 1
    %s21 = ssub.s32 %s13, %s20
    %p22 = scmp.eq.s32.totalorder %s21, 0
    %s24 = sadd.s32 %s23, 1
    %s25 = scalar_select %p22, %s23, %s24
    %p28 = pneg %p22
    %p29 = scmp.eq.s32.totalorder %s13, 1
    %p30 = por %p28, %p29
    %p31 = scmp.ne.s32.totalorder %s23, %s26
    %p32 = scmp.eq.s32.totalorder %s13, 0
    %p33 = por %p31, %p32
    %p34 = scmp.ne.s32.totalorder %s23, %s26
    %p35 = scmp.eq.s32.totalorder %s18, 1
    %p36 = por %p34, %p35
    %p37 = scmp.ne.s32.totalorder %s26, %s27
    %p38 = scmp.eq.s32.totalorder %s18, 0
    %p39 = por %p37, %p38
    %p40 = scmp.ne.s32.totalorder %s26, %s27
    %p41 = scmp.eq.s32.totalorder %s19, 1
    %p42 = por %p40, %p41
    %p44 = scmp.ne.s32.totalorder %s27, %s43
    %p45 = scmp.eq.s32.totalorder %s19, 0
    %p46 = por %p44, %p45
    %s47 = ssub.s32 %s13, %s20
    %p48 = scmp.eq.s32.totalorder %s47, 0
    %s50 = sadd.s32 %s49, 1
    %s51 = scalar_select %p48, %s49, %s50
    %p54 = pneg %p48
    %p55 = scmp.eq.s32.totalorder %s13, 1
    %p56 = por %p54, %p55
    %p57 = scmp.ne.s32.totalorder %s49, %s52
    %p58 = scmp.eq.s32.totalorder %s13, 0
    %p59 = por %p57, %p58
    %p60 = scmp.ne.s32.totalorder %s49, %s52
    %p61 = scmp.eq.s32.totalorder %s18, 1
    %p62 = por %p60, %p61
    %p63 = scmp.ne.s32.totalorder %s52, %s53
    %p64 = scmp.eq.s32.totalorder %s18, 0
    %p65 = por %p63, %p64
    %p66 = scmp.ne.s32.totalorder %s52, %s53
    %p67 = scmp.eq.s32.totalorder %s19, 1
    %p68 = por %p66, %p67
    %p70 = scmp.ne.s32.totalorder %s53, %s69
    %p71 = scmp.eq.s32.totalorder %s19, 0
    %p72 = por %p70, %p71
    %s73 = ssub.s32 %s13, %s20
    %p74 = scmp.eq.s32.totalorder %s73, 0
    %s76 = sadd.s32 %s75, 1
    %s77 = scalar_select %p74, %s75, %s76
    %p80 = pneg %p74
    %p81 = scmp.eq.s32.totalorder %s13, 1
    %p82 = por %p80, %p81
    %p83 = scmp.ne.s32.totalorder %s75, %s78
    %p84 = scmp.eq.s32.totalorder %s13, 0
    %p85 = por %p83, %p84
    %p86 = scmp.ne.s32.totalorder %s75, %s78
    %p87 = scmp.eq.s32.totalorder %s18, 1
    %p88 = por %p86, %p87
    %p89 = scmp.ne.s32.totalorder %s78, %s79
    %p90 = scmp.eq.s32.totalorder %s18, 0
    %p91 = por %p89, %p90
    %p92 = scmp.ne.s32.totalorder %s78, %s79
    %p93 = scmp.eq.s32.totalorder %s19, 1
    %p94 = por %p92, %p93
    %p96 = scmp.ne.s32.totalorder %s79, %s95
    %p97 = scmp.eq.s32.totalorder %s19, 0
    %p98 = por %p96, %p97
    %s100 = sadd.s32 %s99, 1
    %p103 = scmp.eq.s32.totalorder %s13, 1
    %p104 = scmp.ne.s32.totalorder %s99, %s101
    %p105 = scmp.eq.s32.totalorder %s13, 0
    %p106 = por %p104, %p105
    %p107 = scmp.ne.s32.totalorder %s99, %s101
    %p108 = scmp.eq.s32.totalorder %s18, 1
    %p109 = por %p107, %p108
    %p110 = scmp.ne.s32.totalorder %s101, %s102
    %p111 = scmp.eq.s32.totalorder %s18, 0
    %p112 = por %p110, %p111
    %p113 = scmp.ne.s32.totalorder %s101, %s102
    %p114 = scmp.eq.s32.totalorder %s19, 1
    %p115 = por %p113, %p114
    %p117 = scmp.ne.s32.totalorder %s102, %s116
    %p118 = scmp.eq.s32.totalorder %s19, 0
    %p119 = por %p117, %p118
    %s121 = sadd.s32 %s120, 1
    %p124 = scmp.eq.s32.totalorder %s13, 1
    %p125 = scmp.ne.s32.totalorder %s120, %s122
    %p126 = scmp.eq.s32.totalorder %s13, 0
    %p127 = por %p125, %p126
    %p128 = scmp.ne.s32.totalorder %s120, %s122
    %p129 = scmp.eq.s32.totalorder %s18, 1
    %p130 = por %p128, %p129
    %p131 = scmp.ne.s32.totalorder %s122, %s123
    %p132 = scmp.eq.s32.totalorder %s18, 0
    %p133 = por %p131, %p132
    %p134 = scmp.ne.s32.totalorder %s122, %s123
    %p135 = scmp.eq.s32.totalorder %s19, 1
    %p136 = por %p134, %p135
    %p138 = scmp.ne.s32.totalorder %s123, %s137
    %p139 = scmp.eq.s32.totalorder %s19, 0
    %p140 = por %p138, %p139
    %s142 = sadd.s32 %s141, 1
    %p145 = scmp.eq.s32.totalorder %s13, 1
    %p146 = scmp.ne.s32.totalorder %s141, %s143
    %p147 = scmp.eq.s32.totalorder %s13, 0
    %p148 = por %p146, %p147
    %p149 = scmp.ne.s32.totalorder %s141, %s143
    %p150 = scmp.eq.s32.totalorder %s18, 1
    %p151 = por %p149, %p150
    %p152 = scmp.ne.s32.totalorder %s143, %s144
    %p153 = scmp.eq.s32.totalorder %s18, 0
    %p154 = por %p152, %p153
    %p155 = scmp.ne.s32.totalorder %s143, %s144
    %p156 = scmp.eq.s32.totalorder %s19, 1
    %p157 = por %p155, %p156
    %p159 = scmp.ne.s32.totalorder %s144, %s158
    %p160 = scmp.eq.s32.totalorder %s19, 0
    %p161 = por %p159, %p160
    %s163 = sadd.s32 %s162, 1
    %p166 = scmp.eq.s32.totalorder %s13, 1
    %p167 = scmp.ne.s32.totalorder %s162, %s164
    %p168 = scmp.eq.s32.totalorder %s13, 0
    %p169 = por %p167, %p168
    %p170 = scmp.ne.s32.totalorder %s162, %s164
    %p171 = scmp.eq.s32.totalorder %s18, 1
    %p172 = por %p170, %p171
    %p173 = scmp.ne.s32.totalorder %s164, %s165
    %p174 = scmp.eq.s32.totalorder %s18, 0
    %p175 = por %p173, %p174
    %p176 = scmp.ne.s32.totalorder %s164, %s165
    %p177 = scmp.eq.s32.totalorder %s19, 1
    %p178 = por %p176, %p177
    %p180 = scmp.ne.s32.totalorder %s165, %s179
    %p181 = scmp.eq.s32.totalorder %s19, 0
    %p182 = por %p180, %p181
    %s183 = ssub.s32 %s13, %s20
    %p184 = scmp.eq.s32.totalorder %s183, 0
    %s186 = sadd.s32 %s185, 1
    %s187 = scalar_select %p184, %s185, %s186
    %p190 = pneg %p184
    %p191 = scmp.eq.s32.totalorder %s13, 1
    %p192 = por %p190, %p191
    %p193 = scmp.ne.s32.totalorder %s185, %s188
    %p194 = scmp.eq.s32.totalorder %s13, 0
    %p195 = por %p193, %p194
    %p196 = scmp.ne.s32.totalorder %s185, %s188
    %p197 = scmp.eq.s32.totalorder %s18, 1
    %p198 = por %p196, %p197
    %p199 = scmp.ne.s32.totalorder %s188, %s189
    %p200 = scmp.eq.s32.totalorder %s18, 0
    %p201 = por %p199, %p200
    %p202 = scmp.ne.s32.totalorder %s188, %s189
    %p203 = scmp.eq.s32.totalorder %s19, 1
    %p204 = por %p202, %p203
    %p206 = scmp.ne.s32.totalorder %s189, %s205
    %p207 = scmp.eq.s32.totalorder %s19, 0
    %p208 = por %p206, %p207
    %p209 = scmp.le.s32.totalorder 1, %s13
    %p210 = scmp.lt.s32.totalorder %s13, 3
    %p211 = pnand %p209, %p210
    %p212 = pneg %p211
    // Predicated region
    $region9: #{gt_model_forward.1} parent=5 // pred_check
      _
    $region10: #{gt_model_forward.1} parent=5 // pred_check_branch
      %214 = sbr.rel (%p211) target = $region12
    $region11: #{gt_model_forward.1} parent=5 // pred_region
      %s215 = ssub.s32 %s13, 1
      // Predicated region
      $region13: #{gt_model_forward.1} parent=11 // pred_check
        %p216 = pneg %p112
      $region14: #{gt_model_forward.1} parent=11 // pred_check_branch
        %218 = sbr.rel (%p216) target = $region16
      $region15: #{gt_model_forward.1} parent=11 // pred_region
        _
      $region16: #{gt_model_forward.1} parent=11 // pred_fallthru
        _
      // Predicated region
      $region17: #{gt_model_forward.1} parent=11 // pred_check
        %p219 = pneg %p133
      $region18: #{gt_model_forward.1} parent=11 // pred_check_branch
        %221 = sbr.rel (%p219) target = $region20
      $region19: #{gt_model_forward.1} parent=11 // pred_region
        _
      $region20: #{gt_model_forward.1} parent=11 // pred_fallthru
        _
      // Predicated region
      $region21: #{gt_model_forward.1} parent=11 // pred_check
        %p222 = pneg %p154
      $region22: #{gt_model_forward.1} parent=11 // pred_check_branch
        %224 = sbr.rel (%p222) target = $region24
      $region23: #{gt_model_forward.1} parent=11 // pred_region
        _
      $region24: #{gt_model_forward.1} parent=11 // pred_fallthru
        _
      // Predicated region
      $region25: #{gt_model_forward.1} parent=11 // pred_check
        %p225 = pneg %p175
      $region26: #{gt_model_forward.1} parent=11 // pred_check_branch
        %227 = sbr.rel (%p225) target = $region28
      $region27: #{gt_model_forward.1} parent=11 // pred_region
        _
      $region28: #{gt_model_forward.1} parent=11 // pred_fallthru
        _
    $region12: #{gt_model_forward.1} parent=5 // pred_fallthru
      _
    %p228 = scmp.lt.s32.totalorder %s13, 2
    // Predicated region
    $region29: #{gt_model_forward.1} parent=5 // pred_check
      %p229 = pneg %p228
    $region30: #{gt_model_forward.1} parent=5 // pred_check_branch
      %231 = sbr.rel (%p229) target = $region32
    $region31: #{gt_model_forward.1} parent=5 // pred_region
      // Predicated region
      $region33: #{gt_model_forward.1} parent=31 // pred_check
        %p232 = pneg %p33
      $region34: #{gt_model_forward.1} parent=31 // pred_check_branch
        %234 = sbr.rel (%p232) target = $region36
      $region35: #{gt_model_forward.1} parent=31 // pred_region
        %s235 = smul.u32 16, %s13
        %p236 = scmp.lt.s32.totalorder %s235, 31
        %s237 = scalar_select %p236, %s235, 31
        %s238 = smul.addr %s237, 8
        %s239 = scalar_lea.vmem %s0, %s238
        %s240 = smul.u32 16, %s13
      $region36: #{gt_model_forward.1} parent=31 // pred_fallthru
        _
      // Predicated region
      $region37: #{gt_model_forward.1} parent=31 // pred_check
        %p241 = pneg %p59
      $region38: #{gt_model_forward.1} parent=31 // pred_check_branch
        %243 = sbr.rel (%p241) target = $region40
      $region39: #{gt_model_forward.1} parent=31 // pred_region
        %s244 = smul.u32 16, %s13
        %p245 = scmp.lt.s32.totalorder %s244, 31
        %s246 = scalar_select %p245, %s244, 31
        %s247 = smul.addr %s246, 8
        %s248 = scalar_lea.vmem %s1, %s247
        %s249 = smul.u32 16, %s13
      $region40: #{gt_model_forward.1} parent=31 // pred_fallthru
        _
      // Predicated region
      $region41: #{gt_model_forward.1} parent=31 // pred_check
        %p250 = pneg %p85
      $region42: #{gt_model_forward.1} parent=31 // pred_check_branch
        %252 = sbr.rel (%p250) target = $region44
      $region43: #{gt_model_forward.1} parent=31 // pred_region
        %p253 = scmp.lt.s32.totalorder %s13, 1
        %s254 = scalar_select %p253, %s13, 1
        %s255 = smul.addr %s254, 16
        %s256 = smul.addr %s255, 8
        %s257 = scalar_lea.vmem %s2, %s256
      $region44: #{gt_model_forward.1} parent=31 // pred_fallthru
        _
    $region32: #{gt_model_forward.1} parent=5 // pred_fallthru
      _
    %p258 = scmp.le.s32.totalorder 1, %s13
    %p259 = scmp.lt.s32.totalorder %s13, 3
    %p260 = pnand %p258, %p259
    %p261 = pneg %p260
    // Predicated region
    $region45: #{gt_model_forward.1} parent=5 // pred_check
      _
    $region46: #{gt_model_forward.1} parent=5 // pred_check_branch
      %263 = sbr.rel (%p260) target = $region48
    $region47: #{gt_model_forward.1} parent=5 // pred_region
      %s264 = ssub.s32 %s13, 1
      %s265 = smul.u32 16, %s18
      %p266 = scmp.lt.s32.totalorder %s265, 31
      %s267 = scalar_select %p266, %s265, 31
      %s268 = smul.addr %s267, 8
      %s269 = scalar_lea.vmem %s0, %s268
      %p270 = pneg %p39
      %p271 = pneg %p36
      %s272 = smul.u32 16, %s18
      %p273 = scmp.lt.s32.totalorder %s272, 31
      %s274 = scalar_select %p273, %s272, 31
      %s275 = smul.addr %s274, 8
      %s276 = scalar_lea.vmem %s1, %s275
      %p277 = pneg %p65
      %p278 = pneg %p62
      %p279 = scmp.lt.s32.totalorder %s18, 1
      %s280 = scalar_select %p279, %s18, 1
      %s281 = smul.addr %s280, 16
      %s282 = smul.addr %s281, 8
      %s283 = scalar_lea.vmem %s2, %s282
      %p284 = pneg %p91
      %p285 = pneg %p88
      %p286 = pneg %p112
      %p287 = pneg %p109
      %p288 = pneg %p133
      %p289 = pneg %p130
      %p290 = pneg %p154
      %p291 = pneg %p151
      %p292 = pneg %p175
      %p293 = pneg %p172
      %p294 = pneg %p201
      %p295 = pneg %p198
      %p296 = scmp.lt.s32.totalorder %s18, 1
      %s297 = scalar_select %p296, %s18, 1
      %s298 = smul.addr %s297, 8
      %s299 = scalar_lea.vmem %s7, %s298
      %s300 = smul.u32 16, %s18
      %p301 = scmp.lt.s32.totalorder %s300, 31
      %s302 = scalar_select %p301, %s300, 31
      %s303 = smul.addr %s302, 8
      %s304 = scalar_lea.vmem %s0, %s303
      %s305 = smul.u32 16, %s18
      %s306 = smul.u32 16, %s18
      %p307 = scmp.lt.s32.totalorder %s306, 31
      %s308 = scalar_select %p307, %s306, 31
      %s309 = smul.addr %s308, 8
      %s310 = scalar_lea.vmem %s1, %s309
      %s311 = smul.u32 16, %s18
      %p312 = scmp.lt.s32.totalorder %s18, 1
      %s313 = scalar_select %p312, %s18, 1
      %s314 = smul.addr %s313, 16
      %s315 = smul.addr %s314, 8
      %s316 = scalar_lea.vmem %s2, %s315
      %p317 = scmp.lt.s32.totalorder %s18, 1
      %s318 = scalar_select %p317, %s18, 1
      %s319 = smul.addr %s318, 8
      %s320 = scalar_lea.vmem %s7, %s319
      %v321 = vlaneseq
      %v322 = vand.u32 %v321, 127
      %v323 = vshra.s32 %v322, 4
      %v324 = vlaneseq
      %v325 = vshrl.u32 %v324, 7
      %vm326 = vcmp.eq.s32.totalorder %v323, %v325
      %v327 = vsel %vm326, 1, 0
      %v328 = vcvt.s32.f32 %v327
      %v329 = vmul.f32 %v328, 0.0625
      %v330 = vadd.s32 %v325, 8
      %v331 = vadd.s32 %v325, 16
      %v332 = vadd.s32 %v325, 24
      %v333 = vadd.s32 %v325, 32
      %v334 = vadd.s32 %v325, 40
      %v335 = vadd.s32 %v325, 48
      %v336 = vadd.s32 %v325, 56
      %v337 = vadd.s32 %v325, 64
      %v338 = vadd.s32 %v325, 72
      %v339 = vadd.s32 %v325, 80
      %v340 = vadd.s32 %v325, 88
      %v341 = vadd.s32 %v325, 96
      %v342 = vadd.s32 %v325, 104
      %v343 = vadd.s32 %v325, 112
      %v344 = vadd.s32 %v325, 120
      %v345 = vshra.s32 %v325, 4
      %v346 = vshra.s32 %v330, 4
      %v347 = vshra.s32 %v331, 4
      %v348 = vshra.s32 %v332, 4
      %v349 = vshra.s32 %v333, 4
      %v350 = vshra.s32 %v334, 4
      %v351 = vshra.s32 %v335, 4
      %v352 = vshra.s32 %v336, 4
      %v353 = vshra.s32 %v337, 4
      %v354 = vshra.s32 %v338, 4
      %v355 = vshra.s32 %v339, 4
      %v356 = vshra.s32 %v340, 4
      %v357 = vshra.s32 %v341, 4
      %v358 = vshra.s32 %v342, 4
      %v359 = vshra.s32 %v343, 4
      %v360 = vshra.s32 %v344, 4
      %vm361 = vcmp.eq.s32.totalorder %v345, %v322
      %vm362 = vcmp.eq.s32.totalorder %v346, %v322
      %vm363 = vcmp.eq.s32.totalorder %v347, %v322
      %vm364 = vcmp.eq.s32.totalorder %v348, %v322
      %vm365 = vcmp.eq.s32.totalorder %v349, %v322
      %vm366 = vcmp.eq.s32.totalorder %v350, %v322
      %vm367 = vcmp.eq.s32.totalorder %v351, %v322
      %vm368 = vcmp.eq.s32.totalorder %v352, %v322
      %vm369 = vcmp.eq.s32.totalorder %v353, %v322
      %vm370 = vcmp.eq.s32.totalorder %v354, %v322
      %vm371 = vcmp.eq.s32.totalorder %v355, %v322
      %vm372 = vcmp.eq.s32.totalorder %v356, %v322
      %vm373 = vcmp.eq.s32.totalorder %v357, %v322
      %vm374 = vcmp.eq.s32.totalorder %v358, %v322
      %vm375 = vcmp.eq.s32.totalorder %v359, %v322
      %vm376 = vcmp.eq.s32.totalorder %v360, %v322
      %v377 = vsel %vm361, 1, 0
      %v378 = vsel %vm362, 1, 0
      %v379 = vsel %vm363, 1, 0
      %v380 = vsel %vm364, 1, 0
      %v381 = vsel %vm365, 1, 0
      %v382 = vsel %vm366, 1, 0
      %v383 = vsel %vm367, 1, 0
      %v384 = vsel %vm368, 1, 0
      %v385 = vsel %vm369, 1, 0
      %v386 = vsel %vm370, 1, 0
      %v387 = vsel %vm371, 1, 0
      %v388 = vsel %vm372, 1, 0
      %v389 = vsel %vm373, 1, 0
      %v390 = vsel %vm374, 1, 0
      %v391 = vsel %vm375, 1, 0
      %v392 = vsel %vm376, 1, 0
      %v393 = vcvt.s32.f32 %v377
      %v394 = vcvt.s32.f32 %v378
      %v395 = vcvt.s32.f32 %v379
      %v396 = vcvt.s32.f32 %v380
      %v397 = vcvt.s32.f32 %v381
      %v398 = vcvt.s32.f32 %v382
      %v399 = vcvt.s32.f32 %v383
      %v400 = vcvt.s32.f32 %v384
      %v401 = vcvt.s32.f32 %v385
      %v402 = vcvt.s32.f32 %v386
      %v403 = vcvt.s32.f32 %v387
      %v404 = vcvt.s32.f32 %v388
      %v405 = vcvt.s32.f32 %v389
      %v406 = vcvt.s32.f32 %v390
      %v407 = vcvt.s32.f32 %v391
      %v408 = vcvt.s32.f32 %v392
      %v409 = vld [vmem:[%s316] sm:$0xff]
      %v410 = vld [vmem:[%s316 + $0x8] sm:$0xff]
      %v411 = vld [vmem:[%s316 + $0x10] sm:$0xff]
      %v412 = vld [vmem:[%s316 + $0x18] sm:$0xff]
      %v413 = vld [vmem:[%s316 + $0x20] sm:$0xff]
      %v414 = vld [vmem:[%s316 + $0x28] sm:$0xff]
      %v415 = vld [vmem:[%s316 + $0x30] sm:$0xff]
      %v416 = vld [vmem:[%s316 + $0x38] sm:$0xff]
      %v417 = vld [vmem:[%s316 + $0x40] sm:$0xff]
      %v418 = vld [vmem:[%s316 + $0x48] sm:$0xff]
      %v419 = vld [vmem:[%s316 + $0x50] sm:$0xff]
      %v420 = vld [vmem:[%s316 + $0x58] sm:$0xff]
      %v421 = vld [vmem:[%s316 + $0x60] sm:$0xff]
      %v422 = vld [vmem:[%s316 + $0x68] sm:$0xff]
      %v423 = vld [vmem:[%s316 + $0x70] sm:$0xff]
      %v424 = vld [vmem:[%s316 + $0x78] sm:$0xff]
      %v425 = vld [vmem:[%s304] sm:$0xff]
      %v426 = vld [vmem:[%s304 + $0x8] sm:$0xff]
      %v427 = vld [vmem:[%s304 + $0x10] sm:$0xff]
      %v428 = vld [vmem:[%s304 + $0x18] sm:$0xff]
      %v429 = vld [vmem:[%s304 + $0x20] sm:$0xff]
      %v430 = vld [vmem:[%s304 + $0x28] sm:$0xff]
      %v431 = vld [vmem:[%s304 + $0x30] sm:$0xff]
      %v432 = vld [vmem:[%s304 + $0x38] sm:$0xff]
      %v433 = vld [vmem:[%s304 + $0x40] sm:$0xff]
      %v434 = vld [vmem:[%s304 + $0x48] sm:$0xff]
      %v435 = vld [vmem:[%s304 + $0x50] sm:$0xff]
      %v436 = vld [vmem:[%s304 + $0x58] sm:$0xff]
      %v437 = vld [vmem:[%s304 + $0x60] sm:$0xff]
      %v438 = vld [vmem:[%s304 + $0x68] sm:$0xff]
      %v439 = vld [vmem:[%s304 + $0x70] sm:$0xff]
      %v440 = vld [vmem:[%s304 + $0x78] sm:$0xff]
      %v441 = vld [vmem:[%s310] sm:$0xff]
      %v442 = vld [vmem:[%s310 + $0x8] sm:$0xff]
      %v443 = vld [vmem:[%s310 + $0x10] sm:$0xff]
      %v444 = vld [vmem:[%s310 + $0x18] sm:$0xff]
      %v445 = vld [vmem:[%s310 + $0x20] sm:$0xff]
      %v446 = vld [vmem:[%s310 + $0x28] sm:$0xff]
      %v447 = vld [vmem:[%s310 + $0x30] sm:$0xff]
      %v448 = vld [vmem:[%s310 + $0x38] sm:$0xff]
      %v449 = vld [vmem:[%s310 + $0x40] sm:$0xff]
      %v450 = vld [vmem:[%s310 + $0x48] sm:$0xff]
      %v451 = vld [vmem:[%s310 + $0x50] sm:$0xff]
      %v452 = vld [vmem:[%s310 + $0x58] sm:$0xff]
      %v453 = vld [vmem:[%s310 + $0x60] sm:$0xff]
      %v454 = vld [vmem:[%s310 + $0x68] sm:$0xff]
      %v455 = vld [vmem:[%s310 + $0x70] sm:$0xff]
      %v456 = vld [vmem:[%s310 + $0x78] sm:$0xff]
      %v457 = vld [vmem:[%s3] sm:$0xff]
      %vm458 = vcmask 64512
      %v460 = vsel %vm458, %v441, 0
      %v463 = vsel %vm458, %v442, 0
      %v466 = vsel %vm458, %v443, 0
      %v469 = vsel %vm458, %v444, 0
      %v472 = vsel %vm458, %v445, 0
      %v475 = vsel %vm458, %v446, 0
      %v478 = vsel %vm458, %v447, 0
      %v481 = vsel %vm458, %v448, 0
      %v484 = vsel %vm458, %v449, 0
      %v487 = vsel %vm458, %v450, 0
      %v490 = vsel %vm458, %v451, 0
      %v493 = vsel %vm458, %v452, 0
      %v496 = vsel %vm458, %v453, 0
      %v499 = vsel %vm458, %v454, 0
      %v502 = vsel %vm458, %v455, 0
      %v505 = vsel %vm458, %v456, 0
      %507 = vmatpush.msra.mxu0 0.0
      %508 = vmatpush.msra.mxu0 0.0
      %509 = vmatpush.msra.mxu0 0.0
      %510 = vmatpush.msra.mxu0 0.0
      %511 = vmatpush.msra.mxu0 0.0
      %512 = vmatpush.msra.mxu0 0.0
      %513 = vmatpush.msra.mxu0 0.0
      %514 = vmatpush.msra.mxu0 0.0
      %515 = vmatpush.msra.mxu0 0.0
      %516 = vmatpush.msra.mxu0 0.0
      %517 = vmatpush.msra.mxu0 0.0
      %518 = vmatpush.msra.mxu0 0.0
      %519 = vmatpush.msra.mxu0 0.0
      %520 = vmatpush.msra.mxu0 0.0
      %521 = vmatpush.msra.mxu0 0.0
      %522 = vmatpush.msra.mxu0 %v457
      %523 = vmatmul.f32.gmra.mxu0 %v460
      %v524 = vpop.f32.mrf.mxu0
      %v525 = vadd.f32 0.0, %v524
      %526 = vmatmul.f32.gmra.mxu0 %v463
      %v527 = vpop.f32.mrf.mxu0
      %v528 = vadd.f32 0.0, %v527
      %529 = vmatmul.f32.gmra.mxu0 %v466
      %v530 = vpop.f32.mrf.mxu0
      %v531 = vadd.f32 0.0, %v530
      %532 = vmatmul.f32.gmra.mxu0 %v469
      %v533 = vpop.f32.mrf.mxu0
      %v534 = vadd.f32 0.0, %v533
      %535 = vmatmul.f32.gmra.mxu0 %v472
      %v536 = vpop.f32.mrf.mxu0
      %v537 = vadd.f32 0.0, %v536
      %538 = vmatmul.f32.gmra.mxu0 %v475
      %v539 = vpop.f32.mrf.mxu0
      %v540 = vadd.f32 0.0, %v539
      %541 = vmatmul.f32.gmra.mxu0 %v478
      %v542 = vpop.f32.mrf.mxu0
      %v543 = vadd.f32 0.0, %v542
      %544 = vmatmul.f32.gmra.mxu0 %v481
      %v545 = vpop.f32.mrf.mxu0
      %v546 = vadd.f32 0.0, %v545
      %547 = vmatmul.f32.gmra.mxu0 %v484
      %v548 = vpop.f32.mrf.mxu0
      %v549 = vadd.f32 0.0, %v548
      %550 = vmatmul.f32.gmra.mxu0 %v487
      %v551 = vpop.f32.mrf.mxu0
      %v552 = vadd.f32 0.0, %v551
      %553 = vmatmul.f32.gmra.mxu0 %v490
      %v554 = vpop.f32.mrf.mxu0
      %v555 = vadd.f32 0.0, %v554
      %556 = vmatmul.f32.gmra.mxu0 %v493
      %v557 = vpop.f32.mrf.mxu0
      %v558 = vadd.f32 0.0, %v557
      %559 = vmatmul.f32.gmra.mxu0 %v496
      %v560 = vpop.f32.mrf.mxu0
      %v561 = vadd.f32 0.0, %v560
      %562 = vmatmul.f32.gmra.mxu0 %v499
      %v563 = vpop.f32.mrf.mxu0
      %v564 = vadd.f32 0.0, %v563
      %565 = vmatmul.f32.gmra.mxu0 %v502
      %v566 = vpop.f32.mrf.mxu0
      %v567 = vadd.f32 0.0, %v566
      %568 = vmatmul.f32.gmra.mxu0 %v505
      %v569 = vpop.f32.mrf.mxu0
      %v570 = vadd.f32 0.0, %v569
      %571 = vdwg.mxu0
      %v572 = vadd.f32 %v425, %v525
      %v573 = vadd.f32 %v426, %v528
      %v574 = vadd.f32 %v427, %v531
      %v575 = vadd.f32 %v428, %v534
      %v576 = vadd.f32 %v429, %v537
      %v577 = vadd.f32 %v430, %v540
      %v578 = vadd.f32 %v431, %v543
      %v579 = vadd.f32 %v432, %v546
      %v580 = vadd.f32 %v433, %v549
      %v581 = vadd.f32 %v434, %v552
      %v582 = vadd.f32 %v435, %v555
      %v583 = vadd.f32 %v436, %v558
      %v584 = vadd.f32 %v437, %v561
      %v585 = vadd.f32 %v438, %v564
      %v586 = vadd.f32 %v439, %v567
      %v587 = vadd.f32 %v440, %v570
      %v588 = vld [vmem:[%s6] sm:$0x1]
      %v589 = vperm.slane %v588, 0
      %v590 = vadd.f32 %v572, %v589
      %v591 = vadd.f32 %v573, %v589
      %v592 = vadd.f32 %v574, %v589
      %v593 = vadd.f32 %v575, %v589
      %v594 = vadd.f32 %v576, %v589
      %v595 = vadd.f32 %v577, %v589
      %v596 = vadd.f32 %v578, %v589
      %v597 = vadd.f32 %v579, %v589
      %v598 = vadd.f32 %v580, %v589
      %v599 = vadd.f32 %v581, %v589
      %v600 = vadd.f32 %v582, %v589
      %v601 = vadd.f32 %v583, %v589
      %v602 = vadd.f32 %v584, %v589
      %v603 = vadd.f32 %v585, %v589
      %v604 = vadd.f32 %v586, %v589
      %v605 = vadd.f32 %v587, %v589
      %v606 = vld [vmem:[%s3 + $0x8] sm:$0xff]
      %v607 = vld [vmem:[%s3 + $0x10] sm:$0xff]
      %v608 = vld [vmem:[%s3 + $0x18] sm:$0xff]
      %v609 = vld [vmem:[%s3 + $0x20] sm:$0xff]
      %v610 = vld [vmem:[%s3 + $0x28] sm:$0xff]
      %v611 = vld [vmem:[%s3 + $0x30] sm:$0xff]
      %v612 = vld [vmem:[%s3 + $0x38] sm:$0xff]
      %v613 = vld [vmem:[%s3 + $0x40] sm:$0xff]
      %v614 = vld [vmem:[%s3 + $0x48] sm:$0xff]
      %v615 = vld [vmem:[%s3 + $0x50] sm:$0xff]
      %v616 = vld [vmem:[%s3 + $0x58] sm:$0xff]
      %v617 = vld [vmem:[%s3 + $0x60] sm:$0xff]
      %v618 = vld [vmem:[%s3 + $0x68] sm:$0xff]
      %v619 = vld [vmem:[%s3 + $0x70] sm:$0xff]
      %v620 = vld [vmem:[%s3 + $0x78] sm:$0xff]
      %v621 = vld [vmem:[%s3 + $0x80] sm:$0xff]
      %v622 = vld [vmem:[%s6 + $0x1] sm:$0x1]
      %v623 = vperm.slane %v622, 0
      %vm624 = vcmask 261120
      %v626 = vsel %vm624, %v590, 0
      %v629 = vsel %vm624, %v591, 0
      %v632 = vsel %vm624, %v592, 0
      %v635 = vsel %vm624, %v593, 0
      %v638 = vsel %vm624, %v594, 0
      %v641 = vsel %vm624, %v595, 0
      %v644 = vsel %vm624, %v596, 0
      %v647 = vsel %vm624, %v597, 0
      %v650 = vsel %vm624, %v598, 0
      %v653 = vsel %vm624, %v599, 0
      %v656 = vsel %vm624, %v600, 0
      %v659 = vsel %vm624, %v601, 0
      %v662 = vsel %vm624, %v602, 0
      %v665 = vsel %vm624, %v603, 0
      %v668 = vsel %vm624, %v604, 0
      %v671 = vsel %vm624, %v605, 0
      %673 = vmatpush.msra.mxu0 0.0
      %674 = vmatpush.msra.mxu0 0.0
      %675 = vmatpush.msra.mxu0 0.0
      %676 = vmatpush.msra.mxu0 0.0
      %677 = vmatpush.msra.mxu0 0.0
      %678 = vmatpush.msra.mxu0 0.0
      %679 = vmatpush.msra.mxu0 0.0
      %680 = vmatpush.msra.mxu0 0.0
      %681 = vmatpush.msra.mxu0 0.0
      %682 = vmatpush.msra.mxu0 0.0
      %683 = vmatpush.msra.mxu0 0.0
      %684 = vmatpush.msra.mxu0 0.0
      %685 = vmatpush.msra.mxu0 %v609
      %686 = vmatpush.msra.mxu0 %v608
      %687 = vmatpush.msra.mxu0 %v607
      %688 = vmatpush.msra.mxu0 %v606
      %689 = vmatmul.f32.gmra.mxu0 %v626
      %v690 = vpop.f32.mrf.mxu0
      %v691 = vadd.f32 %v623, %v690
      %692 = vmatmul.f32.gmra.mxu0 %v629
      %v693 = vpop.f32.mrf.mxu0
      %v694 = vadd.f32 %v623, %v693
      %695 = vmatmul.f32.gmra.mxu0 %v632
      %v696 = vpop.f32.mrf.mxu0
      %v697 = vadd.f32 %v623, %v696
      %698 = vmatmul.f32.gmra.mxu0 %v635
      %v699 = vpop.f32.mrf.mxu0
      %v700 = vadd.f32 %v623, %v699
      %701 = vmatmul.f32.gmra.mxu0 %v638
      %v702 = vpop.f32.mrf.mxu0
      %v703 = vadd.f32 %v623, %v702
      %704 = vmatmul.f32.gmra.mxu0 %v641
      %v705 = vpop.f32.mrf.mxu0
      %v706 = vadd.f32 %v623, %v705
      %707 = vmatmul.f32.gmra.mxu0 %v644
      %v708 = vpop.f32.mrf.mxu0
      %v709 = vadd.f32 %v623, %v708
      %710 = vmatmul.f32.gmra.mxu0 %v647
      %v711 = vpop.f32.mrf.mxu0
      %v712 = vadd.f32 %v623, %v711
      %713 = vmatmul.f32.gmra.mxu0 %v650
      %v714 = vpop.f32.mrf.mxu0
      %v715 = vadd.f32 %v623, %v714
      %716 = vmatmul.f32.gmra.mxu0 %v653
      %v717 = vpop.f32.mrf.mxu0
      %v718 = vadd.f32 %v623, %v717
      %719 = vmatmul.f32.gmra.mxu0 %v656
      %v720 = vpop.f32.mrf.mxu0
      %v721 = vadd.f32 %v623, %v720
      %722 = vmatmul.f32.gmra.mxu0 %v659
      %v723 = vpop.f32.mrf.mxu0
      %v724 = vadd.f32 %v623, %v723
      %725 = vmatmul.f32.gmra.mxu0 %v662
      %v726 = vpop.f32.mrf.mxu0
      %v727 = vadd.f32 %v623, %v726
      %728 = vmatmul.f32.gmra.mxu0 %v665
      %v729 = vpop.f32.mrf.mxu0
      %v730 = vadd.f32 %v623, %v729
      %731 = vmatmul.f32.gmra.mxu0 %v668
      %v732 = vpop.f32.mrf.mxu0
      %v733 = vadd.f32 %v623, %v732
      %734 = vmatmul.f32.gmra.mxu0 %v671
      %v735 = vpop.f32.mrf.mxu0
      %v736 = vadd.f32 %v623, %v735
      %737 = vdwg.mxu0
      %738 = vmatpush.msra.mxu0 0.0
      %739 = vmatpush.msra.mxu0 0.0
      %740 = vmatpush.msra.mxu0 0.0
      %741 = vmatpush.msra.mxu0 0.0
      %742 = vmatpush.msra.mxu0 0.0
      %743 = vmatpush.msra.mxu0 0.0
      %744 = vmatpush.msra.mxu0 0.0
      %745 = vmatpush.msra.mxu0 0.0
      %746 = vmatpush.msra.mxu0 0.0
      %747 = vmatpush.msra.mxu0 0.0
      %748 = vmatpush.msra.mxu0 0.0
      %749 = vmatpush.msra.mxu0 0.0
      %750 = vmatpush.msra.mxu0 %v613
      %751 = vmatpush.msra.mxu0 %v612
      %752 = vmatpush.msra.mxu0 %v611
      %753 = vmatpush.msra.mxu0 %v610
      %754 = vmatmul.f32.gmra.mxu0 %v626
      %v755 = vpop.f32.mrf.mxu0
      %v756 = vadd.f32 0.0, %v755
      %757 = vmatmul.f32.gmra.mxu0 %v629
      %v758 = vpop.f32.mrf.mxu0
      %v759 = vadd.f32 0.0, %v758
      %760 = vmatmul.f32.gmra.mxu0 %v632
      %v761 = vpop.f32.mrf.mxu0
      %v762 = vadd.f32 0.0, %v761
      %763 = vmatmul.f32.gmra.mxu0 %v635
      %v764 = vpop.f32.mrf.mxu0
      %v765 = vadd.f32 0.0, %v764
      %766 = vmatmul.f32.gmra.mxu0 %v638
      %v767 = vpop.f32.mrf.mxu0
      %v768 = vadd.f32 0.0, %v767
      %769 = vmatmul.f32.gmra.mxu0 %v641
      %v770 = vpop.f32.mrf.mxu0
      %v771 = vadd.f32 0.0, %v770
      %772 = vmatmul.f32.gmra.mxu0 %v644
      %v773 = vpop.f32.mrf.mxu0
      %v774 = vadd.f32 0.0, %v773
      %775 = vmatmul.f32.gmra.mxu0 %v647
      %v776 = vpop.f32.mrf.mxu0
      %v777 = vadd.f32 0.0, %v776
      %778 = vmatmul.f32.gmra.mxu0 %v650
      %v779 = vpop.f32.mrf.mxu0
      %v780 = vadd.f32 0.0, %v779
      %781 = vmatmul.f32.gmra.mxu0 %v653
      %v782 = vpop.f32.mrf.mxu0
      %v783 = vadd.f32 0.0, %v782
      %784 = vmatmul.f32.gmra.mxu0 %v656
      %v785 = vpop.f32.mrf.mxu0
      %v786 = vadd.f32 0.0, %v785
      %787 = vmatmul.f32.gmra.mxu0 %v659
      %v788 = vpop.f32.mrf.mxu0
      %v789 = vadd.f32 0.0, %v788
      %790 = vmatmul.f32.gmra.mxu0 %v662
      %v791 = vpop.f32.mrf.mxu0
      %v792 = vadd.f32 0.0, %v791
      %793 = vmatmul.f32.gmra.mxu0 %v665
      %v794 = vpop.f32.mrf.mxu0
      %v795 = vadd.f32 0.0, %v794
      %796 = vmatmul.f32.gmra.mxu0 %v668
      %v797 = vpop.f32.mrf.mxu0
      %v798 = vadd.f32 0.0, %v797
      %799 = vmatmul.f32.gmra.mxu0 %v671
      %v800 = vpop.f32.mrf.mxu0
      %v801 = vadd.f32 0.0, %v800
      %802 = vdwg.mxu0
      %803 = vmatpush.msra.mxu0 0.0
      %804 = vmatpush.msra.mxu0 0.0
      %805 = vmatpush.msra.mxu0 0.0
      %806 = vmatpush.msra.mxu0 0.0
      %807 = vmatpush.msra.mxu0 0.0
      %808 = vmatpush.msra.mxu0 0.0
      %809 = vmatpush.msra.mxu0 0.0
      %810 = vmatpush.msra.mxu0 0.0
      %811 = vmatpush.msra.mxu0 0.0
      %812 = vmatpush.msra.mxu0 0.0
      %813 = vmatpush.msra.mxu0 0.0
      %814 = vmatpush.msra.mxu0 0.0
      %815 = vmatpush.msra.mxu0 %v617
      %816 = vmatpush.msra.mxu0 %v616
      %817 = vmatpush.msra.mxu0 %v615
      %818 = vmatpush.msra.mxu0 %v614
      %819 = vmatmul.f32.gmra.mxu0 %v626
      %v820 = vpop.f32.mrf.mxu0
      %v821 = vadd.f32 0.0, %v820
      %822 = vmatmul.f32.gmra.mxu0 %v629
      %v823 = vpop.f32.mrf.mxu0
      %v824 = vadd.f32 0.0, %v823
      %825 = vmatmul.f32.gmra.mxu0 %v632
      %v826 = vpop.f32.mrf.mxu0
      %v827 = vadd.f32 0.0, %v826
      %828 = vmatmul.f32.gmra.mxu0 %v635
      %v829 = vpop.f32.mrf.mxu0
      %v830 = vadd.f32 0.0, %v829
      %831 = vmatmul.f32.gmra.mxu0 %v638
      %v832 = vpop.f32.mrf.mxu0
      %v833 = vadd.f32 0.0, %v832
      %834 = vmatmul.f32.gmra.mxu0 %v641
      %v835 = vpop.f32.mrf.mxu0
      %v836 = vadd.f32 0.0, %v835
      %837 = vmatmul.f32.gmra.mxu0 %v644
      %v838 = vpop.f32.mrf.mxu0
      %v839 = vadd.f32 0.0, %v838
      %840 = vmatmul.f32.gmra.mxu0 %v647
      %v841 = vpop.f32.mrf.mxu0
      %v842 = vadd.f32 0.0, %v841
      %843 = vmatmul.f32.gmra.mxu0 %v650
      %v844 = vpop.f32.mrf.mxu0
      %v845 = vadd.f32 0.0, %v844
      %846 = vmatmul.f32.gmra.mxu0 %v653
      %v847 = vpop.f32.mrf.mxu0
      %v848 = vadd.f32 0.0, %v847
      %849 = vmatmul.f32.gmra.mxu0 %v656
      %v850 = vpop.f32.mrf.mxu0
      %v851 = vadd.f32 0.0, %v850
      %852 = vmatmul.f32.gmra.mxu0 %v659
      %v853 = vpop.f32.mrf.mxu0
      %v854 = vadd.f32 0.0, %v853
      %855 = vmatmul.f32.gmra.mxu0 %v662
      %v856 = vpop.f32.mrf.mxu0
      %v857 = vadd.f32 0.0, %v856
      %858 = vmatmul.f32.gmra.mxu0 %v665
      %v859 = vpop.f32.mrf.mxu0
      %v860 = vadd.f32 0.0, %v859
      %861 = vmatmul.f32.gmra.mxu0 %v668
      %v862 = vpop.f32.mrf.mxu0
      %v863 = vadd.f32 0.0, %v862
      %864 = vmatmul.f32.gmra.mxu0 %v671
      %v865 = vpop.f32.mrf.mxu0
      %v866 = vadd.f32 0.0, %v865
      %867 = vdwg.mxu0
      %v869 = vsel %vm624, %v691, 0
      %v872 = vsel %vm624, %v694, 0
      %v875 = vsel %vm624, %v697, 0
      %v878 = vsel %vm624, %v700, 0
      %v881 = vsel %vm624, %v703, 0
      %v884 = vsel %vm624, %v706, 0
      %v887 = vsel %vm624, %v709, 0
      %v890 = vsel %vm624, %v712, 0
      %v893 = vsel %vm624, %v715, 0
      %v896 = vsel %vm624, %v718, 0
      %v899 = vsel %vm624, %v721, 0
      %v902 = vsel %vm624, %v724, 0
      %v905 = vsel %vm624, %v727, 0
      %v908 = vsel %vm624, %v730, 0
      %v911 = vsel %vm624, %v733, 0
      %v914 = vsel %vm624, %v736, 0
      %v917 = vsel %vm624, %v756, 0
      %v920 = vsel %vm624, %v759, 0
      %v923 = vsel %vm624, %v762, 0
      %v926 = vsel %vm624, %v765, 0
      %v929 = vsel %vm624, %v768, 0
      %v932 = vsel %vm624, %v771, 0
      %v935 = vsel %vm624, %v774, 0
      %v938 = vsel %vm624, %v777, 0
      %v941 = vsel %vm624, %v780, 0
      %v944 = vsel %vm624, %v783, 0
      %v947 = vsel %vm624, %v786, 0
      %v950 = vsel %vm624, %v789, 0
      %v953 = vsel %vm624, %v792, 0
      %v956 = vsel %vm624, %v795, 0
      %v959 = vsel %vm624, %v798, 0
      %v962 = vsel %vm624, %v801, 0
      %964 = vmatpush.xpose.msra.mxu0 %v962
      %965 = vmatpush.xpose.msra.mxu0 %v959
      %966 = vmatpush.xpose.msra.mxu0 %v956
      %967 = vmatpush.xpose.msra.mxu0 %v953
      %968 = vmatpush.xpose.msra.mxu0 %v950
      %969 = vmatpush.xpose.msra.mxu0 %v947
      %970 = vmatpush.xpose.msra.mxu0 %v944
      %971 = vmatpush.xpose.msra.mxu0 %v941
      %972 = vmatpush.xpose.msra.mxu0 %v938
      %973 = vmatpush.xpose.msra.mxu0 %v935
      %974 = vmatpush.xpose.msra.mxu0 %v932
      %975 = vmatpush.xpose.msra.mxu0 %v929
      %976 = vmatpush.xpose.msra.mxu0 %v926
      %977 = vmatpush.xpose.msra.mxu0 %v923
      %978 = vmatpush.xpose.msra.mxu0 %v920
      %979 = vmatpush.xpose.msra.mxu0 %v917
      %980 = vmatmul.f32.gmra.mxu0 %v869
      %v981 = vpop.f32.mrf.mxu0
      %v982 = vadd.f32 %v409, %v981
      %983 = vmatmul.f32.gmra.mxu0 %v872
      %v984 = vpop.f32.mrf.mxu0
      %v985 = vadd.f32 %v410, %v984
      %986 = vmatmul.f32.gmra.mxu0 %v875
      %v987 = vpop.f32.mrf.mxu0
      %v988 = vadd.f32 %v411, %v987
      %989 = vmatmul.f32.gmra.mxu0 %v878
      %v990 = vpop.f32.mrf.mxu0
      %v991 = vadd.f32 %v412, %v990
      %992 = vmatmul.f32.gmra.mxu0 %v881
      %v993 = vpop.f32.mrf.mxu0
      %v994 = vadd.f32 %v413, %v993
      %995 = vmatmul.f32.gmra.mxu0 %v884
      %v996 = vpop.f32.mrf.mxu0
      %v997 = vadd.f32 %v414, %v996
      %998 = vmatmul.f32.gmra.mxu0 %v887
      %v999 = vpop.f32.mrf.mxu0
      %v1000 = vadd.f32 %v415, %v999
      %1001 = vmatmul.f32.gmra.mxu0 %v890
      %v1002 = vpop.f32.mrf.mxu0
      %v1003 = vadd.f32 %v416, %v1002
      %1004 = vmatmul.f32.gmra.mxu0 %v893
      %v1005 = vpop.f32.mrf.mxu0
      %v1006 = vadd.f32 %v417, %v1005
      %1007 = vmatmul.f32.gmra.mxu0 %v896
      %v1008 = vpop.f32.mrf.mxu0
      %v1009 = vadd.f32 %v418, %v1008
      %1010 = vmatmul.f32.gmra.mxu0 %v899
      %v1011 = vpop.f32.mrf.mxu0
      %v1012 = vadd.f32 %v419, %v1011
      %1013 = vmatmul.f32.gmra.mxu0 %v902
      %v1014 = vpop.f32.mrf.mxu0
      %v1015 = vadd.f32 %v420, %v1014
      %1016 = vmatmul.f32.gmra.mxu0 %v905
      %v1017 = vpop.f32.mrf.mxu0
      %v1018 = vadd.f32 %v421, %v1017
      %1019 = vmatmul.f32.gmra.mxu0 %v908
      %v1020 = vpop.f32.mrf.mxu0
      %v1021 = vadd.f32 %v422, %v1020
      %1022 = vmatmul.f32.gmra.mxu0 %v911
      %v1023 = vpop.f32.mrf.mxu0
      %v1024 = vadd.f32 %v423, %v1023
      %1025 = vmatmul.f32.gmra.mxu0 %v914
      %v1026 = vpop.f32.mrf.mxu0
      %v1027 = vadd.f32 %v424, %v1026
      %1028 = vdwg.mxu0
      %1029 = vmax.xlane.f32.xlu0 %v982
      %v1030 = vpop.xlane.xlu0 %1029
      %1031 = vmax.xlane.f32.xlu0 %v985
      %v1032 = vpop.xlane.xlu0 %1031
      %1033 = vmax.xlane.f32.xlu0 %v988
      %v1034 = vpop.xlane.xlu0 %1033
      %1035 = vmax.xlane.f32.xlu0 %v991
      %v1036 = vpop.xlane.xlu0 %1035
      %1037 = vmax.xlane.f32.xlu0 %v994
      %v1038 = vpop.xlane.xlu0 %1037
      %1039 = vmax.xlane.f32.xlu0 %v997
      %v1040 = vpop.xlane.xlu0 %1039
      %1041 = vmax.xlane.f32.xlu0 %v1000
      %v1042 = vpop.xlane.xlu0 %1041
      %1043 = vmax.xlane.f32.xlu0 %v1003
      %v1044 = vpop.xlane.xlu0 %1043
      %1045 = vmax.xlane.f32.xlu0 %v1006
      %v1046 = vpop.xlane.xlu0 %1045
      %1047 = vmax.xlane.f32.xlu0 %v1009
      %v1048 = vpop.xlane.xlu0 %1047
      %1049 = vmax.xlane.f32.xlu0 %v1012
      %v1050 = vpop.xlane.xlu0 %1049
      %1051 = vmax.xlane.f32.xlu0 %v1015
      %v1052 = vpop.xlane.xlu0 %1051
      %1053 = vmax.xlane.f32.xlu0 %v1018
      %v1054 = vpop.xlane.xlu0 %1053
      %1055 = vmax.xlane.f32.xlu0 %v1021
      %v1056 = vpop.xlane.xlu0 %1055
      %1057 = vmax.xlane.f32.xlu0 %v1024
      %v1058 = vpop.xlane.xlu0 %1057
      %1059 = vmax.xlane.f32.xlu0 %v1027
      %v1060 = vpop.xlane.xlu0 %1059
      %v1061 = vsub.f32 %v982, %v1030
      %v1062 = vsub.f32 %v985, %v1032
      %v1063 = vsub.f32 %v988, %v1034
      %v1064 = vsub.f32 %v991, %v1036
      %v1065 = vsub.f32 %v994, %v1038
      %v1066 = vsub.f32 %v997, %v1040
      %v1067 = vsub.f32 %v1000, %v1042
      %v1068 = vsub.f32 %v1003, %v1044
      %v1069 = vsub.f32 %v1006, %v1046
      %v1070 = vsub.f32 %v1009, %v1048
      %v1071 = vsub.f32 %v1012, %v1050
      %v1072 = vsub.f32 %v1015, %v1052
      %v1073 = vsub.f32 %v1018, %v1054
      %v1074 = vsub.f32 %v1021, %v1056
      %v1075 = vsub.f32 %v1024, %v1058
      %v1076 = vsub.f32 %v1027, %v1060
      %v1077 = vmul.f32 %v1061, 1.442695
      %v1078 = vpow.pop %v1077
      %v1079 = vmul.f32 %v1062, 1.442695
      %v1080 = vpow.pop %v1079
      %v1081 = vmul.f32 %v1063, 1.442695
      %v1082 = vpow.pop %v1081
      %v1083 = vmul.f32 %v1064, 1.442695
      %v1084 = vpow.pop %v1083
      %v1085 = vmul.f32 %v1065, 1.442695
      %v1086 = vpow.pop %v1085
      %v1087 = vmul.f32 %v1066, 1.442695
      %v1088 = vpow.pop %v1087
      %v1089 = vmul.f32 %v1067, 1.442695
      %v1090 = vpow.pop %v1089
      %v1091 = vmul.f32 %v1068, 1.442695
      %v1092 = vpow.pop %v1091
      %v1093 = vmul.f32 %v1069, 1.442695
      %v1094 = vpow.pop %v1093
      %v1095 = vmul.f32 %v1070, 1.442695
      %v1096 = vpow.pop %v1095
      %v1097 = vmul.f32 %v1071, 1.442695
      %v1098 = vpow.pop %v1097
      %v1099 = vmul.f32 %v1072, 1.442695
      %v1100 = vpow.pop %v1099
      %v1101 = vmul.f32 %v1073, 1.442695
      %v1102 = vpow.pop %v1101
      %v1103 = vmul.f32 %v1074, 1.442695
      %v1104 = vpow.pop %v1103
      %v1105 = vmul.f32 %v1075, 1.442695
      %v1106 = vpow.pop %v1105
      %v1107 = vmul.f32 %v1076, 1.442695
      %v1108 = vpow.pop %v1107
      %1109 = vadd.xlane.f32.xlu0 %v1078
      %v1110 = vpop.xlane.xlu0 %1109
      %1111 = vadd.xlane.f32.xlu0 %v1080
      %v1112 = vpop.xlane.xlu0 %1111
      %1113 = vadd.xlane.f32.xlu0 %v1082
      %v1114 = vpop.xlane.xlu0 %1113
      %1115 = vadd.xlane.f32.xlu0 %v1084
      %v1116 = vpop.xlane.xlu0 %1115
      %1117 = vadd.xlane.f32.xlu0 %v1086
      %v1118 = vpop.xlane.xlu0 %1117
      %1119 = vadd.xlane.f32.xlu0 %v1088
      %v1120 = vpop.xlane.xlu0 %1119
      %1121 = vadd.xlane.f32.xlu0 %v1090
      %v1122 = vpop.xlane.xlu0 %1121
      %1123 = vadd.xlane.f32.xlu0 %v1092
      %v1124 = vpop.xlane.xlu0 %1123
      %1125 = vadd.xlane.f32.xlu0 %v1094
      %v1126 = vpop.xlane.xlu0 %1125
      %1127 = vadd.xlane.f32.xlu0 %v1096
      %v1128 = vpop.xlane.xlu0 %1127
      %1129 = vadd.xlane.f32.xlu0 %v1098
      %v1130 = vpop.xlane.xlu0 %1129
      %1131 = vadd.xlane.f32.xlu0 %v1100
      %v1132 = vpop.xlane.xlu0 %1131
      %1133 = vadd.xlane.f32.xlu0 %v1102
      %v1134 = vpop.xlane.xlu0 %1133
      %1135 = vadd.xlane.f32.xlu0 %v1104
      %v1136 = vpop.xlane.xlu0 %1135
      %1137 = vadd.xlane.f32.xlu0 %v1106
      %v1138 = vpop.xlane.xlu0 %1137
      %1139 = vadd.xlane.f32.xlu0 %v1108
      %v1140 = vpop.xlane.xlu0 %1139
      %v1141 = vrcp.pop %v1110
      %v1142 = vrcp.pop %v1112
      %v1143 = vrcp.pop %v1114
      %v1144 = vrcp.pop %v1116
      %v1145 = vrcp.pop %v1118
      %v1146 = vrcp.pop %v1120
      %v1147 = vrcp.pop %v1122
      %v1148 = vrcp.pop %v1124
      %v1149 = vrcp.pop %v1126
      %v1150 = vrcp.pop %v1128
      %v1151 = vrcp.pop %v1130
      %v1152 = vrcp.pop %v1132
      %v1153 = vrcp.pop %v1134
      %v1154 = vrcp.pop %v1136
      %v1155 = vrcp.pop %v1138
      %v1156 = vrcp.pop %v1140
      %v1157 = vmul.f32 %v1078, %v1141
      %v1158 = vmul.f32 %v1080, %v1142
      %v1159 = vmul.f32 %v1082, %v1143
      %v1160 = vmul.f32 %v1084, %v1144
      %v1161 = vmul.f32 %v1086, %v1145
      %v1162 = vmul.f32 %v1088, %v1146
      %v1163 = vmul.f32 %v1090, %v1147
      %v1164 = vmul.f32 %v1092, %v1148
      %v1165 = vmul.f32 %v1094, %v1149
      %v1166 = vmul.f32 %v1096, %v1150
      %v1167 = vmul.f32 %v1098, %v1151
      %v1168 = vmul.f32 %v1100, %v1152
      %v1169 = vmul.f32 %v1102, %v1153
      %v1170 = vmul.f32 %v1104, %v1154
      %v1171 = vmul.f32 %v1106, %v1155
      %v1172 = vmul.f32 %v1108, %v1156
      %1173 = vmatpush.msra.mxu0 %v866
      %1174 = vmatpush.msra.mxu0 %v863
      %1175 = vmatpush.msra.mxu0 %v860
      %1176 = vmatpush.msra.mxu0 %v857
      %1177 = vmatpush.msra.mxu0 %v854
      %1178 = vmatpush.msra.mxu0 %v851
      %1179 = vmatpush.msra.mxu0 %v848
      %1180 = vmatpush.msra.mxu0 %v845
      %1181 = vmatpush.msra.mxu0 %v842
      %1182 = vmatpush.msra.mxu0 %v839
      %1183 = vmatpush.msra.mxu0 %v836
      %1184 = vmatpush.msra.mxu0 %v833
      %1185 = vmatpush.msra.mxu0 %v830
      %1186 = vmatpush.msra.mxu0 %v827
      %1187 = vmatpush.msra.mxu0 %v824
      %1188 = vmatpush.msra.mxu0 %v821
      %1189 = vmatmul.f32.gmra.mxu0 %v1157
      %v1190 = vpop.f32.mrf.mxu0
      %v1191 = vadd.f32 0.0, %v1190
      %1192 = vmatmul.f32.gmra.mxu0 %v1158
      %v1193 = vpop.f32.mrf.mxu0
      %v1194 = vadd.f32 0.0, %v1193
      %1195 = vmatmul.f32.gmra.mxu0 %v1159
      %v1196 = vpop.f32.mrf.mxu0
      %v1197 = vadd.f32 0.0, %v1196
      %1198 = vmatmul.f32.gmra.mxu0 %v1160
      %v1199 = vpop.f32.mrf.mxu0
      %v1200 = vadd.f32 0.0, %v1199
      %1201 = vmatmul.f32.gmra.mxu0 %v1161
      %v1202 = vpop.f32.mrf.mxu0
      %v1203 = vadd.f32 0.0, %v1202
      %1204 = vmatmul.f32.gmra.mxu0 %v1162
      %v1205 = vpop.f32.mrf.mxu0
      %v1206 = vadd.f32 0.0, %v1205
      %1207 = vmatmul.f32.gmra.mxu0 %v1163
      %v1208 = vpop.f32.mrf.mxu0
      %v1209 = vadd.f32 0.0, %v1208
      %1210 = vmatmul.f32.gmra.mxu0 %v1164
      %v1211 = vpop.f32.mrf.mxu0
      %v1212 = vadd.f32 0.0, %v1211
      %1213 = vmatmul.f32.gmra.mxu0 %v1165
      %v1214 = vpop.f32.mrf.mxu0
      %v1215 = vadd.f32 0.0, %v1214
      %1216 = vmatmul.f32.gmra.mxu0 %v1166
      %v1217 = vpop.f32.mrf.mxu0
      %v1218 = vadd.f32 0.0, %v1217
      %1219 = vmatmul.f32.gmra.mxu0 %v1167
      %v1220 = vpop.f32.mrf.mxu0
      %v1221 = vadd.f32 0.0, %v1220
      %1222 = vmatmul.f32.gmra.mxu0 %v1168
      %v1223 = vpop.f32.mrf.mxu0
      %v1224 = vadd.f32 0.0, %v1223
      %1225 = vmatmul.f32.gmra.mxu0 %v1169
      %v1226 = vpop.f32.mrf.mxu0
      %v1227 = vadd.f32 0.0, %v1226
      %1228 = vmatmul.f32.gmra.mxu0 %v1170
      %v1229 = vpop.f32.mrf.mxu0
      %v1230 = vadd.f32 0.0, %v1229
      %1231 = vmatmul.f32.gmra.mxu0 %v1171
      %v1232 = vpop.f32.mrf.mxu0
      %v1233 = vadd.f32 0.0, %v1232
      %1234 = vmatmul.f32.gmra.mxu0 %v1172
      %v1235 = vpop.f32.mrf.mxu0
      %v1236 = vadd.f32 0.0, %v1235
      %1237 = vdwg.mxu0
      %v1238 = vld [vmem:[%s3 + $0x88] sm:$0xff]
      %v1239 = vld [vmem:[%s3 + $0x90] sm:$0xff]
      %v1240 = vld [vmem:[%s3 + $0x98] sm:$0xff]
      %v1241 = vld [vmem:[%s3 + $0xa0] sm:$0xff]
      %v1242 = vld [vmem:[%s3 + $0xa8] sm:$0xff]
      %v1243 = vld [vmem:[%s3 + $0xb0] sm:$0xff]
      %v1244 = vld [vmem:[%s3 + $0xb8] sm:$0xff]
      %v1245 = vld [vmem:[%s3 + $0xc0] sm:$0xff]
      %v1246 = vld [vmem:[%s3 + $0xc8] sm:$0xff]
      %v1247 = vld [vmem:[%s3 + $0xd0] sm:$0xff]
      %v1248 = vld [vmem:[%s3 + $0xd8] sm:$0xff]
      %v1249 = vld [vmem:[%s3 + $0xe0] sm:$0xff]
      %v1250 = vld [vmem:[%s3 + $0xe8] sm:$0xff]
      %v1251 = vld [vmem:[%s3 + $0xf0] sm:$0xff]
      %v1252 = vld [vmem:[%s3 + $0xf8] sm:$0xff]
      %v1253 = vld [vmem:[%s3 + $0x100] sm:$0xff]
      %v1254 = vld [vmem:[%s6 + $0x2] sm:$0x1]
      %v1255 = vperm.slane %v1254, 0
      %1256 = vmatpush.msra.mxu0 0.0
      %1257 = vmatpush.msra.mxu0 0.0
      %1258 = vmatpush.msra.mxu0 0.0
      %1259 = vmatpush.msra.mxu0 0.0
      %1260 = vmatpush.msra.mxu0 0.0
      %1261 = vmatpush.msra.mxu0 0.0
      %1262 = vmatpush.msra.mxu0 0.0
      %1263 = vmatpush.msra.mxu0 0.0
      %1264 = vmatpush.msra.mxu0 0.0
      %1265 = vmatpush.msra.mxu0 0.0
      %1266 = vmatpush.msra.mxu0 0.0
      %1267 = vmatpush.msra.mxu0 0.0
      %1268 = vmatpush.msra.mxu0 %v1241
      %1269 = vmatpush.msra.mxu0 %v1240
      %1270 = vmatpush.msra.mxu0 %v1239
      %1271 = vmatpush.msra.mxu0 %v1238
      %1272 = vmatmul.f32.gmra.mxu0 %v626
      %v1273 = vpop.f32.mrf.mxu0
      %v1274 = vadd.f32 %v1255, %v1273
      %1275 = vmatmul.f32.gmra.mxu0 %v629
      %v1276 = vpop.f32.mrf.mxu0
      %v1277 = vadd.f32 %v1255, %v1276
      %1278 = vmatmul.f32.gmra.mxu0 %v632
      %v1279 = vpop.f32.mrf.mxu0
      %v1280 = vadd.f32 %v1255, %v1279
      %1281 = vmatmul.f32.gmra.mxu0 %v635
      %v1282 = vpop.f32.mrf.mxu0
      %v1283 = vadd.f32 %v1255, %v1282
      %1284 = vmatmul.f32.gmra.mxu0 %v638
      %v1285 = vpop.f32.mrf.mxu0
      %v1286 = vadd.f32 %v1255, %v1285
      %1287 = vmatmul.f32.gmra.mxu0 %v641
      %v1288 = vpop.f32.mrf.mxu0
      %v1289 = vadd.f32 %v1255, %v1288
      %1290 = vmatmul.f32.gmra.mxu0 %v644
      %v1291 = vpop.f32.mrf.mxu0
      %v1292 = vadd.f32 %v1255, %v1291
      %1293 = vmatmul.f32.gmra.mxu0 %v647
      %v1294 = vpop.f32.mrf.mxu0
      %v1295 = vadd.f32 %v1255, %v1294
      %1296 = vmatmul.f32.gmra.mxu0 %v650
      %v1297 = vpop.f32.mrf.mxu0
      %v1298 = vadd.f32 %v1255, %v1297
      %1299 = vmatmul.f32.gmra.mxu0 %v653
      %v1300 = vpop.f32.mrf.mxu0
      %v1301 = vadd.f32 %v1255, %v1300
      %1302 = vmatmul.f32.gmra.mxu0 %v656
      %v1303 = vpop.f32.mrf.mxu0
      %v1304 = vadd.f32 %v1255, %v1303
      %1305 = vmatmul.f32.gmra.mxu0 %v659
      %v1306 = vpop.f32.mrf.mxu0
      %v1307 = vadd.f32 %v1255, %v1306
      %1308 = vmatmul.f32.gmra.mxu0 %v662
      %v1309 = vpop.f32.mrf.mxu0
      %v1310 = vadd.f32 %v1255, %v1309
      %1311 = vmatmul.f32.gmra.mxu0 %v665
      %v1312 = vpop.f32.mrf.mxu0
      %v1313 = vadd.f32 %v1255, %v1312
      %1314 = vmatmul.f32.gmra.mxu0 %v668
      %v1315 = vpop.f32.mrf.mxu0
      %v1316 = vadd.f32 %v1255, %v1315
      %1317 = vmatmul.f32.gmra.mxu0 %v671
      %v1318 = vpop.f32.mrf.mxu0
      %v1319 = vadd.f32 %v1255, %v1318
      %1320 = vdwg.mxu0
      %1321 = vmatpush.msra.mxu0 0.0
      %1322 = vmatpush.msra.mxu0 0.0
      %1323 = vmatpush.msra.mxu0 0.0
      %1324 = vmatpush.msra.mxu0 0.0
      %1325 = vmatpush.msra.mxu0 0.0
      %1326 = vmatpush.msra.mxu0 0.0
      %1327 = vmatpush.msra.mxu0 0.0
      %1328 = vmatpush.msra.mxu0 0.0
      %1329 = vmatpush.msra.mxu0 0.0
      %1330 = vmatpush.msra.mxu0 0.0
      %1331 = vmatpush.msra.mxu0 0.0
      %1332 = vmatpush.msra.mxu0 0.0
      %1333 = vmatpush.msra.mxu0 %v1245
      %1334 = vmatpush.msra.mxu0 %v1244
      %1335 = vmatpush.msra.mxu0 %v1243
      %1336 = vmatpush.msra.mxu0 %v1242
      %1337 = vmatmul.f32.gmra.mxu0 %v626
      %v1338 = vpop.f32.mrf.mxu0
      %v1339 = vadd.f32 0.0, %v1338
      %1340 = vmatmul.f32.gmra.mxu0 %v629
      %v1341 = vpop.f32.mrf.mxu0
      %v1342 = vadd.f32 0.0, %v1341
      %1343 = vmatmul.f32.gmra.mxu0 %v632
      %v1344 = vpop.f32.mrf.mxu0
      %v1345 = vadd.f32 0.0, %v1344
      %1346 = vmatmul.f32.gmra.mxu0 %v635
      %v1347 = vpop.f32.mrf.mxu0
      %v1348 = vadd.f32 0.0, %v1347
      %1349 = vmatmul.f32.gmra.mxu0 %v638
      %v1350 = vpop.f32.mrf.mxu0
      %v1351 = vadd.f32 0.0, %v1350
      %1352 = vmatmul.f32.gmra.mxu0 %v641
      %v1353 = vpop.f32.mrf.mxu0
      %v1354 = vadd.f32 0.0, %v1353
      %1355 = vmatmul.f32.gmra.mxu0 %v644
      %v1356 = vpop.f32.mrf.mxu0
      %v1357 = vadd.f32 0.0, %v1356
      %1358 = vmatmul.f32.gmra.mxu0 %v647
      %v1359 = vpop.f32.mrf.mxu0
      %v1360 = vadd.f32 0.0, %v1359
      %1361 = vmatmul.f32.gmra.mxu0 %v650
      %v1362 = vpop.f32.mrf.mxu0
      %v1363 = vadd.f32 0.0, %v1362
      %1364 = vmatmul.f32.gmra.mxu0 %v653
      %v1365 = vpop.f32.mrf.mxu0
      %v1366 = vadd.f32 0.0, %v1365
      %1367 = vmatmul.f32.gmra.mxu0 %v656
      %v1368 = vpop.f32.mrf.mxu0
      %v1369 = vadd.f32 0.0, %v1368
      %1370 = vmatmul.f32.gmra.mxu0 %v659
      %v1371 = vpop.f32.mrf.mxu0
      %v1372 = vadd.f32 0.0, %v1371
      %1373 = vmatmul.f32.gmra.mxu0 %v662
      %v1374 = vpop.f32.mrf.mxu0
      %v1375 = vadd.f32 0.0, %v1374
      %1376 = vmatmul.f32.gmra.mxu0 %v665
      %v1377 = vpop.f32.mrf.mxu0
      %v1378 = vadd.f32 0.0, %v1377
      %1379 = vmatmul.f32.gmra.mxu0 %v668
      %v1380 = vpop.f32.mrf.mxu0
      %v1381 = vadd.f32 0.0, %v1380
      %1382 = vmatmul.f32.gmra.mxu0 %v671
      %v1383 = vpop.f32.mrf.mxu0
      %v1384 = vadd.f32 0.0, %v1383
      %1385 = vdwg.mxu0
      %1386 = vmatpush.msra.mxu0 0.0
      %1387 = vmatpush.msra.mxu0 0.0
      %1388 = vmatpush.msra.mxu0 0.0
      %1389 = vmatpush.msra.mxu0 0.0
      %1390 = vmatpush.msra.mxu0 0.0
      %1391 = vmatpush.msra.mxu0 0.0
      %1392 = vmatpush.msra.mxu0 0.0
      %1393 = vmatpush.msra.mxu0 0.0
      %1394 = vmatpush.msra.mxu0 0.0
      %1395 = vmatpush.msra.mxu0 0.0
      %1396 = vmatpush.msra.mxu0 0.0
      %1397 = vmatpush.msra.mxu0 0.0
      %1398 = vmatpush.msra.mxu0 %v1249
      %1399 = vmatpush.msra.mxu0 %v1248
      %1400 = vmatpush.msra.mxu0 %v1247
      %1401 = vmatpush.msra.mxu0 %v1246
      %1402 = vmatmul.f32.gmra.mxu0 %v626
      %v1403 = vpop.f32.mrf.mxu0
      %v1404 = vadd.f32 0.0, %v1403
      %1405 = vmatmul.f32.gmra.mxu0 %v629
      %v1406 = vpop.f32.mrf.mxu0
      %v1407 = vadd.f32 0.0, %v1406
      %1408 = vmatmul.f32.gmra.mxu0 %v632
      %v1409 = vpop.f32.mrf.mxu0
      %v1410 = vadd.f32 0.0, %v1409
      %1411 = vmatmul.f32.gmra.mxu0 %v635
      %v1412 = vpop.f32.mrf.mxu0
      %v1413 = vadd.f32 0.0, %v1412
      %1414 = vmatmul.f32.gmra.mxu0 %v638
      %v1415 = vpop.f32.mrf.mxu0
      %v1416 = vadd.f32 0.0, %v1415
      %1417 = vmatmul.f32.gmra.mxu0 %v641
      %v1418 = vpop.f32.mrf.mxu0
      %v1419 = vadd.f32 0.0, %v1418
      %1420 = vmatmul.f32.gmra.mxu0 %v644
      %v1421 = vpop.f32.mrf.mxu0
      %v1422 = vadd.f32 0.0, %v1421
      %1423 = vmatmul.f32.gmra.mxu0 %v647
      %v1424 = vpop.f32.mrf.mxu0
      %v1425 = vadd.f32 0.0, %v1424
      %1426 = vmatmul.f32.gmra.mxu0 %v650
      %v1427 = vpop.f32.mrf.mxu0
      %v1428 = vadd.f32 0.0, %v1427
      %1429 = vmatmul.f32.gmra.mxu0 %v653
      %v1430 = vpop.f32.mrf.mxu0
      %v1431 = vadd.f32 0.0, %v1430
      %1432 = vmatmul.f32.gmra.mxu0 %v656
      %v1433 = vpop.f32.mrf.mxu0
      %v1434 = vadd.f32 0.0, %v1433
      %1435 = vmatmul.f32.gmra.mxu0 %v659
      %v1436 = vpop.f32.mrf.mxu0
      %v1437 = vadd.f32 0.0, %v1436
      %1438 = vmatmul.f32.gmra.mxu0 %v662
      %v1439 = vpop.f32.mrf.mxu0
      %v1440 = vadd.f32 0.0, %v1439
      %1441 = vmatmul.f32.gmra.mxu0 %v665
      %v1442 = vpop.f32.mrf.mxu0
      %v1443 = vadd.f32 0.0, %v1442
      %1444 = vmatmul.f32.gmra.mxu0 %v668
      %v1445 = vpop.f32.mrf.mxu0
      %v1446 = vadd.f32 0.0, %v1445
      %1447 = vmatmul.f32.gmra.mxu0 %v671
      %v1448 = vpop.f32.mrf.mxu0
      %v1449 = vadd.f32 0.0, %v1448
      %1450 = vdwg.mxu0
      %v1452 = vsel %vm624, %v1274, 0
      %v1455 = vsel %vm624, %v1277, 0
      %v1458 = vsel %vm624, %v1280, 0
      %v1461 = vsel %vm624, %v1283, 0
      %v1464 = vsel %vm624, %v1286, 0
      %v1467 = vsel %vm624, %v1289, 0
      %v1470 = vsel %vm624, %v1292, 0
      %v1473 = vsel %vm624, %v1295, 0
      %v1476 = vsel %vm624, %v1298, 0
      %v1479 = vsel %vm624, %v1301, 0
      %v1482 = vsel %vm624, %v1304, 0
      %v1485 = vsel %vm624, %v1307, 0
      %v1488 = vsel %vm624, %v1310, 0
      %v1491 = vsel %vm624, %v1313, 0
      %v1494 = vsel %vm624, %v1316, 0
      %v1497 = vsel %vm624, %v1319, 0
      %v1500 = vsel %vm624, %v1339, 0
      %v1503 = vsel %vm624, %v1342, 0
      %v1506 = vsel %vm624, %v1345, 0
      %v1509 = vsel %vm624, %v1348, 0
      %v1512 = vsel %vm624, %v1351, 0
      %v1515 = vsel %vm624, %v1354, 0
      %v1518 = vsel %vm624, %v1357, 0
      %v1521 = vsel %vm624, %v1360, 0
      %v1524 = vsel %vm624, %v1363, 0
      %v1527 = vsel %vm624, %v1366, 0
      %v1530 = vsel %vm624, %v1369, 0
      %v1533 = vsel %vm624, %v1372, 0
      %v1536 = vsel %vm624, %v1375, 0
      %v1539 = vsel %vm624, %v1378, 0
      %v1542 = vsel %vm624, %v1381, 0
      %v1545 = vsel %vm624, %v1384, 0
      %1547 = vmatpush.xpose.msra.mxu0 %v1545
      %1548 = vmatpush.xpose.msra.mxu0 %v1542
      %1549 = vmatpush.xpose.msra.mxu0 %v1539
      %1550 = vmatpush.xpose.msra.mxu0 %v1536
      %1551 = vmatpush.xpose.msra.mxu0 %v1533
      %1552 = vmatpush.xpose.msra.mxu0 %v1530
      %1553 = vmatpush.xpose.msra.mxu0 %v1527
      %1554 = vmatpush.xpose.msra.mxu0 %v1524
      %1555 = vmatpush.xpose.msra.mxu0 %v1521
      %1556 = vmatpush.xpose.msra.mxu0 %v1518
      %1557 = vmatpush.xpose.msra.mxu0 %v1515
      %1558 = vmatpush.xpose.msra.mxu0 %v1512
      %1559 = vmatpush.xpose.msra.mxu0 %v1509
      %1560 = vmatpush.xpose.msra.mxu0 %v1506
      %1561 = vmatpush.xpose.msra.mxu0 %v1503
      %1562 = vmatpush.xpose.msra.mxu0 %v1500
      %1563 = vmatmul.f32.gmra.mxu0 %v1452
      %v1564 = vpop.f32.mrf.mxu0
      %v1565 = vadd.f32 %v409, %v1564
      %1566 = vmatmul.f32.gmra.mxu0 %v1455
      %v1567 = vpop.f32.mrf.mxu0
      %v1568 = vadd.f32 %v410, %v1567
      %1569 = vmatmul.f32.gmra.mxu0 %v1458
      %v1570 = vpop.f32.mrf.mxu0
      %v1571 = vadd.f32 %v411, %v1570
      %1572 = vmatmul.f32.gmra.mxu0 %v1461
      %v1573 = vpop.f32.mrf.mxu0
      %v1574 = vadd.f32 %v412, %v1573
      %1575 = vmatmul.f32.gmra.mxu0 %v1464
      %v1576 = vpop.f32.mrf.mxu0
      %v1577 = vadd.f32 %v413, %v1576
      %1578 = vmatmul.f32.gmra.mxu0 %v1467
      %v1579 = vpop.f32.mrf.mxu0
      %v1580 = vadd.f32 %v414, %v1579
      %1581 = vmatmul.f32.gmra.mxu0 %v1470
      %v1582 = vpop.f32.mrf.mxu0
      %v1583 = vadd.f32 %v415, %v1582
      %1584 = vmatmul.f32.gmra.mxu0 %v1473
      %v1585 = vpop.f32.mrf.mxu0
      %v1586 = vadd.f32 %v416, %v1585
      %1587 = vmatmul.f32.gmra.mxu0 %v1476
      %v1588 = vpop.f32.mrf.mxu0
      %v1589 = vadd.f32 %v417, %v1588
      %1590 = vmatmul.f32.gmra.mxu0 %v1479
      %v1591 = vpop.f32.mrf.mxu0
      %v1592 = vadd.f32 %v418, %v1591
      %1593 = vmatmul.f32.gmra.mxu0 %v1482
      %v1594 = vpop.f32.mrf.mxu0
      %v1595 = vadd.f32 %v419, %v1594
      %1596 = vmatmul.f32.gmra.mxu0 %v1485
      %v1597 = vpop.f32.mrf.mxu0
      %v1598 = vadd.f32 %v420, %v1597
      %1599 = vmatmul.f32.gmra.mxu0 %v1488
      %v1600 = vpop.f32.mrf.mxu0
      %v1601 = vadd.f32 %v421, %v1600
      %1602 = vmatmul.f32.gmra.mxu0 %v1491
      %v1603 = vpop.f32.mrf.mxu0
      %v1604 = vadd.f32 %v422, %v1603
      %1605 = vmatmul.f32.gmra.mxu0 %v1494
      %v1606 = vpop.f32.mrf.mxu0
      %v1607 = vadd.f32 %v423, %v1606
      %1608 = vmatmul.f32.gmra.mxu0 %v1497
      %v1609 = vpop.f32.mrf.mxu0
      %v1610 = vadd.f32 %v424, %v1609
      %1611 = vdwg.mxu0
      %1612 = vmax.xlane.f32.xlu0 %v1565
      %v1613 = vpop.xlane.xlu0 %1612
      %1614 = vmax.xlane.f32.xlu0 %v1568
      %v1615 = vpop.xlane.xlu0 %1614
      %1616 = vmax.xlane.f32.xlu0 %v1571
      %v1617 = vpop.xlane.xlu0 %1616
      %1618 = vmax.xlane.f32.xlu0 %v1574
      %v1619 = vpop.xlane.xlu0 %1618
      %1620 = vmax.xlane.f32.xlu0 %v1577
      %v1621 = vpop.xlane.xlu0 %1620
      %1622 = vmax.xlane.f32.xlu0 %v1580
      %v1623 = vpop.xlane.xlu0 %1622
      %1624 = vmax.xlane.f32.xlu0 %v1583
      %v1625 = vpop.xlane.xlu0 %1624
      %1626 = vmax.xlane.f32.xlu0 %v1586
      %v1627 = vpop.xlane.xlu0 %1626
      %1628 = vmax.xlane.f32.xlu0 %v1589
      %v1629 = vpop.xlane.xlu0 %1628
      %1630 = vmax.xlane.f32.xlu0 %v1592
      %v1631 = vpop.xlane.xlu0 %1630
      %1632 = vmax.xlane.f32.xlu0 %v1595
      %v1633 = vpop.xlane.xlu0 %1632
      %1634 = vmax.xlane.f32.xlu0 %v1598
      %v1635 = vpop.xlane.xlu0 %1634
      %1636 = vmax.xlane.f32.xlu0 %v1601
      %v1637 = vpop.xlane.xlu0 %1636
      %1638 = vmax.xlane.f32.xlu0 %v1604
      %v1639 = vpop.xlane.xlu0 %1638
      %1640 = vmax.xlane.f32.xlu0 %v1607
      %v1641 = vpop.xlane.xlu0 %1640
      %1642 = vmax.xlane.f32.xlu0 %v1610
      %v1643 = vpop.xlane.xlu0 %1642
      %v1644 = vsub.f32 %v1565, %v1613
      %v1645 = vsub.f32 %v1568, %v1615
      %v1646 = vsub.f32 %v1571, %v1617
      %v1647 = vsub.f32 %v1574, %v1619
      %v1648 = vsub.f32 %v1577, %v1621
      %v1649 = vsub.f32 %v1580, %v1623
      %v1650 = vsub.f32 %v1583, %v1625
      %v1651 = vsub.f32 %v1586, %v1627
      %v1652 = vsub.f32 %v1589, %v1629
      %v1653 = vsub.f32 %v1592, %v1631
      %v1654 = vsub.f32 %v1595, %v1633
      %v1655 = vsub.f32 %v1598, %v1635
      %v1656 = vsub.f32 %v1601, %v1637
      %v1657 = vsub.f32 %v1604, %v1639
      %v1658 = vsub.f32 %v1607, %v1641
      %v1659 = vsub.f32 %v1610, %v1643
      %v1660 = vmul.f32 %v1644, 1.442695
      %v1661 = vpow.pop %v1660
      %v1662 = vmul.f32 %v1645, 1.442695
      %v1663 = vpow.pop %v1662
      %v1664 = vmul.f32 %v1646, 1.442695
      %v1665 = vpow.pop %v1664
      %v1666 = vmul.f32 %v1647, 1.442695
      %v1667 = vpow.pop %v1666
      %v1668 = vmul.f32 %v1648, 1.442695
      %v1669 = vpow.pop %v1668
      %v1670 = vmul.f32 %v1649, 1.442695
      %v1671 = vpow.pop %v1670
      %v1672 = vmul.f32 %v1650, 1.442695
      %v1673 = vpow.pop %v1672
      %v1674 = vmul.f32 %v1651, 1.442695
      %v1675 = vpow.pop %v1674
      %v1676 = vmul.f32 %v1652, 1.442695
      %v1677 = vpow.pop %v1676
      %v1678 = vmul.f32 %v1653, 1.442695
      %v1679 = vpow.pop %v1678
      %v1680 = vmul.f32 %v1654, 1.442695
      %v1681 = vpow.pop %v1680
      %v1682 = vmul.f32 %v1655, 1.442695
      %v1683 = vpow.pop %v1682
      %v1684 = vmul.f32 %v1656, 1.442695
      %v1685 = vpow.pop %v1684
      %v1686 = vmul.f32 %v1657, 1.442695
      %v1687 = vpow.pop %v1686
      %v1688 = vmul.f32 %v1658, 1.442695
      %v1689 = vpow.pop %v1688
      %v1690 = vmul.f32 %v1659, 1.442695
      %v1691 = vpow.pop %v1690
      %1692 = vadd.xlane.f32.xlu0 %v1661
      %v1693 = vpop.xlane.xlu0 %1692
      %1694 = vadd.xlane.f32.xlu0 %v1663
      %v1695 = vpop.xlane.xlu0 %1694
      %1696 = vadd.xlane.f32.xlu0 %v1665
      %v1697 = vpop.xlane.xlu0 %1696
      %1698 = vadd.xlane.f32.xlu0 %v1667
      %v1699 = vpop.xlane.xlu0 %1698
      %1700 = vadd.xlane.f32.xlu0 %v1669
      %v1701 = vpop.xlane.xlu0 %1700
      %1702 = vadd.xlane.f32.xlu0 %v1671
      %v1703 = vpop.xlane.xlu0 %1702
      %1704 = vadd.xlane.f32.xlu0 %v1673
      %v1705 = vpop.xlane.xlu0 %1704
      %1706 = vadd.xlane.f32.xlu0 %v1675
      %v1707 = vpop.xlane.xlu0 %1706
      %1708 = vadd.xlane.f32.xlu0 %v1677
      %v1709 = vpop.xlane.xlu0 %1708
      %1710 = vadd.xlane.f32.xlu0 %v1679
      %v1711 = vpop.xlane.xlu0 %1710
      %1712 = vadd.xlane.f32.xlu0 %v1681
      %v1713 = vpop.xlane.xlu0 %1712
      %1714 = vadd.xlane.f32.xlu0 %v1683
      %v1715 = vpop.xlane.xlu0 %1714
      %1716 = vadd.xlane.f32.xlu0 %v1685
      %v1717 = vpop.xlane.xlu0 %1716
      %1718 = vadd.xlane.f32.xlu0 %v1687
      %v1719 = vpop.xlane.xlu0 %1718
      %1720 = vadd.xlane.f32.xlu0 %v1689
      %v1721 = vpop.xlane.xlu0 %1720
      %1722 = vadd.xlane.f32.xlu0 %v1691
      %v1723 = vpop.xlane.xlu0 %1722
      %v1724 = vrcp.pop %v1693
      %v1725 = vrcp.pop %v1695
      %v1726 = vrcp.pop %v1697
      %v1727 = vrcp.pop %v1699
      %v1728 = vrcp.pop %v1701
      %v1729 = vrcp.pop %v1703
      %v1730 = vrcp.pop %v1705
      %v1731 = vrcp.pop %v1707
      %v1732 = vrcp.pop %v1709
      %v1733 = vrcp.pop %v1711
      %v1734 = vrcp.pop %v1713
      %v1735 = vrcp.pop %v1715
      %v1736 = vrcp.pop %v1717
      %v1737 = vrcp.pop %v1719
      %v1738 = vrcp.pop %v1721
      %v1739 = vrcp.pop %v1723
      %v1740 = vmul.f32 %v1661, %v1724
      %v1741 = vmul.f32 %v1663, %v1725
      %v1742 = vmul.f32 %v1665, %v1726
      %v1743 = vmul.f32 %v1667, %v1727
      %v1744 = vmul.f32 %v1669, %v1728
      %v1745 = vmul.f32 %v1671, %v1729
      %v1746 = vmul.f32 %v1673, %v1730
      %v1747 = vmul.f32 %v1675, %v1731
      %v1748 = vmul.f32 %v1677, %v1732
      %v1749 = vmul.f32 %v1679, %v1733
      %v1750 = vmul.f32 %v1681, %v1734
      %v1751 = vmul.f32 %v1683, %v1735
      %v1752 = vmul.f32 %v1685, %v1736
      %v1753 = vmul.f32 %v1687, %v1737
      %v1754 = vmul.f32 %v1689, %v1738
      %v1755 = vmul.f32 %v1691, %v1739
      %1756 = vmatpush.msra.mxu0 %v1449
      %1757 = vmatpush.msra.mxu0 %v1446
      %1758 = vmatpush.msra.mxu0 %v1443
      %1759 = vmatpush.msra.mxu0 %v1440
      %1760 = vmatpush.msra.mxu0 %v1437
      %1761 = vmatpush.msra.mxu0 %v1434
      %1762 = vmatpush.msra.mxu0 %v1431
      %1763 = vmatpush.msra.mxu0 %v1428
      %1764 = vmatpush.msra.mxu0 %v1425
      %1765 = vmatpush.msra.mxu0 %v1422
      %1766 = vmatpush.msra.mxu0 %v1419
      %1767 = vmatpush.msra.mxu0 %v1416
      %1768 = vmatpush.msra.mxu0 %v1413
      %1769 = vmatpush.msra.mxu0 %v1410
      %1770 = vmatpush.msra.mxu0 %v1407
      %1771 = vmatpush.msra.mxu0 %v1404
      %1772 = vmatmul.f32.gmra.mxu0 %v1740
      %v1773 = vpop.f32.mrf.mxu0
      %v1774 = vadd.f32 0.0, %v1773
      %1775 = vmatmul.f32.gmra.mxu0 %v1741
      %v1776 = vpop.f32.mrf.mxu0
      %v1777 = vadd.f32 0.0, %v1776
      %1778 = vmatmul.f32.gmra.mxu0 %v1742
      %v1779 = vpop.f32.mrf.mxu0
      %v1780 = vadd.f32 0.0, %v1779
      %1781 = vmatmul.f32.gmra.mxu0 %v1743
      %v1782 = vpop.f32.mrf.mxu0
      %v1783 = vadd.f32 0.0, %v1782
      %1784 = vmatmul.f32.gmra.mxu0 %v1744
      %v1785 = vpop.f32.mrf.mxu0
      %v1786 = vadd.f32 0.0, %v1785
      %1787 = vmatmul.f32.gmra.mxu0 %v1745
      %v1788 = vpop.f32.mrf.mxu0
      %v1789 = vadd.f32 0.0, %v1788
      %1790 = vmatmul.f32.gmra.mxu0 %v1746
      %v1791 = vpop.f32.mrf.mxu0
      %v1792 = vadd.f32 0.0, %v1791
      %1793 = vmatmul.f32.gmra.mxu0 %v1747
      %v1794 = vpop.f32.mrf.mxu0
      %v1795 = vadd.f32 0.0, %v1794
      %1796 = vmatmul.f32.gmra.mxu0 %v1748
      %v1797 = vpop.f32.mrf.mxu0
      %v1798 = vadd.f32 0.0, %v1797
      %1799 = vmatmul.f32.gmra.mxu0 %v1749
      %v1800 = vpop.f32.mrf.mxu0
      %v1801 = vadd.f32 0.0, %v1800
      %1802 = vmatmul.f32.gmra.mxu0 %v1750
      %v1803 = vpop.f32.mrf.mxu0
      %v1804 = vadd.f32 0.0, %v1803
      %1805 = vmatmul.f32.gmra.mxu0 %v1751
      %v1806 = vpop.f32.mrf.mxu0
      %v1807 = vadd.f32 0.0, %v1806
      %1808 = vmatmul.f32.gmra.mxu0 %v1752
      %v1809 = vpop.f32.mrf.mxu0
      %v1810 = vadd.f32 0.0, %v1809
      %1811 = vmatmul.f32.gmra.mxu0 %v1753
      %v1812 = vpop.f32.mrf.mxu0
      %v1813 = vadd.f32 0.0, %v1812
      %1814 = vmatmul.f32.gmra.mxu0 %v1754
      %v1815 = vpop.f32.mrf.mxu0
      %v1816 = vadd.f32 0.0, %v1815
      %1817 = vmatmul.f32.gmra.mxu0 %v1755
      %v1818 = vpop.f32.mrf.mxu0
      %v1819 = vadd.f32 0.0, %v1818
      %1820 = vdwg.mxu0
      %v1822 = vsel %vm624, %v1774, 0
      %v1825 = vsel %vm624, %v1777, 0
      %v1828 = vsel %vm624, %v1780, 0
      %v1831 = vsel %vm624, %v1783, 0
      %v1834 = vsel %vm624, %v1786, 0
      %v1837 = vsel %vm624, %v1789, 0
      %v1840 = vsel %vm624, %v1792, 0
      %v1843 = vsel %vm624, %v1795, 0
      %v1846 = vsel %vm624, %v1798, 0
      %v1849 = vsel %vm624, %v1801, 0
      %v1852 = vsel %vm624, %v1804, 0
      %v1855 = vsel %vm624, %v1807, 0
      %v1858 = vsel %vm624, %v1810, 0
      %v1861 = vsel %vm624, %v1813, 0
      %v1864 = vsel %vm624, %v1816, 0
      %v1867 = vsel %vm624, %v1819, 0
      %1869 = vmatpush.msra.mxu0 0.0
      %1870 = vmatpush.msra.mxu0 0.0
      %1871 = vmatpush.msra.mxu0 0.0
      %1872 = vmatpush.msra.mxu0 0.0
      %1873 = vmatpush.msra.mxu0 0.0
      %1874 = vmatpush.msra.mxu0 0.0
      %1875 = vmatpush.msra.mxu0 0.0
      %1876 = vmatpush.msra.mxu0 0.0
      %1877 = vmatpush.msra.mxu0 0.0
      %1878 = vmatpush.msra.mxu0 0.0
      %1879 = vmatpush.msra.mxu0 0.0
      %1880 = vmatpush.msra.mxu0 0.0
      %1881 = vmatpush.msra.mxu0 %v1253
      %1882 = vmatpush.msra.mxu0 %v1252
      %1883 = vmatpush.msra.mxu0 %v1251
      %1884 = vmatpush.msra.mxu0 %v1250
      %1885 = vmatmul.f32.gmra.mxu0 %v1822
      %v1886 = vpop.f32.mrf.mxu0
      %v1887 = vadd.f32 0.0, %v1886
      %1888 = vmatmul.f32.gmra.mxu0 %v1825
      %v1889 = vpop.f32.mrf.mxu0
      %v1890 = vadd.f32 0.0, %v1889
      %1891 = vmatmul.f32.gmra.mxu0 %v1828
      %v1892 = vpop.f32.mrf.mxu0
      %v1893 = vadd.f32 0.0, %v1892
      %1894 = vmatmul.f32.gmra.mxu0 %v1831
      %v1895 = vpop.f32.mrf.mxu0
      %v1896 = vadd.f32 0.0, %v1895
      %1897 = vmatmul.f32.gmra.mxu0 %v1834
      %v1898 = vpop.f32.mrf.mxu0
      %v1899 = vadd.f32 0.0, %v1898
      %1900 = vmatmul.f32.gmra.mxu0 %v1837
      %v1901 = vpop.f32.mrf.mxu0
      %v1902 = vadd.f32 0.0, %v1901
      %1903 = vmatmul.f32.gmra.mxu0 %v1840
      %v1904 = vpop.f32.mrf.mxu0
      %v1905 = vadd.f32 0.0, %v1904
      %1906 = vmatmul.f32.gmra.mxu0 %v1843
      %v1907 = vpop.f32.mrf.mxu0
      %v1908 = vadd.f32 0.0, %v1907
      %1909 = vmatmul.f32.gmra.mxu0 %v1846
      %v1910 = vpop.f32.mrf.mxu0
      %v1911 = vadd.f32 0.0, %v1910
      %1912 = vmatmul.f32.gmra.mxu0 %v1849
      %v1913 = vpop.f32.mrf.mxu0
      %v1914 = vadd.f32 0.0, %v1913
      %1915 = vmatmul.f32.gmra.mxu0 %v1852
      %v1916 = vpop.f32.mrf.mxu0
      %v1917 = vadd.f32 0.0, %v1916
      %1918 = vmatmul.f32.gmra.mxu0 %v1855
      %v1919 = vpop.f32.mrf.mxu0
      %v1920 = vadd.f32 0.0, %v1919
      %1921 = vmatmul.f32.gmra.mxu0 %v1858
      %v1922 = vpop.f32.mrf.mxu0
      %v1923 = vadd.f32 0.0, %v1922
      %1924 = vmatmul.f32.gmra.mxu0 %v1861
      %v1925 = vpop.f32.mrf.mxu0
      %v1926 = vadd.f32 0.0, %v1925
      %1927 = vmatmul.f32.gmra.mxu0 %v1864
      %v1928 = vpop.f32.mrf.mxu0
      %v1929 = vadd.f32 0.0, %v1928
      %1930 = vmatmul.f32.gmra.mxu0 %v1867
      %v1931 = vpop.f32.mrf.mxu0
      %v1932 = vadd.f32 0.0, %v1931
      %1933 = vdwg.mxu0
      %v1935 = vsel %vm624, %v1191, 0
      %v1938 = vsel %vm624, %v1194, 0
      %v1941 = vsel %vm624, %v1197, 0
      %v1944 = vsel %vm624, %v1200, 0
      %v1947 = vsel %vm624, %v1203, 0
      %v1950 = vsel %vm624, %v1206, 0
      %v1953 = vsel %vm624, %v1209, 0
      %v1956 = vsel %vm624, %v1212, 0
      %v1959 = vsel %vm624, %v1215, 0
      %v1962 = vsel %vm624, %v1218, 0
      %v1965 = vsel %vm624, %v1221, 0
      %v1968 = vsel %vm624, %v1224, 0
      %v1971 = vsel %vm624, %v1227, 0
      %v1974 = vsel %vm624, %v1230, 0
      %v1977 = vsel %vm624, %v1233, 0
      %v1980 = vsel %vm624, %v1236, 0
      %1982 = vmatpush.msra.mxu0 0.0
      %1983 = vmatpush.msra.mxu0 0.0
      %1984 = vmatpush.msra.mxu0 0.0
      %1985 = vmatpush.msra.mxu0 0.0
      %1986 = vmatpush.msra.mxu0 0.0
      %1987 = vmatpush.msra.mxu0 0.0
      %1988 = vmatpush.msra.mxu0 0.0
      %1989 = vmatpush.msra.mxu0 0.0
      %1990 = vmatpush.msra.mxu0 0.0
      %1991 = vmatpush.msra.mxu0 0.0
      %1992 = vmatpush.msra.mxu0 0.0
      %1993 = vmatpush.msra.mxu0 0.0
      %1994 = vmatpush.msra.mxu0 %v621
      %1995 = vmatpush.msra.mxu0 %v620
      %1996 = vmatpush.msra.mxu0 %v619
      %1997 = vmatpush.msra.mxu0 %v618
      %1998 = vmatmul.f32.gmra.mxu0 %v1935
      %v1999 = vpop.f32.mrf.mxu0
      %v2000 = vadd.f32 %v1887, %v1999
      %2001 = vmatmul.f32.gmra.mxu0 %v1938
      %v2002 = vpop.f32.mrf.mxu0
      %v2003 = vadd.f32 %v1890, %v2002
      %2004 = vmatmul.f32.gmra.mxu0 %v1941
      %v2005 = vpop.f32.mrf.mxu0
      %v2006 = vadd.f32 %v1893, %v2005
      %2007 = vmatmul.f32.gmra.mxu0 %v1944
      %v2008 = vpop.f32.mrf.mxu0
      %v2009 = vadd.f32 %v1896, %v2008
      %2010 = vmatmul.f32.gmra.mxu0 %v1947
      %v2011 = vpop.f32.mrf.mxu0
      %v2012 = vadd.f32 %v1899, %v2011
      %2013 = vmatmul.f32.gmra.mxu0 %v1950
      %v2014 = vpop.f32.mrf.mxu0
      %v2015 = vadd.f32 %v1902, %v2014
      %2016 = vmatmul.f32.gmra.mxu0 %v1953
      %v2017 = vpop.f32.mrf.mxu0
      %v2018 = vadd.f32 %v1905, %v2017
      %2019 = vmatmul.f32.gmra.mxu0 %v1956
      %v2020 = vpop.f32.mrf.mxu0
      %v2021 = vadd.f32 %v1908, %v2020
      %2022 = vmatmul.f32.gmra.mxu0 %v1959
      %v2023 = vpop.f32.mrf.mxu0
      %v2024 = vadd.f32 %v1911, %v2023
      %2025 = vmatmul.f32.gmra.mxu0 %v1962
      %v2026 = vpop.f32.mrf.mxu0
      %v2027 = vadd.f32 %v1914, %v2026
      %2028 = vmatmul.f32.gmra.mxu0 %v1965
      %v2029 = vpop.f32.mrf.mxu0
      %v2030 = vadd.f32 %v1917, %v2029
      %2031 = vmatmul.f32.gmra.mxu0 %v1968
      %v2032 = vpop.f32.mrf.mxu0
      %v2033 = vadd.f32 %v1920, %v2032
      %2034 = vmatmul.f32.gmra.mxu0 %v1971
      %v2035 = vpop.f32.mrf.mxu0
      %v2036 = vadd.f32 %v1923, %v2035
      %2037 = vmatmul.f32.gmra.mxu0 %v1974
      %v2038 = vpop.f32.mrf.mxu0
      %v2039 = vadd.f32 %v1926, %v2038
      %2040 = vmatmul.f32.gmra.mxu0 %v1977
      %v2041 = vpop.f32.mrf.mxu0
      %v2042 = vadd.f32 %v1929, %v2041
      %2043 = vmatmul.f32.gmra.mxu0 %v1980
      %v2044 = vpop.f32.mrf.mxu0
      %v2045 = vadd.f32 %v1932, %v2044
      %2046 = vdwg.mxu0
      %v2047 = vld [vmem:[%s3 + $0x108] sm:$0xff]
      %v2048 = vld [vmem:[%s3 + $0x110] sm:$0xff]
      %v2049 = vld [vmem:[%s3 + $0x118] sm:$0xff]
      %v2050 = vld [vmem:[%s3 + $0x120] sm:$0xff]
      %v2051 = vld [vmem:[%s3 + $0x128] sm:$0xff]
      %v2052 = vld [vmem:[%s3 + $0x130] sm:$0xff]
      %v2053 = vld [vmem:[%s3 + $0x138] sm:$0xff]
      %v2054 = vld [vmem:[%s3 + $0x140] sm:$0xff]
      %v2055 = vld [vmem:[%s3 + $0x148] sm:$0xff]
      %v2056 = vld [vmem:[%s3 + $0x150] sm:$0xff]
      %v2057 = vld [vmem:[%s3 + $0x158] sm:$0xff]
      %v2058 = vld [vmem:[%s3 + $0x160] sm:$0xff]
      %v2059 = vld [vmem:[%s3 + $0x168] sm:$0xff]
      %v2060 = vld [vmem:[%s3 + $0x170] sm:$0xff]
      %v2061 = vld [vmem:[%s3 + $0x178] sm:$0xff]
      %v2062 = vld [vmem:[%s3 + $0x180] sm:$0xff]
      %v2063 = vld [vmem:[%s6 + $0x3] sm:$0x1]
      %v2064 = vperm.slane %v2063, 0
      %2065 = vmatpush.msra.mxu0 0.0
      %2066 = vmatpush.msra.mxu0 0.0
      %2067 = vmatpush.msra.mxu0 0.0
      %2068 = vmatpush.msra.mxu0 0.0
      %2069 = vmatpush.msra.mxu0 0.0
      %2070 = vmatpush.msra.mxu0 0.0
      %2071 = vmatpush.msra.mxu0 0.0
      %2072 = vmatpush.msra.mxu0 0.0
      %2073 = vmatpush.msra.mxu0 0.0
      %2074 = vmatpush.msra.mxu0 0.0
      %2075 = vmatpush.msra.mxu0 0.0
      %2076 = vmatpush.msra.mxu0 0.0
      %2077 = vmatpush.msra.mxu0 %v2050
      %2078 = vmatpush.msra.mxu0 %v2049
      %2079 = vmatpush.msra.mxu0 %v2048
      %2080 = vmatpush.msra.mxu0 %v2047
      %2081 = vmatmul.f32.gmra.mxu0 %v626
      %v2082 = vpop.f32.mrf.mxu0
      %v2083 = vadd.f32 %v2064, %v2082
      %2084 = vmatmul.f32.gmra.mxu0 %v629
      %v2085 = vpop.f32.mrf.mxu0
      %v2086 = vadd.f32 %v2064, %v2085
      %2087 = vmatmul.f32.gmra.mxu0 %v632
      %v2088 = vpop.f32.mrf.mxu0
      %v2089 = vadd.f32 %v2064, %v2088
      %2090 = vmatmul.f32.gmra.mxu0 %v635
      %v2091 = vpop.f32.mrf.mxu0
      %v2092 = vadd.f32 %v2064, %v2091
      %2093 = vmatmul.f32.gmra.mxu0 %v638
      %v2094 = vpop.f32.mrf.mxu0
      %v2095 = vadd.f32 %v2064, %v2094
      %2096 = vmatmul.f32.gmra.mxu0 %v641
      %v2097 = vpop.f32.mrf.mxu0
      %v2098 = vadd.f32 %v2064, %v2097
      %2099 = vmatmul.f32.gmra.mxu0 %v644
      %v2100 = vpop.f32.mrf.mxu0
      %v2101 = vadd.f32 %v2064, %v2100
      %2102 = vmatmul.f32.gmra.mxu0 %v647
      %v2103 = vpop.f32.mrf.mxu0
      %v2104 = vadd.f32 %v2064, %v2103
      %2105 = vmatmul.f32.gmra.mxu0 %v650
      %v2106 = vpop.f32.mrf.mxu0
      %v2107 = vadd.f32 %v2064, %v2106
      %2108 = vmatmul.f32.gmra.mxu0 %v653
      %v2109 = vpop.f32.mrf.mxu0
      %v2110 = vadd.f32 %v2064, %v2109
      %2111 = vmatmul.f32.gmra.mxu0 %v656
      %v2112 = vpop.f32.mrf.mxu0
      %v2113 = vadd.f32 %v2064, %v2112
      %2114 = vmatmul.f32.gmra.mxu0 %v659
      %v2115 = vpop.f32.mrf.mxu0
      %v2116 = vadd.f32 %v2064, %v2115
      %2117 = vmatmul.f32.gmra.mxu0 %v662
      %v2118 = vpop.f32.mrf.mxu0
      %v2119 = vadd.f32 %v2064, %v2118
      %2120 = vmatmul.f32.gmra.mxu0 %v665
      %v2121 = vpop.f32.mrf.mxu0
      %v2122 = vadd.f32 %v2064, %v2121
      %2123 = vmatmul.f32.gmra.mxu0 %v668
      %v2124 = vpop.f32.mrf.mxu0
      %v2125 = vadd.f32 %v2064, %v2124
      %2126 = vmatmul.f32.gmra.mxu0 %v671
      %v2127 = vpop.f32.mrf.mxu0
      %v2128 = vadd.f32 %v2064, %v2127
      %2129 = vdwg.mxu0
      %2130 = vmatpush.msra.mxu0 0.0
      %2131 = vmatpush.msra.mxu0 0.0
      %2132 = vmatpush.msra.mxu0 0.0
      %2133 = vmatpush.msra.mxu0 0.0
      %2134 = vmatpush.msra.mxu0 0.0
      %2135 = vmatpush.msra.mxu0 0.0
      %2136 = vmatpush.msra.mxu0 0.0
      %2137 = vmatpush.msra.mxu0 0.0
      %2138 = vmatpush.msra.mxu0 0.0
      %2139 = vmatpush.msra.mxu0 0.0
      %2140 = vmatpush.msra.mxu0 0.0
      %2141 = vmatpush.msra.mxu0 0.0
      %2142 = vmatpush.msra.mxu0 %v2054
      %2143 = vmatpush.msra.mxu0 %v2053
      %2144 = vmatpush.msra.mxu0 %v2052
      %2145 = vmatpush.msra.mxu0 %v2051
      %2146 = vmatmul.f32.gmra.mxu0 %v626
      %v2147 = vpop.f32.mrf.mxu0
      %v2148 = vadd.f32 0.0, %v2147
      %2149 = vmatmul.f32.gmra.mxu0 %v629
      %v2150 = vpop.f32.mrf.mxu0
      %v2151 = vadd.f32 0.0, %v2150
      %2152 = vmatmul.f32.gmra.mxu0 %v632
      %v2153 = vpop.f32.mrf.mxu0
      %v2154 = vadd.f32 0.0, %v2153
      %2155 = vmatmul.f32.gmra.mxu0 %v635
      %v2156 = vpop.f32.mrf.mxu0
      %v2157 = vadd.f32 0.0, %v2156
      %2158 = vmatmul.f32.gmra.mxu0 %v638
      %v2159 = vpop.f32.mrf.mxu0
      %v2160 = vadd.f32 0.0, %v2159
      %2161 = vmatmul.f32.gmra.mxu0 %v641
      %v2162 = vpop.f32.mrf.mxu0
      %v2163 = vadd.f32 0.0, %v2162
      %2164 = vmatmul.f32.gmra.mxu0 %v644
      %v2165 = vpop.f32.mrf.mxu0
      %v2166 = vadd.f32 0.0, %v2165
      %2167 = vmatmul.f32.gmra.mxu0 %v647
      %v2168 = vpop.f32.mrf.mxu0
      %v2169 = vadd.f32 0.0, %v2168
      %2170 = vmatmul.f32.gmra.mxu0 %v650
      %v2171 = vpop.f32.mrf.mxu0
      %v2172 = vadd.f32 0.0, %v2171
      %2173 = vmatmul.f32.gmra.mxu0 %v653
      %v2174 = vpop.f32.mrf.mxu0
      %v2175 = vadd.f32 0.0, %v2174
      %2176 = vmatmul.f32.gmra.mxu0 %v656
      %v2177 = vpop.f32.mrf.mxu0
      %v2178 = vadd.f32 0.0, %v2177
      %2179 = vmatmul.f32.gmra.mxu0 %v659
      %v2180 = vpop.f32.mrf.mxu0
      %v2181 = vadd.f32 0.0, %v2180
      %2182 = vmatmul.f32.gmra.mxu0 %v662
      %v2183 = vpop.f32.mrf.mxu0
      %v2184 = vadd.f32 0.0, %v2183
      %2185 = vmatmul.f32.gmra.mxu0 %v665
      %v2186 = vpop.f32.mrf.mxu0
      %v2187 = vadd.f32 0.0, %v2186
      %2188 = vmatmul.f32.gmra.mxu0 %v668
      %v2189 = vpop.f32.mrf.mxu0
      %v2190 = vadd.f32 0.0, %v2189
      %2191 = vmatmul.f32.gmra.mxu0 %v671
      %v2192 = vpop.f32.mrf.mxu0
      %v2193 = vadd.f32 0.0, %v2192
      %2194 = vdwg.mxu0
      %2195 = vmatpush.msra.mxu0 0.0
      %2196 = vmatpush.msra.mxu0 0.0
      %2197 = vmatpush.msra.mxu0 0.0
      %2198 = vmatpush.msra.mxu0 0.0
      %2199 = vmatpush.msra.mxu0 0.0
      %2200 = vmatpush.msra.mxu0 0.0
      %2201 = vmatpush.msra.mxu0 0.0
      %2202 = vmatpush.msra.mxu0 0.0
      %2203 = vmatpush.msra.mxu0 0.0
      %2204 = vmatpush.msra.mxu0 0.0
      %2205 = vmatpush.msra.mxu0 0.0
      %2206 = vmatpush.msra.mxu0 0.0
      %2207 = vmatpush.msra.mxu0 %v2058
      %2208 = vmatpush.msra.mxu0 %v2057
      %2209 = vmatpush.msra.mxu0 %v2056
      %2210 = vmatpush.msra.mxu0 %v2055
      %2211 = vmatmul.f32.gmra.mxu0 %v626
      %v2212 = vpop.f32.mrf.mxu0
      %v2213 = vadd.f32 0.0, %v2212
      %2214 = vmatmul.f32.gmra.mxu0 %v629
      %v2215 = vpop.f32.mrf.mxu0
      %v2216 = vadd.f32 0.0, %v2215
      %2217 = vmatmul.f32.gmra.mxu0 %v632
      %v2218 = vpop.f32.mrf.mxu0
      %v2219 = vadd.f32 0.0, %v2218
      %2220 = vmatmul.f32.gmra.mxu0 %v635
      %v2221 = vpop.f32.mrf.mxu0
      %v2222 = vadd.f32 0.0, %v2221
      %2223 = vmatmul.f32.gmra.mxu0 %v638
      %v2224 = vpop.f32.mrf.mxu0
      %v2225 = vadd.f32 0.0, %v2224
      %2226 = vmatmul.f32.gmra.mxu0 %v641
      %v2227 = vpop.f32.mrf.mxu0
      %v2228 = vadd.f32 0.0, %v2227
      %2229 = vmatmul.f32.gmra.mxu0 %v644
      %v2230 = vpop.f32.mrf.mxu0
      %v2231 = vadd.f32 0.0, %v2230
      %2232 = vmatmul.f32.gmra.mxu0 %v647
      %v2233 = vpop.f32.mrf.mxu0
      %v2234 = vadd.f32 0.0, %v2233
      %2235 = vmatmul.f32.gmra.mxu0 %v650
      %v2236 = vpop.f32.mrf.mxu0
      %v2237 = vadd.f32 0.0, %v2236
      %2238 = vmatmul.f32.gmra.mxu0 %v653
      %v2239 = vpop.f32.mrf.mxu0
      %v2240 = vadd.f32 0.0, %v2239
      %2241 = vmatmul.f32.gmra.mxu0 %v656
      %v2242 = vpop.f32.mrf.mxu0
      %v2243 = vadd.f32 0.0, %v2242
      %2244 = vmatmul.f32.gmra.mxu0 %v659
      %v2245 = vpop.f32.mrf.mxu0
      %v2246 = vadd.f32 0.0, %v2245
      %2247 = vmatmul.f32.gmra.mxu0 %v662
      %v2248 = vpop.f32.mrf.mxu0
      %v2249 = vadd.f32 0.0, %v2248
      %2250 = vmatmul.f32.gmra.mxu0 %v665
      %v2251 = vpop.f32.mrf.mxu0
      %v2252 = vadd.f32 0.0, %v2251
      %2253 = vmatmul.f32.gmra.mxu0 %v668
      %v2254 = vpop.f32.mrf.mxu0
      %v2255 = vadd.f32 0.0, %v2254
      %2256 = vmatmul.f32.gmra.mxu0 %v671
      %v2257 = vpop.f32.mrf.mxu0
      %v2258 = vadd.f32 0.0, %v2257
      %2259 = vdwg.mxu0
      %v2261 = vsel %vm624, %v2083, 0
      %v2264 = vsel %vm624, %v2086, 0
      %v2267 = vsel %vm624, %v2089, 0
      %v2270 = vsel %vm624, %v2092, 0
      %v2273 = vsel %vm624, %v2095, 0
      %v2276 = vsel %vm624, %v2098, 0
      %v2279 = vsel %vm624, %v2101, 0
      %v2282 = vsel %vm624, %v2104, 0
      %v2285 = vsel %vm624, %v2107, 0
      %v2288 = vsel %vm624, %v2110, 0
      %v2291 = vsel %vm624, %v2113, 0
      %v2294 = vsel %vm624, %v2116, 0
      %v2297 = vsel %vm624, %v2119, 0
      %v2300 = vsel %vm624, %v2122, 0
      %v2303 = vsel %vm624, %v2125, 0
      %v2306 = vsel %vm624, %v2128, 0
      %v2309 = vsel %vm624, %v2148, 0
      %v2312 = vsel %vm624, %v2151, 0
      %v2315 = vsel %vm624, %v2154, 0
      %v2318 = vsel %vm624, %v2157, 0
      %v2321 = vsel %vm624, %v2160, 0
      %v2324 = vsel %vm624, %v2163, 0
      %v2327 = vsel %vm624, %v2166, 0
      %v2330 = vsel %vm624, %v2169, 0
      %v2333 = vsel %vm624, %v2172, 0
      %v2336 = vsel %vm624, %v2175, 0
      %v2339 = vsel %vm624, %v2178, 0
      %v2342 = vsel %vm624, %v2181, 0
      %v2345 = vsel %vm624, %v2184, 0
      %v2348 = vsel %vm624, %v2187, 0
      %v2351 = vsel %vm624, %v2190, 0
      %v2354 = vsel %vm624, %v2193, 0
      %2356 = vmatpush.xpose.msra.mxu0 %v2354
      %2357 = vmatpush.xpose.msra.mxu0 %v2351
      %2358 = vmatpush.xpose.msra.mxu0 %v2348
      %2359 = vmatpush.xpose.msra.mxu0 %v2345
      %2360 = vmatpush.xpose.msra.mxu0 %v2342
      %2361 = vmatpush.xpose.msra.mxu0 %v2339
      %2362 = vmatpush.xpose.msra.mxu0 %v2336
      %2363 = vmatpush.xpose.msra.mxu0 %v2333
      %2364 = vmatpush.xpose.msra.mxu0 %v2330
      %2365 = vmatpush.xpose.msra.mxu0 %v2327
      %2366 = vmatpush.xpose.msra.mxu0 %v2324
      %2367 = vmatpush.xpose.msra.mxu0 %v2321
      %2368 = vmatpush.xpose.msra.mxu0 %v2318
      %2369 = vmatpush.xpose.msra.mxu0 %v2315
      %2370 = vmatpush.xpose.msra.mxu0 %v2312
      %2371 = vmatpush.xpose.msra.mxu0 %v2309
      %2372 = vmatmul.f32.gmra.mxu0 %v2261
      %v2373 = vpop.f32.mrf.mxu0
      %v2374 = vadd.f32 %v409, %v2373
      %2375 = vmatmul.f32.gmra.mxu0 %v2264
      %v2376 = vpop.f32.mrf.mxu0
      %v2377 = vadd.f32 %v410, %v2376
      %2378 = vmatmul.f32.gmra.mxu0 %v2267
      %v2379 = vpop.f32.mrf.mxu0
      %v2380 = vadd.f32 %v411, %v2379
      %2381 = vmatmul.f32.gmra.mxu0 %v2270
      %v2382 = vpop.f32.mrf.mxu0
      %v2383 = vadd.f32 %v412, %v2382
      %2384 = vmatmul.f32.gmra.mxu0 %v2273
      %v2385 = vpop.f32.mrf.mxu0
      %v2386 = vadd.f32 %v413, %v2385
      %2387 = vmatmul.f32.gmra.mxu0 %v2276
      %v2388 = vpop.f32.mrf.mxu0
      %v2389 = vadd.f32 %v414, %v2388
      %2390 = vmatmul.f32.gmra.mxu0 %v2279
      %v2391 = vpop.f32.mrf.mxu0
      %v2392 = vadd.f32 %v415, %v2391
      %2393 = vmatmul.f32.gmra.mxu0 %v2282
      %v2394 = vpop.f32.mrf.mxu0
      %v2395 = vadd.f32 %v416, %v2394
      %2396 = vmatmul.f32.gmra.mxu0 %v2285
      %v2397 = vpop.f32.mrf.mxu0
      %v2398 = vadd.f32 %v417, %v2397
      %2399 = vmatmul.f32.gmra.mxu0 %v2288
      %v2400 = vpop.f32.mrf.mxu0
      %v2401 = vadd.f32 %v418, %v2400
      %2402 = vmatmul.f32.gmra.mxu0 %v2291
      %v2403 = vpop.f32.mrf.mxu0
      %v2404 = vadd.f32 %v419, %v2403
      %2405 = vmatmul.f32.gmra.mxu0 %v2294
      %v2406 = vpop.f32.mrf.mxu0
      %v2407 = vadd.f32 %v420, %v2406
      %2408 = vmatmul.f32.gmra.mxu0 %v2297
      %v2409 = vpop.f32.mrf.mxu0
      %v2410 = vadd.f32 %v421, %v2409
      %2411 = vmatmul.f32.gmra.mxu0 %v2300
      %v2412 = vpop.f32.mrf.mxu0
      %v2413 = vadd.f32 %v422, %v2412
      %2414 = vmatmul.f32.gmra.mxu0 %v2303
      %v2415 = vpop.f32.mrf.mxu0
      %v2416 = vadd.f32 %v423, %v2415
      %2417 = vmatmul.f32.gmra.mxu0 %v2306
      %v2418 = vpop.f32.mrf.mxu0
      %v2419 = vadd.f32 %v424, %v2418
      %2420 = vdwg.mxu0
      %2421 = vmax.xlane.f32.xlu0 %v2374
      %v2422 = vpop.xlane.xlu0 %2421
      %2423 = vmax.xlane.f32.xlu0 %v2377
      %v2424 = vpop.xlane.xlu0 %2423
      %2425 = vmax.xlane.f32.xlu0 %v2380
      %v2426 = vpop.xlane.xlu0 %2425
      %2427 = vmax.xlane.f32.xlu0 %v2383
      %v2428 = vpop.xlane.xlu0 %2427
      %2429 = vmax.xlane.f32.xlu0 %v2386
      %v2430 = vpop.xlane.xlu0 %2429
      %2431 = vmax.xlane.f32.xlu0 %v2389
      %v2432 = vpop.xlane.xlu0 %2431
      %2433 = vmax.xlane.f32.xlu0 %v2392
      %v2434 = vpop.xlane.xlu0 %2433
      %2435 = vmax.xlane.f32.xlu0 %v2395
      %v2436 = vpop.xlane.xlu0 %2435
      %2437 = vmax.xlane.f32.xlu0 %v2398
      %v2438 = vpop.xlane.xlu0 %2437
      %2439 = vmax.xlane.f32.xlu0 %v2401
      %v2440 = vpop.xlane.xlu0 %2439
      %2441 = vmax.xlane.f32.xlu0 %v2404
      %v2442 = vpop.xlane.xlu0 %2441
      %2443 = vmax.xlane.f32.xlu0 %v2407
      %v2444 = vpop.xlane.xlu0 %2443
      %2445 = vmax.xlane.f32.xlu0 %v2410
      %v2446 = vpop.xlane.xlu0 %2445
      %2447 = vmax.xlane.f32.xlu0 %v2413
      %v2448 = vpop.xlane.xlu0 %2447
      %2449 = vmax.xlane.f32.xlu0 %v2416
      %v2450 = vpop.xlane.xlu0 %2449
      %2451 = vmax.xlane.f32.xlu0 %v2419
      %v2452 = vpop.xlane.xlu0 %2451
      %v2453 = vsub.f32 %v2374, %v2422
      %v2454 = vsub.f32 %v2377, %v2424
      %v2455 = vsub.f32 %v2380, %v2426
      %v2456 = vsub.f32 %v2383, %v2428
      %v2457 = vsub.f32 %v2386, %v2430
      %v2458 = vsub.f32 %v2389, %v2432
      %v2459 = vsub.f32 %v2392, %v2434
      %v2460 = vsub.f32 %v2395, %v2436
      %v2461 = vsub.f32 %v2398, %v2438
      %v2462 = vsub.f32 %v2401, %v2440
      %v2463 = vsub.f32 %v2404, %v2442
      %v2464 = vsub.f32 %v2407, %v2444
      %v2465 = vsub.f32 %v2410, %v2446
      %v2466 = vsub.f32 %v2413, %v2448
      %v2467 = vsub.f32 %v2416, %v2450
      %v2468 = vsub.f32 %v2419, %v2452
      %v2469 = vmul.f32 %v2453, 1.442695
      %v2470 = vpow.pop %v2469
      %v2471 = vmul.f32 %v2454, 1.442695
      %v2472 = vpow.pop %v2471
      %v2473 = vmul.f32 %v2455, 1.442695
      %v2474 = vpow.pop %v2473
      %v2475 = vmul.f32 %v2456, 1.442695
      %v2476 = vpow.pop %v2475
      %v2477 = vmul.f32 %v2457, 1.442695
      %v2478 = vpow.pop %v2477
      %v2479 = vmul.f32 %v2458, 1.442695
      %v2480 = vpow.pop %v2479
      %v2481 = vmul.f32 %v2459, 1.442695
      %v2482 = vpow.pop %v2481
      %v2483 = vmul.f32 %v2460, 1.442695
      %v2484 = vpow.pop %v2483
      %v2485 = vmul.f32 %v2461, 1.442695
      %v2486 = vpow.pop %v2485
      %v2487 = vmul.f32 %v2462, 1.442695
      %v2488 = vpow.pop %v2487
      %v2489 = vmul.f32 %v2463, 1.442695
      %v2490 = vpow.pop %v2489
      %v2491 = vmul.f32 %v2464, 1.442695
      %v2492 = vpow.pop %v2491
      %v2493 = vmul.f32 %v2465, 1.442695
      %v2494 = vpow.pop %v2493
      %v2495 = vmul.f32 %v2466, 1.442695
      %v2496 = vpow.pop %v2495
      %v2497 = vmul.f32 %v2467, 1.442695
      %v2498 = vpow.pop %v2497
      %v2499 = vmul.f32 %v2468, 1.442695
      %v2500 = vpow.pop %v2499
      %2501 = vadd.xlane.f32.xlu0 %v2470
      %v2502 = vpop.xlane.xlu0 %2501
      %2503 = vadd.xlane.f32.xlu0 %v2472
      %v2504 = vpop.xlane.xlu0 %2503
      %2505 = vadd.xlane.f32.xlu0 %v2474
      %v2506 = vpop.xlane.xlu0 %2505
      %2507 = vadd.xlane.f32.xlu0 %v2476
      %v2508 = vpop.xlane.xlu0 %2507
      %2509 = vadd.xlane.f32.xlu0 %v2478
      %v2510 = vpop.xlane.xlu0 %2509
      %2511 = vadd.xlane.f32.xlu0 %v2480
      %v2512 = vpop.xlane.xlu0 %2511
      %2513 = vadd.xlane.f32.xlu0 %v2482
      %v2514 = vpop.xlane.xlu0 %2513
      %2515 = vadd.xlane.f32.xlu0 %v2484
      %v2516 = vpop.xlane.xlu0 %2515
      %2517 = vadd.xlane.f32.xlu0 %v2486
      %v2518 = vpop.xlane.xlu0 %2517
      %2519 = vadd.xlane.f32.xlu0 %v2488
      %v2520 = vpop.xlane.xlu0 %2519
      %2521 = vadd.xlane.f32.xlu0 %v2490
      %v2522 = vpop.xlane.xlu0 %2521
      %2523 = vadd.xlane.f32.xlu0 %v2492
      %v2524 = vpop.xlane.xlu0 %2523
      %2525 = vadd.xlane.f32.xlu0 %v2494
      %v2526 = vpop.xlane.xlu0 %2525
      %2527 = vadd.xlane.f32.xlu0 %v2496
      %v2528 = vpop.xlane.xlu0 %2527
      %2529 = vadd.xlane.f32.xlu0 %v2498
      %v2530 = vpop.xlane.xlu0 %2529
      %2531 = vadd.xlane.f32.xlu0 %v2500
      %v2532 = vpop.xlane.xlu0 %2531
      %v2533 = vrcp.pop %v2502
      %v2534 = vrcp.pop %v2504
      %v2535 = vrcp.pop %v2506
      %v2536 = vrcp.pop %v2508
      %v2537 = vrcp.pop %v2510
      %v2538 = vrcp.pop %v2512
      %v2539 = vrcp.pop %v2514
      %v2540 = vrcp.pop %v2516
      %v2541 = vrcp.pop %v2518
      %v2542 = vrcp.pop %v2520
      %v2543 = vrcp.pop %v2522
      %v2544 = vrcp.pop %v2524
      %v2545 = vrcp.pop %v2526
      %v2546 = vrcp.pop %v2528
      %v2547 = vrcp.pop %v2530
      %v2548 = vrcp.pop %v2532
      %v2549 = vmul.f32 %v2470, %v2533
      %v2550 = vmul.f32 %v2472, %v2534
      %v2551 = vmul.f32 %v2474, %v2535
      %v2552 = vmul.f32 %v2476, %v2536
      %v2553 = vmul.f32 %v2478, %v2537
      %v2554 = vmul.f32 %v2480, %v2538
      %v2555 = vmul.f32 %v2482, %v2539
      %v2556 = vmul.f32 %v2484, %v2540
      %v2557 = vmul.f32 %v2486, %v2541
      %v2558 = vmul.f32 %v2488, %v2542
      %v2559 = vmul.f32 %v2490, %v2543
      %v2560 = vmul.f32 %v2492, %v2544
      %v2561 = vmul.f32 %v2494, %v2545
      %v2562 = vmul.f32 %v2496, %v2546
      %v2563 = vmul.f32 %v2498, %v2547
      %v2564 = vmul.f32 %v2500, %v2548
      %2565 = vmatpush.msra.mxu0 %v2258
      %2566 = vmatpush.msra.mxu0 %v2255
      %2567 = vmatpush.msra.mxu0 %v2252
      %2568 = vmatpush.msra.mxu0 %v2249
      %2569 = vmatpush.msra.mxu0 %v2246
      %2570 = vmatpush.msra.mxu0 %v2243
      %2571 = vmatpush.msra.mxu0 %v2240
      %2572 = vmatpush.msra.mxu0 %v2237
      %2573 = vmatpush.msra.mxu0 %v2234
      %2574 = vmatpush.msra.mxu0 %v2231
      %2575 = vmatpush.msra.mxu0 %v2228
      %2576 = vmatpush.msra.mxu0 %v2225
      %2577 = vmatpush.msra.mxu0 %v2222
      %2578 = vmatpush.msra.mxu0 %v2219
      %2579 = vmatpush.msra.mxu0 %v2216
      %2580 = vmatpush.msra.mxu0 %v2213
      %2581 = vmatmul.f32.gmra.mxu0 %v2549
      %v2582 = vpop.f32.mrf.mxu0
      %v2583 = vadd.f32 0.0, %v2582
      %2584 = vmatmul.f32.gmra.mxu0 %v2550
      %v2585 = vpop.f32.mrf.mxu0
      %v2586 = vadd.f32 0.0, %v2585
      %2587 = vmatmul.f32.gmra.mxu0 %v2551
      %v2588 = vpop.f32.mrf.mxu0
      %v2589 = vadd.f32 0.0, %v2588
      %2590 = vmatmul.f32.gmra.mxu0 %v2552
      %v2591 = vpop.f32.mrf.mxu0
      %v2592 = vadd.f32 0.0, %v2591
      %2593 = vmatmul.f32.gmra.mxu0 %v2553
      %v2594 = vpop.f32.mrf.mxu0
      %v2595 = vadd.f32 0.0, %v2594
      %2596 = vmatmul.f32.gmra.mxu0 %v2554
      %v2597 = vpop.f32.mrf.mxu0
      %v2598 = vadd.f32 0.0, %v2597
      %2599 = vmatmul.f32.gmra.mxu0 %v2555
      %v2600 = vpop.f32.mrf.mxu0
      %v2601 = vadd.f32 0.0, %v2600
      %2602 = vmatmul.f32.gmra.mxu0 %v2556
      %v2603 = vpop.f32.mrf.mxu0
      %v2604 = vadd.f32 0.0, %v2603
      %2605 = vmatmul.f32.gmra.mxu0 %v2557
      %v2606 = vpop.f32.mrf.mxu0
      %v2607 = vadd.f32 0.0, %v2606
      %2608 = vmatmul.f32.gmra.mxu0 %v2558
      %v2609 = vpop.f32.mrf.mxu0
      %v2610 = vadd.f32 0.0, %v2609
      %2611 = vmatmul.f32.gmra.mxu0 %v2559
      %v2612 = vpop.f32.mrf.mxu0
      %v2613 = vadd.f32 0.0, %v2612
      %2614 = vmatmul.f32.gmra.mxu0 %v2560
      %v2615 = vpop.f32.mrf.mxu0
      %v2616 = vadd.f32 0.0, %v2615
      %2617 = vmatmul.f32.gmra.mxu0 %v2561
      %v2618 = vpop.f32.mrf.mxu0
      %v2619 = vadd.f32 0.0, %v2618
      %2620 = vmatmul.f32.gmra.mxu0 %v2562
      %v2621 = vpop.f32.mrf.mxu0
      %v2622 = vadd.f32 0.0, %v2621
      %2623 = vmatmul.f32.gmra.mxu0 %v2563
      %v2624 = vpop.f32.mrf.mxu0
      %v2625 = vadd.f32 0.0, %v2624
      %2626 = vmatmul.f32.gmra.mxu0 %v2564
      %v2627 = vpop.f32.mrf.mxu0
      %v2628 = vadd.f32 0.0, %v2627
      %2629 = vdwg.mxu0
      %v2631 = vsel %vm624, %v2583, 0
      %v2634 = vsel %vm624, %v2586, 0
      %v2637 = vsel %vm624, %v2589, 0
      %v2640 = vsel %vm624, %v2592, 0
      %v2643 = vsel %vm624, %v2595, 0
      %v2646 = vsel %vm624, %v2598, 0
      %v2649 = vsel %vm624, %v2601, 0
      %v2652 = vsel %vm624, %v2604, 0
      %v2655 = vsel %vm624, %v2607, 0
      %v2658 = vsel %vm624, %v2610, 0
      %v2661 = vsel %vm624, %v2613, 0
      %v2664 = vsel %vm624, %v2616, 0
      %v2667 = vsel %vm624, %v2619, 0
      %v2670 = vsel %vm624, %v2622, 0
      %v2673 = vsel %vm624, %v2625, 0
      %v2676 = vsel %vm624, %v2628, 0
      %2678 = vmatpush.msra.mxu0 0.0
      %2679 = vmatpush.msra.mxu0 0.0
      %2680 = vmatpush.msra.mxu0 0.0
      %2681 = vmatpush.msra.mxu0 0.0
      %2682 = vmatpush.msra.mxu0 0.0
      %2683 = vmatpush.msra.mxu0 0.0
      %2684 = vmatpush.msra.mxu0 0.0
      %2685 = vmatpush.msra.mxu0 0.0
      %2686 = vmatpush.msra.mxu0 0.0
      %2687 = vmatpush.msra.mxu0 0.0
      %2688 = vmatpush.msra.mxu0 0.0
      %2689 = vmatpush.msra.mxu0 0.0
      %2690 = vmatpush.msra.mxu0 %v2062
      %2691 = vmatpush.msra.mxu0 %v2061
      %2692 = vmatpush.msra.mxu0 %v2060
      %2693 = vmatpush.msra.mxu0 %v2059
      %2694 = vmatmul.f32.gmra.mxu0 %v2631
      %v2695 = vpop.f32.mrf.mxu0
      %v2696 = vadd.f32 0.0, %v2695
      %2697 = vmatmul.f32.gmra.mxu0 %v2634
      %v2698 = vpop.f32.mrf.mxu0
      %v2699 = vadd.f32 0.0, %v2698
      %2700 = vmatmul.f32.gmra.mxu0 %v2637
      %v2701 = vpop.f32.mrf.mxu0
      %v2702 = vadd.f32 0.0, %v2701
      %2703 = vmatmul.f32.gmra.mxu0 %v2640
      %v2704 = vpop.f32.mrf.mxu0
      %v2705 = vadd.f32 0.0, %v2704
      %2706 = vmatmul.f32.gmra.mxu0 %v2643
      %v2707 = vpop.f32.mrf.mxu0
      %v2708 = vadd.f32 0.0, %v2707
      %2709 = vmatmul.f32.gmra.mxu0 %v2646
      %v2710 = vpop.f32.mrf.mxu0
      %v2711 = vadd.f32 0.0, %v2710
      %2712 = vmatmul.f32.gmra.mxu0 %v2649
      %v2713 = vpop.f32.mrf.mxu0
      %v2714 = vadd.f32 0.0, %v2713
      %2715 = vmatmul.f32.gmra.mxu0 %v2652
      %v2716 = vpop.f32.mrf.mxu0
      %v2717 = vadd.f32 0.0, %v2716
      %2718 = vmatmul.f32.gmra.mxu0 %v2655
      %v2719 = vpop.f32.mrf.mxu0
      %v2720 = vadd.f32 0.0, %v2719
      %2721 = vmatmul.f32.gmra.mxu0 %v2658
      %v2722 = vpop.f32.mrf.mxu0
      %v2723 = vadd.f32 0.0, %v2722
      %2724 = vmatmul.f32.gmra.mxu0 %v2661
      %v2725 = vpop.f32.mrf.mxu0
      %v2726 = vadd.f32 0.0, %v2725
      %2727 = vmatmul.f32.gmra.mxu0 %v2664
      %v2728 = vpop.f32.mrf.mxu0
      %v2729 = vadd.f32 0.0, %v2728
      %2730 = vmatmul.f32.gmra.mxu0 %v2667
      %v2731 = vpop.f32.mrf.mxu0
      %v2732 = vadd.f32 0.0, %v2731
      %2733 = vmatmul.f32.gmra.mxu0 %v2670
      %v2734 = vpop.f32.mrf.mxu0
      %v2735 = vadd.f32 0.0, %v2734
      %2736 = vmatmul.f32.gmra.mxu0 %v2673
      %v2737 = vpop.f32.mrf.mxu0
      %v2738 = vadd.f32 0.0, %v2737
      %2739 = vmatmul.f32.gmra.mxu0 %v2676
      %v2740 = vpop.f32.mrf.mxu0
      %v2741 = vadd.f32 0.0, %v2740
      %2742 = vdwg.mxu0
      %v2743 = vadd.f32 %v2000, %v2696
      %v2744 = vadd.f32 %v2003, %v2699
      %v2745 = vadd.f32 %v2006, %v2702
      %v2746 = vadd.f32 %v2009, %v2705
      %v2747 = vadd.f32 %v2012, %v2708
      %v2748 = vadd.f32 %v2015, %v2711
      %v2749 = vadd.f32 %v2018, %v2714
      %v2750 = vadd.f32 %v2021, %v2717
      %v2751 = vadd.f32 %v2024, %v2720
      %v2752 = vadd.f32 %v2027, %v2723
      %v2753 = vadd.f32 %v2030, %v2726
      %v2754 = vadd.f32 %v2033, %v2729
      %v2755 = vadd.f32 %v2036, %v2732
      %v2756 = vadd.f32 %v2039, %v2735
      %v2757 = vadd.f32 %v2042, %v2738
      %v2758 = vadd.f32 %v2045, %v2741
      %v2759 = vld [vmem:[%s3 + $0x188] sm:$0xff]
      %v2760 = vld [vmem:[%s3 + $0x190] sm:$0xff]
      %v2761 = vld [vmem:[%s3 + $0x198] sm:$0xff]
      %v2762 = vld [vmem:[%s3 + $0x1a0] sm:$0xff]
      %v2763 = vld [vmem:[%s3 + $0x1a8] sm:$0xff]
      %v2764 = vld [vmem:[%s3 + $0x1b0] sm:$0xff]
      %v2765 = vld [vmem:[%s3 + $0x1b8] sm:$0xff]
      %v2766 = vld [vmem:[%s3 + $0x1c0] sm:$0xff]
      %v2767 = vld [vmem:[%s3 + $0x1c8] sm:$0xff]
      %v2768 = vld [vmem:[%s3 + $0x1d0] sm:$0xff]
      %v2769 = vld [vmem:[%s3 + $0x1d8] sm:$0xff]
      %v2770 = vld [vmem:[%s3 + $0x1e0] sm:$0xff]
      %v2771 = vld [vmem:[%s3 + $0x1e8] sm:$0xff]
      %v2772 = vld [vmem:[%s3 + $0x1f0] sm:$0xff]
      %v2773 = vld [vmem:[%s3 + $0x1f8] sm:$0xff]
      %v2774 = vld [vmem:[%s3 + $0x200] sm:$0xff]
      %v2775 = vld [vmem:[%s6 + $0x4] sm:$0x1]
      %v2776 = vperm.slane %v2775, 0
      %2777 = vmatpush.msra.mxu0 0.0
      %2778 = vmatpush.msra.mxu0 0.0
      %2779 = vmatpush.msra.mxu0 0.0
      %2780 = vmatpush.msra.mxu0 0.0
      %2781 = vmatpush.msra.mxu0 0.0
      %2782 = vmatpush.msra.mxu0 0.0
      %2783 = vmatpush.msra.mxu0 0.0
      %2784 = vmatpush.msra.mxu0 0.0
      %2785 = vmatpush.msra.mxu0 0.0
      %2786 = vmatpush.msra.mxu0 0.0
      %2787 = vmatpush.msra.mxu0 0.0
      %2788 = vmatpush.msra.mxu0 0.0
      %2789 = vmatpush.msra.mxu0 %v2762
      %2790 = vmatpush.msra.mxu0 %v2761
      %2791 = vmatpush.msra.mxu0 %v2760
      %2792 = vmatpush.msra.mxu0 %v2759
      %2793 = vmatmul.f32.gmra.mxu0 %v626
      %v2794 = vpop.f32.mrf.mxu0
      %v2795 = vadd.f32 %v2776, %v2794
      %2796 = vmatmul.f32.gmra.mxu0 %v629
      %v2797 = vpop.f32.mrf.mxu0
      %v2798 = vadd.f32 %v2776, %v2797
      %2799 = vmatmul.f32.gmra.mxu0 %v632
      %v2800 = vpop.f32.mrf.mxu0
      %v2801 = vadd.f32 %v2776, %v2800
      %2802 = vmatmul.f32.gmra.mxu0 %v635
      %v2803 = vpop.f32.mrf.mxu0
      %v2804 = vadd.f32 %v2776, %v2803
      %2805 = vmatmul.f32.gmra.mxu0 %v638
      %v2806 = vpop.f32.mrf.mxu0
      %v2807 = vadd.f32 %v2776, %v2806
      %2808 = vmatmul.f32.gmra.mxu0 %v641
      %v2809 = vpop.f32.mrf.mxu0
      %v2810 = vadd.f32 %v2776, %v2809
      %2811 = vmatmul.f32.gmra.mxu0 %v644
      %v2812 = vpop.f32.mrf.mxu0
      %v2813 = vadd.f32 %v2776, %v2812
      %2814 = vmatmul.f32.gmra.mxu0 %v647
      %v2815 = vpop.f32.mrf.mxu0
      %v2816 = vadd.f32 %v2776, %v2815
      %2817 = vmatmul.f32.gmra.mxu0 %v650
      %v2818 = vpop.f32.mrf.mxu0
      %v2819 = vadd.f32 %v2776, %v2818
      %2820 = vmatmul.f32.gmra.mxu0 %v653
      %v2821 = vpop.f32.mrf.mxu0
      %v2822 = vadd.f32 %v2776, %v2821
      %2823 = vmatmul.f32.gmra.mxu0 %v656
      %v2824 = vpop.f32.mrf.mxu0
      %v2825 = vadd.f32 %v2776, %v2824
      %2826 = vmatmul.f32.gmra.mxu0 %v659
      %v2827 = vpop.f32.mrf.mxu0
      %v2828 = vadd.f32 %v2776, %v2827
      %2829 = vmatmul.f32.gmra.mxu0 %v662
      %v2830 = vpop.f32.mrf.mxu0
      %v2831 = vadd.f32 %v2776, %v2830
      %2832 = vmatmul.f32.gmra.mxu0 %v665
      %v2833 = vpop.f32.mrf.mxu0
      %v2834 = vadd.f32 %v2776, %v2833
      %2835 = vmatmul.f32.gmra.mxu0 %v668
      %v2836 = vpop.f32.mrf.mxu0
      %v2837 = vadd.f32 %v2776, %v2836
      %2838 = vmatmul.f32.gmra.mxu0 %v671
      %v2839 = vpop.f32.mrf.mxu0
      %v2840 = vadd.f32 %v2776, %v2839
      %2841 = vdwg.mxu0
      %2842 = vmatpush.msra.mxu0 0.0
      %2843 = vmatpush.msra.mxu0 0.0
      %2844 = vmatpush.msra.mxu0 0.0
      %2845 = vmatpush.msra.mxu0 0.0
      %2846 = vmatpush.msra.mxu0 0.0
      %2847 = vmatpush.msra.mxu0 0.0
      %2848 = vmatpush.msra.mxu0 0.0
      %2849 = vmatpush.msra.mxu0 0.0
      %2850 = vmatpush.msra.mxu0 0.0
      %2851 = vmatpush.msra.mxu0 0.0
      %2852 = vmatpush.msra.mxu0 0.0
      %2853 = vmatpush.msra.mxu0 0.0
      %2854 = vmatpush.msra.mxu0 %v2766
      %2855 = vmatpush.msra.mxu0 %v2765
      %2856 = vmatpush.msra.mxu0 %v2764
      %2857 = vmatpush.msra.mxu0 %v2763
      %2858 = vmatmul.f32.gmra.mxu0 %v626
      %v2859 = vpop.f32.mrf.mxu0
      %v2860 = vadd.f32 0.0, %v2859
      %2861 = vmatmul.f32.gmra.mxu0 %v629
      %v2862 = vpop.f32.mrf.mxu0
      %v2863 = vadd.f32 0.0, %v2862
      %2864 = vmatmul.f32.gmra.mxu0 %v632
      %v2865 = vpop.f32.mrf.mxu0
      %v2866 = vadd.f32 0.0, %v2865
      %2867 = vmatmul.f32.gmra.mxu0 %v635
      %v2868 = vpop.f32.mrf.mxu0
      %v2869 = vadd.f32 0.0, %v2868
      %2870 = vmatmul.f32.gmra.mxu0 %v638
      %v2871 = vpop.f32.mrf.mxu0
      %v2872 = vadd.f32 0.0, %v2871
      %2873 = vmatmul.f32.gmra.mxu0 %v641
      %v2874 = vpop.f32.mrf.mxu0
      %v2875 = vadd.f32 0.0, %v2874
      %2876 = vmatmul.f32.gmra.mxu0 %v644
      %v2877 = vpop.f32.mrf.mxu0
      %v2878 = vadd.f32 0.0, %v2877
      %2879 = vmatmul.f32.gmra.mxu0 %v647
      %v2880 = vpop.f32.mrf.mxu0
      %v2881 = vadd.f32 0.0, %v2880
      %2882 = vmatmul.f32.gmra.mxu0 %v650
      %v2883 = vpop.f32.mrf.mxu0
      %v2884 = vadd.f32 0.0, %v2883
      %2885 = vmatmul.f32.gmra.mxu0 %v653
      %v2886 = vpop.f32.mrf.mxu0
      %v2887 = vadd.f32 0.0, %v2886
      %2888 = vmatmul.f32.gmra.mxu0 %v656
      %v2889 = vpop.f32.mrf.mxu0
      %v2890 = vadd.f32 0.0, %v2889
      %2891 = vmatmul.f32.gmra.mxu0 %v659
      %v2892 = vpop.f32.mrf.mxu0
      %v2893 = vadd.f32 0.0, %v2892
      %2894 = vmatmul.f32.gmra.mxu0 %v662
      %v2895 = vpop.f32.mrf.mxu0
      %v2896 = vadd.f32 0.0, %v2895
      %2897 = vmatmul.f32.gmra.mxu0 %v665
      %v2898 = vpop.f32.mrf.mxu0
      %v2899 = vadd.f32 0.0, %v2898
      %2900 = vmatmul.f32.gmra.mxu0 %v668
      %v2901 = vpop.f32.mrf.mxu0
      %v2902 = vadd.f32 0.0, %v2901
      %2903 = vmatmul.f32.gmra.mxu0 %v671
      %v2904 = vpop.f32.mrf.mxu0
      %v2905 = vadd.f32 0.0, %v2904
      %2906 = vdwg.mxu0
      %2907 = vmatpush.msra.mxu0 0.0
      %2908 = vmatpush.msra.mxu0 0.0
      %2909 = vmatpush.msra.mxu0 0.0
      %2910 = vmatpush.msra.mxu0 0.0
      %2911 = vmatpush.msra.mxu0 0.0
      %2912 = vmatpush.msra.mxu0 0.0
      %2913 = vmatpush.msra.mxu0 0.0
      %2914 = vmatpush.msra.mxu0 0.0
      %2915 = vmatpush.msra.mxu0 0.0
      %2916 = vmatpush.msra.mxu0 0.0
      %2917 = vmatpush.msra.mxu0 0.0
      %2918 = vmatpush.msra.mxu0 0.0
      %2919 = vmatpush.msra.mxu0 %v2770
      %2920 = vmatpush.msra.mxu0 %v2769
      %2921 = vmatpush.msra.mxu0 %v2768
      %2922 = vmatpush.msra.mxu0 %v2767
      %2923 = vmatmul.f32.gmra.mxu0 %v626
      %v2924 = vpop.f32.mrf.mxu0
      %v2925 = vadd.f32 0.0, %v2924
      %2926 = vmatmul.f32.gmra.mxu0 %v629
      %v2927 = vpop.f32.mrf.mxu0
      %v2928 = vadd.f32 0.0, %v2927
      %2929 = vmatmul.f32.gmra.mxu0 %v632
      %v2930 = vpop.f32.mrf.mxu0
      %v2931 = vadd.f32 0.0, %v2930
      %2932 = vmatmul.f32.gmra.mxu0 %v635
      %v2933 = vpop.f32.mrf.mxu0
      %v2934 = vadd.f32 0.0, %v2933
      %2935 = vmatmul.f32.gmra.mxu0 %v638
      %v2936 = vpop.f32.mrf.mxu0
      %v2937 = vadd.f32 0.0, %v2936
      %2938 = vmatmul.f32.gmra.mxu0 %v641
      %v2939 = vpop.f32.mrf.mxu0
      %v2940 = vadd.f32 0.0, %v2939
      %2941 = vmatmul.f32.gmra.mxu0 %v644
      %v2942 = vpop.f32.mrf.mxu0
      %v2943 = vadd.f32 0.0, %v2942
      %2944 = vmatmul.f32.gmra.mxu0 %v647
      %v2945 = vpop.f32.mrf.mxu0
      %v2946 = vadd.f32 0.0, %v2945
      %2947 = vmatmul.f32.gmra.mxu0 %v650
      %v2948 = vpop.f32.mrf.mxu0
      %v2949 = vadd.f32 0.0, %v2948
      %2950 = vmatmul.f32.gmra.mxu0 %v653
      %v2951 = vpop.f32.mrf.mxu0
      %v2952 = vadd.f32 0.0, %v2951
      %2953 = vmatmul.f32.gmra.mxu0 %v656
      %v2954 = vpop.f32.mrf.mxu0
      %v2955 = vadd.f32 0.0, %v2954
      %2956 = vmatmul.f32.gmra.mxu0 %v659
      %v2957 = vpop.f32.mrf.mxu0
      %v2958 = vadd.f32 0.0, %v2957
      %2959 = vmatmul.f32.gmra.mxu0 %v662
      %v2960 = vpop.f32.mrf.mxu0
      %v2961 = vadd.f32 0.0, %v2960
      %2962 = vmatmul.f32.gmra.mxu0 %v665
      %v2963 = vpop.f32.mrf.mxu0
      %v2964 = vadd.f32 0.0, %v2963
      %2965 = vmatmul.f32.gmra.mxu0 %v668
      %v2966 = vpop.f32.mrf.mxu0
      %v2967 = vadd.f32 0.0, %v2966
      %2968 = vmatmul.f32.gmra.mxu0 %v671
      %v2969 = vpop.f32.mrf.mxu0
      %v2970 = vadd.f32 0.0, %v2969
      %2971 = vdwg.mxu0
      %v2973 = vsel %vm624, %v2795, 0
      %v2976 = vsel %vm624, %v2798, 0
      %v2979 = vsel %vm624, %v2801, 0
      %v2982 = vsel %vm624, %v2804, 0
      %v2985 = vsel %vm624, %v2807, 0
      %v2988 = vsel %vm624, %v2810, 0
      %v2991 = vsel %vm624, %v2813, 0
      %v2994 = vsel %vm624, %v2816, 0
      %v2997 = vsel %vm624, %v2819, 0
      %v3000 = vsel %vm624, %v2822, 0
      %v3003 = vsel %vm624, %v2825, 0
      %v3006 = vsel %vm624, %v2828, 0
      %v3009 = vsel %vm624, %v2831, 0
      %v3012 = vsel %vm624, %v2834, 0
      %v3015 = vsel %vm624, %v2837, 0
      %v3018 = vsel %vm624, %v2840, 0
      %v3021 = vsel %vm624, %v2860, 0
      %v3024 = vsel %vm624, %v2863, 0
      %v3027 = vsel %vm624, %v2866, 0
      %v3030 = vsel %vm624, %v2869, 0
      %v3033 = vsel %vm624, %v2872, 0
      %v3036 = vsel %vm624, %v2875, 0
      %v3039 = vsel %vm624, %v2878, 0
      %v3042 = vsel %vm624, %v2881, 0
      %v3045 = vsel %vm624, %v2884, 0
      %v3048 = vsel %vm624, %v2887, 0
      %v3051 = vsel %vm624, %v2890, 0
      %v3054 = vsel %vm624, %v2893, 0
      %v3057 = vsel %vm624, %v2896, 0
      %v3060 = vsel %vm624, %v2899, 0
      %v3063 = vsel %vm624, %v2902, 0
      %v3066 = vsel %vm624, %v2905, 0
      %3068 = vmatpush.xpose.msra.mxu0 %v3066
      %3069 = vmatpush.xpose.msra.mxu0 %v3063
      %3070 = vmatpush.xpose.msra.mxu0 %v3060
      %3071 = vmatpush.xpose.msra.mxu0 %v3057
      %3072 = vmatpush.xpose.msra.mxu0 %v3054
      %3073 = vmatpush.xpose.msra.mxu0 %v3051
      %3074 = vmatpush.xpose.msra.mxu0 %v3048
      %3075 = vmatpush.xpose.msra.mxu0 %v3045
      %3076 = vmatpush.xpose.msra.mxu0 %v3042
      %3077 = vmatpush.xpose.msra.mxu0 %v3039
      %3078 = vmatpush.xpose.msra.mxu0 %v3036
      %3079 = vmatpush.xpose.msra.mxu0 %v3033
      %3080 = vmatpush.xpose.msra.mxu0 %v3030
      %3081 = vmatpush.xpose.msra.mxu0 %v3027
      %3082 = vmatpush.xpose.msra.mxu0 %v3024
      %3083 = vmatpush.xpose.msra.mxu0 %v3021
      %3084 = vmatmul.f32.gmra.mxu0 %v2973
      %v3085 = vpop.f32.mrf.mxu0
      %v3086 = vadd.f32 %v409, %v3085
      %3087 = vmatmul.f32.gmra.mxu0 %v2976
      %v3088 = vpop.f32.mrf.mxu0
      %v3089 = vadd.f32 %v410, %v3088
      %3090 = vmatmul.f32.gmra.mxu0 %v2979
      %v3091 = vpop.f32.mrf.mxu0
      %v3092 = vadd.f32 %v411, %v3091
      %3093 = vmatmul.f32.gmra.mxu0 %v2982
      %v3094 = vpop.f32.mrf.mxu0
      %v3095 = vadd.f32 %v412, %v3094
      %3096 = vmatmul.f32.gmra.mxu0 %v2985
      %v3097 = vpop.f32.mrf.mxu0
      %v3098 = vadd.f32 %v413, %v3097
      %3099 = vmatmul.f32.gmra.mxu0 %v2988
      %v3100 = vpop.f32.mrf.mxu0
      %v3101 = vadd.f32 %v414, %v3100
      %3102 = vmatmul.f32.gmra.mxu0 %v2991
      %v3103 = vpop.f32.mrf.mxu0
      %v3104 = vadd.f32 %v415, %v3103
      %3105 = vmatmul.f32.gmra.mxu0 %v2994
      %v3106 = vpop.f32.mrf.mxu0
      %v3107 = vadd.f32 %v416, %v3106
      %3108 = vmatmul.f32.gmra.mxu0 %v2997
      %v3109 = vpop.f32.mrf.mxu0
      %v3110 = vadd.f32 %v417, %v3109
      %3111 = vmatmul.f32.gmra.mxu0 %v3000
      %v3112 = vpop.f32.mrf.mxu0
      %v3113 = vadd.f32 %v418, %v3112
      %3114 = vmatmul.f32.gmra.mxu0 %v3003
      %v3115 = vpop.f32.mrf.mxu0
      %v3116 = vadd.f32 %v419, %v3115
      %3117 = vmatmul.f32.gmra.mxu0 %v3006
      %v3118 = vpop.f32.mrf.mxu0
      %v3119 = vadd.f32 %v420, %v3118
      %3120 = vmatmul.f32.gmra.mxu0 %v3009
      %v3121 = vpop.f32.mrf.mxu0
      %v3122 = vadd.f32 %v421, %v3121
      %3123 = vmatmul.f32.gmra.mxu0 %v3012
      %v3124 = vpop.f32.mrf.mxu0
      %v3125 = vadd.f32 %v422, %v3124
      %3126 = vmatmul.f32.gmra.mxu0 %v3015
      %v3127 = vpop.f32.mrf.mxu0
      %v3128 = vadd.f32 %v423, %v3127
      %3129 = vmatmul.f32.gmra.mxu0 %v3018
      %v3130 = vpop.f32.mrf.mxu0
      %v3131 = vadd.f32 %v424, %v3130
      %3132 = vdwg.mxu0
      %3133 = vmax.xlane.f32.xlu0 %v3086
      %v3134 = vpop.xlane.xlu0 %3133
      %3135 = vmax.xlane.f32.xlu0 %v3089
      %v3136 = vpop.xlane.xlu0 %3135
      %3137 = vmax.xlane.f32.xlu0 %v3092
      %v3138 = vpop.xlane.xlu0 %3137
      %3139 = vmax.xlane.f32.xlu0 %v3095
      %v3140 = vpop.xlane.xlu0 %3139
      %3141 = vmax.xlane.f32.xlu0 %v3098
      %v3142 = vpop.xlane.xlu0 %3141
      %3143 = vmax.xlane.f32.xlu0 %v3101
      %v3144 = vpop.xlane.xlu0 %3143
      %3145 = vmax.xlane.f32.xlu0 %v3104
      %v3146 = vpop.xlane.xlu0 %3145
      %3147 = vmax.xlane.f32.xlu0 %v3107
      %v3148 = vpop.xlane.xlu0 %3147
      %3149 = vmax.xlane.f32.xlu0 %v3110
      %v3150 = vpop.xlane.xlu0 %3149
      %3151 = vmax.xlane.f32.xlu0 %v3113
      %v3152 = vpop.xlane.xlu0 %3151
      %3153 = vmax.xlane.f32.xlu0 %v3116
      %v3154 = vpop.xlane.xlu0 %3153
      %3155 = vmax.xlane.f32.xlu0 %v3119
      %v3156 = vpop.xlane.xlu0 %3155
      %3157 = vmax.xlane.f32.xlu0 %v3122
      %v3158 = vpop.xlane.xlu0 %3157
      %3159 = vmax.xlane.f32.xlu0 %v3125
      %v3160 = vpop.xlane.xlu0 %3159
      %3161 = vmax.xlane.f32.xlu0 %v3128
      %v3162 = vpop.xlane.xlu0 %3161
      %3163 = vmax.xlane.f32.xlu0 %v3131
      %v3164 = vpop.xlane.xlu0 %3163
      %v3165 = vsub.f32 %v3086, %v3134
      %v3166 = vsub.f32 %v3089, %v3136
      %v3167 = vsub.f32 %v3092, %v3138
      %v3168 = vsub.f32 %v3095, %v3140
      %v3169 = vsub.f32 %v3098, %v3142
      %v3170 = vsub.f32 %v3101, %v3144
      %v3171 = vsub.f32 %v3104, %v3146
      %v3172 = vsub.f32 %v3107, %v3148
      %v3173 = vsub.f32 %v3110, %v3150
      %v3174 = vsub.f32 %v3113, %v3152
      %v3175 = vsub.f32 %v3116, %v3154
      %v3176 = vsub.f32 %v3119, %v3156
      %v3177 = vsub.f32 %v3122, %v3158
      %v3178 = vsub.f32 %v3125, %v3160
      %v3179 = vsub.f32 %v3128, %v3162
      %v3180 = vsub.f32 %v3131, %v3164
      %v3181 = vmul.f32 %v3165, 1.442695
      %v3182 = vpow.pop %v3181
      %v3183 = vmul.f32 %v3166, 1.442695
      %v3184 = vpow.pop %v3183
      %v3185 = vmul.f32 %v3167, 1.442695
      %v3186 = vpow.pop %v3185
      %v3187 = vmul.f32 %v3168, 1.442695
      %v3188 = vpow.pop %v3187
      %v3189 = vmul.f32 %v3169, 1.442695
      %v3190 = vpow.pop %v3189
      %v3191 = vmul.f32 %v3170, 1.442695
      %v3192 = vpow.pop %v3191
      %v3193 = vmul.f32 %v3171, 1.442695
      %v3194 = vpow.pop %v3193
      %v3195 = vmul.f32 %v3172, 1.442695
      %v3196 = vpow.pop %v3195
      %v3197 = vmul.f32 %v3173, 1.442695
      %v3198 = vpow.pop %v3197
      %v3199 = vmul.f32 %v3174, 1.442695
      %v3200 = vpow.pop %v3199
      %v3201 = vmul.f32 %v3175, 1.442695
      %v3202 = vpow.pop %v3201
      %v3203 = vmul.f32 %v3176, 1.442695
      %v3204 = vpow.pop %v3203
      %v3205 = vmul.f32 %v3177, 1.442695
      %v3206 = vpow.pop %v3205
      %v3207 = vmul.f32 %v3178, 1.442695
      %v3208 = vpow.pop %v3207
      %v3209 = vmul.f32 %v3179, 1.442695
      %v3210 = vpow.pop %v3209
      %v3211 = vmul.f32 %v3180, 1.442695
      %v3212 = vpow.pop %v3211
      %3213 = vadd.xlane.f32.xlu0 %v3182
      %v3214 = vpop.xlane.xlu0 %3213
      %3215 = vadd.xlane.f32.xlu0 %v3184
      %v3216 = vpop.xlane.xlu0 %3215
      %3217 = vadd.xlane.f32.xlu0 %v3186
      %v3218 = vpop.xlane.xlu0 %3217
      %3219 = vadd.xlane.f32.xlu0 %v3188
      %v3220 = vpop.xlane.xlu0 %3219
      %3221 = vadd.xlane.f32.xlu0 %v3190
      %v3222 = vpop.xlane.xlu0 %3221
      %3223 = vadd.xlane.f32.xlu0 %v3192
      %v3224 = vpop.xlane.xlu0 %3223
      %3225 = vadd.xlane.f32.xlu0 %v3194
      %v3226 = vpop.xlane.xlu0 %3225
      %3227 = vadd.xlane.f32.xlu0 %v3196
      %v3228 = vpop.xlane.xlu0 %3227
      %3229 = vadd.xlane.f32.xlu0 %v3198
      %v3230 = vpop.xlane.xlu0 %3229
      %3231 = vadd.xlane.f32.xlu0 %v3200
      %v3232 = vpop.xlane.xlu0 %3231
      %3233 = vadd.xlane.f32.xlu0 %v3202
      %v3234 = vpop.xlane.xlu0 %3233
      %3235 = vadd.xlane.f32.xlu0 %v3204
      %v3236 = vpop.xlane.xlu0 %3235
      %3237 = vadd.xlane.f32.xlu0 %v3206
      %v3238 = vpop.xlane.xlu0 %3237
      %3239 = vadd.xlane.f32.xlu0 %v3208
      %v3240 = vpop.xlane.xlu0 %3239
      %3241 = vadd.xlane.f32.xlu0 %v3210
      %v3242 = vpop.xlane.xlu0 %3241
      %3243 = vadd.xlane.f32.xlu0 %v3212
      %v3244 = vpop.xlane.xlu0 %3243
      %v3245 = vrcp.pop %v3214
      %v3246 = vrcp.pop %v3216
      %v3247 = vrcp.pop %v3218
      %v3248 = vrcp.pop %v3220
      %v3249 = vrcp.pop %v3222
      %v3250 = vrcp.pop %v3224
      %v3251 = vrcp.pop %v3226
      %v3252 = vrcp.pop %v3228
      %v3253 = vrcp.pop %v3230
      %v3254 = vrcp.pop %v3232
      %v3255 = vrcp.pop %v3234
      %v3256 = vrcp.pop %v3236
      %v3257 = vrcp.pop %v3238
      %v3258 = vrcp.pop %v3240
      %v3259 = vrcp.pop %v3242
      %v3260 = vrcp.pop %v3244
      %v3261 = vmul.f32 %v3182, %v3245
      %v3262 = vmul.f32 %v3184, %v3246
      %v3263 = vmul.f32 %v3186, %v3247
      %v3264 = vmul.f32 %v3188, %v3248
      %v3265 = vmul.f32 %v3190, %v3249
      %v3266 = vmul.f32 %v3192, %v3250
      %v3267 = vmul.f32 %v3194, %v3251
      %v3268 = vmul.f32 %v3196, %v3252
      %v3269 = vmul.f32 %v3198, %v3253
      %v3270 = vmul.f32 %v3200, %v3254
      %v3271 = vmul.f32 %v3202, %v3255
      %v3272 = vmul.f32 %v3204, %v3256
      %v3273 = vmul.f32 %v3206, %v3257
      %v3274 = vmul.f32 %v3208, %v3258
      %v3275 = vmul.f32 %v3210, %v3259
      %v3276 = vmul.f32 %v3212, %v3260
      %3277 = vmatpush.msra.mxu0 %v2970
      %3278 = vmatpush.msra.mxu0 %v2967
      %3279 = vmatpush.msra.mxu0 %v2964
      %3280 = vmatpush.msra.mxu0 %v2961
      %3281 = vmatpush.msra.mxu0 %v2958
      %3282 = vmatpush.msra.mxu0 %v2955
      %3283 = vmatpush.msra.mxu0 %v2952
      %3284 = vmatpush.msra.mxu0 %v2949
      %3285 = vmatpush.msra.mxu0 %v2946
      %3286 = vmatpush.msra.mxu0 %v2943
      %3287 = vmatpush.msra.mxu0 %v2940
      %3288 = vmatpush.msra.mxu0 %v2937
      %3289 = vmatpush.msra.mxu0 %v2934
      %3290 = vmatpush.msra.mxu0 %v2931
      %3291 = vmatpush.msra.mxu0 %v2928
      %3292 = vmatpush.msra.mxu0 %v2925
      %3293 = vmatmul.f32.gmra.mxu0 %v3261
      %v3294 = vpop.f32.mrf.mxu0
      %v3295 = vadd.f32 0.0, %v3294
      %3296 = vmatmul.f32.gmra.mxu0 %v3262
      %v3297 = vpop.f32.mrf.mxu0
      %v3298 = vadd.f32 0.0, %v3297
      %3299 = vmatmul.f32.gmra.mxu0 %v3263
      %v3300 = vpop.f32.mrf.mxu0
      %v3301 = vadd.f32 0.0, %v3300
      %3302 = vmatmul.f32.gmra.mxu0 %v3264
      %v3303 = vpop.f32.mrf.mxu0
      %v3304 = vadd.f32 0.0, %v3303
      %3305 = vmatmul.f32.gmra.mxu0 %v3265
      %v3306 = vpop.f32.mrf.mxu0
      %v3307 = vadd.f32 0.0, %v3306
      %3308 = vmatmul.f32.gmra.mxu0 %v3266
      %v3309 = vpop.f32.mrf.mxu0
      %v3310 = vadd.f32 0.0, %v3309
      %3311 = vmatmul.f32.gmra.mxu0 %v3267
      %v3312 = vpop.f32.mrf.mxu0
      %v3313 = vadd.f32 0.0, %v3312
      %3314 = vmatmul.f32.gmra.mxu0 %v3268
      %v3315 = vpop.f32.mrf.mxu0
      %v3316 = vadd.f32 0.0, %v3315
      %3317 = vmatmul.f32.gmra.mxu0 %v3269
      %v3318 = vpop.f32.mrf.mxu0
      %v3319 = vadd.f32 0.0, %v3318
      %3320 = vmatmul.f32.gmra.mxu0 %v3270
      %v3321 = vpop.f32.mrf.mxu0
      %v3322 = vadd.f32 0.0, %v3321
      %3323 = vmatmul.f32.gmra.mxu0 %v3271
      %v3324 = vpop.f32.mrf.mxu0
      %v3325 = vadd.f32 0.0, %v3324
      %3326 = vmatmul.f32.gmra.mxu0 %v3272
      %v3327 = vpop.f32.mrf.mxu0
      %v3328 = vadd.f32 0.0, %v3327
      %3329 = vmatmul.f32.gmra.mxu0 %v3273
      %v3330 = vpop.f32.mrf.mxu0
      %v3331 = vadd.f32 0.0, %v3330
      %3332 = vmatmul.f32.gmra.mxu0 %v3274
      %v3333 = vpop.f32.mrf.mxu0
      %v3334 = vadd.f32 0.0, %v3333
      %3335 = vmatmul.f32.gmra.mxu0 %v3275
      %v3336 = vpop.f32.mrf.mxu0
      %v3337 = vadd.f32 0.0, %v3336
      %3338 = vmatmul.f32.gmra.mxu0 %v3276
      %v3339 = vpop.f32.mrf.mxu0
      %v3340 = vadd.f32 0.0, %v3339
      %3341 = vdwg.mxu0
      %v3343 = vsel %vm624, %v3295, 0
      %v3346 = vsel %vm624, %v3298, 0
      %v3349 = vsel %vm624, %v3301, 0
      %v3352 = vsel %vm624, %v3304, 0
      %v3355 = vsel %vm624, %v3307, 0
      %v3358 = vsel %vm624, %v3310, 0
      %v3361 = vsel %vm624, %v3313, 0
      %v3364 = vsel %vm624, %v3316, 0
      %v3367 = vsel %vm624, %v3319, 0
      %v3370 = vsel %vm624, %v3322, 0
      %v3373 = vsel %vm624, %v3325, 0
      %v3376 = vsel %vm624, %v3328, 0
      %v3379 = vsel %vm624, %v3331, 0
      %v3382 = vsel %vm624, %v3334, 0
      %v3385 = vsel %vm624, %v3337, 0
      %v3388 = vsel %vm624, %v3340, 0
      %3390 = vmatpush.msra.mxu0 0.0
      %3391 = vmatpush.msra.mxu0 0.0
      %3392 = vmatpush.msra.mxu0 0.0
      %3393 = vmatpush.msra.mxu0 0.0
      %3394 = vmatpush.msra.mxu0 0.0
      %3395 = vmatpush.msra.mxu0 0.0
      %3396 = vmatpush.msra.mxu0 0.0
      %3397 = vmatpush.msra.mxu0 0.0
      %3398 = vmatpush.msra.mxu0 0.0
      %3399 = vmatpush.msra.mxu0 0.0
      %3400 = vmatpush.msra.mxu0 0.0
      %3401 = vmatpush.msra.mxu0 0.0
      %3402 = vmatpush.msra.mxu0 %v2774
      %3403 = vmatpush.msra.mxu0 %v2773
      %3404 = vmatpush.msra.mxu0 %v2772
      %3405 = vmatpush.msra.mxu0 %v2771
      %3406 = vmatmul.f32.gmra.mxu0 %v3343
      %v3407 = vpop.f32.mrf.mxu0
      %v3408 = vadd.f32 0.0, %v3407
      %3409 = vmatmul.f32.gmra.mxu0 %v3346
      %v3410 = vpop.f32.mrf.mxu0
      %v3411 = vadd.f32 0.0, %v3410
      %3412 = vmatmul.f32.gmra.mxu0 %v3349
      %v3413 = vpop.f32.mrf.mxu0
      %v3414 = vadd.f32 0.0, %v3413
      %3415 = vmatmul.f32.gmra.mxu0 %v3352
      %v3416 = vpop.f32.mrf.mxu0
      %v3417 = vadd.f32 0.0, %v3416
      %3418 = vmatmul.f32.gmra.mxu0 %v3355
      %v3419 = vpop.f32.mrf.mxu0
      %v3420 = vadd.f32 0.0, %v3419
      %3421 = vmatmul.f32.gmra.mxu0 %v3358
      %v3422 = vpop.f32.mrf.mxu0
      %v3423 = vadd.f32 0.0, %v3422
      %3424 = vmatmul.f32.gmra.mxu0 %v3361
      %v3425 = vpop.f32.mrf.mxu0
      %v3426 = vadd.f32 0.0, %v3425
      %3427 = vmatmul.f32.gmra.mxu0 %v3364
      %v3428 = vpop.f32.mrf.mxu0
      %v3429 = vadd.f32 0.0, %v3428
      %3430 = vmatmul.f32.gmra.mxu0 %v3367
      %v3431 = vpop.f32.mrf.mxu0
      %v3432 = vadd.f32 0.0, %v3431
      %3433 = vmatmul.f32.gmra.mxu0 %v3370
      %v3434 = vpop.f32.mrf.mxu0
      %v3435 = vadd.f32 0.0, %v3434
      %3436 = vmatmul.f32.gmra.mxu0 %v3373
      %v3437 = vpop.f32.mrf.mxu0
      %v3438 = vadd.f32 0.0, %v3437
      %3439 = vmatmul.f32.gmra.mxu0 %v3376
      %v3440 = vpop.f32.mrf.mxu0
      %v3441 = vadd.f32 0.0, %v3440
      %3442 = vmatmul.f32.gmra.mxu0 %v3379
      %v3443 = vpop.f32.mrf.mxu0
      %v3444 = vadd.f32 0.0, %v3443
      %3445 = vmatmul.f32.gmra.mxu0 %v3382
      %v3446 = vpop.f32.mrf.mxu0
      %v3447 = vadd.f32 0.0, %v3446
      %3448 = vmatmul.f32.gmra.mxu0 %v3385
      %v3449 = vpop.f32.mrf.mxu0
      %v3450 = vadd.f32 0.0, %v3449
      %3451 = vmatmul.f32.gmra.mxu0 %v3388
      %v3452 = vpop.f32.mrf.mxu0
      %v3453 = vadd.f32 0.0, %v3452
      %3454 = vdwg.mxu0
      %v3455 = vadd.f32 %v2743, %v3408
      %v3456 = vadd.f32 %v2744, %v3411
      %v3457 = vadd.f32 %v2745, %v3414
      %v3458 = vadd.f32 %v2746, %v3417
      %v3459 = vadd.f32 %v2747, %v3420
      %v3460 = vadd.f32 %v2748, %v3423
      %v3461 = vadd.f32 %v2749, %v3426
      %v3462 = vadd.f32 %v2750, %v3429
      %v3463 = vadd.f32 %v2751, %v3432
      %v3464 = vadd.f32 %v2752, %v3435
      %v3465 = vadd.f32 %v2753, %v3438
      %v3466 = vadd.f32 %v2754, %v3441
      %v3467 = vadd.f32 %v2755, %v3444
      %v3468 = vadd.f32 %v2756, %v3447
      %v3469 = vadd.f32 %v2757, %v3450
      %v3470 = vadd.f32 %v2758, %v3453
      %v3471 = vld [vmem:[%s6 + $0x5] sm:$0x1]
      %v3472 = vperm.slane %v3471, 0
      %v3473 = vadd.f32 %v3455, %v3472
      %v3474 = vadd.f32 %v3456, %v3472
      %v3475 = vadd.f32 %v3457, %v3472
      %v3476 = vadd.f32 %v3458, %v3472
      %v3477 = vadd.f32 %v3459, %v3472
      %v3478 = vadd.f32 %v3460, %v3472
      %v3479 = vadd.f32 %v3461, %v3472
      %v3480 = vadd.f32 %v3462, %v3472
      %v3481 = vadd.f32 %v3463, %v3472
      %v3482 = vadd.f32 %v3464, %v3472
      %v3483 = vadd.f32 %v3465, %v3472
      %v3484 = vadd.f32 %v3466, %v3472
      %v3485 = vadd.f32 %v3467, %v3472
      %v3486 = vadd.f32 %v3468, %v3472
      %v3487 = vadd.f32 %v3469, %v3472
      %v3488 = vadd.f32 %v3470, %v3472
      %v3489 = vadd.f32 %v3473, %v590
      %v3490 = vadd.f32 %v3474, %v591
      %v3491 = vadd.f32 %v3475, %v592
      %v3492 = vadd.f32 %v3476, %v593
      %v3493 = vadd.f32 %v3477, %v594
      %v3494 = vadd.f32 %v3478, %v595
      %v3495 = vadd.f32 %v3479, %v596
      %v3496 = vadd.f32 %v3480, %v597
      %v3497 = vadd.f32 %v3481, %v598
      %v3498 = vadd.f32 %v3482, %v599
      %v3499 = vadd.f32 %v3483, %v600
      %v3500 = vadd.f32 %v3484, %v601
      %v3501 = vadd.f32 %v3485, %v602
      %v3502 = vadd.f32 %v3486, %v603
      %v3503 = vadd.f32 %v3487, %v604
      %v3504 = vadd.f32 %v3488, %v605
      %v3505 = vld [vmem:[%s6 + $0x6] sm:$0x1]
      %v3506 = vld [vmem:[%s6 + $0x7] sm:$0x1]
      %3507 = vmatpush.msra.mxu0 %v3504
      %3508 = vmatpush.msra.mxu0 %v3503
      %3509 = vmatpush.msra.mxu0 %v3502
      %3510 = vmatpush.msra.mxu0 %v3501
      %3511 = vmatpush.msra.mxu0 %v3500
      %3512 = vmatpush.msra.mxu0 %v3499
      %3513 = vmatpush.msra.mxu0 %v3498
      %3514 = vmatpush.msra.mxu0 %v3497
      %3515 = vmatpush.msra.mxu0 %v3496
      %3516 = vmatpush.msra.mxu0 %v3495
      %3517 = vmatpush.msra.mxu0 %v3494
      %3518 = vmatpush.msra.mxu0 %v3493
      %3519 = vmatpush.msra.mxu0 %v3492
      %3520 = vmatpush.msra.mxu0 %v3491
      %3521 = vmatpush.msra.mxu0 %v3490
      %3522 = vmatpush.msra.mxu0 %v3489
      %3523 = vmatmul.f32.gmra.mxu0 %v329
      %v3524 = vpop.f32.mrf.mxu0
      %v3525 = vadd.f32 0.0, %v3524
      %3526 = vdwg.mxu0
      %v3527 = vmul.f32 %v3489, %v3489
      %v3528 = vmul.f32 %v3490, %v3490
      %v3529 = vmul.f32 %v3491, %v3491
      %v3530 = vmul.f32 %v3492, %v3492
      %v3531 = vmul.f32 %v3493, %v3493
      %v3532 = vmul.f32 %v3494, %v3494
      %v3533 = vmul.f32 %v3495, %v3495
      %v3534 = vmul.f32 %v3496, %v3496
      %v3535 = vmul.f32 %v3497, %v3497
      %v3536 = vmul.f32 %v3498, %v3498
      %v3537 = vmul.f32 %v3499, %v3499
      %v3538 = vmul.f32 %v3500, %v3500
      %v3539 = vmul.f32 %v3501, %v3501
      %v3540 = vmul.f32 %v3502, %v3502
      %v3541 = vmul.f32 %v3503, %v3503
      %v3542 = vmul.f32 %v3504, %v3504
      %3543 = vmatpush.msra.mxu0 %v3542
      %3544 = vmatpush.msra.mxu0 %v3541
      %3545 = vmatpush.msra.mxu0 %v3540
      %3546 = vmatpush.msra.mxu0 %v3539
      %3547 = vmatpush.msra.mxu0 %v3538
      %3548 = vmatpush.msra.mxu0 %v3537
      %3549 = vmatpush.msra.mxu0 %v3536
      %3550 = vmatpush.msra.mxu0 %v3535
      %3551 = vmatpush.msra.mxu0 %v3534
      %3552 = vmatpush.msra.mxu0 %v3533
      %3553 = vmatpush.msra.mxu0 %v3532
      %3554 = vmatpush.msra.mxu0 %v3531
      %3555 = vmatpush.msra.mxu0 %v3530
      %3556 = vmatpush.msra.mxu0 %v3529
      %3557 = vmatpush.msra.mxu0 %v3528
      %3558 = vmatpush.msra.mxu0 %v3527
      %3559 = vmatmul.f32.gmra.mxu0 %v329
      %v3560 = vpop.f32.mrf.mxu0
      %v3561 = vadd.f32 0.0, %v3560
      %3562 = vdwg.mxu0
      %v3563 = vmul.f32 %v3525, %v3525
      %v3564 = vsub.f32 %v3561, %v3563
      %v3565 = vmax.f32 %v3564, 0.0
      %v3566 = vadd.f32 %v3565, 1e-05
      %v3567 = vrsqrt.pop %v3566
      %v3568 = vmul.f32 %v3567, %v3566
      %v3569 = vmul.f32 %v3568, %v3567
      %v3570 = vmul.f32 0.5, %v3569
      %v3571 = vsub.f32 1.5, %v3570
      %v3572 = vmul.f32 %v3567, %v3571
      %vm3573 = vweird.f32 %v3566
      %vm3574 = vweird.f32 %v3567
      %vm3575 = vmor %vm3573, %vm3574
      %v3576 = vsel %vm3575, %v3567, %v3572
      %v3578 = vsel %vm458, %v393, 0
      %v3581 = vsel %vm458, %v394, 0
      %v3584 = vsel %vm458, %v395, 0
      %v3587 = vsel %vm458, %v396, 0
      %v3590 = vsel %vm458, %v397, 0
      %v3593 = vsel %vm458, %v398, 0
      %v3596 = vsel %vm458, %v399, 0
      %v3599 = vsel %vm458, %v400, 0
      %v3602 = vsel %vm458, %v401, 0
      %v3605 = vsel %vm458, %v402, 0
      %v3608 = vsel %vm458, %v403, 0
      %v3611 = vsel %vm458, %v404, 0
      %v3614 = vsel %vm458, %v405, 0
      %v3617 = vsel %vm458, %v406, 0
      %v3620 = vsel %vm458, %v407, 0
      %v3623 = vsel %vm458, %v408, 0
      %3625 = vmatpush.msra.mxu0 0.0
      %3626 = vmatpush.msra.mxu0 0.0
      %3627 = vmatpush.msra.mxu0 0.0
      %3628 = vmatpush.msra.mxu0 0.0
      %3629 = vmatpush.msra.mxu0 0.0
      %3630 = vmatpush.msra.mxu0 0.0
      %3631 = vmatpush.msra.mxu0 0.0
      %3632 = vmatpush.msra.mxu0 0.0
      %3633 = vmatpush.msra.mxu0 0.0
      %3634 = vmatpush.msra.mxu0 0.0
      %3635 = vmatpush.msra.mxu0 0.0
      %3636 = vmatpush.msra.mxu0 0.0
      %3637 = vmatpush.msra.mxu0 0.0
      %3638 = vmatpush.msra.mxu0 0.0
      %3639 = vmatpush.msra.mxu0 0.0
      %3640 = vmatpush.msra.mxu0 %v3525
      %3641 = vmatmul.f32.gmra.mxu0 %v3578
      %v3642 = vpop.f32.mrf.mxu0
      %v3643 = vadd.f32 0.0, %v3642
      %3644 = vmatmul.f32.gmra.mxu0 %v3581
      %v3645 = vpop.f32.mrf.mxu0
      %v3646 = vadd.f32 0.0, %v3645
      %3647 = vmatmul.f32.gmra.mxu0 %v3584
      %v3648 = vpop.f32.mrf.mxu0
      %v3649 = vadd.f32 0.0, %v3648
      %3650 = vmatmul.f32.gmra.mxu0 %v3587
      %v3651 = vpop.f32.mrf.mxu0
      %v3652 = vadd.f32 0.0, %v3651
      %3653 = vmatmul.f32.gmra.mxu0 %v3590
      %v3654 = vpop.f32.mrf.mxu0
      %v3655 = vadd.f32 0.0, %v3654
      %3656 = vmatmul.f32.gmra.mxu0 %v3593
      %v3657 = vpop.f32.mrf.mxu0
      %v3658 = vadd.f32 0.0, %v3657
      %3659 = vmatmul.f32.gmra.mxu0 %v3596
      %v3660 = vpop.f32.mrf.mxu0
      %v3661 = vadd.f32 0.0, %v3660
      %3662 = vmatmul.f32.gmra.mxu0 %v3599
      %v3663 = vpop.f32.mrf.mxu0
      %v3664 = vadd.f32 0.0, %v3663
      %3665 = vmatmul.f32.gmra.mxu0 %v3602
      %v3666 = vpop.f32.mrf.mxu0
      %v3667 = vadd.f32 0.0, %v3666
      %3668 = vmatmul.f32.gmra.mxu0 %v3605
      %v3669 = vpop.f32.mrf.mxu0
      %v3670 = vadd.f32 0.0, %v3669
      %3671 = vmatmul.f32.gmra.mxu0 %v3608
      %v3672 = vpop.f32.mrf.mxu0
      %v3673 = vadd.f32 0.0, %v3672
      %3674 = vmatmul.f32.gmra.mxu0 %v3611
      %v3675 = vpop.f32.mrf.mxu0
      %v3676 = vadd.f32 0.0, %v3675
      %3677 = vmatmul.f32.gmra.mxu0 %v3614
      %v3678 = vpop.f32.mrf.mxu0
      %v3679 = vadd.f32 0.0, %v3678
      %3680 = vmatmul.f32.gmra.mxu0 %v3617
      %v3681 = vpop.f32.mrf.mxu0
      %v3682 = vadd.f32 0.0, %v3681
      %3683 = vmatmul.f32.gmra.mxu0 %v3620
      %v3684 = vpop.f32.mrf.mxu0
      %v3685 = vadd.f32 0.0, %v3684
      %3686 = vmatmul.f32.gmra.mxu0 %v3623
      %v3687 = vpop.f32.mrf.mxu0
      %v3688 = vadd.f32 0.0, %v3687
      %3689 = vdwg.mxu0
      %3690 = vmatpush.msra.mxu0 0.0
      %3691 = vmatpush.msra.mxu0 0.0
      %3692 = vmatpush.msra.mxu0 0.0
      %3693 = vmatpush.msra.mxu0 0.0
      %3694 = vmatpush.msra.mxu0 0.0
      %3695 = vmatpush.msra.mxu0 0.0
      %3696 = vmatpush.msra.mxu0 0.0
      %3697 = vmatpush.msra.mxu0 0.0
      %3698 = vmatpush.msra.mxu0 0.0
      %3699 = vmatpush.msra.mxu0 0.0
      %3700 = vmatpush.msra.mxu0 0.0
      %3701 = vmatpush.msra.mxu0 0.0
      %3702 = vmatpush.msra.mxu0 0.0
      %3703 = vmatpush.msra.mxu0 0.0
      %3704 = vmatpush.msra.mxu0 0.0
      %3705 = vmatpush.msra.mxu0 %v3576
      %3706 = vmatmul.f32.gmra.mxu0 %v3578
      %v3707 = vpop.f32.mrf.mxu0
      %v3708 = vadd.f32 0.0, %v3707
      %3709 = vmatmul.f32.gmra.mxu0 %v3581
      %v3710 = vpop.f32.mrf.mxu0
      %v3711 = vadd.f32 0.0, %v3710
      %3712 = vmatmul.f32.gmra.mxu0 %v3584
      %v3713 = vpop.f32.mrf.mxu0
      %v3714 = vadd.f32 0.0, %v3713
      %3715 = vmatmul.f32.gmra.mxu0 %v3587
      %v3716 = vpop.f32.mrf.mxu0
      %v3717 = vadd.f32 0.0, %v3716
      %3718 = vmatmul.f32.gmra.mxu0 %v3590
      %v3719 = vpop.f32.mrf.mxu0
      %v3720 = vadd.f32 0.0, %v3719
      %3721 = vmatmul.f32.gmra.mxu0 %v3593
      %v3722 = vpop.f32.mrf.mxu0
      %v3723 = vadd.f32 0.0, %v3722
      %3724 = vmatmul.f32.gmra.mxu0 %v3596
      %v3725 = vpop.f32.mrf.mxu0
      %v3726 = vadd.f32 0.0, %v3725
      %3727 = vmatmul.f32.gmra.mxu0 %v3599
      %v3728 = vpop.f32.mrf.mxu0
      %v3729 = vadd.f32 0.0, %v3728
      %3730 = vmatmul.f32.gmra.mxu0 %v3602
      %v3731 = vpop.f32.mrf.mxu0
      %v3732 = vadd.f32 0.0, %v3731
      %3733 = vmatmul.f32.gmra.mxu0 %v3605
      %v3734 = vpop.f32.mrf.mxu0
      %v3735 = vadd.f32 0.0, %v3734
      %3736 = vmatmul.f32.gmra.mxu0 %v3608
      %v3737 = vpop.f32.mrf.mxu0
      %v3738 = vadd.f32 0.0, %v3737
      %3739 = vmatmul.f32.gmra.mxu0 %v3611
      %v3740 = vpop.f32.mrf.mxu0
      %v3741 = vadd.f32 0.0, %v3740
      %3742 = vmatmul.f32.gmra.mxu0 %v3614
      %v3743 = vpop.f32.mrf.mxu0
      %v3744 = vadd.f32 0.0, %v3743
      %3745 = vmatmul.f32.gmra.mxu0 %v3617
      %v3746 = vpop.f32.mrf.mxu0
      %v3747 = vadd.f32 0.0, %v3746
      %3748 = vmatmul.f32.gmra.mxu0 %v3620
      %v3749 = vpop.f32.mrf.mxu0
      %v3750 = vadd.f32 0.0, %v3749
      %3751 = vmatmul.f32.gmra.mxu0 %v3623
      %v3752 = vpop.f32.mrf.mxu0
      %v3753 = vadd.f32 0.0, %v3752
      %3754 = vdwg.mxu0
      %v3755 = vsub.f32 %v3489, %v3643
      %v3756 = vsub.f32 %v3490, %v3646
      %v3757 = vsub.f32 %v3491, %v3649
      %v3758 = vsub.f32 %v3492, %v3652
      %v3759 = vsub.f32 %v3493, %v3655
      %v3760 = vsub.f32 %v3494, %v3658
      %v3761 = vsub.f32 %v3495, %v3661
      %v3762 = vsub.f32 %v3496, %v3664
      %v3763 = vsub.f32 %v3497, %v3667
      %v3764 = vsub.f32 %v3498, %v3670
      %v3765 = vsub.f32 %v3499, %v3673
      %v3766 = vsub.f32 %v3500, %v3676
      %v3767 = vsub.f32 %v3501, %v3679
      %v3768 = vsub.f32 %v3502, %v3682
      %v3769 = vsub.f32 %v3503, %v3685
      %v3770 = vsub.f32 %v3504, %v3688
      %v3771 = vmul.f32 %v3755, %v3708
      %v3772 = vmul.f32 %v3756, %v3711
      %v3773 = vmul.f32 %v3757, %v3714
      %v3774 = vmul.f32 %v3758, %v3717
      %v3775 = vmul.f32 %v3759, %v3720
      %v3776 = vmul.f32 %v3760, %v3723
      %v3777 = vmul.f32 %v3761, %v3726
      %v3778 = vmul.f32 %v3762, %v3729
      %v3779 = vmul.f32 %v3763, %v3732
      %v3780 = vmul.f32 %v3764, %v3735
      %v3781 = vmul.f32 %v3765, %v3738
      %v3782 = vmul.f32 %v3766, %v3741
      %v3783 = vmul.f32 %v3767, %v3744
      %v3784 = vmul.f32 %v3768, %v3747
      %v3785 = vmul.f32 %v3769, %v3750
      %v3786 = vmul.f32 %v3770, %v3753
      %v3787 = vperm.slane %v3505, 0
      %v3788 = vmul.f32 %v3771, %v3787
      %v3789 = vmul.f32 %v3772, %v3787
      %v3790 = vmul.f32 %v3773, %v3787
      %v3791 = vmul.f32 %v3774, %v3787
      %v3792 = vmul.f32 %v3775, %v3787
      %v3793 = vmul.f32 %v3776, %v3787
      %v3794 = vmul.f32 %v3777, %v3787
      %v3795 = vmul.f32 %v3778, %v3787
      %v3796 = vmul.f32 %v3779, %v3787
      %v3797 = vmul.f32 %v3780, %v3787
      %v3798 = vmul.f32 %v3781, %v3787
      %v3799 = vmul.f32 %v3782, %v3787
      %v3800 = vmul.f32 %v3783, %v3787
      %v3801 = vmul.f32 %v3784, %v3787
      %v3802 = vmul.f32 %v3785, %v3787
      %v3803 = vmul.f32 %v3786, %v3787
      %v3804 = vperm.slane %v3506, 0
      %v3805 = vadd.f32 %v3788, %v3804
      %v3806 = vadd.f32 %v3789, %v3804
      %v3807 = vadd.f32 %v3790, %v3804
      %v3808 = vadd.f32 %v3791, %v3804
      %v3809 = vadd.f32 %v3792, %v3804
      %v3810 = vadd.f32 %v3793, %v3804
      %v3811 = vadd.f32 %v3794, %v3804
      %v3812 = vadd.f32 %v3795, %v3804
      %v3813 = vadd.f32 %v3796, %v3804
      %v3814 = vadd.f32 %v3797, %v3804
      %v3815 = vadd.f32 %v3798, %v3804
      %v3816 = vadd.f32 %v3799, %v3804
      %v3817 = vadd.f32 %v3800, %v3804
      %v3818 = vadd.f32 %v3801, %v3804
      %v3819 = vadd.f32 %v3802, %v3804
      %v3820 = vadd.f32 %v3803, %v3804
      %v3821 = vld [vmem:[%s4] sm:$0xff]
      %v3822 = vld [vmem:[%s4 + $0x8] sm:$0xff]
      %v3823 = vld [vmem:[%s4 + $0x10] sm:$0xff]
      %v3824 = vld [vmem:[%s4 + $0x18] sm:$0xff]
      %v3825 = vld [vmem:[%s3 + $0x208] sm:$0xff]
      %v3826 = vld [vmem:[%s3 + $0x210] sm:$0xff]
      %v3827 = vld [vmem:[%s3 + $0x218] sm:$0xff]
      %v3828 = vld [vmem:[%s3 + $0x220] sm:$0xff]
      %v3829 = vld [vmem:[%s3 + $0x228] sm:$0xff]
      %v3830 = vld [vmem:[%s3 + $0x230] sm:$0xff]
      %v3831 = vld [vmem:[%s3 + $0x238] sm:$0xff]
      %v3832 = vld [vmem:[%s3 + $0x240] sm:$0xff]
      %v3833 = vld [vmem:[%s6 + $0x8] sm:$0x1]
      %v3834 = vperm.slane %v3833, 0
      %v3836 = vsel %vm624, %v3805, 0
      %v3839 = vsel %vm624, %v3806, 0
      %v3842 = vsel %vm624, %v3807, 0
      %v3845 = vsel %vm624, %v3808, 0
      %v3848 = vsel %vm624, %v3809, 0
      %v3851 = vsel %vm624, %v3810, 0
      %v3854 = vsel %vm624, %v3811, 0
      %v3857 = vsel %vm624, %v3812, 0
      %v3860 = vsel %vm624, %v3813, 0
      %v3863 = vsel %vm624, %v3814, 0
      %v3866 = vsel %vm624, %v3815, 0
      %v3869 = vsel %vm624, %v3816, 0
      %v3872 = vsel %vm624, %v3817, 0
      %v3875 = vsel %vm624, %v3818, 0
      %v3878 = vsel %vm624, %v3819, 0
      %v3881 = vsel %vm624, %v3820, 0
      %3883 = vmatpush.msra.mxu0 0.0
      %3884 = vmatpush.msra.mxu0 0.0
      %3885 = vmatpush.msra.mxu0 0.0
      %3886 = vmatpush.msra.mxu0 0.0
      %3887 = vmatpush.msra.mxu0 0.0
      %3888 = vmatpush.msra.mxu0 0.0
      %3889 = vmatpush.msra.mxu0 0.0
      %3890 = vmatpush.msra.mxu0 0.0
      %3891 = vmatpush.msra.mxu0 0.0
      %3892 = vmatpush.msra.mxu0 0.0
      %3893 = vmatpush.msra.mxu0 0.0
      %3894 = vmatpush.msra.mxu0 0.0
      %3895 = vmatpush.msra.mxu0 %v3824
      %3896 = vmatpush.msra.mxu0 %v3823
      %3897 = vmatpush.msra.mxu0 %v3822
      %3898 = vmatpush.msra.mxu0 %v3821
      %3899 = vmatmul.f32.gmra.mxu0 %v3836
      %v3900 = vpop.f32.mrf.mxu0
      %v3901 = vadd.f32 %v3834, %v3900
      %3902 = vmatmul.f32.gmra.mxu0 %v3839
      %v3903 = vpop.f32.mrf.mxu0
      %v3904 = vadd.f32 %v3834, %v3903
      %3905 = vmatmul.f32.gmra.mxu0 %v3842
      %v3906 = vpop.f32.mrf.mxu0
      %v3907 = vadd.f32 %v3834, %v3906
      %3908 = vmatmul.f32.gmra.mxu0 %v3845
      %v3909 = vpop.f32.mrf.mxu0
      %v3910 = vadd.f32 %v3834, %v3909
      %3911 = vmatmul.f32.gmra.mxu0 %v3848
      %v3912 = vpop.f32.mrf.mxu0
      %v3913 = vadd.f32 %v3834, %v3912
      %3914 = vmatmul.f32.gmra.mxu0 %v3851
      %v3915 = vpop.f32.mrf.mxu0
      %v3916 = vadd.f32 %v3834, %v3915
      %3917 = vmatmul.f32.gmra.mxu0 %v3854
      %v3918 = vpop.f32.mrf.mxu0
      %v3919 = vadd.f32 %v3834, %v3918
      %3920 = vmatmul.f32.gmra.mxu0 %v3857
      %v3921 = vpop.f32.mrf.mxu0
      %v3922 = vadd.f32 %v3834, %v3921
      %3923 = vmatmul.f32.gmra.mxu0 %v3860
      %v3924 = vpop.f32.mrf.mxu0
      %v3925 = vadd.f32 %v3834, %v3924
      %3926 = vmatmul.f32.gmra.mxu0 %v3863
      %v3927 = vpop.f32.mrf.mxu0
      %v3928 = vadd.f32 %v3834, %v3927
      %3929 = vmatmul.f32.gmra.mxu0 %v3866
      %v3930 = vpop.f32.mrf.mxu0
      %v3931 = vadd.f32 %v3834, %v3930
      %3932 = vmatmul.f32.gmra.mxu0 %v3869
      %v3933 = vpop.f32.mrf.mxu0
      %v3934 = vadd.f32 %v3834, %v3933
      %3935 = vmatmul.f32.gmra.mxu0 %v3872
      %v3936 = vpop.f32.mrf.mxu0
      %v3937 = vadd.f32 %v3834, %v3936
      %3938 = vmatmul.f32.gmra.mxu0 %v3875
      %v3939 = vpop.f32.mrf.mxu0
      %v3940 = vadd.f32 %v3834, %v3939
      %3941 = vmatmul.f32.gmra.mxu0 %v3878
      %v3942 = vpop.f32.mrf.mxu0
      %v3943 = vadd.f32 %v3834, %v3942
      %3944 = vmatmul.f32.gmra.mxu0 %v3881
      %v3945 = vpop.f32.mrf.mxu0
      %v3946 = vadd.f32 %v3834, %v3945
      %3947 = vdwg.mxu0
      %v3948 = vmax.f32 %v3901, 0.0
      %v3949 = vmax.f32 %v3904, 0.0
      %v3950 = vmax.f32 %v3907, 0.0
      %v3951 = vmax.f32 %v3910, 0.0
      %v3952 = vmax.f32 %v3913, 0.0
      %v3953 = vmax.f32 %v3916, 0.0
      %v3954 = vmax.f32 %v3919, 0.0
      %v3955 = vmax.f32 %v3922, 0.0
      %v3956 = vmax.f32 %v3925, 0.0
      %v3957 = vmax.f32 %v3928, 0.0
      %v3958 = vmax.f32 %v3931, 0.0
      %v3959 = vmax.f32 %v3934, 0.0
      %v3960 = vmax.f32 %v3937, 0.0
      %v3961 = vmax.f32 %v3940, 0.0
      %v3962 = vmax.f32 %v3943, 0.0
      %v3963 = vmax.f32 %v3946, 0.0
      %v3964 = vld [vmem:[%s6 + $0x9] sm:$0x1]
      %v3965 = vperm.slane %v3964, 0
      %vm3966 = vcmask 523264
      %v3968 = vsel %vm3966, %v3948, 0
      %v3971 = vsel %vm3966, %v3949, 0
      %v3974 = vsel %vm3966, %v3950, 0
      %v3977 = vsel %vm3966, %v3951, 0
      %v3980 = vsel %vm3966, %v3952, 0
      %v3983 = vsel %vm3966, %v3953, 0
      %v3986 = vsel %vm3966, %v3954, 0
      %v3989 = vsel %vm3966, %v3955, 0
      %v3992 = vsel %vm3966, %v3956, 0
      %v3995 = vsel %vm3966, %v3957, 0
      %v3998 = vsel %vm3966, %v3958, 0
      %v4001 = vsel %vm3966, %v3959, 0
      %v4004 = vsel %vm3966, %v3960, 0
      %v4007 = vsel %vm3966, %v3961, 0
      %v4010 = vsel %vm3966, %v3962, 0
      %v4013 = vsel %vm3966, %v3963, 0
      %4015 = vmatpush.msra.mxu0 0.0
      %4016 = vmatpush.msra.mxu0 0.0
      %4017 = vmatpush.msra.mxu0 0.0
      %4018 = vmatpush.msra.mxu0 0.0
      %4019 = vmatpush.msra.mxu0 0.0
      %4020 = vmatpush.msra.mxu0 0.0
      %4021 = vmatpush.msra.mxu0 0.0
      %4022 = vmatpush.msra.mxu0 0.0
      %4023 = vmatpush.msra.mxu0 %v3832
      %4024 = vmatpush.msra.mxu0 %v3831
      %4025 = vmatpush.msra.mxu0 %v3830
      %4026 = vmatpush.msra.mxu0 %v3829
      %4027 = vmatpush.msra.mxu0 %v3828
      %4028 = vmatpush.msra.mxu0 %v3827
      %4029 = vmatpush.msra.mxu0 %v3826
      %4030 = vmatpush.msra.mxu0 %v3825
      %4031 = vmatmul.f32.gmra.mxu0 %v3968
      %v4032 = vpop.f32.mrf.mxu0
      %v4033 = vadd.f32 %v3965, %v4032
      %4034 = vmatmul.f32.gmra.mxu0 %v3971
      %v4035 = vpop.f32.mrf.mxu0
      %v4036 = vadd.f32 %v3965, %v4035
      %4037 = vmatmul.f32.gmra.mxu0 %v3974
      %v4038 = vpop.f32.mrf.mxu0
      %v4039 = vadd.f32 %v3965, %v4038
      %4040 = vmatmul.f32.gmra.mxu0 %v3977
      %v4041 = vpop.f32.mrf.mxu0
      %v4042 = vadd.f32 %v3965, %v4041
      %4043 = vmatmul.f32.gmra.mxu0 %v3980
      %v4044 = vpop.f32.mrf.mxu0
      %v4045 = vadd.f32 %v3965, %v4044
      %4046 = vmatmul.f32.gmra.mxu0 %v3983
      %v4047 = vpop.f32.mrf.mxu0
      %v4048 = vadd.f32 %v3965, %v4047
      %4049 = vmatmul.f32.gmra.mxu0 %v3986
      %v4050 = vpop.f32.mrf.mxu0
      %v4051 = vadd.f32 %v3965, %v4050
      %4052 = vmatmul.f32.gmra.mxu0 %v3989
      %v4053 = vpop.f32.mrf.mxu0
      %v4054 = vadd.f32 %v3965, %v4053
      %4055 = vmatmul.f32.gmra.mxu0 %v3992
      %v4056 = vpop.f32.mrf.mxu0
      %v4057 = vadd.f32 %v3965, %v4056
      %4058 = vmatmul.f32.gmra.mxu0 %v3995
      %v4059 = vpop.f32.mrf.mxu0
      %v4060 = vadd.f32 %v3965, %v4059
      %4061 = vmatmul.f32.gmra.mxu0 %v3998
      %v4062 = vpop.f32.mrf.mxu0
      %v4063 = vadd.f32 %v3965, %v4062
      %4064 = vmatmul.f32.gmra.mxu0 %v4001
      %v4065 = vpop.f32.mrf.mxu0
      %v4066 = vadd.f32 %v3965, %v4065
      %4067 = vmatmul.f32.gmra.mxu0 %v4004
      %v4068 = vpop.f32.mrf.mxu0
      %v4069 = vadd.f32 %v3965, %v4068
      %4070 = vmatmul.f32.gmra.mxu0 %v4007
      %v4071 = vpop.f32.mrf.mxu0
      %v4072 = vadd.f32 %v3965, %v4071
      %4073 = vmatmul.f32.gmra.mxu0 %v4010
      %v4074 = vpop.f32.mrf.mxu0
      %v4075 = vadd.f32 %v3965, %v4074
      %4076 = vmatmul.f32.gmra.mxu0 %v4013
      %v4077 = vpop.f32.mrf.mxu0
      %v4078 = vadd.f32 %v3965, %v4077
      %4079 = vdwg.mxu0
      %v4080 = vadd.f32 %v3805, %v4033
      %v4081 = vadd.f32 %v3806, %v4036
      %v4082 = vadd.f32 %v3807, %v4039
      %v4083 = vadd.f32 %v3808, %v4042
      %v4084 = vadd.f32 %v3809, %v4045
      %v4085 = vadd.f32 %v3810, %v4048
      %v4086 = vadd.f32 %v3811, %v4051
      %v4087 = vadd.f32 %v3812, %v4054
      %v4088 = vadd.f32 %v3813, %v4057
      %v4089 = vadd.f32 %v3814, %v4060
      %v4090 = vadd.f32 %v3815, %v4063
      %v4091 = vadd.f32 %v3816, %v4066
      %v4092 = vadd.f32 %v3817, %v4069
      %v4093 = vadd.f32 %v3818, %v4072
      %v4094 = vadd.f32 %v3819, %v4075
      %v4095 = vadd.f32 %v3820, %v4078
      %v4096 = vld [vmem:[%s6 + $0xa] sm:$0x1]
      %v4097 = vld [vmem:[%s6 + $0xb] sm:$0x1]
      %4098 = vmatpush.msra.mxu0 %v4095
      %4099 = vmatpush.msra.mxu0 %v4094
      %4100 = vmatpush.msra.mxu0 %v4093
      %4101 = vmatpush.msra.mxu0 %v4092
      %4102 = vmatpush.msra.mxu0 %v4091
      %4103 = vmatpush.msra.mxu0 %v4090
      %4104 = vmatpush.msra.mxu0 %v4089
      %4105 = vmatpush.msra.mxu0 %v4088
      %4106 = vmatpush.msra.mxu0 %v4087
      %4107 = vmatpush.msra.mxu0 %v4086
      %4108 = vmatpush.msra.mxu0 %v4085
      %4109 = vmatpush.msra.mxu0 %v4084
      %4110 = vmatpush.msra.mxu0 %v4083
      %4111 = vmatpush.msra.mxu0 %v4082
      %4112 = vmatpush.msra.mxu0 %v4081
      %4113 = vmatpush.msra.mxu0 %v4080
      %4114 = vmatmul.f32.gmra.mxu0 %v329
      %v4115 = vpop.f32.mrf.mxu0
      %v4116 = vadd.f32 0.0, %v4115
      %4117 = vdwg.mxu0
      %v4118 = vmul.f32 %v4080, %v4080
      %v4119 = vmul.f32 %v4081, %v4081
      %v4120 = vmul.f32 %v4082, %v4082
      %v4121 = vmul.f32 %v4083, %v4083
      %v4122 = vmul.f32 %v4084, %v4084
      %v4123 = vmul.f32 %v4085, %v4085
      %v4124 = vmul.f32 %v4086, %v4086
      %v4125 = vmul.f32 %v4087, %v4087
      %v4126 = vmul.f32 %v4088, %v4088
      %v4127 = vmul.f32 %v4089, %v4089
      %v4128 = vmul.f32 %v4090, %v4090
      %v4129 = vmul.f32 %v4091, %v4091
      %v4130 = vmul.f32 %v4092, %v4092
      %v4131 = vmul.f32 %v4093, %v4093
      %v4132 = vmul.f32 %v4094, %v4094
      %v4133 = vmul.f32 %v4095, %v4095
      %4134 = vmatpush.msra.mxu0 %v4133
      %4135 = vmatpush.msra.mxu0 %v4132
      %4136 = vmatpush.msra.mxu0 %v4131
      %4137 = vmatpush.msra.mxu0 %v4130
      %4138 = vmatpush.msra.mxu0 %v4129
      %4139 = vmatpush.msra.mxu0 %v4128
      %4140 = vmatpush.msra.mxu0 %v4127
      %4141 = vmatpush.msra.mxu0 %v4126
      %4142 = vmatpush.msra.mxu0 %v4125
      %4143 = vmatpush.msra.mxu0 %v4124
      %4144 = vmatpush.msra.mxu0 %v4123
      %4145 = vmatpush.msra.mxu0 %v4122
      %4146 = vmatpush.msra.mxu0 %v4121
      %4147 = vmatpush.msra.mxu0 %v4120
      %4148 = vmatpush.msra.mxu0 %v4119
      %4149 = vmatpush.msra.mxu0 %v4118
      %4150 = vmatmul.f32.gmra.mxu0 %v329
      %v4151 = vpop.f32.mrf.mxu0
      %v4152 = vadd.f32 0.0, %v4151
      %4153 = vdwg.mxu0
      %v4154 = vmul.f32 %v4116, %v4116
      %v4155 = vsub.f32 %v4152, %v4154
      %v4156 = vmax.f32 %v4155, 0.0
      %v4157 = vadd.f32 %v4156, 1e-05
      %v4158 = vrsqrt.pop %v4157
      %v4159 = vmul.f32 %v4158, %v4157
      %v4160 = vmul.f32 %v4159, %v4158
      %v4161 = vmul.f32 0.5, %v4160
      %v4162 = vsub.f32 1.5, %v4161
      %v4163 = vmul.f32 %v4158, %v4162
      %vm4164 = vweird.f32 %v4157
      %vm4165 = vweird.f32 %v4158
      %vm4166 = vmor %vm4164, %vm4165
      %v4167 = vsel %vm4166, %v4158, %v4163
      %4168 = vmatpush.msra.mxu0 0.0
      %4169 = vmatpush.msra.mxu0 0.0
      %4170 = vmatpush.msra.mxu0 0.0
      %4171 = vmatpush.msra.mxu0 0.0
      %4172 = vmatpush.msra.mxu0 0.0
      %4173 = vmatpush.msra.mxu0 0.0
      %4174 = vmatpush.msra.mxu0 0.0
      %4175 = vmatpush.msra.mxu0 0.0
      %4176 = vmatpush.msra.mxu0 0.0
      %4177 = vmatpush.msra.mxu0 0.0
      %4178 = vmatpush.msra.mxu0 0.0
      %4179 = vmatpush.msra.mxu0 0.0
      %4180 = vmatpush.msra.mxu0 0.0
      %4181 = vmatpush.msra.mxu0 0.0
      %4182 = vmatpush.msra.mxu0 0.0
      %4183 = vmatpush.msra.mxu0 %v4116
      %4184 = vmatmul.f32.gmra.mxu0 %v3578
      %v4185 = vpop.f32.mrf.mxu0
      %v4186 = vadd.f32 0.0, %v4185
      %4187 = vmatmul.f32.gmra.mxu0 %v3581
      %v4188 = vpop.f32.mrf.mxu0
      %v4189 = vadd.f32 0.0, %v4188
      %4190 = vmatmul.f32.gmra.mxu0 %v3584
      %v4191 = vpop.f32.mrf.mxu0
      %v4192 = vadd.f32 0.0, %v4191
      %4193 = vmatmul.f32.gmra.mxu0 %v3587
      %v4194 = vpop.f32.mrf.mxu0
      %v4195 = vadd.f32 0.0, %v4194
      %4196 = vmatmul.f32.gmra.mxu0 %v3590
      %v4197 = vpop.f32.mrf.mxu0
      %v4198 = vadd.f32 0.0, %v4197
      %4199 = vmatmul.f32.gmra.mxu0 %v3593
      %v4200 = vpop.f32.mrf.mxu0
      %v4201 = vadd.f32 0.0, %v4200
      %4202 = vmatmul.f32.gmra.mxu0 %v3596
      %v4203 = vpop.f32.mrf.mxu0
      %v4204 = vadd.f32 0.0, %v4203
      %4205 = vmatmul.f32.gmra.mxu0 %v3599
      %v4206 = vpop.f32.mrf.mxu0
      %v4207 = vadd.f32 0.0, %v4206
      %4208 = vmatmul.f32.gmra.mxu0 %v3602
      %v4209 = vpop.f32.mrf.mxu0
      %v4210 = vadd.f32 0.0, %v4209
      %4211 = vmatmul.f32.gmra.mxu0 %v3605
      %v4212 = vpop.f32.mrf.mxu0
      %v4213 = vadd.f32 0.0, %v4212
      %4214 = vmatmul.f32.gmra.mxu0 %v3608
      %v4215 = vpop.f32.mrf.mxu0
      %v4216 = vadd.f32 0.0, %v4215
      %4217 = vmatmul.f32.gmra.mxu0 %v3611
      %v4218 = vpop.f32.mrf.mxu0
      %v4219 = vadd.f32 0.0, %v4218
      %4220 = vmatmul.f32.gmra.mxu0 %v3614
      %v4221 = vpop.f32.mrf.mxu0
      %v4222 = vadd.f32 0.0, %v4221
      %4223 = vmatmul.f32.gmra.mxu0 %v3617
      %v4224 = vpop.f32.mrf.mxu0
      %v4225 = vadd.f32 0.0, %v4224
      %4226 = vmatmul.f32.gmra.mxu0 %v3620
      %v4227 = vpop.f32.mrf.mxu0
      %v4228 = vadd.f32 0.0, %v4227
      %4229 = vmatmul.f32.gmra.mxu0 %v3623
      %v4230 = vpop.f32.mrf.mxu0
      %v4231 = vadd.f32 0.0, %v4230
      %4232 = vdwg.mxu0
      %4233 = vmatpush.msra.mxu0 0.0
      %4234 = vmatpush.msra.mxu0 0.0
      %4235 = vmatpush.msra.mxu0 0.0
      %4236 = vmatpush.msra.mxu0 0.0
      %4237 = vmatpush.msra.mxu0 0.0
      %4238 = vmatpush.msra.mxu0 0.0
      %4239 = vmatpush.msra.mxu0 0.0
      %4240 = vmatpush.msra.mxu0 0.0
      %4241 = vmatpush.msra.mxu0 0.0
      %4242 = vmatpush.msra.mxu0 0.0
      %4243 = vmatpush.msra.mxu0 0.0
      %4244 = vmatpush.msra.mxu0 0.0
      %4245 = vmatpush.msra.mxu0 0.0
      %4246 = vmatpush.msra.mxu0 0.0
      %4247 = vmatpush.msra.mxu0 0.0
      %4248 = vmatpush.msra.mxu0 %v4167
      %4249 = vmatmul.f32.gmra.mxu0 %v3578
      %v4250 = vpop.f32.mrf.mxu0
      %v4251 = vadd.f32 0.0, %v4250
      %4252 = vmatmul.f32.gmra.mxu0 %v3581
      %v4253 = vpop.f32.mrf.mxu0
      %v4254 = vadd.f32 0.0, %v4253
      %4255 = vmatmul.f32.gmra.mxu0 %v3584
      %v4256 = vpop.f32.mrf.mxu0
      %v4257 = vadd.f32 0.0, %v4256
      %4258 = vmatmul.f32.gmra.mxu0 %v3587
      %v4259 = vpop.f32.mrf.mxu0
      %v4260 = vadd.f32 0.0, %v4259
      %4261 = vmatmul.f32.gmra.mxu0 %v3590
      %v4262 = vpop.f32.mrf.mxu0
      %v4263 = vadd.f32 0.0, %v4262
      %4264 = vmatmul.f32.gmra.mxu0 %v3593
      %v4265 = vpop.f32.mrf.mxu0
      %v4266 = vadd.f32 0.0, %v4265
      %4267 = vmatmul.f32.gmra.mxu0 %v3596
      %v4268 = vpop.f32.mrf.mxu0
      %v4269 = vadd.f32 0.0, %v4268
      %4270 = vmatmul.f32.gmra.mxu0 %v3599
      %v4271 = vpop.f32.mrf.mxu0
      %v4272 = vadd.f32 0.0, %v4271
      %4273 = vmatmul.f32.gmra.mxu0 %v3602
      %v4274 = vpop.f32.mrf.mxu0
      %v4275 = vadd.f32 0.0, %v4274
      %4276 = vmatmul.f32.gmra.mxu0 %v3605
      %v4277 = vpop.f32.mrf.mxu0
      %v4278 = vadd.f32 0.0, %v4277
      %4279 = vmatmul.f32.gmra.mxu0 %v3608
      %v4280 = vpop.f32.mrf.mxu0
      %v4281 = vadd.f32 0.0, %v4280
      %4282 = vmatmul.f32.gmra.mxu0 %v3611
      %v4283 = vpop.f32.mrf.mxu0
      %v4284 = vadd.f32 0.0, %v4283
      %4285 = vmatmul.f32.gmra.mxu0 %v3614
      %v4286 = vpop.f32.mrf.mxu0
      %v4287 = vadd.f32 0.0, %v4286
      %4288 = vmatmul.f32.gmra.mxu0 %v3617
      %v4289 = vpop.f32.mrf.mxu0
      %v4290 = vadd.f32 0.0, %v4289
      %4291 = vmatmul.f32.gmra.mxu0 %v3620
      %v4292 = vpop.f32.mrf.mxu0
      %v4293 = vadd.f32 0.0, %v4292
      %4294 = vmatmul.f32.gmra.mxu0 %v3623
      %v4295 = vpop.f32.mrf.mxu0
      %v4296 = vadd.f32 0.0, %v4295
      %4297 = vdwg.mxu0
      %v4298 = vsub.f32 %v4080, %v4186
      %v4299 = vsub.f32 %v4081, %v4189
      %v4300 = vsub.f32 %v4082, %v4192
      %v4301 = vsub.f32 %v4083, %v4195
      %v4302 = vsub.f32 %v4084, %v4198
      %v4303 = vsub.f32 %v4085, %v4201
      %v4304 = vsub.f32 %v4086, %v4204
      %v4305 = vsub.f32 %v4087, %v4207
      %v4306 = vsub.f32 %v4088, %v4210
      %v4307 = vsub.f32 %v4089, %v4213
      %v4308 = vsub.f32 %v4090, %v4216
      %v4309 = vsub.f32 %v4091, %v4219
      %v4310 = vsub.f32 %v4092, %v4222
      %v4311 = vsub.f32 %v4093, %v4225
      %v4312 = vsub.f32 %v4094, %v4228
      %v4313 = vsub.f32 %v4095, %v4231
      %v4314 = vmul.f32 %v4298, %v4251
      %v4315 = vmul.f32 %v4299, %v4254
      %v4316 = vmul.f32 %v4300, %v4257
      %v4317 = vmul.f32 %v4301, %v4260
      %v4318 = vmul.f32 %v4302, %v4263
      %v4319 = vmul.f32 %v4303, %v4266
      %v4320 = vmul.f32 %v4304, %v4269
      %v4321 = vmul.f32 %v4305, %v4272
      %v4322 = vmul.f32 %v4306, %v4275
      %v4323 = vmul.f32 %v4307, %v4278
      %v4324 = vmul.f32 %v4308, %v4281
      %v4325 = vmul.f32 %v4309, %v4284
      %v4326 = vmul.f32 %v4310, %v4287
      %v4327 = vmul.f32 %v4311, %v4290
      %v4328 = vmul.f32 %v4312, %v4293
      %v4329 = vmul.f32 %v4313, %v4296
      %v4330 = vperm.slane %v4096, 0
      %v4331 = vmul.f32 %v4314, %v4330
      %v4332 = vmul.f32 %v4315, %v4330
      %v4333 = vmul.f32 %v4316, %v4330
      %v4334 = vmul.f32 %v4317, %v4330
      %v4335 = vmul.f32 %v4318, %v4330
      %v4336 = vmul.f32 %v4319, %v4330
      %v4337 = vmul.f32 %v4320, %v4330
      %v4338 = vmul.f32 %v4321, %v4330
      %v4339 = vmul.f32 %v4322, %v4330
      %v4340 = vmul.f32 %v4323, %v4330
      %v4341 = vmul.f32 %v4324, %v4330
      %v4342 = vmul.f32 %v4325, %v4330
      %v4343 = vmul.f32 %v4326, %v4330
      %v4344 = vmul.f32 %v4327, %v4330
      %v4345 = vmul.f32 %v4328, %v4330
      %v4346 = vmul.f32 %v4329, %v4330
      %v4347 = vperm.slane %v4097, 0
      %v4348 = vadd.f32 %v4331, %v4347
      %v4349 = vadd.f32 %v4332, %v4347
      %v4350 = vadd.f32 %v4333, %v4347
      %v4351 = vadd.f32 %v4334, %v4347
      %v4352 = vadd.f32 %v4335, %v4347
      %v4353 = vadd.f32 %v4336, %v4347
      %v4354 = vadd.f32 %v4337, %v4347
      %v4355 = vadd.f32 %v4338, %v4347
      %v4356 = vadd.f32 %v4339, %v4347
      %v4357 = vadd.f32 %v4340, %v4347
      %v4358 = vadd.f32 %v4341, %v4347
      %v4359 = vadd.f32 %v4342, %v4347
      %v4360 = vadd.f32 %v4343, %v4347
      %v4361 = vadd.f32 %v4344, %v4347
      %v4362 = vadd.f32 %v4345, %v4347
      %v4363 = vadd.f32 %v4346, %v4347
      %v4364 = vld [vmem:[%s3 + $0x248] sm:$0xff]
      %v4365 = vld [vmem:[%s3 + $0x250] sm:$0xff]
      %v4366 = vld [vmem:[%s3 + $0x258] sm:$0xff]
      %v4367 = vld [vmem:[%s3 + $0x260] sm:$0xff]
      %v4368 = vld [vmem:[%s3 + $0x268] sm:$0xff]
      %v4369 = vld [vmem:[%s3 + $0x270] sm:$0xff]
      %v4370 = vld [vmem:[%s3 + $0x278] sm:$0xff]
      %v4371 = vld [vmem:[%s3 + $0x280] sm:$0xff]
      %v4372 = vld [vmem:[%s3 + $0x288] sm:$0xff]
      %v4373 = vld [vmem:[%s3 + $0x290] sm:$0xff]
      %v4374 = vld [vmem:[%s3 + $0x298] sm:$0xff]
      %v4375 = vld [vmem:[%s3 + $0x2a0] sm:$0xff]
      %v4376 = vld [vmem:[%s3 + $0x2a8] sm:$0xff]
      %v4377 = vld [vmem:[%s3 + $0x2b0] sm:$0xff]
      %v4378 = vld [vmem:[%s3 + $0x2b8] sm:$0xff]
      %v4379 = vld [vmem:[%s3 + $0x2c0] sm:$0xff]
      %v4380 = vld [vmem:[%s6 + $0xc] sm:$0x1]
      %v4381 = vperm.slane %v4380, 0
      %v4383 = vsel %vm624, %v4348, 0
      %v4386 = vsel %vm624, %v4349, 0
      %v4389 = vsel %vm624, %v4350, 0
      %v4392 = vsel %vm624, %v4351, 0
      %v4395 = vsel %vm624, %v4352, 0
      %v4398 = vsel %vm624, %v4353, 0
      %v4401 = vsel %vm624, %v4354, 0
      %v4404 = vsel %vm624, %v4355, 0
      %v4407 = vsel %vm624, %v4356, 0
      %v4410 = vsel %vm624, %v4357, 0
      %v4413 = vsel %vm624, %v4358, 0
      %v4416 = vsel %vm624, %v4359, 0
      %v4419 = vsel %vm624, %v4360, 0
      %v4422 = vsel %vm624, %v4361, 0
      %v4425 = vsel %vm624, %v4362, 0
      %v4428 = vsel %vm624, %v4363, 0
      %4430 = vmatpush.msra.mxu0 0.0
      %4431 = vmatpush.msra.mxu0 0.0
      %4432 = vmatpush.msra.mxu0 0.0
      %4433 = vmatpush.msra.mxu0 0.0
      %4434 = vmatpush.msra.mxu0 0.0
      %4435 = vmatpush.msra.mxu0 0.0
      %4436 = vmatpush.msra.mxu0 0.0
      %4437 = vmatpush.msra.mxu0 0.0
      %4438 = vmatpush.msra.mxu0 0.0
      %4439 = vmatpush.msra.mxu0 0.0
      %4440 = vmatpush.msra.mxu0 0.0
      %4441 = vmatpush.msra.mxu0 0.0
      %4442 = vmatpush.msra.mxu0 %v4367
      %4443 = vmatpush.msra.mxu0 %v4366
      %4444 = vmatpush.msra.mxu0 %v4365
      %4445 = vmatpush.msra.mxu0 %v4364
      %4446 = vmatmul.f32.gmra.mxu0 %v4383
      %v4447 = vpop.f32.mrf.mxu0
      %v4448 = vadd.f32 %v4381, %v4447
      %4449 = vmatmul.f32.gmra.mxu0 %v4386
      %v4450 = vpop.f32.mrf.mxu0
      %v4451 = vadd.f32 %v4381, %v4450
      %4452 = vmatmul.f32.gmra.mxu0 %v4389
      %v4453 = vpop.f32.mrf.mxu0
      %v4454 = vadd.f32 %v4381, %v4453
      %4455 = vmatmul.f32.gmra.mxu0 %v4392
      %v4456 = vpop.f32.mrf.mxu0
      %v4457 = vadd.f32 %v4381, %v4456
      %4458 = vmatmul.f32.gmra.mxu0 %v4395
      %v4459 = vpop.f32.mrf.mxu0
      %v4460 = vadd.f32 %v4381, %v4459
      %4461 = vmatmul.f32.gmra.mxu0 %v4398
      %v4462 = vpop.f32.mrf.mxu0
      %v4463 = vadd.f32 %v4381, %v4462
      %4464 = vmatmul.f32.gmra.mxu0 %v4401
      %v4465 = vpop.f32.mrf.mxu0
      %v4466 = vadd.f32 %v4381, %v4465
      %4467 = vmatmul.f32.gmra.mxu0 %v4404
      %v4468 = vpop.f32.mrf.mxu0
      %v4469 = vadd.f32 %v4381, %v4468
      %4470 = vmatmul.f32.gmra.mxu0 %v4407
      %v4471 = vpop.f32.mrf.mxu0
      %v4472 = vadd.f32 %v4381, %v4471
      %4473 = vmatmul.f32.gmra.mxu0 %v4410
      %v4474 = vpop.f32.mrf.mxu0
      %v4475 = vadd.f32 %v4381, %v4474
      %4476 = vmatmul.f32.gmra.mxu0 %v4413
      %v4477 = vpop.f32.mrf.mxu0
      %v4478 = vadd.f32 %v4381, %v4477
      %4479 = vmatmul.f32.gmra.mxu0 %v4416
      %v4480 = vpop.f32.mrf.mxu0
      %v4481 = vadd.f32 %v4381, %v4480
      %4482 = vmatmul.f32.gmra.mxu0 %v4419
      %v4483 = vpop.f32.mrf.mxu0
      %v4484 = vadd.f32 %v4381, %v4483
      %4485 = vmatmul.f32.gmra.mxu0 %v4422
      %v4486 = vpop.f32.mrf.mxu0
      %v4487 = vadd.f32 %v4381, %v4486
      %4488 = vmatmul.f32.gmra.mxu0 %v4425
      %v4489 = vpop.f32.mrf.mxu0
      %v4490 = vadd.f32 %v4381, %v4489
      %4491 = vmatmul.f32.gmra.mxu0 %v4428
      %v4492 = vpop.f32.mrf.mxu0
      %v4493 = vadd.f32 %v4381, %v4492
      %4494 = vdwg.mxu0
      %4495 = vmatpush.msra.mxu0 0.0
      %4496 = vmatpush.msra.mxu0 0.0
      %4497 = vmatpush.msra.mxu0 0.0
      %4498 = vmatpush.msra.mxu0 0.0
      %4499 = vmatpush.msra.mxu0 0.0
      %4500 = vmatpush.msra.mxu0 0.0
      %4501 = vmatpush.msra.mxu0 0.0
      %4502 = vmatpush.msra.mxu0 0.0
      %4503 = vmatpush.msra.mxu0 0.0
      %4504 = vmatpush.msra.mxu0 0.0
      %4505 = vmatpush.msra.mxu0 0.0
      %4506 = vmatpush.msra.mxu0 0.0
      %4507 = vmatpush.msra.mxu0 %v4371
      %4508 = vmatpush.msra.mxu0 %v4370
      %4509 = vmatpush.msra.mxu0 %v4369
      %4510 = vmatpush.msra.mxu0 %v4368
      %4511 = vmatmul.f32.gmra.mxu0 %v4383
      %v4512 = vpop.f32.mrf.mxu0
      %v4513 = vadd.f32 0.0, %v4512
      %4514 = vmatmul.f32.gmra.mxu0 %v4386
      %v4515 = vpop.f32.mrf.mxu0
      %v4516 = vadd.f32 0.0, %v4515
      %4517 = vmatmul.f32.gmra.mxu0 %v4389
      %v4518 = vpop.f32.mrf.mxu0
      %v4519 = vadd.f32 0.0, %v4518
      %4520 = vmatmul.f32.gmra.mxu0 %v4392
      %v4521 = vpop.f32.mrf.mxu0
      %v4522 = vadd.f32 0.0, %v4521
      %4523 = vmatmul.f32.gmra.mxu0 %v4395
      %v4524 = vpop.f32.mrf.mxu0
      %v4525 = vadd.f32 0.0, %v4524
      %4526 = vmatmul.f32.gmra.mxu0 %v4398
      %v4527 = vpop.f32.mrf.mxu0
      %v4528 = vadd.f32 0.0, %v4527
      %4529 = vmatmul.f32.gmra.mxu0 %v4401
      %v4530 = vpop.f32.mrf.mxu0
      %v4531 = vadd.f32 0.0, %v4530
      %4532 = vmatmul.f32.gmra.mxu0 %v4404
      %v4533 = vpop.f32.mrf.mxu0
      %v4534 = vadd.f32 0.0, %v4533
      %4535 = vmatmul.f32.gmra.mxu0 %v4407
      %v4536 = vpop.f32.mrf.mxu0
      %v4537 = vadd.f32 0.0, %v4536
      %4538 = vmatmul.f32.gmra.mxu0 %v4410
      %v4539 = vpop.f32.mrf.mxu0
      %v4540 = vadd.f32 0.0, %v4539
      %4541 = vmatmul.f32.gmra.mxu0 %v4413
      %v4542 = vpop.f32.mrf.mxu0
      %v4543 = vadd.f32 0.0, %v4542
      %4544 = vmatmul.f32.gmra.mxu0 %v4416
      %v4545 = vpop.f32.mrf.mxu0
      %v4546 = vadd.f32 0.0, %v4545
      %4547 = vmatmul.f32.gmra.mxu0 %v4419
      %v4548 = vpop.f32.mrf.mxu0
      %v4549 = vadd.f32 0.0, %v4548
      %4550 = vmatmul.f32.gmra.mxu0 %v4422
      %v4551 = vpop.f32.mrf.mxu0
      %v4552 = vadd.f32 0.0, %v4551
      %4553 = vmatmul.f32.gmra.mxu0 %v4425
      %v4554 = vpop.f32.mrf.mxu0
      %v4555 = vadd.f32 0.0, %v4554
      %4556 = vmatmul.f32.gmra.mxu0 %v4428
      %v4557 = vpop.f32.mrf.mxu0
      %v4558 = vadd.f32 0.0, %v4557
      %4559 = vdwg.mxu0
      %4560 = vmatpush.msra.mxu0 0.0
      %4561 = vmatpush.msra.mxu0 0.0
      %4562 = vmatpush.msra.mxu0 0.0
      %4563 = vmatpush.msra.mxu0 0.0
      %4564 = vmatpush.msra.mxu0 0.0
      %4565 = vmatpush.msra.mxu0 0.0
      %4566 = vmatpush.msra.mxu0 0.0
      %4567 = vmatpush.msra.mxu0 0.0
      %4568 = vmatpush.msra.mxu0 0.0
      %4569 = vmatpush.msra.mxu0 0.0
      %4570 = vmatpush.msra.mxu0 0.0
      %4571 = vmatpush.msra.mxu0 0.0
      %4572 = vmatpush.msra.mxu0 %v4375
      %4573 = vmatpush.msra.mxu0 %v4374
      %4574 = vmatpush.msra.mxu0 %v4373
      %4575 = vmatpush.msra.mxu0 %v4372
      %4576 = vmatmul.f32.gmra.mxu0 %v4383
      %v4577 = vpop.f32.mrf.mxu0
      %v4578 = vadd.f32 0.0, %v4577
      %4579 = vmatmul.f32.gmra.mxu0 %v4386
      %v4580 = vpop.f32.mrf.mxu0
      %v4581 = vadd.f32 0.0, %v4580
      %4582 = vmatmul.f32.gmra.mxu0 %v4389
      %v4583 = vpop.f32.mrf.mxu0
      %v4584 = vadd.f32 0.0, %v4583
      %4585 = vmatmul.f32.gmra.mxu0 %v4392
      %v4586 = vpop.f32.mrf.mxu0
      %v4587 = vadd.f32 0.0, %v4586
      %4588 = vmatmul.f32.gmra.mxu0 %v4395
      %v4589 = vpop.f32.mrf.mxu0
      %v4590 = vadd.f32 0.0, %v4589
      %4591 = vmatmul.f32.gmra.mxu0 %v4398
      %v4592 = vpop.f32.mrf.mxu0
      %v4593 = vadd.f32 0.0, %v4592
      %4594 = vmatmul.f32.gmra.mxu0 %v4401
      %v4595 = vpop.f32.mrf.mxu0
      %v4596 = vadd.f32 0.0, %v4595
      %4597 = vmatmul.f32.gmra.mxu0 %v4404
      %v4598 = vpop.f32.mrf.mxu0
      %v4599 = vadd.f32 0.0, %v4598
      %4600 = vmatmul.f32.gmra.mxu0 %v4407
      %v4601 = vpop.f32.mrf.mxu0
      %v4602 = vadd.f32 0.0, %v4601
      %4603 = vmatmul.f32.gmra.mxu0 %v4410
      %v4604 = vpop.f32.mrf.mxu0
      %v4605 = vadd.f32 0.0, %v4604
      %4606 = vmatmul.f32.gmra.mxu0 %v4413
      %v4607 = vpop.f32.mrf.mxu0
      %v4608 = vadd.f32 0.0, %v4607
      %4609 = vmatmul.f32.gmra.mxu0 %v4416
      %v4610 = vpop.f32.mrf.mxu0
      %v4611 = vadd.f32 0.0, %v4610
      %4612 = vmatmul.f32.gmra.mxu0 %v4419
      %v4613 = vpop.f32.mrf.mxu0
      %v4614 = vadd.f32 0.0, %v4613
      %4615 = vmatmul.f32.gmra.mxu0 %v4422
      %v4616 = vpop.f32.mrf.mxu0
      %v4617 = vadd.f32 0.0, %v4616
      %4618 = vmatmul.f32.gmra.mxu0 %v4425
      %v4619 = vpop.f32.mrf.mxu0
      %v4620 = vadd.f32 0.0, %v4619
      %4621 = vmatmul.f32.gmra.mxu0 %v4428
      %v4622 = vpop.f32.mrf.mxu0
      %v4623 = vadd.f32 0.0, %v4622
      %4624 = vdwg.mxu0
      %v4626 = vsel %vm624, %v4448, 0
      %v4629 = vsel %vm624, %v4451, 0
      %v4632 = vsel %vm624, %v4454, 0
      %v4635 = vsel %vm624, %v4457, 0
      %v4638 = vsel %vm624, %v4460, 0
      %v4641 = vsel %vm624, %v4463, 0
      %v4644 = vsel %vm624, %v4466, 0
      %v4647 = vsel %vm624, %v4469, 0
      %v4650 = vsel %vm624, %v4472, 0
      %v4653 = vsel %vm624, %v4475, 0
      %v4656 = vsel %vm624, %v4478, 0
      %v4659 = vsel %vm624, %v4481, 0
      %v4662 = vsel %vm624, %v4484, 0
      %v4665 = vsel %vm624, %v4487, 0
      %v4668 = vsel %vm624, %v4490, 0
      %v4671 = vsel %vm624, %v4493, 0
      %v4674 = vsel %vm624, %v4513, 0
      %v4677 = vsel %vm624, %v4516, 0
      %v4680 = vsel %vm624, %v4519, 0
      %v4683 = vsel %vm624, %v4522, 0
      %v4686 = vsel %vm624, %v4525, 0
      %v4689 = vsel %vm624, %v4528, 0
      %v4692 = vsel %vm624, %v4531, 0
      %v4695 = vsel %vm624, %v4534, 0
      %v4698 = vsel %vm624, %v4537, 0
      %v4701 = vsel %vm624, %v4540, 0
      %v4704 = vsel %vm624, %v4543, 0
      %v4707 = vsel %vm624, %v4546, 0
      %v4710 = vsel %vm624, %v4549, 0
      %v4713 = vsel %vm624, %v4552, 0
      %v4716 = vsel %vm624, %v4555, 0
      %v4719 = vsel %vm624, %v4558, 0
      %4721 = vmatpush.xpose.msra.mxu0 %v4719
      %4722 = vmatpush.xpose.msra.mxu0 %v4716
      %4723 = vmatpush.xpose.msra.mxu0 %v4713
      %4724 = vmatpush.xpose.msra.mxu0 %v4710
      %4725 = vmatpush.xpose.msra.mxu0 %v4707
      %4726 = vmatpush.xpose.msra.mxu0 %v4704
      %4727 = vmatpush.xpose.msra.mxu0 %v4701
      %4728 = vmatpush.xpose.msra.mxu0 %v4698
      %4729 = vmatpush.xpose.msra.mxu0 %v4695
      %4730 = vmatpush.xpose.msra.mxu0 %v4692
      %4731 = vmatpush.xpose.msra.mxu0 %v4689
      %4732 = vmatpush.xpose.msra.mxu0 %v4686
      %4733 = vmatpush.xpose.msra.mxu0 %v4683
      %4734 = vmatpush.xpose.msra.mxu0 %v4680
      %4735 = vmatpush.xpose.msra.mxu0 %v4677
      %4736 = vmatpush.xpose.msra.mxu0 %v4674
      %4737 = vmatmul.f32.gmra.mxu0 %v4626
      %v4738 = vpop.f32.mrf.mxu0
      %v4739 = vadd.f32 %v409, %v4738
      %4740 = vmatmul.f32.gmra.mxu0 %v4629
      %v4741 = vpop.f32.mrf.mxu0
      %v4742 = vadd.f32 %v410, %v4741
      %4743 = vmatmul.f32.gmra.mxu0 %v4632
      %v4744 = vpop.f32.mrf.mxu0
      %v4745 = vadd.f32 %v411, %v4744
      %4746 = vmatmul.f32.gmra.mxu0 %v4635
      %v4747 = vpop.f32.mrf.mxu0
      %v4748 = vadd.f32 %v412, %v4747
      %4749 = vmatmul.f32.gmra.mxu0 %v4638
      %v4750 = vpop.f32.mrf.mxu0
      %v4751 = vadd.f32 %v413, %v4750
      %4752 = vmatmul.f32.gmra.mxu0 %v4641
      %v4753 = vpop.f32.mrf.mxu0
      %v4754 = vadd.f32 %v414, %v4753
      %4755 = vmatmul.f32.gmra.mxu0 %v4644
      %v4756 = vpop.f32.mrf.mxu0
      %v4757 = vadd.f32 %v415, %v4756
      %4758 = vmatmul.f32.gmra.mxu0 %v4647
      %v4759 = vpop.f32.mrf.mxu0
      %v4760 = vadd.f32 %v416, %v4759
      %4761 = vmatmul.f32.gmra.mxu0 %v4650
      %v4762 = vpop.f32.mrf.mxu0
      %v4763 = vadd.f32 %v417, %v4762
      %4764 = vmatmul.f32.gmra.mxu0 %v4653
      %v4765 = vpop.f32.mrf.mxu0
      %v4766 = vadd.f32 %v418, %v4765
      %4767 = vmatmul.f32.gmra.mxu0 %v4656
      %v4768 = vpop.f32.mrf.mxu0
      %v4769 = vadd.f32 %v419, %v4768
      %4770 = vmatmul.f32.gmra.mxu0 %v4659
      %v4771 = vpop.f32.mrf.mxu0
      %v4772 = vadd.f32 %v420, %v4771
      %4773 = vmatmul.f32.gmra.mxu0 %v4662
      %v4774 = vpop.f32.mrf.mxu0
      %v4775 = vadd.f32 %v421, %v4774
      %4776 = vmatmul.f32.gmra.mxu0 %v4665
      %v4777 = vpop.f32.mrf.mxu0
      %v4778 = vadd.f32 %v422, %v4777
      %4779 = vmatmul.f32.gmra.mxu0 %v4668
      %v4780 = vpop.f32.mrf.mxu0
      %v4781 = vadd.f32 %v423, %v4780
      %4782 = vmatmul.f32.gmra.mxu0 %v4671
      %v4783 = vpop.f32.mrf.mxu0
      %v4784 = vadd.f32 %v424, %v4783
      %4785 = vdwg.mxu0
      %4786 = vmax.xlane.f32.xlu0 %v4739
      %v4787 = vpop.xlane.xlu0 %4786
      %4788 = vmax.xlane.f32.xlu0 %v4742
      %v4789 = vpop.xlane.xlu0 %4788
      %4790 = vmax.xlane.f32.xlu0 %v4745
      %v4791 = vpop.xlane.xlu0 %4790
      %4792 = vmax.xlane.f32.xlu0 %v4748
      %v4793 = vpop.xlane.xlu0 %4792
      %4794 = vmax.xlane.f32.xlu0 %v4751
      %v4795 = vpop.xlane.xlu0 %4794
      %4796 = vmax.xlane.f32.xlu0 %v4754
      %v4797 = vpop.xlane.xlu0 %4796
      %4798 = vmax.xlane.f32.xlu0 %v4757
      %v4799 = vpop.xlane.xlu0 %4798
      %4800 = vmax.xlane.f32.xlu0 %v4760
      %v4801 = vpop.xlane.xlu0 %4800
      %4802 = vmax.xlane.f32.xlu0 %v4763
      %v4803 = vpop.xlane.xlu0 %4802
      %4804 = vmax.xlane.f32.xlu0 %v4766
      %v4805 = vpop.xlane.xlu0 %4804
      %4806 = vmax.xlane.f32.xlu0 %v4769
      %v4807 = vpop.xlane.xlu0 %4806
      %4808 = vmax.xlane.f32.xlu0 %v4772
      %v4809 = vpop.xlane.xlu0 %4808
      %4810 = vmax.xlane.f32.xlu0 %v4775
      %v4811 = vpop.xlane.xlu0 %4810
      %4812 = vmax.xlane.f32.xlu0 %v4778
      %v4813 = vpop.xlane.xlu0 %4812
      %4814 = vmax.xlane.f32.xlu0 %v4781
      %v4815 = vpop.xlane.xlu0 %4814
      %4816 = vmax.xlane.f32.xlu0 %v4784
      %v4817 = vpop.xlane.xlu0 %4816
      %v4818 = vsub.f32 %v4739, %v4787
      %v4819 = vsub.f32 %v4742, %v4789
      %v4820 = vsub.f32 %v4745, %v4791
      %v4821 = vsub.f32 %v4748, %v4793
      %v4822 = vsub.f32 %v4751, %v4795
      %v4823 = vsub.f32 %v4754, %v4797
      %v4824 = vsub.f32 %v4757, %v4799
      %v4825 = vsub.f32 %v4760, %v4801
      %v4826 = vsub.f32 %v4763, %v4803
      %v4827 = vsub.f32 %v4766, %v4805
      %v4828 = vsub.f32 %v4769, %v4807
      %v4829 = vsub.f32 %v4772, %v4809
      %v4830 = vsub.f32 %v4775, %v4811
      %v4831 = vsub.f32 %v4778, %v4813
      %v4832 = vsub.f32 %v4781, %v4815
      %v4833 = vsub.f32 %v4784, %v4817
      %v4834 = vmul.f32 %v4818, 1.442695
      %v4835 = vpow.pop %v4834
      %v4836 = vmul.f32 %v4819, 1.442695
      %v4837 = vpow.pop %v4836
      %v4838 = vmul.f32 %v4820, 1.442695
      %v4839 = vpow.pop %v4838
      %v4840 = vmul.f32 %v4821, 1.442695
      %v4841 = vpow.pop %v4840
      %v4842 = vmul.f32 %v4822, 1.442695
      %v4843 = vpow.pop %v4842
      %v4844 = vmul.f32 %v4823, 1.442695
      %v4845 = vpow.pop %v4844
      %v4846 = vmul.f32 %v4824, 1.442695
      %v4847 = vpow.pop %v4846
      %v4848 = vmul.f32 %v4825, 1.442695
      %v4849 = vpow.pop %v4848
      %v4850 = vmul.f32 %v4826, 1.442695
      %v4851 = vpow.pop %v4850
      %v4852 = vmul.f32 %v4827, 1.442695
      %v4853 = vpow.pop %v4852
      %v4854 = vmul.f32 %v4828, 1.442695
      %v4855 = vpow.pop %v4854
      %v4856 = vmul.f32 %v4829, 1.442695
      %v4857 = vpow.pop %v4856
      %v4858 = vmul.f32 %v4830, 1.442695
      %v4859 = vpow.pop %v4858
      %v4860 = vmul.f32 %v4831, 1.442695
      %v4861 = vpow.pop %v4860
      %v4862 = vmul.f32 %v4832, 1.442695
      %v4863 = vpow.pop %v4862
      %v4864 = vmul.f32 %v4833, 1.442695
      %v4865 = vpow.pop %v4864
      %4866 = vadd.xlane.f32.xlu0 %v4835
      %v4867 = vpop.xlane.xlu0 %4866
      %4868 = vadd.xlane.f32.xlu0 %v4837
      %v4869 = vpop.xlane.xlu0 %4868
      %4870 = vadd.xlane.f32.xlu0 %v4839
      %v4871 = vpop.xlane.xlu0 %4870
      %4872 = vadd.xlane.f32.xlu0 %v4841
      %v4873 = vpop.xlane.xlu0 %4872
      %4874 = vadd.xlane.f32.xlu0 %v4843
      %v4875 = vpop.xlane.xlu0 %4874
      %4876 = vadd.xlane.f32.xlu0 %v4845
      %v4877 = vpop.xlane.xlu0 %4876
      %4878 = vadd.xlane.f32.xlu0 %v4847
      %v4879 = vpop.xlane.xlu0 %4878
      %4880 = vadd.xlane.f32.xlu0 %v4849
      %v4881 = vpop.xlane.xlu0 %4880
      %4882 = vadd.xlane.f32.xlu0 %v4851
      %v4883 = vpop.xlane.xlu0 %4882
      %4884 = vadd.xlane.f32.xlu0 %v4853
      %v4885 = vpop.xlane.xlu0 %4884
      %4886 = vadd.xlane.f32.xlu0 %v4855
      %v4887 = vpop.xlane.xlu0 %4886
      %4888 = vadd.xlane.f32.xlu0 %v4857
      %v4889 = vpop.xlane.xlu0 %4888
      %4890 = vadd.xlane.f32.xlu0 %v4859
      %v4891 = vpop.xlane.xlu0 %4890
      %4892 = vadd.xlane.f32.xlu0 %v4861
      %v4893 = vpop.xlane.xlu0 %4892
      %4894 = vadd.xlane.f32.xlu0 %v4863
      %v4895 = vpop.xlane.xlu0 %4894
      %4896 = vadd.xlane.f32.xlu0 %v4865
      %v4897 = vpop.xlane.xlu0 %4896
      %v4898 = vrcp.pop %v4867
      %v4899 = vrcp.pop %v4869
      %v4900 = vrcp.pop %v4871
      %v4901 = vrcp.pop %v4873
      %v4902 = vrcp.pop %v4875
      %v4903 = vrcp.pop %v4877
      %v4904 = vrcp.pop %v4879
      %v4905 = vrcp.pop %v4881
      %v4906 = vrcp.pop %v4883
      %v4907 = vrcp.pop %v4885
      %v4908 = vrcp.pop %v4887
      %v4909 = vrcp.pop %v4889
      %v4910 = vrcp.pop %v4891
      %v4911 = vrcp.pop %v4893
      %v4912 = vrcp.pop %v4895
      %v4913 = vrcp.pop %v4897
      %v4914 = vmul.f32 %v4835, %v4898
      %v4915 = vmul.f32 %v4837, %v4899
      %v4916 = vmul.f32 %v4839, %v4900
      %v4917 = vmul.f32 %v4841, %v4901
      %v4918 = vmul.f32 %v4843, %v4902
      %v4919 = vmul.f32 %v4845, %v4903
      %v4920 = vmul.f32 %v4847, %v4904
      %v4921 = vmul.f32 %v4849, %v4905
      %v4922 = vmul.f32 %v4851, %v4906
      %v4923 = vmul.f32 %v4853, %v4907
      %v4924 = vmul.f32 %v4855, %v4908
      %v4925 = vmul.f32 %v4857, %v4909
      %v4926 = vmul.f32 %v4859, %v4910
      %v4927 = vmul.f32 %v4861, %v4911
      %v4928 = vmul.f32 %v4863, %v4912
      %v4929 = vmul.f32 %v4865, %v4913
      %4930 = vmatpush.msra.mxu0 %v4623
      %4931 = vmatpush.msra.mxu0 %v4620
      %4932 = vmatpush.msra.mxu0 %v4617
      %4933 = vmatpush.msra.mxu0 %v4614
      %4934 = vmatpush.msra.mxu0 %v4611
      %4935 = vmatpush.msra.mxu0 %v4608
      %4936 = vmatpush.msra.mxu0 %v4605
      %4937 = vmatpush.msra.mxu0 %v4602
      %4938 = vmatpush.msra.mxu0 %v4599
      %4939 = vmatpush.msra.mxu0 %v4596
      %4940 = vmatpush.msra.mxu0 %v4593
      %4941 = vmatpush.msra.mxu0 %v4590
      %4942 = vmatpush.msra.mxu0 %v4587
      %4943 = vmatpush.msra.mxu0 %v4584
      %4944 = vmatpush.msra.mxu0 %v4581
      %4945 = vmatpush.msra.mxu0 %v4578
      %4946 = vmatmul.f32.gmra.mxu0 %v4914
      %v4947 = vpop.f32.mrf.mxu0
      %v4948 = vadd.f32 0.0, %v4947
      %4949 = vmatmul.f32.gmra.mxu0 %v4915
      %v4950 = vpop.f32.mrf.mxu0
      %v4951 = vadd.f32 0.0, %v4950
      %4952 = vmatmul.f32.gmra.mxu0 %v4916
      %v4953 = vpop.f32.mrf.mxu0
      %v4954 = vadd.f32 0.0, %v4953
      %4955 = vmatmul.f32.gmra.mxu0 %v4917
      %v4956 = vpop.f32.mrf.mxu0
      %v4957 = vadd.f32 0.0, %v4956
      %4958 = vmatmul.f32.gmra.mxu0 %v4918
      %v4959 = vpop.f32.mrf.mxu0
      %v4960 = vadd.f32 0.0, %v4959
      %4961 = vmatmul.f32.gmra.mxu0 %v4919
      %v4962 = vpop.f32.mrf.mxu0
      %v4963 = vadd.f32 0.0, %v4962
      %4964 = vmatmul.f32.gmra.mxu0 %v4920
      %v4965 = vpop.f32.mrf.mxu0
      %v4966 = vadd.f32 0.0, %v4965
      %4967 = vmatmul.f32.gmra.mxu0 %v4921
      %v4968 = vpop.f32.mrf.mxu0
      %v4969 = vadd.f32 0.0, %v4968
      %4970 = vmatmul.f32.gmra.mxu0 %v4922
      %v4971 = vpop.f32.mrf.mxu0
      %v4972 = vadd.f32 0.0, %v4971
      %4973 = vmatmul.f32.gmra.mxu0 %v4923
      %v4974 = vpop.f32.mrf.mxu0
      %v4975 = vadd.f32 0.0, %v4974
      %4976 = vmatmul.f32.gmra.mxu0 %v4924
      %v4977 = vpop.f32.mrf.mxu0
      %v4978 = vadd.f32 0.0, %v4977
      %4979 = vmatmul.f32.gmra.mxu0 %v4925
      %v4980 = vpop.f32.mrf.mxu0
      %v4981 = vadd.f32 0.0, %v4980
      %4982 = vmatmul.f32.gmra.mxu0 %v4926
      %v4983 = vpop.f32.mrf.mxu0
      %v4984 = vadd.f32 0.0, %v4983
      %4985 = vmatmul.f32.gmra.mxu0 %v4927
      %v4986 = vpop.f32.mrf.mxu0
      %v4987 = vadd.f32 0.0, %v4986
      %4988 = vmatmul.f32.gmra.mxu0 %v4928
      %v4989 = vpop.f32.mrf.mxu0
      %v4990 = vadd.f32 0.0, %v4989
      %4991 = vmatmul.f32.gmra.mxu0 %v4929
      %v4992 = vpop.f32.mrf.mxu0
      %v4993 = vadd.f32 0.0, %v4992
      %4994 = vdwg.mxu0
      %v4995 = vld [vmem:[%s3 + $0x2c8] sm:$0xff]
      %v4996 = vld [vmem:[%s3 + $0x2d0] sm:$0xff]
      %v4997 = vld [vmem:[%s3 + $0x2d8] sm:$0xff]
      %v4998 = vld [vmem:[%s3 + $0x2e0] sm:$0xff]
      %v4999 = vld [vmem:[%s3 + $0x2e8] sm:$0xff]
      %v5000 = vld [vmem:[%s3 + $0x2f0] sm:$0xff]
      %v5001 = vld [vmem:[%s3 + $0x2f8] sm:$0xff]
      %v5002 = vld [vmem:[%s3 + $0x300] sm:$0xff]
      %v5003 = vld [vmem:[%s3 + $0x308] sm:$0xff]
      %v5004 = vld [vmem:[%s3 + $0x310] sm:$0xff]
      %v5005 = vld [vmem:[%s3 + $0x318] sm:$0xff]
      %v5006 = vld [vmem:[%s3 + $0x320] sm:$0xff]
      %v5007 = vld [vmem:[%s3 + $0x328] sm:$0xff]
      %v5008 = vld [vmem:[%s3 + $0x330] sm:$0xff]
      %v5009 = vld [vmem:[%s3 + $0x338] sm:$0xff]
      %v5010 = vld [vmem:[%s3 + $0x340] sm:$0xff]
      %v5011 = vld [vmem:[%s6 + $0xd] sm:$0x1]
      %v5012 = vperm.slane %v5011, 0
      %5013 = vmatpush.msra.mxu0 0.0
      %5014 = vmatpush.msra.mxu0 0.0
      %5015 = vmatpush.msra.mxu0 0.0
      %5016 = vmatpush.msra.mxu0 0.0
      %5017 = vmatpush.msra.mxu0 0.0
      %5018 = vmatpush.msra.mxu0 0.0
      %5019 = vmatpush.msra.mxu0 0.0
      %5020 = vmatpush.msra.mxu0 0.0
      %5021 = vmatpush.msra.mxu0 0.0
      %5022 = vmatpush.msra.mxu0 0.0
      %5023 = vmatpush.msra.mxu0 0.0
      %5024 = vmatpush.msra.mxu0 0.0
      %5025 = vmatpush.msra.mxu0 %v4998
      %5026 = vmatpush.msra.mxu0 %v4997
      %5027 = vmatpush.msra.mxu0 %v4996
      %5028 = vmatpush.msra.mxu0 %v4995
      %5029 = vmatmul.f32.gmra.mxu0 %v4383
      %v5030 = vpop.f32.mrf.mxu0
      %v5031 = vadd.f32 %v5012, %v5030
      %5032 = vmatmul.f32.gmra.mxu0 %v4386
      %v5033 = vpop.f32.mrf.mxu0
      %v5034 = vadd.f32 %v5012, %v5033
      %5035 = vmatmul.f32.gmra.mxu0 %v4389
      %v5036 = vpop.f32.mrf.mxu0
      %v5037 = vadd.f32 %v5012, %v5036
      %5038 = vmatmul.f32.gmra.mxu0 %v4392
      %v5039 = vpop.f32.mrf.mxu0
      %v5040 = vadd.f32 %v5012, %v5039
      %5041 = vmatmul.f32.gmra.mxu0 %v4395
      %v5042 = vpop.f32.mrf.mxu0
      %v5043 = vadd.f32 %v5012, %v5042
      %5044 = vmatmul.f32.gmra.mxu0 %v4398
      %v5045 = vpop.f32.mrf.mxu0
      %v5046 = vadd.f32 %v5012, %v5045
      %5047 = vmatmul.f32.gmra.mxu0 %v4401
      %v5048 = vpop.f32.mrf.mxu0
      %v5049 = vadd.f32 %v5012, %v5048
      %5050 = vmatmul.f32.gmra.mxu0 %v4404
      %v5051 = vpop.f32.mrf.mxu0
      %v5052 = vadd.f32 %v5012, %v5051
      %5053 = vmatmul.f32.gmra.mxu0 %v4407
      %v5054 = vpop.f32.mrf.mxu0
      %v5055 = vadd.f32 %v5012, %v5054
      %5056 = vmatmul.f32.gmra.mxu0 %v4410
      %v5057 = vpop.f32.mrf.mxu0
      %v5058 = vadd.f32 %v5012, %v5057
      %5059 = vmatmul.f32.gmra.mxu0 %v4413
      %v5060 = vpop.f32.mrf.mxu0
      %v5061 = vadd.f32 %v5012, %v5060
      %5062 = vmatmul.f32.gmra.mxu0 %v4416
      %v5063 = vpop.f32.mrf.mxu0
      %v5064 = vadd.f32 %v5012, %v5063
      %5065 = vmatmul.f32.gmra.mxu0 %v4419
      %v5066 = vpop.f32.mrf.mxu0
      %v5067 = vadd.f32 %v5012, %v5066
      %5068 = vmatmul.f32.gmra.mxu0 %v4422
      %v5069 = vpop.f32.mrf.mxu0
      %v5070 = vadd.f32 %v5012, %v5069
      %5071 = vmatmul.f32.gmra.mxu0 %v4425
      %v5072 = vpop.f32.mrf.mxu0
      %v5073 = vadd.f32 %v5012, %v5072
      %5074 = vmatmul.f32.gmra.mxu0 %v4428
      %v5075 = vpop.f32.mrf.mxu0
      %v5076 = vadd.f32 %v5012, %v5075
      %5077 = vdwg.mxu0
      %5078 = vmatpush.msra.mxu0 0.0
      %5079 = vmatpush.msra.mxu0 0.0
      %5080 = vmatpush.msra.mxu0 0.0
      %5081 = vmatpush.msra.mxu0 0.0
      %5082 = vmatpush.msra.mxu0 0.0
      %5083 = vmatpush.msra.mxu0 0.0
      %5084 = vmatpush.msra.mxu0 0.0
      %5085 = vmatpush.msra.mxu0 0.0
      %5086 = vmatpush.msra.mxu0 0.0
      %5087 = vmatpush.msra.mxu0 0.0
      %5088 = vmatpush.msra.mxu0 0.0
      %5089 = vmatpush.msra.mxu0 0.0
      %5090 = vmatpush.msra.mxu0 %v5002
      %5091 = vmatpush.msra.mxu0 %v5001
      %5092 = vmatpush.msra.mxu0 %v5000
      %5093 = vmatpush.msra.mxu0 %v4999
      %5094 = vmatmul.f32.gmra.mxu0 %v4383
      %v5095 = vpop.f32.mrf.mxu0
      %v5096 = vadd.f32 0.0, %v5095
      %5097 = vmatmul.f32.gmra.mxu0 %v4386
      %v5098 = vpop.f32.mrf.mxu0
      %v5099 = vadd.f32 0.0, %v5098
      %5100 = vmatmul.f32.gmra.mxu0 %v4389
      %v5101 = vpop.f32.mrf.mxu0
      %v5102 = vadd.f32 0.0, %v5101
      %5103 = vmatmul.f32.gmra.mxu0 %v4392
      %v5104 = vpop.f32.mrf.mxu0
      %v5105 = vadd.f32 0.0, %v5104
      %5106 = vmatmul.f32.gmra.mxu0 %v4395
      %v5107 = vpop.f32.mrf.mxu0
      %v5108 = vadd.f32 0.0, %v5107
      %5109 = vmatmul.f32.gmra.mxu0 %v4398
      %v5110 = vpop.f32.mrf.mxu0
      %v5111 = vadd.f32 0.0, %v5110
      %5112 = vmatmul.f32.gmra.mxu0 %v4401
      %v5113 = vpop.f32.mrf.mxu0
      %v5114 = vadd.f32 0.0, %v5113
      %5115 = vmatmul.f32.gmra.mxu0 %v4404
      %v5116 = vpop.f32.mrf.mxu0
      %v5117 = vadd.f32 0.0, %v5116
      %5118 = vmatmul.f32.gmra.mxu0 %v4407
      %v5119 = vpop.f32.mrf.mxu0
      %v5120 = vadd.f32 0.0, %v5119
      %5121 = vmatmul.f32.gmra.mxu0 %v4410
      %v5122 = vpop.f32.mrf.mxu0
      %v5123 = vadd.f32 0.0, %v5122
      %5124 = vmatmul.f32.gmra.mxu0 %v4413
      %v5125 = vpop.f32.mrf.mxu0
      %v5126 = vadd.f32 0.0, %v5125
      %5127 = vmatmul.f32.gmra.mxu0 %v4416
      %v5128 = vpop.f32.mrf.mxu0
      %v5129 = vadd.f32 0.0, %v5128
      %5130 = vmatmul.f32.gmra.mxu0 %v4419
      %v5131 = vpop.f32.mrf.mxu0
      %v5132 = vadd.f32 0.0, %v5131
      %5133 = vmatmul.f32.gmra.mxu0 %v4422
      %v5134 = vpop.f32.mrf.mxu0
      %v5135 = vadd.f32 0.0, %v5134
      %5136 = vmatmul.f32.gmra.mxu0 %v4425
      %v5137 = vpop.f32.mrf.mxu0
      %v5138 = vadd.f32 0.0, %v5137
      %5139 = vmatmul.f32.gmra.mxu0 %v4428
      %v5140 = vpop.f32.mrf.mxu0
      %v5141 = vadd.f32 0.0, %v5140
      %5142 = vdwg.mxu0
      %5143 = vmatpush.msra.mxu0 0.0
      %5144 = vmatpush.msra.mxu0 0.0
      %5145 = vmatpush.msra.mxu0 0.0
      %5146 = vmatpush.msra.mxu0 0.0
      %5147 = vmatpush.msra.mxu0 0.0
      %5148 = vmatpush.msra.mxu0 0.0
      %5149 = vmatpush.msra.mxu0 0.0
      %5150 = vmatpush.msra.mxu0 0.0
      %5151 = vmatpush.msra.mxu0 0.0
      %5152 = vmatpush.msra.mxu0 0.0
      %5153 = vmatpush.msra.mxu0 0.0
      %5154 = vmatpush.msra.mxu0 0.0
      %5155 = vmatpush.msra.mxu0 %v5006
      %5156 = vmatpush.msra.mxu0 %v5005
      %5157 = vmatpush.msra.mxu0 %v5004
      %5158 = vmatpush.msra.mxu0 %v5003
      %5159 = vmatmul.f32.gmra.mxu0 %v4383
      %v5160 = vpop.f32.mrf.mxu0
      %v5161 = vadd.f32 0.0, %v5160
      %5162 = vmatmul.f32.gmra.mxu0 %v4386
      %v5163 = vpop.f32.mrf.mxu0
      %v5164 = vadd.f32 0.0, %v5163
      %5165 = vmatmul.f32.gmra.mxu0 %v4389
      %v5166 = vpop.f32.mrf.mxu0
      %v5167 = vadd.f32 0.0, %v5166
      %5168 = vmatmul.f32.gmra.mxu0 %v4392
      %v5169 = vpop.f32.mrf.mxu0
      %v5170 = vadd.f32 0.0, %v5169
      %5171 = vmatmul.f32.gmra.mxu0 %v4395
      %v5172 = vpop.f32.mrf.mxu0
      %v5173 = vadd.f32 0.0, %v5172
      %5174 = vmatmul.f32.gmra.mxu0 %v4398
      %v5175 = vpop.f32.mrf.mxu0
      %v5176 = vadd.f32 0.0, %v5175
      %5177 = vmatmul.f32.gmra.mxu0 %v4401
      %v5178 = vpop.f32.mrf.mxu0
      %v5179 = vadd.f32 0.0, %v5178
      %5180 = vmatmul.f32.gmra.mxu0 %v4404
      %v5181 = vpop.f32.mrf.mxu0
      %v5182 = vadd.f32 0.0, %v5181
      %5183 = vmatmul.f32.gmra.mxu0 %v4407
      %v5184 = vpop.f32.mrf.mxu0
      %v5185 = vadd.f32 0.0, %v5184
      %5186 = vmatmul.f32.gmra.mxu0 %v4410
      %v5187 = vpop.f32.mrf.mxu0
      %v5188 = vadd.f32 0.0, %v5187
      %5189 = vmatmul.f32.gmra.mxu0 %v4413
      %v5190 = vpop.f32.mrf.mxu0
      %v5191 = vadd.f32 0.0, %v5190
      %5192 = vmatmul.f32.gmra.mxu0 %v4416
      %v5193 = vpop.f32.mrf.mxu0
      %v5194 = vadd.f32 0.0, %v5193
      %5195 = vmatmul.f32.gmra.mxu0 %v4419
      %v5196 = vpop.f32.mrf.mxu0
      %v5197 = vadd.f32 0.0, %v5196
      %5198 = vmatmul.f32.gmra.mxu0 %v4422
      %v5199 = vpop.f32.mrf.mxu0
      %v5200 = vadd.f32 0.0, %v5199
      %5201 = vmatmul.f32.gmra.mxu0 %v4425
      %v5202 = vpop.f32.mrf.mxu0
      %v5203 = vadd.f32 0.0, %v5202
      %5204 = vmatmul.f32.gmra.mxu0 %v4428
      %v5205 = vpop.f32.mrf.mxu0
      %v5206 = vadd.f32 0.0, %v5205
      %5207 = vdwg.mxu0
      %v5209 = vsel %vm624, %v5031, 0
      %v5212 = vsel %vm624, %v5034, 0
      %v5215 = vsel %vm624, %v5037, 0
      %v5218 = vsel %vm624, %v5040, 0
      %v5221 = vsel %vm624, %v5043, 0
      %v5224 = vsel %vm624, %v5046, 0
      %v5227 = vsel %vm624, %v5049, 0
      %v5230 = vsel %vm624, %v5052, 0
      %v5233 = vsel %vm624, %v5055, 0
      %v5236 = vsel %vm624, %v5058, 0
      %v5239 = vsel %vm624, %v5061, 0
      %v5242 = vsel %vm624, %v5064, 0
      %v5245 = vsel %vm624, %v5067, 0
      %v5248 = vsel %vm624, %v5070, 0
      %v5251 = vsel %vm624, %v5073, 0
      %v5254 = vsel %vm624, %v5076, 0
      %v5257 = vsel %vm624, %v5096, 0
      %v5260 = vsel %vm624, %v5099, 0
      %v5263 = vsel %vm624, %v5102, 0
      %v5266 = vsel %vm624, %v5105, 0
      %v5269 = vsel %vm624, %v5108, 0
      %v5272 = vsel %vm624, %v5111, 0
      %v5275 = vsel %vm624, %v5114, 0
      %v5278 = vsel %vm624, %v5117, 0
      %v5281 = vsel %vm624, %v5120, 0
      %v5284 = vsel %vm624, %v5123, 0
      %v5287 = vsel %vm624, %v5126, 0
      %v5290 = vsel %vm624, %v5129, 0
      %v5293 = vsel %vm624, %v5132, 0
      %v5296 = vsel %vm624, %v5135, 0
      %v5299 = vsel %vm624, %v5138, 0
      %v5302 = vsel %vm624, %v5141, 0
      %5304 = vmatpush.xpose.msra.mxu0 %v5302
      %5305 = vmatpush.xpose.msra.mxu0 %v5299
      %5306 = vmatpush.xpose.msra.mxu0 %v5296
      %5307 = vmatpush.xpose.msra.mxu0 %v5293
      %5308 = vmatpush.xpose.msra.mxu0 %v5290
      %5309 = vmatpush.xpose.msra.mxu0 %v5287
      %5310 = vmatpush.xpose.msra.mxu0 %v5284
      %5311 = vmatpush.xpose.msra.mxu0 %v5281
      %5312 = vmatpush.xpose.msra.mxu0 %v5278
      %5313 = vmatpush.xpose.msra.mxu0 %v5275
      %5314 = vmatpush.xpose.msra.mxu0 %v5272
      %5315 = vmatpush.xpose.msra.mxu0 %v5269
      %5316 = vmatpush.xpose.msra.mxu0 %v5266
      %5317 = vmatpush.xpose.msra.mxu0 %v5263
      %5318 = vmatpush.xpose.msra.mxu0 %v5260
      %5319 = vmatpush.xpose.msra.mxu0 %v5257
      %5320 = vmatmul.f32.gmra.mxu0 %v5209
      %v5321 = vpop.f32.mrf.mxu0
      %v5322 = vadd.f32 %v409, %v5321
      %5323 = vmatmul.f32.gmra.mxu0 %v5212
      %v5324 = vpop.f32.mrf.mxu0
      %v5325 = vadd.f32 %v410, %v5324
      %5326 = vmatmul.f32.gmra.mxu0 %v5215
      %v5327 = vpop.f32.mrf.mxu0
      %v5328 = vadd.f32 %v411, %v5327
      %5329 = vmatmul.f32.gmra.mxu0 %v5218
      %v5330 = vpop.f32.mrf.mxu0
      %v5331 = vadd.f32 %v412, %v5330
      %5332 = vmatmul.f32.gmra.mxu0 %v5221
      %v5333 = vpop.f32.mrf.mxu0
      %v5334 = vadd.f32 %v413, %v5333
      %5335 = vmatmul.f32.gmra.mxu0 %v5224
      %v5336 = vpop.f32.mrf.mxu0
      %v5337 = vadd.f32 %v414, %v5336
      %5338 = vmatmul.f32.gmra.mxu0 %v5227
      %v5339 = vpop.f32.mrf.mxu0
      %v5340 = vadd.f32 %v415, %v5339
      %5341 = vmatmul.f32.gmra.mxu0 %v5230
      %v5342 = vpop.f32.mrf.mxu0
      %v5343 = vadd.f32 %v416, %v5342
      %5344 = vmatmul.f32.gmra.mxu0 %v5233
      %v5345 = vpop.f32.mrf.mxu0
      %v5346 = vadd.f32 %v417, %v5345
      %5347 = vmatmul.f32.gmra.mxu0 %v5236
      %v5348 = vpop.f32.mrf.mxu0
      %v5349 = vadd.f32 %v418, %v5348
      %5350 = vmatmul.f32.gmra.mxu0 %v5239
      %v5351 = vpop.f32.mrf.mxu0
      %v5352 = vadd.f32 %v419, %v5351
      %5353 = vmatmul.f32.gmra.mxu0 %v5242
      %v5354 = vpop.f32.mrf.mxu0
      %v5355 = vadd.f32 %v420, %v5354
      %5356 = vmatmul.f32.gmra.mxu0 %v5245
      %v5357 = vpop.f32.mrf.mxu0
      %v5358 = vadd.f32 %v421, %v5357
      %5359 = vmatmul.f32.gmra.mxu0 %v5248
      %v5360 = vpop.f32.mrf.mxu0
      %v5361 = vadd.f32 %v422, %v5360
      %5362 = vmatmul.f32.gmra.mxu0 %v5251
      %v5363 = vpop.f32.mrf.mxu0
      %v5364 = vadd.f32 %v423, %v5363
      %5365 = vmatmul.f32.gmra.mxu0 %v5254
      %v5366 = vpop.f32.mrf.mxu0
      %v5367 = vadd.f32 %v424, %v5366
      %5368 = vdwg.mxu0
      %5369 = vmax.xlane.f32.xlu0 %v5322
      %v5370 = vpop.xlane.xlu0 %5369
      %5371 = vmax.xlane.f32.xlu0 %v5325
      %v5372 = vpop.xlane.xlu0 %5371
      %5373 = vmax.xlane.f32.xlu0 %v5328
      %v5374 = vpop.xlane.xlu0 %5373
      %5375 = vmax.xlane.f32.xlu0 %v5331
      %v5376 = vpop.xlane.xlu0 %5375
      %5377 = vmax.xlane.f32.xlu0 %v5334
      %v5378 = vpop.xlane.xlu0 %5377
      %5379 = vmax.xlane.f32.xlu0 %v5337
      %v5380 = vpop.xlane.xlu0 %5379
      %5381 = vmax.xlane.f32.xlu0 %v5340
      %v5382 = vpop.xlane.xlu0 %5381
      %5383 = vmax.xlane.f32.xlu0 %v5343
      %v5384 = vpop.xlane.xlu0 %5383
      %5385 = vmax.xlane.f32.xlu0 %v5346
      %v5386 = vpop.xlane.xlu0 %5385
      %5387 = vmax.xlane.f32.xlu0 %v5349
      %v5388 = vpop.xlane.xlu0 %5387
      %5389 = vmax.xlane.f32.xlu0 %v5352
      %v5390 = vpop.xlane.xlu0 %5389
      %5391 = vmax.xlane.f32.xlu0 %v5355
      %v5392 = vpop.xlane.xlu0 %5391
      %5393 = vmax.xlane.f32.xlu0 %v5358
      %v5394 = vpop.xlane.xlu0 %5393
      %5395 = vmax.xlane.f32.xlu0 %v5361
      %v5396 = vpop.xlane.xlu0 %5395
      %5397 = vmax.xlane.f32.xlu0 %v5364
      %v5398 = vpop.xlane.xlu0 %5397
      %5399 = vmax.xlane.f32.xlu0 %v5367
      %v5400 = vpop.xlane.xlu0 %5399
      %v5401 = vsub.f32 %v5322, %v5370
      %v5402 = vsub.f32 %v5325, %v5372
      %v5403 = vsub.f32 %v5328, %v5374
      %v5404 = vsub.f32 %v5331, %v5376
      %v5405 = vsub.f32 %v5334, %v5378
      %v5406 = vsub.f32 %v5337, %v5380
      %v5407 = vsub.f32 %v5340, %v5382
      %v5408 = vsub.f32 %v5343, %v5384
      %v5409 = vsub.f32 %v5346, %v5386
      %v5410 = vsub.f32 %v5349, %v5388
      %v5411 = vsub.f32 %v5352, %v5390
      %v5412 = vsub.f32 %v5355, %v5392
      %v5413 = vsub.f32 %v5358, %v5394
      %v5414 = vsub.f32 %v5361, %v5396
      %v5415 = vsub.f32 %v5364, %v5398
      %v5416 = vsub.f32 %v5367, %v5400
      %v5417 = vmul.f32 %v5401, 1.442695
      %v5418 = vpow.pop %v5417
      %v5419 = vmul.f32 %v5402, 1.442695
      %v5420 = vpow.pop %v5419
      %v5421 = vmul.f32 %v5403, 1.442695
      %v5422 = vpow.pop %v5421
      %v5423 = vmul.f32 %v5404, 1.442695
      %v5424 = vpow.pop %v5423
      %v5425 = vmul.f32 %v5405, 1.442695
      %v5426 = vpow.pop %v5425
      %v5427 = vmul.f32 %v5406, 1.442695
      %v5428 = vpow.pop %v5427
      %v5429 = vmul.f32 %v5407, 1.442695
      %v5430 = vpow.pop %v5429
      %v5431 = vmul.f32 %v5408, 1.442695
      %v5432 = vpow.pop %v5431
      %v5433 = vmul.f32 %v5409, 1.442695
      %v5434 = vpow.pop %v5433
      %v5435 = vmul.f32 %v5410, 1.442695
      %v5436 = vpow.pop %v5435
      %v5437 = vmul.f32 %v5411, 1.442695
      %v5438 = vpow.pop %v5437
      %v5439 = vmul.f32 %v5412, 1.442695
      %v5440 = vpow.pop %v5439
      %v5441 = vmul.f32 %v5413, 1.442695
      %v5442 = vpow.pop %v5441
      %v5443 = vmul.f32 %v5414, 1.442695
      %v5444 = vpow.pop %v5443
      %v5445 = vmul.f32 %v5415, 1.442695
      %v5446 = vpow.pop %v5445
      %v5447 = vmul.f32 %v5416, 1.442695
      %v5448 = vpow.pop %v5447
      %5449 = vadd.xlane.f32.xlu0 %v5418
      %v5450 = vpop.xlane.xlu0 %5449
      %5451 = vadd.xlane.f32.xlu0 %v5420
      %v5452 = vpop.xlane.xlu0 %5451
      %5453 = vadd.xlane.f32.xlu0 %v5422
      %v5454 = vpop.xlane.xlu0 %5453
      %5455 = vadd.xlane.f32.xlu0 %v5424
      %v5456 = vpop.xlane.xlu0 %5455
      %5457 = vadd.xlane.f32.xlu0 %v5426
      %v5458 = vpop.xlane.xlu0 %5457
      %5459 = vadd.xlane.f32.xlu0 %v5428
      %v5460 = vpop.xlane.xlu0 %5459
      %5461 = vadd.xlane.f32.xlu0 %v5430
      %v5462 = vpop.xlane.xlu0 %5461
      %5463 = vadd.xlane.f32.xlu0 %v5432
      %v5464 = vpop.xlane.xlu0 %5463
      %5465 = vadd.xlane.f32.xlu0 %v5434
      %v5466 = vpop.xlane.xlu0 %5465
      %5467 = vadd.xlane.f32.xlu0 %v5436
      %v5468 = vpop.xlane.xlu0 %5467
      %5469 = vadd.xlane.f32.xlu0 %v5438
      %v5470 = vpop.xlane.xlu0 %5469
      %5471 = vadd.xlane.f32.xlu0 %v5440
      %v5472 = vpop.xlane.xlu0 %5471
      %5473 = vadd.xlane.f32.xlu0 %v5442
      %v5474 = vpop.xlane.xlu0 %5473
      %5475 = vadd.xlane.f32.xlu0 %v5444
      %v5476 = vpop.xlane.xlu0 %5475
      %5477 = vadd.xlane.f32.xlu0 %v5446
      %v5478 = vpop.xlane.xlu0 %5477
      %5479 = vadd.xlane.f32.xlu0 %v5448
      %v5480 = vpop.xlane.xlu0 %5479
      %v5481 = vrcp.pop %v5450
      %v5482 = vrcp.pop %v5452
      %v5483 = vrcp.pop %v5454
      %v5484 = vrcp.pop %v5456
      %v5485 = vrcp.pop %v5458
      %v5486 = vrcp.pop %v5460
      %v5487 = vrcp.pop %v5462
      %v5488 = vrcp.pop %v5464
      %v5489 = vrcp.pop %v5466
      %v5490 = vrcp.pop %v5468
      %v5491 = vrcp.pop %v5470
      %v5492 = vrcp.pop %v5472
      %v5493 = vrcp.pop %v5474
      %v5494 = vrcp.pop %v5476
      %v5495 = vrcp.pop %v5478
      %v5496 = vrcp.pop %v5480
      %v5497 = vmul.f32 %v5418, %v5481
      %v5498 = vmul.f32 %v5420, %v5482
      %v5499 = vmul.f32 %v5422, %v5483
      %v5500 = vmul.f32 %v5424, %v5484
      %v5501 = vmul.f32 %v5426, %v5485
      %v5502 = vmul.f32 %v5428, %v5486
      %v5503 = vmul.f32 %v5430, %v5487
      %v5504 = vmul.f32 %v5432, %v5488
      %v5505 = vmul.f32 %v5434, %v5489
      %v5506 = vmul.f32 %v5436, %v5490
      %v5507 = vmul.f32 %v5438, %v5491
      %v5508 = vmul.f32 %v5440, %v5492
      %v5509 = vmul.f32 %v5442, %v5493
      %v5510 = vmul.f32 %v5444, %v5494
      %v5511 = vmul.f32 %v5446, %v5495
      %v5512 = vmul.f32 %v5448, %v5496
      %5513 = vmatpush.msra.mxu0 %v5206
      %5514 = vmatpush.msra.mxu0 %v5203
      %5515 = vmatpush.msra.mxu0 %v5200
      %5516 = vmatpush.msra.mxu0 %v5197
      %5517 = vmatpush.msra.mxu0 %v5194
      %5518 = vmatpush.msra.mxu0 %v5191
      %5519 = vmatpush.msra.mxu0 %v5188
      %5520 = vmatpush.msra.mxu0 %v5185
      %5521 = vmatpush.msra.mxu0 %v5182
      %5522 = vmatpush.msra.mxu0 %v5179
      %5523 = vmatpush.msra.mxu0 %v5176
      %5524 = vmatpush.msra.mxu0 %v5173
      %5525 = vmatpush.msra.mxu0 %v5170
      %5526 = vmatpush.msra.mxu0 %v5167
      %5527 = vmatpush.msra.mxu0 %v5164
      %5528 = vmatpush.msra.mxu0 %v5161
      %5529 = vmatmul.f32.gmra.mxu0 %v5497
      %v5530 = vpop.f32.mrf.mxu0
      %v5531 = vadd.f32 0.0, %v5530
      %5532 = vmatmul.f32.gmra.mxu0 %v5498
      %v5533 = vpop.f32.mrf.mxu0
      %v5534 = vadd.f32 0.0, %v5533
      %5535 = vmatmul.f32.gmra.mxu0 %v5499
      %v5536 = vpop.f32.mrf.mxu0
      %v5537 = vadd.f32 0.0, %v5536
      %5538 = vmatmul.f32.gmra.mxu0 %v5500
      %v5539 = vpop.f32.mrf.mxu0
      %v5540 = vadd.f32 0.0, %v5539
      %5541 = vmatmul.f32.gmra.mxu0 %v5501
      %v5542 = vpop.f32.mrf.mxu0
      %v5543 = vadd.f32 0.0, %v5542
      %5544 = vmatmul.f32.gmra.mxu0 %v5502
      %v5545 = vpop.f32.mrf.mxu0
      %v5546 = vadd.f32 0.0, %v5545
      %5547 = vmatmul.f32.gmra.mxu0 %v5503
      %v5548 = vpop.f32.mrf.mxu0
      %v5549 = vadd.f32 0.0, %v5548
      %5550 = vmatmul.f32.gmra.mxu0 %v5504
      %v5551 = vpop.f32.mrf.mxu0
      %v5552 = vadd.f32 0.0, %v5551
      %5553 = vmatmul.f32.gmra.mxu0 %v5505
      %v5554 = vpop.f32.mrf.mxu0
      %v5555 = vadd.f32 0.0, %v5554
      %5556 = vmatmul.f32.gmra.mxu0 %v5506
      %v5557 = vpop.f32.mrf.mxu0
      %v5558 = vadd.f32 0.0, %v5557
      %5559 = vmatmul.f32.gmra.mxu0 %v5507
      %v5560 = vpop.f32.mrf.mxu0
      %v5561 = vadd.f32 0.0, %v5560
      %5562 = vmatmul.f32.gmra.mxu0 %v5508
      %v5563 = vpop.f32.mrf.mxu0
      %v5564 = vadd.f32 0.0, %v5563
      %5565 = vmatmul.f32.gmra.mxu0 %v5509
      %v5566 = vpop.f32.mrf.mxu0
      %v5567 = vadd.f32 0.0, %v5566
      %5568 = vmatmul.f32.gmra.mxu0 %v5510
      %v5569 = vpop.f32.mrf.mxu0
      %v5570 = vadd.f32 0.0, %v5569
      %5571 = vmatmul.f32.gmra.mxu0 %v5511
      %v5572 = vpop.f32.mrf.mxu0
      %v5573 = vadd.f32 0.0, %v5572
      %5574 = vmatmul.f32.gmra.mxu0 %v5512
      %v5575 = vpop.f32.mrf.mxu0
      %v5576 = vadd.f32 0.0, %v5575
      %5577 = vdwg.mxu0
      %v5579 = vsel %vm624, %v5531, 0
      %v5582 = vsel %vm624, %v5534, 0
      %v5585 = vsel %vm624, %v5537, 0
      %v5588 = vsel %vm624, %v5540, 0
      %v5591 = vsel %vm624, %v5543, 0
      %v5594 = vsel %vm624, %v5546, 0
      %v5597 = vsel %vm624, %v5549, 0
      %v5600 = vsel %vm624, %v5552, 0
      %v5603 = vsel %vm624, %v5555, 0
      %v5606 = vsel %vm624, %v5558, 0
      %v5609 = vsel %vm624, %v5561, 0
      %v5612 = vsel %vm624, %v5564, 0
      %v5615 = vsel %vm624, %v5567, 0
      %v5618 = vsel %vm624, %v5570, 0
      %v5621 = vsel %vm624, %v5573, 0
      %v5624 = vsel %vm624, %v5576, 0
      %5626 = vmatpush.msra.mxu0 0.0
      %5627 = vmatpush.msra.mxu0 0.0
      %5628 = vmatpush.msra.mxu0 0.0
      %5629 = vmatpush.msra.mxu0 0.0
      %5630 = vmatpush.msra.mxu0 0.0
      %5631 = vmatpush.msra.mxu0 0.0
      %5632 = vmatpush.msra.mxu0 0.0
      %5633 = vmatpush.msra.mxu0 0.0
      %5634 = vmatpush.msra.mxu0 0.0
      %5635 = vmatpush.msra.mxu0 0.0
      %5636 = vmatpush.msra.mxu0 0.0
      %5637 = vmatpush.msra.mxu0 0.0
      %5638 = vmatpush.msra.mxu0 %v5010
      %5639 = vmatpush.msra.mxu0 %v5009
      %5640 = vmatpush.msra.mxu0 %v5008
      %5641 = vmatpush.msra.mxu0 %v5007
      %5642 = vmatmul.f32.gmra.mxu0 %v5579
      %v5643 = vpop.f32.mrf.mxu0
      %v5644 = vadd.f32 0.0, %v5643
      %5645 = vmatmul.f32.gmra.mxu0 %v5582
      %v5646 = vpop.f32.mrf.mxu0
      %v5647 = vadd.f32 0.0, %v5646
      %5648 = vmatmul.f32.gmra.mxu0 %v5585
      %v5649 = vpop.f32.mrf.mxu0
      %v5650 = vadd.f32 0.0, %v5649
      %5651 = vmatmul.f32.gmra.mxu0 %v5588
      %v5652 = vpop.f32.mrf.mxu0
      %v5653 = vadd.f32 0.0, %v5652
      %5654 = vmatmul.f32.gmra.mxu0 %v5591
      %v5655 = vpop.f32.mrf.mxu0
      %v5656 = vadd.f32 0.0, %v5655
      %5657 = vmatmul.f32.gmra.mxu0 %v5594
      %v5658 = vpop.f32.mrf.mxu0
      %v5659 = vadd.f32 0.0, %v5658
      %5660 = vmatmul.f32.gmra.mxu0 %v5597
      %v5661 = vpop.f32.mrf.mxu0
      %v5662 = vadd.f32 0.0, %v5661
      %5663 = vmatmul.f32.gmra.mxu0 %v5600
      %v5664 = vpop.f32.mrf.mxu0
      %v5665 = vadd.f32 0.0, %v5664
      %5666 = vmatmul.f32.gmra.mxu0 %v5603
      %v5667 = vpop.f32.mrf.mxu0
      %v5668 = vadd.f32 0.0, %v5667
      %5669 = vmatmul.f32.gmra.mxu0 %v5606
      %v5670 = vpop.f32.mrf.mxu0
      %v5671 = vadd.f32 0.0, %v5670
      %5672 = vmatmul.f32.gmra.mxu0 %v5609
      %v5673 = vpop.f32.mrf.mxu0
      %v5674 = vadd.f32 0.0, %v5673
      %5675 = vmatmul.f32.gmra.mxu0 %v5612
      %v5676 = vpop.f32.mrf.mxu0
      %v5677 = vadd.f32 0.0, %v5676
      %5678 = vmatmul.f32.gmra.mxu0 %v5615
      %v5679 = vpop.f32.mrf.mxu0
      %v5680 = vadd.f32 0.0, %v5679
      %5681 = vmatmul.f32.gmra.mxu0 %v5618
      %v5682 = vpop.f32.mrf.mxu0
      %v5683 = vadd.f32 0.0, %v5682
      %5684 = vmatmul.f32.gmra.mxu0 %v5621
      %v5685 = vpop.f32.mrf.mxu0
      %v5686 = vadd.f32 0.0, %v5685
      %5687 = vmatmul.f32.gmra.mxu0 %v5624
      %v5688 = vpop.f32.mrf.mxu0
      %v5689 = vadd.f32 0.0, %v5688
      %5690 = vdwg.mxu0
      %v5692 = vsel %vm624, %v4948, 0
      %v5695 = vsel %vm624, %v4951, 0
      %v5698 = vsel %vm624, %v4954, 0
      %v5701 = vsel %vm624, %v4957, 0
      %v5704 = vsel %vm624, %v4960, 0
      %v5707 = vsel %vm624, %v4963, 0
      %v5710 = vsel %vm624, %v4966, 0
      %v5713 = vsel %vm624, %v4969, 0
      %v5716 = vsel %vm624, %v4972, 0
      %v5719 = vsel %vm624, %v4975, 0
      %v5722 = vsel %vm624, %v4978, 0
      %v5725 = vsel %vm624, %v4981, 0
      %v5728 = vsel %vm624, %v4984, 0
      %v5731 = vsel %vm624, %v4987, 0
      %v5734 = vsel %vm624, %v4990, 0
      %v5737 = vsel %vm624, %v4993, 0
      %5739 = vmatpush.msra.mxu0 0.0
      %5740 = vmatpush.msra.mxu0 0.0
      %5741 = vmatpush.msra.mxu0 0.0
      %5742 = vmatpush.msra.mxu0 0.0
      %5743 = vmatpush.msra.mxu0 0.0
      %5744 = vmatpush.msra.mxu0 0.0
      %5745 = vmatpush.msra.mxu0 0.0
      %5746 = vmatpush.msra.mxu0 0.0
      %5747 = vmatpush.msra.mxu0 0.0
      %5748 = vmatpush.msra.mxu0 0.0
      %5749 = vmatpush.msra.mxu0 0.0
      %5750 = vmatpush.msra.mxu0 0.0
      %5751 = vmatpush.msra.mxu0 %v4379
      %5752 = vmatpush.msra.mxu0 %v4378
      %5753 = vmatpush.msra.mxu0 %v4377
      %5754 = vmatpush.msra.mxu0 %v4376
      %5755 = vmatmul.f32.gmra.mxu0 %v5692
      %v5756 = vpop.f32.mrf.mxu0
      %v5757 = vadd.f32 %v5644, %v5756
      %5758 = vmatmul.f32.gmra.mxu0 %v5695
      %v5759 = vpop.f32.mrf.mxu0
      %v5760 = vadd.f32 %v5647, %v5759
      %5761 = vmatmul.f32.gmra.mxu0 %v5698
      %v5762 = vpop.f32.mrf.mxu0
      %v5763 = vadd.f32 %v5650, %v5762
      %5764 = vmatmul.f32.gmra.mxu0 %v5701
      %v5765 = vpop.f32.mrf.mxu0
      %v5766 = vadd.f32 %v5653, %v5765
      %5767 = vmatmul.f32.gmra.mxu0 %v5704
      %v5768 = vpop.f32.mrf.mxu0
      %v5769 = vadd.f32 %v5656, %v5768
      %5770 = vmatmul.f32.gmra.mxu0 %v5707
      %v5771 = vpop.f32.mrf.mxu0
      %v5772 = vadd.f32 %v5659, %v5771
      %5773 = vmatmul.f32.gmra.mxu0 %v5710
      %v5774 = vpop.f32.mrf.mxu0
      %v5775 = vadd.f32 %v5662, %v5774
      %5776 = vmatmul.f32.gmra.mxu0 %v5713
      %v5777 = vpop.f32.mrf.mxu0
      %v5778 = vadd.f32 %v5665, %v5777
      %5779 = vmatmul.f32.gmra.mxu0 %v5716
      %v5780 = vpop.f32.mrf.mxu0
      %v5781 = vadd.f32 %v5668, %v5780
      %5782 = vmatmul.f32.gmra.mxu0 %v5719
      %v5783 = vpop.f32.mrf.mxu0
      %v5784 = vadd.f32 %v5671, %v5783
      %5785 = vmatmul.f32.gmra.mxu0 %v5722
      %v5786 = vpop.f32.mrf.mxu0
      %v5787 = vadd.f32 %v5674, %v5786
      %5788 = vmatmul.f32.gmra.mxu0 %v5725
      %v5789 = vpop.f32.mrf.mxu0
      %v5790 = vadd.f32 %v5677, %v5789
      %5791 = vmatmul.f32.gmra.mxu0 %v5728
      %v5792 = vpop.f32.mrf.mxu0
      %v5793 = vadd.f32 %v5680, %v5792
      %5794 = vmatmul.f32.gmra.mxu0 %v5731
      %v5795 = vpop.f32.mrf.mxu0
      %v5796 = vadd.f32 %v5683, %v5795
      %5797 = vmatmul.f32.gmra.mxu0 %v5734
      %v5798 = vpop.f32.mrf.mxu0
      %v5799 = vadd.f32 %v5686, %v5798
      %5800 = vmatmul.f32.gmra.mxu0 %v5737
      %v5801 = vpop.f32.mrf.mxu0
      %v5802 = vadd.f32 %v5689, %v5801
      %5803 = vdwg.mxu0
      %v5804 = vld [vmem:[%s3 + $0x348] sm:$0xff]
      %v5805 = vld [vmem:[%s3 + $0x350] sm:$0xff]
      %v5806 = vld [vmem:[%s3 + $0x358] sm:$0xff]
      %v5807 = vld [vmem:[%s3 + $0x360] sm:$0xff]
      %v5808 = vld [vmem:[%s3 + $0x368] sm:$0xff]
      %v5809 = vld [vmem:[%s3 + $0x370] sm:$0xff]
      %v5810 = vld [vmem:[%s3 + $0x378] sm:$0xff]
      %v5811 = vld [vmem:[%s3 + $0x380] sm:$0xff]
      %v5812 = vld [vmem:[%s3 + $0x388] sm:$0xff]
      %v5813 = vld [vmem:[%s3 + $0x390] sm:$0xff]
      %v5814 = vld [vmem:[%s3 + $0x398] sm:$0xff]
      %v5815 = vld [vmem:[%s3 + $0x3a0] sm:$0xff]
      %v5816 = vld [vmem:[%s3 + $0x3a8] sm:$0xff]
      %v5817 = vld [vmem:[%s3 + $0x3b0] sm:$0xff]
      %v5818 = vld [vmem:[%s3 + $0x3b8] sm:$0xff]
      %v5819 = vld [vmem:[%s3 + $0x3c0] sm:$0xff]
      %v5820 = vld [vmem:[%s6 + $0xe] sm:$0x1]
      %v5821 = vperm.slane %v5820, 0
      %5822 = vmatpush.msra.mxu0 0.0
      %5823 = vmatpush.msra.mxu0 0.0
      %5824 = vmatpush.msra.mxu0 0.0
      %5825 = vmatpush.msra.mxu0 0.0
      %5826 = vmatpush.msra.mxu0 0.0
      %5827 = vmatpush.msra.mxu0 0.0
      %5828 = vmatpush.msra.mxu0 0.0
      %5829 = vmatpush.msra.mxu0 0.0
      %5830 = vmatpush.msra.mxu0 0.0
      %5831 = vmatpush.msra.mxu0 0.0
      %5832 = vmatpush.msra.mxu0 0.0
      %5833 = vmatpush.msra.mxu0 0.0
      %5834 = vmatpush.msra.mxu0 %v5807
      %5835 = vmatpush.msra.mxu0 %v5806
      %5836 = vmatpush.msra.mxu0 %v5805
      %5837 = vmatpush.msra.mxu0 %v5804
      %5838 = vmatmul.f32.gmra.mxu0 %v4383
      %v5839 = vpop.f32.mrf.mxu0
      %v5840 = vadd.f32 %v5821, %v5839
      %5841 = vmatmul.f32.gmra.mxu0 %v4386
      %v5842 = vpop.f32.mrf.mxu0
      %v5843 = vadd.f32 %v5821, %v5842
      %5844 = vmatmul.f32.gmra.mxu0 %v4389
      %v5845 = vpop.f32.mrf.mxu0
      %v5846 = vadd.f32 %v5821, %v5845
      %5847 = vmatmul.f32.gmra.mxu0 %v4392
      %v5848 = vpop.f32.mrf.mxu0
      %v5849 = vadd.f32 %v5821, %v5848
      %5850 = vmatmul.f32.gmra.mxu0 %v4395
      %v5851 = vpop.f32.mrf.mxu0
      %v5852 = vadd.f32 %v5821, %v5851
      %5853 = vmatmul.f32.gmra.mxu0 %v4398
      %v5854 = vpop.f32.mrf.mxu0
      %v5855 = vadd.f32 %v5821, %v5854
      %5856 = vmatmul.f32.gmra.mxu0 %v4401
      %v5857 = vpop.f32.mrf.mxu0
      %v5858 = vadd.f32 %v5821, %v5857
      %5859 = vmatmul.f32.gmra.mxu0 %v4404
      %v5860 = vpop.f32.mrf.mxu0
      %v5861 = vadd.f32 %v5821, %v5860
      %5862 = vmatmul.f32.gmra.mxu0 %v4407
      %v5863 = vpop.f32.mrf.mxu0
      %v5864 = vadd.f32 %v5821, %v5863
      %5865 = vmatmul.f32.gmra.mxu0 %v4410
      %v5866 = vpop.f32.mrf.mxu0
      %v5867 = vadd.f32 %v5821, %v5866
      %5868 = vmatmul.f32.gmra.mxu0 %v4413
      %v5869 = vpop.f32.mrf.mxu0
      %v5870 = vadd.f32 %v5821, %v5869
      %5871 = vmatmul.f32.gmra.mxu0 %v4416
      %v5872 = vpop.f32.mrf.mxu0
      %v5873 = vadd.f32 %v5821, %v5872
      %5874 = vmatmul.f32.gmra.mxu0 %v4419
      %v5875 = vpop.f32.mrf.mxu0
      %v5876 = vadd.f32 %v5821, %v5875
      %5877 = vmatmul.f32.gmra.mxu0 %v4422
      %v5878 = vpop.f32.mrf.mxu0
      %v5879 = vadd.f32 %v5821, %v5878
      %5880 = vmatmul.f32.gmra.mxu0 %v4425
      %v5881 = vpop.f32.mrf.mxu0
      %v5882 = vadd.f32 %v5821, %v5881
      %5883 = vmatmul.f32.gmra.mxu0 %v4428
      %v5884 = vpop.f32.mrf.mxu0
      %v5885 = vadd.f32 %v5821, %v5884
      %5886 = vdwg.mxu0
      %5887 = vmatpush.msra.mxu0 0.0
      %5888 = vmatpush.msra.mxu0 0.0
      %5889 = vmatpush.msra.mxu0 0.0
      %5890 = vmatpush.msra.mxu0 0.0
      %5891 = vmatpush.msra.mxu0 0.0
      %5892 = vmatpush.msra.mxu0 0.0
      %5893 = vmatpush.msra.mxu0 0.0
      %5894 = vmatpush.msra.mxu0 0.0
      %5895 = vmatpush.msra.mxu0 0.0
      %5896 = vmatpush.msra.mxu0 0.0
      %5897 = vmatpush.msra.mxu0 0.0
      %5898 = vmatpush.msra.mxu0 0.0
      %5899 = vmatpush.msra.mxu0 %v5811
      %5900 = vmatpush.msra.mxu0 %v5810
      %5901 = vmatpush.msra.mxu0 %v5809
      %5902 = vmatpush.msra.mxu0 %v5808
      %5903 = vmatmul.f32.gmra.mxu0 %v4383
      %v5904 = vpop.f32.mrf.mxu0
      %v5905 = vadd.f32 0.0, %v5904
      %5906 = vmatmul.f32.gmra.mxu0 %v4386
      %v5907 = vpop.f32.mrf.mxu0
      %v5908 = vadd.f32 0.0, %v5907
      %5909 = vmatmul.f32.gmra.mxu0 %v4389
      %v5910 = vpop.f32.mrf.mxu0
      %v5911 = vadd.f32 0.0, %v5910
      %5912 = vmatmul.f32.gmra.mxu0 %v4392
      %v5913 = vpop.f32.mrf.mxu0
      %v5914 = vadd.f32 0.0, %v5913
      %5915 = vmatmul.f32.gmra.mxu0 %v4395
      %v5916 = vpop.f32.mrf.mxu0
      %v5917 = vadd.f32 0.0, %v5916
      %5918 = vmatmul.f32.gmra.mxu0 %v4398
      %v5919 = vpop.f32.mrf.mxu0
      %v5920 = vadd.f32 0.0, %v5919
      %5921 = vmatmul.f32.gmra.mxu0 %v4401
      %v5922 = vpop.f32.mrf.mxu0
      %v5923 = vadd.f32 0.0, %v5922
      %5924 = vmatmul.f32.gmra.mxu0 %v4404
      %v5925 = vpop.f32.mrf.mxu0
      %v5926 = vadd.f32 0.0, %v5925
      %5927 = vmatmul.f32.gmra.mxu0 %v4407
      %v5928 = vpop.f32.mrf.mxu0
      %v5929 = vadd.f32 0.0, %v5928
      %5930 = vmatmul.f32.gmra.mxu0 %v4410
      %v5931 = vpop.f32.mrf.mxu0
      %v5932 = vadd.f32 0.0, %v5931
      %5933 = vmatmul.f32.gmra.mxu0 %v4413
      %v5934 = vpop.f32.mrf.mxu0
      %v5935 = vadd.f32 0.0, %v5934
      %5936 = vmatmul.f32.gmra.mxu0 %v4416
      %v5937 = vpop.f32.mrf.mxu0
      %v5938 = vadd.f32 0.0, %v5937
      %5939 = vmatmul.f32.gmra.mxu0 %v4419
      %v5940 = vpop.f32.mrf.mxu0
      %v5941 = vadd.f32 0.0, %v5940
      %5942 = vmatmul.f32.gmra.mxu0 %v4422
      %v5943 = vpop.f32.mrf.mxu0
      %v5944 = vadd.f32 0.0, %v5943
      %5945 = vmatmul.f32.gmra.mxu0 %v4425
      %v5946 = vpop.f32.mrf.mxu0
      %v5947 = vadd.f32 0.0, %v5946
      %5948 = vmatmul.f32.gmra.mxu0 %v4428
      %v5949 = vpop.f32.mrf.mxu0
      %v5950 = vadd.f32 0.0, %v5949
      %5951 = vdwg.mxu0
      %5952 = vmatpush.msra.mxu0 0.0
      %5953 = vmatpush.msra.mxu0 0.0
      %5954 = vmatpush.msra.mxu0 0.0
      %5955 = vmatpush.msra.mxu0 0.0
      %5956 = vmatpush.msra.mxu0 0.0
      %5957 = vmatpush.msra.mxu0 0.0
      %5958 = vmatpush.msra.mxu0 0.0
      %5959 = vmatpush.msra.mxu0 0.0
      %5960 = vmatpush.msra.mxu0 0.0
      %5961 = vmatpush.msra.mxu0 0.0
      %5962 = vmatpush.msra.mxu0 0.0
      %5963 = vmatpush.msra.mxu0 0.0
      %5964 = vmatpush.msra.mxu0 %v5815
      %5965 = vmatpush.msra.mxu0 %v5814
      %5966 = vmatpush.msra.mxu0 %v5813
      %5967 = vmatpush.msra.mxu0 %v5812
      %5968 = vmatmul.f32.gmra.mxu0 %v4383
      %v5969 = vpop.f32.mrf.mxu0
      %v5970 = vadd.f32 0.0, %v5969
      %5971 = vmatmul.f32.gmra.mxu0 %v4386
      %v5972 = vpop.f32.mrf.mxu0
      %v5973 = vadd.f32 0.0, %v5972
      %5974 = vmatmul.f32.gmra.mxu0 %v4389
      %v5975 = vpop.f32.mrf.mxu0
      %v5976 = vadd.f32 0.0, %v5975
      %5977 = vmatmul.f32.gmra.mxu0 %v4392
      %v5978 = vpop.f32.mrf.mxu0
      %v5979 = vadd.f32 0.0, %v5978
      %5980 = vmatmul.f32.gmra.mxu0 %v4395
      %v5981 = vpop.f32.mrf.mxu0
      %v5982 = vadd.f32 0.0, %v5981
      %5983 = vmatmul.f32.gmra.mxu0 %v4398
      %v5984 = vpop.f32.mrf.mxu0
      %v5985 = vadd.f32 0.0, %v5984
      %5986 = vmatmul.f32.gmra.mxu0 %v4401
      %v5987 = vpop.f32.mrf.mxu0
      %v5988 = vadd.f32 0.0, %v5987
      %5989 = vmatmul.f32.gmra.mxu0 %v4404
      %v5990 = vpop.f32.mrf.mxu0
      %v5991 = vadd.f32 0.0, %v5990
      %5992 = vmatmul.f32.gmra.mxu0 %v4407
      %v5993 = vpop.f32.mrf.mxu0
      %v5994 = vadd.f32 0.0, %v5993
      %5995 = vmatmul.f32.gmra.mxu0 %v4410
      %v5996 = vpop.f32.mrf.mxu0
      %v5997 = vadd.f32 0.0, %v5996
      %5998 = vmatmul.f32.gmra.mxu0 %v4413
      %v5999 = vpop.f32.mrf.mxu0
      %v6000 = vadd.f32 0.0, %v5999
      %6001 = vmatmul.f32.gmra.mxu0 %v4416
      %v6002 = vpop.f32.mrf.mxu0
      %v6003 = vadd.f32 0.0, %v6002
      %6004 = vmatmul.f32.gmra.mxu0 %v4419
      %v6005 = vpop.f32.mrf.mxu0
      %v6006 = vadd.f32 0.0, %v6005
      %6007 = vmatmul.f32.gmra.mxu0 %v4422
      %v6008 = vpop.f32.mrf.mxu0
      %v6009 = vadd.f32 0.0, %v6008
      %6010 = vmatmul.f32.gmra.mxu0 %v4425
      %v6011 = vpop.f32.mrf.mxu0
      %v6012 = vadd.f32 0.0, %v6011
      %6013 = vmatmul.f32.gmra.mxu0 %v4428
      %v6014 = vpop.f32.mrf.mxu0
      %v6015 = vadd.f32 0.0, %v6014
      %6016 = vdwg.mxu0
      %v6018 = vsel %vm624, %v5840, 0
      %v6021 = vsel %vm624, %v5843, 0
      %v6024 = vsel %vm624, %v5846, 0
      %v6027 = vsel %vm624, %v5849, 0
      %v6030 = vsel %vm624, %v5852, 0
      %v6033 = vsel %vm624, %v5855, 0
      %v6036 = vsel %vm624, %v5858, 0
      %v6039 = vsel %vm624, %v5861, 0
      %v6042 = vsel %vm624, %v5864, 0
      %v6045 = vsel %vm624, %v5867, 0
      %v6048 = vsel %vm624, %v5870, 0
      %v6051 = vsel %vm624, %v5873, 0
      %v6054 = vsel %vm624, %v5876, 0
      %v6057 = vsel %vm624, %v5879, 0
      %v6060 = vsel %vm624, %v5882, 0
      %v6063 = vsel %vm624, %v5885, 0
      %v6066 = vsel %vm624, %v5905, 0
      %v6069 = vsel %vm624, %v5908, 0
      %v6072 = vsel %vm624, %v5911, 0
      %v6075 = vsel %vm624, %v5914, 0
      %v6078 = vsel %vm624, %v5917, 0
      %v6081 = vsel %vm624, %v5920, 0
      %v6084 = vsel %vm624, %v5923, 0
      %v6087 = vsel %vm624, %v5926, 0
      %v6090 = vsel %vm624, %v5929, 0
      %v6093 = vsel %vm624, %v5932, 0
      %v6096 = vsel %vm624, %v5935, 0
      %v6099 = vsel %vm624, %v5938, 0
      %v6102 = vsel %vm624, %v5941, 0
      %v6105 = vsel %vm624, %v5944, 0
      %v6108 = vsel %vm624, %v5947, 0
      %v6111 = vsel %vm624, %v5950, 0
      %6113 = vmatpush.xpose.msra.mxu0 %v6111
      %6114 = vmatpush.xpose.msra.mxu0 %v6108
      %6115 = vmatpush.xpose.msra.mxu0 %v6105
      %6116 = vmatpush.xpose.msra.mxu0 %v6102
      %6117 = vmatpush.xpose.msra.mxu0 %v6099
      %6118 = vmatpush.xpose.msra.mxu0 %v6096
      %6119 = vmatpush.xpose.msra.mxu0 %v6093
      %6120 = vmatpush.xpose.msra.mxu0 %v6090
      %6121 = vmatpush.xpose.msra.mxu0 %v6087
      %6122 = vmatpush.xpose.msra.mxu0 %v6084
      %6123 = vmatpush.xpose.msra.mxu0 %v6081
      %6124 = vmatpush.xpose.msra.mxu0 %v6078
      %6125 = vmatpush.xpose.msra.mxu0 %v6075
      %6126 = vmatpush.xpose.msra.mxu0 %v6072
      %6127 = vmatpush.xpose.msra.mxu0 %v6069
      %6128 = vmatpush.xpose.msra.mxu0 %v6066
      %6129 = vmatmul.f32.gmra.mxu0 %v6018
      %v6130 = vpop.f32.mrf.mxu0
      %v6131 = vadd.f32 %v409, %v6130
      %6132 = vmatmul.f32.gmra.mxu0 %v6021
      %v6133 = vpop.f32.mrf.mxu0
      %v6134 = vadd.f32 %v410, %v6133
      %6135 = vmatmul.f32.gmra.mxu0 %v6024
      %v6136 = vpop.f32.mrf.mxu0
      %v6137 = vadd.f32 %v411, %v6136
      %6138 = vmatmul.f32.gmra.mxu0 %v6027
      %v6139 = vpop.f32.mrf.mxu0
      %v6140 = vadd.f32 %v412, %v6139
      %6141 = vmatmul.f32.gmra.mxu0 %v6030
      %v6142 = vpop.f32.mrf.mxu0
      %v6143 = vadd.f32 %v413, %v6142
      %6144 = vmatmul.f32.gmra.mxu0 %v6033
      %v6145 = vpop.f32.mrf.mxu0
      %v6146 = vadd.f32 %v414, %v6145
      %6147 = vmatmul.f32.gmra.mxu0 %v6036
      %v6148 = vpop.f32.mrf.mxu0
      %v6149 = vadd.f32 %v415, %v6148
      %6150 = vmatmul.f32.gmra.mxu0 %v6039
      %v6151 = vpop.f32.mrf.mxu0
      %v6152 = vadd.f32 %v416, %v6151
      %6153 = vmatmul.f32.gmra.mxu0 %v6042
      %v6154 = vpop.f32.mrf.mxu0
      %v6155 = vadd.f32 %v417, %v6154
      %6156 = vmatmul.f32.gmra.mxu0 %v6045
      %v6157 = vpop.f32.mrf.mxu0
      %v6158 = vadd.f32 %v418, %v6157
      %6159 = vmatmul.f32.gmra.mxu0 %v6048
      %v6160 = vpop.f32.mrf.mxu0
      %v6161 = vadd.f32 %v419, %v6160
      %6162 = vmatmul.f32.gmra.mxu0 %v6051
      %v6163 = vpop.f32.mrf.mxu0
      %v6164 = vadd.f32 %v420, %v6163
      %6165 = vmatmul.f32.gmra.mxu0 %v6054
      %v6166 = vpop.f32.mrf.mxu0
      %v6167 = vadd.f32 %v421, %v6166
      %6168 = vmatmul.f32.gmra.mxu0 %v6057
      %v6169 = vpop.f32.mrf.mxu0
      %v6170 = vadd.f32 %v422, %v6169
      %6171 = vmatmul.f32.gmra.mxu0 %v6060
      %v6172 = vpop.f32.mrf.mxu0
      %v6173 = vadd.f32 %v423, %v6172
      %6174 = vmatmul.f32.gmra.mxu0 %v6063
      %v6175 = vpop.f32.mrf.mxu0
      %v6176 = vadd.f32 %v424, %v6175
      %6177 = vdwg.mxu0
      %6178 = vmax.xlane.f32.xlu0 %v6131
      %v6179 = vpop.xlane.xlu0 %6178
      %6180 = vmax.xlane.f32.xlu0 %v6134
      %v6181 = vpop.xlane.xlu0 %6180
      %6182 = vmax.xlane.f32.xlu0 %v6137
      %v6183 = vpop.xlane.xlu0 %6182
      %6184 = vmax.xlane.f32.xlu0 %v6140
      %v6185 = vpop.xlane.xlu0 %6184
      %6186 = vmax.xlane.f32.xlu0 %v6143
      %v6187 = vpop.xlane.xlu0 %6186
      %6188 = vmax.xlane.f32.xlu0 %v6146
      %v6189 = vpop.xlane.xlu0 %6188
      %6190 = vmax.xlane.f32.xlu0 %v6149
      %v6191 = vpop.xlane.xlu0 %6190
      %6192 = vmax.xlane.f32.xlu0 %v6152
      %v6193 = vpop.xlane.xlu0 %6192
      %6194 = vmax.xlane.f32.xlu0 %v6155
      %v6195 = vpop.xlane.xlu0 %6194
      %6196 = vmax.xlane.f32.xlu0 %v6158
      %v6197 = vpop.xlane.xlu0 %6196
      %6198 = vmax.xlane.f32.xlu0 %v6161
      %v6199 = vpop.xlane.xlu0 %6198
      %6200 = vmax.xlane.f32.xlu0 %v6164
      %v6201 = vpop.xlane.xlu0 %6200
      %6202 = vmax.xlane.f32.xlu0 %v6167
      %v6203 = vpop.xlane.xlu0 %6202
      %6204 = vmax.xlane.f32.xlu0 %v6170
      %v6205 = vpop.xlane.xlu0 %6204
      %6206 = vmax.xlane.f32.xlu0 %v6173
      %v6207 = vpop.xlane.xlu0 %6206
      %6208 = vmax.xlane.f32.xlu0 %v6176
      %v6209 = vpop.xlane.xlu0 %6208
      %v6210 = vsub.f32 %v6131, %v6179
      %v6211 = vsub.f32 %v6134, %v6181
      %v6212 = vsub.f32 %v6137, %v6183
      %v6213 = vsub.f32 %v6140, %v6185
      %v6214 = vsub.f32 %v6143, %v6187
      %v6215 = vsub.f32 %v6146, %v6189
      %v6216 = vsub.f32 %v6149, %v6191
      %v6217 = vsub.f32 %v6152, %v6193
      %v6218 = vsub.f32 %v6155, %v6195
      %v6219 = vsub.f32 %v6158, %v6197
      %v6220 = vsub.f32 %v6161, %v6199
      %v6221 = vsub.f32 %v6164, %v6201
      %v6222 = vsub.f32 %v6167, %v6203
      %v6223 = vsub.f32 %v6170, %v6205
      %v6224 = vsub.f32 %v6173, %v6207
      %v6225 = vsub.f32 %v6176, %v6209
      %v6226 = vmul.f32 %v6210, 1.442695
      %v6227 = vpow.pop %v6226
      %v6228 = vmul.f32 %v6211, 1.442695
      %v6229 = vpow.pop %v6228
      %v6230 = vmul.f32 %v6212, 1.442695
      %v6231 = vpow.pop %v6230
      %v6232 = vmul.f32 %v6213, 1.442695
      %v6233 = vpow.pop %v6232
      %v6234 = vmul.f32 %v6214, 1.442695
      %v6235 = vpow.pop %v6234
      %v6236 = vmul.f32 %v6215, 1.442695
      %v6237 = vpow.pop %v6236
      %v6238 = vmul.f32 %v6216, 1.442695
      %v6239 = vpow.pop %v6238
      %v6240 = vmul.f32 %v6217, 1.442695
      %v6241 = vpow.pop %v6240
      %v6242 = vmul.f32 %v6218, 1.442695
      %v6243 = vpow.pop %v6242
      %v6244 = vmul.f32 %v6219, 1.442695
      %v6245 = vpow.pop %v6244
      %v6246 = vmul.f32 %v6220, 1.442695
      %v6247 = vpow.pop %v6246
      %v6248 = vmul.f32 %v6221, 1.442695
      %v6249 = vpow.pop %v6248
      %v6250 = vmul.f32 %v6222, 1.442695
      %v6251 = vpow.pop %v6250
      %v6252 = vmul.f32 %v6223, 1.442695
      %v6253 = vpow.pop %v6252
      %v6254 = vmul.f32 %v6224, 1.442695
      %v6255 = vpow.pop %v6254
      %v6256 = vmul.f32 %v6225, 1.442695
      %v6257 = vpow.pop %v6256
      %6258 = vadd.xlane.f32.xlu0 %v6227
      %v6259 = vpop.xlane.xlu0 %6258
      %6260 = vadd.xlane.f32.xlu0 %v6229
      %v6261 = vpop.xlane.xlu0 %6260
      %6262 = vadd.xlane.f32.xlu0 %v6231
      %v6263 = vpop.xlane.xlu0 %6262
      %6264 = vadd.xlane.f32.xlu0 %v6233
      %v6265 = vpop.xlane.xlu0 %6264
      %6266 = vadd.xlane.f32.xlu0 %v6235
      %v6267 = vpop.xlane.xlu0 %6266
      %6268 = vadd.xlane.f32.xlu0 %v6237
      %v6269 = vpop.xlane.xlu0 %6268
      %6270 = vadd.xlane.f32.xlu0 %v6239
      %v6271 = vpop.xlane.xlu0 %6270
      %6272 = vadd.xlane.f32.xlu0 %v6241
      %v6273 = vpop.xlane.xlu0 %6272
      %6274 = vadd.xlane.f32.xlu0 %v6243
      %v6275 = vpop.xlane.xlu0 %6274
      %6276 = vadd.xlane.f32.xlu0 %v6245
      %v6277 = vpop.xlane.xlu0 %6276
      %6278 = vadd.xlane.f32.xlu0 %v6247
      %v6279 = vpop.xlane.xlu0 %6278
      %6280 = vadd.xlane.f32.xlu0 %v6249
      %v6281 = vpop.xlane.xlu0 %6280
      %6282 = vadd.xlane.f32.xlu0 %v6251
      %v6283 = vpop.xlane.xlu0 %6282
      %6284 = vadd.xlane.f32.xlu0 %v6253
      %v6285 = vpop.xlane.xlu0 %6284
      %6286 = vadd.xlane.f32.xlu0 %v6255
      %v6287 = vpop.xlane.xlu0 %6286
      %6288 = vadd.xlane.f32.xlu0 %v6257
      %v6289 = vpop.xlane.xlu0 %6288
      %v6290 = vrcp.pop %v6259
      %v6291 = vrcp.pop %v6261
      %v6292 = vrcp.pop %v6263
      %v6293 = vrcp.pop %v6265
      %v6294 = vrcp.pop %v6267
      %v6295 = vrcp.pop %v6269
      %v6296 = vrcp.pop %v6271
      %v6297 = vrcp.pop %v6273
      %v6298 = vrcp.pop %v6275
      %v6299 = vrcp.pop %v6277
      %v6300 = vrcp.pop %v6279
      %v6301 = vrcp.pop %v6281
      %v6302 = vrcp.pop %v6283
      %v6303 = vrcp.pop %v6285
      %v6304 = vrcp.pop %v6287
      %v6305 = vrcp.pop %v6289
      %v6306 = vmul.f32 %v6227, %v6290
      %v6307 = vmul.f32 %v6229, %v6291
      %v6308 = vmul.f32 %v6231, %v6292
      %v6309 = vmul.f32 %v6233, %v6293
      %v6310 = vmul.f32 %v6235, %v6294
      %v6311 = vmul.f32 %v6237, %v6295
      %v6312 = vmul.f32 %v6239, %v6296
      %v6313 = vmul.f32 %v6241, %v6297
      %v6314 = vmul.f32 %v6243, %v6298
      %v6315 = vmul.f32 %v6245, %v6299
      %v6316 = vmul.f32 %v6247, %v6300
      %v6317 = vmul.f32 %v6249, %v6301
      %v6318 = vmul.f32 %v6251, %v6302
      %v6319 = vmul.f32 %v6253, %v6303
      %v6320 = vmul.f32 %v6255, %v6304
      %v6321 = vmul.f32 %v6257, %v6305
      %6322 = vmatpush.msra.mxu0 %v6015
      %6323 = vmatpush.msra.mxu0 %v6012
      %6324 = vmatpush.msra.mxu0 %v6009
      %6325 = vmatpush.msra.mxu0 %v6006
      %6326 = vmatpush.msra.mxu0 %v6003
      %6327 = vmatpush.msra.mxu0 %v6000
      %6328 = vmatpush.msra.mxu0 %v5997
      %6329 = vmatpush.msra.mxu0 %v5994
      %6330 = vmatpush.msra.mxu0 %v5991
      %6331 = vmatpush.msra.mxu0 %v5988
      %6332 = vmatpush.msra.mxu0 %v5985
      %6333 = vmatpush.msra.mxu0 %v5982
      %6334 = vmatpush.msra.mxu0 %v5979
      %6335 = vmatpush.msra.mxu0 %v5976
      %6336 = vmatpush.msra.mxu0 %v5973
      %6337 = vmatpush.msra.mxu0 %v5970
      %6338 = vmatmul.f32.gmra.mxu0 %v6306
      %v6339 = vpop.f32.mrf.mxu0
      %v6340 = vadd.f32 0.0, %v6339
      %6341 = vmatmul.f32.gmra.mxu0 %v6307
      %v6342 = vpop.f32.mrf.mxu0
      %v6343 = vadd.f32 0.0, %v6342
      %6344 = vmatmul.f32.gmra.mxu0 %v6308
      %v6345 = vpop.f32.mrf.mxu0
      %v6346 = vadd.f32 0.0, %v6345
      %6347 = vmatmul.f32.gmra.mxu0 %v6309
      %v6348 = vpop.f32.mrf.mxu0
      %v6349 = vadd.f32 0.0, %v6348
      %6350 = vmatmul.f32.gmra.mxu0 %v6310
      %v6351 = vpop.f32.mrf.mxu0
      %v6352 = vadd.f32 0.0, %v6351
      %6353 = vmatmul.f32.gmra.mxu0 %v6311
      %v6354 = vpop.f32.mrf.mxu0
      %v6355 = vadd.f32 0.0, %v6354
      %6356 = vmatmul.f32.gmra.mxu0 %v6312
      %v6357 = vpop.f32.mrf.mxu0
      %v6358 = vadd.f32 0.0, %v6357
      %6359 = vmatmul.f32.gmra.mxu0 %v6313
      %v6360 = vpop.f32.mrf.mxu0
      %v6361 = vadd.f32 0.0, %v6360
      %6362 = vmatmul.f32.gmra.mxu0 %v6314
      %v6363 = vpop.f32.mrf.mxu0
      %v6364 = vadd.f32 0.0, %v6363
      %6365 = vmatmul.f32.gmra.mxu0 %v6315
      %v6366 = vpop.f32.mrf.mxu0
      %v6367 = vadd.f32 0.0, %v6366
      %6368 = vmatmul.f32.gmra.mxu0 %v6316
      %v6369 = vpop.f32.mrf.mxu0
      %v6370 = vadd.f32 0.0, %v6369
      %6371 = vmatmul.f32.gmra.mxu0 %v6317
      %v6372 = vpop.f32.mrf.mxu0
      %v6373 = vadd.f32 0.0, %v6372
      %6374 = vmatmul.f32.gmra.mxu0 %v6318
      %v6375 = vpop.f32.mrf.mxu0
      %v6376 = vadd.f32 0.0, %v6375
      %6377 = vmatmul.f32.gmra.mxu0 %v6319
      %v6378 = vpop.f32.mrf.mxu0
      %v6379 = vadd.f32 0.0, %v6378
      %6380 = vmatmul.f32.gmra.mxu0 %v6320
      %v6381 = vpop.f32.mrf.mxu0
      %v6382 = vadd.f32 0.0, %v6381
      %6383 = vmatmul.f32.gmra.mxu0 %v6321
      %v6384 = vpop.f32.mrf.mxu0
      %v6385 = vadd.f32 0.0, %v6384
      %6386 = vdwg.mxu0
      %v6388 = vsel %vm624, %v6340, 0
      %v6391 = vsel %vm624, %v6343, 0
      %v6394 = vsel %vm624, %v6346, 0
      %v6397 = vsel %vm624, %v6349, 0
      %v6400 = vsel %vm624, %v6352, 0
      %v6403 = vsel %vm624, %v6355, 0
      %v6406 = vsel %vm624, %v6358, 0
      %v6409 = vsel %vm624, %v6361, 0
      %v6412 = vsel %vm624, %v6364, 0
      %v6415 = vsel %vm624, %v6367, 0
      %v6418 = vsel %vm624, %v6370, 0
      %v6421 = vsel %vm624, %v6373, 0
      %v6424 = vsel %vm624, %v6376, 0
      %v6427 = vsel %vm624, %v6379, 0
      %v6430 = vsel %vm624, %v6382, 0
      %v6433 = vsel %vm624, %v6385, 0
      %6435 = vmatpush.msra.mxu0 0.0
      %6436 = vmatpush.msra.mxu0 0.0
      %6437 = vmatpush.msra.mxu0 0.0
      %6438 = vmatpush.msra.mxu0 0.0
      %6439 = vmatpush.msra.mxu0 0.0
      %6440 = vmatpush.msra.mxu0 0.0
      %6441 = vmatpush.msra.mxu0 0.0
      %6442 = vmatpush.msra.mxu0 0.0
      %6443 = vmatpush.msra.mxu0 0.0
      %6444 = vmatpush.msra.mxu0 0.0
      %6445 = vmatpush.msra.mxu0 0.0
      %6446 = vmatpush.msra.mxu0 0.0
      %6447 = vmatpush.msra.mxu0 %v5819
      %6448 = vmatpush.msra.mxu0 %v5818
      %6449 = vmatpush.msra.mxu0 %v5817
      %6450 = vmatpush.msra.mxu0 %v5816
      %6451 = vmatmul.f32.gmra.mxu0 %v6388
      %v6452 = vpop.f32.mrf.mxu0
      %v6453 = vadd.f32 0.0, %v6452
      %6454 = vmatmul.f32.gmra.mxu0 %v6391
      %v6455 = vpop.f32.mrf.mxu0
      %v6456 = vadd.f32 0.0, %v6455
      %6457 = vmatmul.f32.gmra.mxu0 %v6394
      %v6458 = vpop.f32.mrf.mxu0
      %v6459 = vadd.f32 0.0, %v6458
      %6460 = vmatmul.f32.gmra.mxu0 %v6397
      %v6461 = vpop.f32.mrf.mxu0
      %v6462 = vadd.f32 0.0, %v6461
      %6463 = vmatmul.f32.gmra.mxu0 %v6400
      %v6464 = vpop.f32.mrf.mxu0
      %v6465 = vadd.f32 0.0, %v6464
      %6466 = vmatmul.f32.gmra.mxu0 %v6403
      %v6467 = vpop.f32.mrf.mxu0
      %v6468 = vadd.f32 0.0, %v6467
      %6469 = vmatmul.f32.gmra.mxu0 %v6406
      %v6470 = vpop.f32.mrf.mxu0
      %v6471 = vadd.f32 0.0, %v6470
      %6472 = vmatmul.f32.gmra.mxu0 %v6409
      %v6473 = vpop.f32.mrf.mxu0
      %v6474 = vadd.f32 0.0, %v6473
      %6475 = vmatmul.f32.gmra.mxu0 %v6412
      %v6476 = vpop.f32.mrf.mxu0
      %v6477 = vadd.f32 0.0, %v6476
      %6478 = vmatmul.f32.gmra.mxu0 %v6415
      %v6479 = vpop.f32.mrf.mxu0
      %v6480 = vadd.f32 0.0, %v6479
      %6481 = vmatmul.f32.gmra.mxu0 %v6418
      %v6482 = vpop.f32.mrf.mxu0
      %v6483 = vadd.f32 0.0, %v6482
      %6484 = vmatmul.f32.gmra.mxu0 %v6421
      %v6485 = vpop.f32.mrf.mxu0
      %v6486 = vadd.f32 0.0, %v6485
      %6487 = vmatmul.f32.gmra.mxu0 %v6424
      %v6488 = vpop.f32.mrf.mxu0
      %v6489 = vadd.f32 0.0, %v6488
      %6490 = vmatmul.f32.gmra.mxu0 %v6427
      %v6491 = vpop.f32.mrf.mxu0
      %v6492 = vadd.f32 0.0, %v6491
      %6493 = vmatmul.f32.gmra.mxu0 %v6430
      %v6494 = vpop.f32.mrf.mxu0
      %v6495 = vadd.f32 0.0, %v6494
      %6496 = vmatmul.f32.gmra.mxu0 %v6433
      %v6497 = vpop.f32.mrf.mxu0
      %v6498 = vadd.f32 0.0, %v6497
      %6499 = vdwg.mxu0
      %v6500 = vadd.f32 %v5757, %v6453
      %v6501 = vadd.f32 %v5760, %v6456
      %v6502 = vadd.f32 %v5763, %v6459
      %v6503 = vadd.f32 %v5766, %v6462
      %v6504 = vadd.f32 %v5769, %v6465
      %v6505 = vadd.f32 %v5772, %v6468
      %v6506 = vadd.f32 %v5775, %v6471
      %v6507 = vadd.f32 %v5778, %v6474
      %v6508 = vadd.f32 %v5781, %v6477
      %v6509 = vadd.f32 %v5784, %v6480
      %v6510 = vadd.f32 %v5787, %v6483
      %v6511 = vadd.f32 %v5790, %v6486
      %v6512 = vadd.f32 %v5793, %v6489
      %v6513 = vadd.f32 %v5796, %v6492
      %v6514 = vadd.f32 %v5799, %v6495
      %v6515 = vadd.f32 %v5802, %v6498
      %v6516 = vld [vmem:[%s3 + $0x3c8] sm:$0xff]
      %v6517 = vld [vmem:[%s3 + $0x3d0] sm:$0xff]
      %v6518 = vld [vmem:[%s3 + $0x3d8] sm:$0xff]
      %v6519 = vld [vmem:[%s3 + $0x3e0] sm:$0xff]
      %v6520 = vld [vmem:[%s3 + $0x3e8] sm:$0xff]
      %v6521 = vld [vmem:[%s3 + $0x3f0] sm:$0xff]
      %v6522 = vld [vmem:[%s3 + $0x3f8] sm:$0xff]
      %v6523 = vld [vmem:[%s3 + $0x400] sm:$0xff]
      %v6524 = vld [vmem:[%s3 + $0x408] sm:$0xff]
      %v6525 = vld [vmem:[%s3 + $0x410] sm:$0xff]
      %v6526 = vld [vmem:[%s3 + $0x418] sm:$0xff]
      %v6527 = vld [vmem:[%s3 + $0x420] sm:$0xff]
      %v6528 = vld [vmem:[%s3 + $0x428] sm:$0xff]
      %v6529 = vld [vmem:[%s3 + $0x430] sm:$0xff]
      %v6530 = vld [vmem:[%s3 + $0x438] sm:$0xff]
      %v6531 = vld [vmem:[%s3 + $0x440] sm:$0xff]
      %v6532 = vld [vmem:[%s6 + $0xf] sm:$0x1]
      %v6533 = vperm.slane %v6532, 0
      %6534 = vmatpush.msra.mxu0 0.0
      %6535 = vmatpush.msra.mxu0 0.0
      %6536 = vmatpush.msra.mxu0 0.0
      %6537 = vmatpush.msra.mxu0 0.0
      %6538 = vmatpush.msra.mxu0 0.0
      %6539 = vmatpush.msra.mxu0 0.0
      %6540 = vmatpush.msra.mxu0 0.0
      %6541 = vmatpush.msra.mxu0 0.0
      %6542 = vmatpush.msra.mxu0 0.0
      %6543 = vmatpush.msra.mxu0 0.0
      %6544 = vmatpush.msra.mxu0 0.0
      %6545 = vmatpush.msra.mxu0 0.0
      %6546 = vmatpush.msra.mxu0 %v6519
      %6547 = vmatpush.msra.mxu0 %v6518
      %6548 = vmatpush.msra.mxu0 %v6517
      %6549 = vmatpush.msra.mxu0 %v6516
      %6550 = vmatmul.f32.gmra.mxu0 %v4383
      %v6551 = vpop.f32.mrf.mxu0
      %v6552 = vadd.f32 %v6533, %v6551
      %6553 = vmatmul.f32.gmra.mxu0 %v4386
      %v6554 = vpop.f32.mrf.mxu0
      %v6555 = vadd.f32 %v6533, %v6554
      %6556 = vmatmul.f32.gmra.mxu0 %v4389
      %v6557 = vpop.f32.mrf.mxu0
      %v6558 = vadd.f32 %v6533, %v6557
      %6559 = vmatmul.f32.gmra.mxu0 %v4392
      %v6560 = vpop.f32.mrf.mxu0
      %v6561 = vadd.f32 %v6533, %v6560
      %6562 = vmatmul.f32.gmra.mxu0 %v4395
      %v6563 = vpop.f32.mrf.mxu0
      %v6564 = vadd.f32 %v6533, %v6563
      %6565 = vmatmul.f32.gmra.mxu0 %v4398
      %v6566 = vpop.f32.mrf.mxu0
      %v6567 = vadd.f32 %v6533, %v6566
      %6568 = vmatmul.f32.gmra.mxu0 %v4401
      %v6569 = vpop.f32.mrf.mxu0
      %v6570 = vadd.f32 %v6533, %v6569
      %6571 = vmatmul.f32.gmra.mxu0 %v4404
      %v6572 = vpop.f32.mrf.mxu0
      %v6573 = vadd.f32 %v6533, %v6572
      %6574 = vmatmul.f32.gmra.mxu0 %v4407
      %v6575 = vpop.f32.mrf.mxu0
      %v6576 = vadd.f32 %v6533, %v6575
      %6577 = vmatmul.f32.gmra.mxu0 %v4410
      %v6578 = vpop.f32.mrf.mxu0
      %v6579 = vadd.f32 %v6533, %v6578
      %6580 = vmatmul.f32.gmra.mxu0 %v4413
      %v6581 = vpop.f32.mrf.mxu0
      %v6582 = vadd.f32 %v6533, %v6581
      %6583 = vmatmul.f32.gmra.mxu0 %v4416
      %v6584 = vpop.f32.mrf.mxu0
      %v6585 = vadd.f32 %v6533, %v6584
      %6586 = vmatmul.f32.gmra.mxu0 %v4419
      %v6587 = vpop.f32.mrf.mxu0
      %v6588 = vadd.f32 %v6533, %v6587
      %6589 = vmatmul.f32.gmra.mxu0 %v4422
      %v6590 = vpop.f32.mrf.mxu0
      %v6591 = vadd.f32 %v6533, %v6590
      %6592 = vmatmul.f32.gmra.mxu0 %v4425
      %v6593 = vpop.f32.mrf.mxu0
      %v6594 = vadd.f32 %v6533, %v6593
      %6595 = vmatmul.f32.gmra.mxu0 %v4428
      %v6596 = vpop.f32.mrf.mxu0
      %v6597 = vadd.f32 %v6533, %v6596
      %6598 = vdwg.mxu0
      %6599 = vmatpush.msra.mxu0 0.0
      %6600 = vmatpush.msra.mxu0 0.0
      %6601 = vmatpush.msra.mxu0 0.0
      %6602 = vmatpush.msra.mxu0 0.0
      %6603 = vmatpush.msra.mxu0 0.0
      %6604 = vmatpush.msra.mxu0 0.0
      %6605 = vmatpush.msra.mxu0 0.0
      %6606 = vmatpush.msra.mxu0 0.0
      %6607 = vmatpush.msra.mxu0 0.0
      %6608 = vmatpush.msra.mxu0 0.0
      %6609 = vmatpush.msra.mxu0 0.0
      %6610 = vmatpush.msra.mxu0 0.0
      %6611 = vmatpush.msra.mxu0 %v6523
      %6612 = vmatpush.msra.mxu0 %v6522
      %6613 = vmatpush.msra.mxu0 %v6521
      %6614 = vmatpush.msra.mxu0 %v6520
      %6615 = vmatmul.f32.gmra.mxu0 %v4383
      %v6616 = vpop.f32.mrf.mxu0
      %v6617 = vadd.f32 0.0, %v6616
      %6618 = vmatmul.f32.gmra.mxu0 %v4386
      %v6619 = vpop.f32.mrf.mxu0
      %v6620 = vadd.f32 0.0, %v6619
      %6621 = vmatmul.f32.gmra.mxu0 %v4389
      %v6622 = vpop.f32.mrf.mxu0
      %v6623 = vadd.f32 0.0, %v6622
      %6624 = vmatmul.f32.gmra.mxu0 %v4392
      %v6625 = vpop.f32.mrf.mxu0
      %v6626 = vadd.f32 0.0, %v6625
      %6627 = vmatmul.f32.gmra.mxu0 %v4395
      %v6628 = vpop.f32.mrf.mxu0
      %v6629 = vadd.f32 0.0, %v6628
      %6630 = vmatmul.f32.gmra.mxu0 %v4398
      %v6631 = vpop.f32.mrf.mxu0
      %v6632 = vadd.f32 0.0, %v6631
      %6633 = vmatmul.f32.gmra.mxu0 %v4401
      %v6634 = vpop.f32.mrf.mxu0
      %v6635 = vadd.f32 0.0, %v6634
      %6636 = vmatmul.f32.gmra.mxu0 %v4404
      %v6637 = vpop.f32.mrf.mxu0
      %v6638 = vadd.f32 0.0, %v6637
      %6639 = vmatmul.f32.gmra.mxu0 %v4407
      %v6640 = vpop.f32.mrf.mxu0
      %v6641 = vadd.f32 0.0, %v6640
      %6642 = vmatmul.f32.gmra.mxu0 %v4410
      %v6643 = vpop.f32.mrf.mxu0
      %v6644 = vadd.f32 0.0, %v6643
      %6645 = vmatmul.f32.gmra.mxu0 %v4413
      %v6646 = vpop.f32.mrf.mxu0
      %v6647 = vadd.f32 0.0, %v6646
      %6648 = vmatmul.f32.gmra.mxu0 %v4416
      %v6649 = vpop.f32.mrf.mxu0
      %v6650 = vadd.f32 0.0, %v6649
      %6651 = vmatmul.f32.gmra.mxu0 %v4419
      %v6652 = vpop.f32.mrf.mxu0
      %v6653 = vadd.f32 0.0, %v6652
      %6654 = vmatmul.f32.gmra.mxu0 %v4422
      %v6655 = vpop.f32.mrf.mxu0
      %v6656 = vadd.f32 0.0, %v6655
      %6657 = vmatmul.f32.gmra.mxu0 %v4425
      %v6658 = vpop.f32.mrf.mxu0
      %v6659 = vadd.f32 0.0, %v6658
      %6660 = vmatmul.f32.gmra.mxu0 %v4428
      %v6661 = vpop.f32.mrf.mxu0
      %v6662 = vadd.f32 0.0, %v6661
      %6663 = vdwg.mxu0
      %6664 = vmatpush.msra.mxu0 0.0
      %6665 = vmatpush.msra.mxu0 0.0
      %6666 = vmatpush.msra.mxu0 0.0
      %6667 = vmatpush.msra.mxu0 0.0
      %6668 = vmatpush.msra.mxu0 0.0
      %6669 = vmatpush.msra.mxu0 0.0
      %6670 = vmatpush.msra.mxu0 0.0
      %6671 = vmatpush.msra.mxu0 0.0
      %6672 = vmatpush.msra.mxu0 0.0
      %6673 = vmatpush.msra.mxu0 0.0
      %6674 = vmatpush.msra.mxu0 0.0
      %6675 = vmatpush.msra.mxu0 0.0
      %6676 = vmatpush.msra.mxu0 %v6527
      %6677 = vmatpush.msra.mxu0 %v6526
      %6678 = vmatpush.msra.mxu0 %v6525
      %6679 = vmatpush.msra.mxu0 %v6524
      %6680 = vmatmul.f32.gmra.mxu0 %v4383
      %v6681 = vpop.f32.mrf.mxu0
      %v6682 = vadd.f32 0.0, %v6681
      %6683 = vmatmul.f32.gmra.mxu0 %v4386
      %v6684 = vpop.f32.mrf.mxu0
      %v6685 = vadd.f32 0.0, %v6684
      %6686 = vmatmul.f32.gmra.mxu0 %v4389
      %v6687 = vpop.f32.mrf.mxu0
      %v6688 = vadd.f32 0.0, %v6687
      %6689 = vmatmul.f32.gmra.mxu0 %v4392
      %v6690 = vpop.f32.mrf.mxu0
      %v6691 = vadd.f32 0.0, %v6690
      %6692 = vmatmul.f32.gmra.mxu0 %v4395
      %v6693 = vpop.f32.mrf.mxu0
      %v6694 = vadd.f32 0.0, %v6693
      %6695 = vmatmul.f32.gmra.mxu0 %v4398
      %v6696 = vpop.f32.mrf.mxu0
      %v6697 = vadd.f32 0.0, %v6696
      %6698 = vmatmul.f32.gmra.mxu0 %v4401
      %v6699 = vpop.f32.mrf.mxu0
      %v6700 = vadd.f32 0.0, %v6699
      %6701 = vmatmul.f32.gmra.mxu0 %v4404
      %v6702 = vpop.f32.mrf.mxu0
      %v6703 = vadd.f32 0.0, %v6702
      %6704 = vmatmul.f32.gmra.mxu0 %v4407
      %v6705 = vpop.f32.mrf.mxu0
      %v6706 = vadd.f32 0.0, %v6705
      %6707 = vmatmul.f32.gmra.mxu0 %v4410
      %v6708 = vpop.f32.mrf.mxu0
      %v6709 = vadd.f32 0.0, %v6708
      %6710 = vmatmul.f32.gmra.mxu0 %v4413
      %v6711 = vpop.f32.mrf.mxu0
      %v6712 = vadd.f32 0.0, %v6711
      %6713 = vmatmul.f32.gmra.mxu0 %v4416
      %v6714 = vpop.f32.mrf.mxu0
      %v6715 = vadd.f32 0.0, %v6714
      %6716 = vmatmul.f32.gmra.mxu0 %v4419
      %v6717 = vpop.f32.mrf.mxu0
      %v6718 = vadd.f32 0.0, %v6717
      %6719 = vmatmul.f32.gmra.mxu0 %v4422
      %v6720 = vpop.f32.mrf.mxu0
      %v6721 = vadd.f32 0.0, %v6720
      %6722 = vmatmul.f32.gmra.mxu0 %v4425
      %v6723 = vpop.f32.mrf.mxu0
      %v6724 = vadd.f32 0.0, %v6723
      %6725 = vmatmul.f32.gmra.mxu0 %v4428
      %v6726 = vpop.f32.mrf.mxu0
      %v6727 = vadd.f32 0.0, %v6726
      %6728 = vdwg.mxu0
      %v6730 = vsel %vm624, %v6552, 0
      %v6733 = vsel %vm624, %v6555, 0
      %v6736 = vsel %vm624, %v6558, 0
      %v6739 = vsel %vm624, %v6561, 0
      %v6742 = vsel %vm624, %v6564, 0
      %v6745 = vsel %vm624, %v6567, 0
      %v6748 = vsel %vm624, %v6570, 0
      %v6751 = vsel %vm624, %v6573, 0
      %v6754 = vsel %vm624, %v6576, 0
      %v6757 = vsel %vm624, %v6579, 0
      %v6760 = vsel %vm624, %v6582, 0
      %v6763 = vsel %vm624, %v6585, 0
      %v6766 = vsel %vm624, %v6588, 0
      %v6769 = vsel %vm624, %v6591, 0
      %v6772 = vsel %vm624, %v6594, 0
      %v6775 = vsel %vm624, %v6597, 0
      %v6778 = vsel %vm624, %v6617, 0
      %v6781 = vsel %vm624, %v6620, 0
      %v6784 = vsel %vm624, %v6623, 0
      %v6787 = vsel %vm624, %v6626, 0
      %v6790 = vsel %vm624, %v6629, 0
      %v6793 = vsel %vm624, %v6632, 0
      %v6796 = vsel %vm624, %v6635, 0
      %v6799 = vsel %vm624, %v6638, 0
      %v6802 = vsel %vm624, %v6641, 0
      %v6805 = vsel %vm624, %v6644, 0
      %v6808 = vsel %vm624, %v6647, 0
      %v6811 = vsel %vm624, %v6650, 0
      %v6814 = vsel %vm624, %v6653, 0
      %v6817 = vsel %vm624, %v6656, 0
      %v6820 = vsel %vm624, %v6659, 0
      %v6823 = vsel %vm624, %v6662, 0
      %6825 = vmatpush.xpose.msra.mxu0 %v6823
      %6826 = vmatpush.xpose.msra.mxu0 %v6820
      %6827 = vmatpush.xpose.msra.mxu0 %v6817
      %6828 = vmatpush.xpose.msra.mxu0 %v6814
      %6829 = vmatpush.xpose.msra.mxu0 %v6811
      %6830 = vmatpush.xpose.msra.mxu0 %v6808
      %6831 = vmatpush.xpose.msra.mxu0 %v6805
      %6832 = vmatpush.xpose.msra.mxu0 %v6802
      %6833 = vmatpush.xpose.msra.mxu0 %v6799
      %6834 = vmatpush.xpose.msra.mxu0 %v6796
      %6835 = vmatpush.xpose.msra.mxu0 %v6793
      %6836 = vmatpush.xpose.msra.mxu0 %v6790
      %6837 = vmatpush.xpose.msra.mxu0 %v6787
      %6838 = vmatpush.xpose.msra.mxu0 %v6784
      %6839 = vmatpush.xpose.msra.mxu0 %v6781
      %6840 = vmatpush.xpose.msra.mxu0 %v6778
      %6841 = vmatmul.f32.gmra.mxu0 %v6730
      %v6842 = vpop.f32.mrf.mxu0
      %v6843 = vadd.f32 %v409, %v6842
      %6844 = vmatmul.f32.gmra.mxu0 %v6733
      %v6845 = vpop.f32.mrf.mxu0
      %v6846 = vadd.f32 %v410, %v6845
      %6847 = vmatmul.f32.gmra.mxu0 %v6736
      %v6848 = vpop.f32.mrf.mxu0
      %v6849 = vadd.f32 %v411, %v6848
      %6850 = vmatmul.f32.gmra.mxu0 %v6739
      %v6851 = vpop.f32.mrf.mxu0
      %v6852 = vadd.f32 %v412, %v6851
      %6853 = vmatmul.f32.gmra.mxu0 %v6742
      %v6854 = vpop.f32.mrf.mxu0
      %v6855 = vadd.f32 %v413, %v6854
      %6856 = vmatmul.f32.gmra.mxu0 %v6745
      %v6857 = vpop.f32.mrf.mxu0
      %v6858 = vadd.f32 %v414, %v6857
      %6859 = vmatmul.f32.gmra.mxu0 %v6748
      %v6860 = vpop.f32.mrf.mxu0
      %v6861 = vadd.f32 %v415, %v6860
      %6862 = vmatmul.f32.gmra.mxu0 %v6751
      %v6863 = vpop.f32.mrf.mxu0
      %v6864 = vadd.f32 %v416, %v6863
      %6865 = vmatmul.f32.gmra.mxu0 %v6754
      %v6866 = vpop.f32.mrf.mxu0
      %v6867 = vadd.f32 %v417, %v6866
      %6868 = vmatmul.f32.gmra.mxu0 %v6757
      %v6869 = vpop.f32.mrf.mxu0
      %v6870 = vadd.f32 %v418, %v6869
      %6871 = vmatmul.f32.gmra.mxu0 %v6760
      %v6872 = vpop.f32.mrf.mxu0
      %v6873 = vadd.f32 %v419, %v6872
      %6874 = vmatmul.f32.gmra.mxu0 %v6763
      %v6875 = vpop.f32.mrf.mxu0
      %v6876 = vadd.f32 %v420, %v6875
      %6877 = vmatmul.f32.gmra.mxu0 %v6766
      %v6878 = vpop.f32.mrf.mxu0
      %v6879 = vadd.f32 %v421, %v6878
      %6880 = vmatmul.f32.gmra.mxu0 %v6769
      %v6881 = vpop.f32.mrf.mxu0
      %v6882 = vadd.f32 %v422, %v6881
      %6883 = vmatmul.f32.gmra.mxu0 %v6772
      %v6884 = vpop.f32.mrf.mxu0
      %v6885 = vadd.f32 %v423, %v6884
      %6886 = vmatmul.f32.gmra.mxu0 %v6775
      %v6887 = vpop.f32.mrf.mxu0
      %v6888 = vadd.f32 %v424, %v6887
      %6889 = vdwg.mxu0
      %6890 = vmax.xlane.f32.xlu0 %v6843
      %v6891 = vpop.xlane.xlu0 %6890
      %6892 = vmax.xlane.f32.xlu0 %v6846
      %v6893 = vpop.xlane.xlu0 %6892
      %6894 = vmax.xlane.f32.xlu0 %v6849
      %v6895 = vpop.xlane.xlu0 %6894
      %6896 = vmax.xlane.f32.xlu0 %v6852
      %v6897 = vpop.xlane.xlu0 %6896
      %6898 = vmax.xlane.f32.xlu0 %v6855
      %v6899 = vpop.xlane.xlu0 %6898
      %6900 = vmax.xlane.f32.xlu0 %v6858
      %v6901 = vpop.xlane.xlu0 %6900
      %6902 = vmax.xlane.f32.xlu0 %v6861
      %v6903 = vpop.xlane.xlu0 %6902
      %6904 = vmax.xlane.f32.xlu0 %v6864
      %v6905 = vpop.xlane.xlu0 %6904
      %6906 = vmax.xlane.f32.xlu0 %v6867
      %v6907 = vpop.xlane.xlu0 %6906
      %6908 = vmax.xlane.f32.xlu0 %v6870
      %v6909 = vpop.xlane.xlu0 %6908
      %6910 = vmax.xlane.f32.xlu0 %v6873
      %v6911 = vpop.xlane.xlu0 %6910
      %6912 = vmax.xlane.f32.xlu0 %v6876
      %v6913 = vpop.xlane.xlu0 %6912
      %6914 = vmax.xlane.f32.xlu0 %v6879
      %v6915 = vpop.xlane.xlu0 %6914
      %6916 = vmax.xlane.f32.xlu0 %v6882
      %v6917 = vpop.xlane.xlu0 %6916
      %6918 = vmax.xlane.f32.xlu0 %v6885
      %v6919 = vpop.xlane.xlu0 %6918
      %6920 = vmax.xlane.f32.xlu0 %v6888
      %v6921 = vpop.xlane.xlu0 %6920
      %v6922 = vsub.f32 %v6843, %v6891
      %v6923 = vsub.f32 %v6846, %v6893
      %v6924 = vsub.f32 %v6849, %v6895
      %v6925 = vsub.f32 %v6852, %v6897
      %v6926 = vsub.f32 %v6855, %v6899
      %v6927 = vsub.f32 %v6858, %v6901
      %v6928 = vsub.f32 %v6861, %v6903
      %v6929 = vsub.f32 %v6864, %v6905
      %v6930 = vsub.f32 %v6867, %v6907
      %v6931 = vsub.f32 %v6870, %v6909
      %v6932 = vsub.f32 %v6873, %v6911
      %v6933 = vsub.f32 %v6876, %v6913
      %v6934 = vsub.f32 %v6879, %v6915
      %v6935 = vsub.f32 %v6882, %v6917
      %v6936 = vsub.f32 %v6885, %v6919
      %v6937 = vsub.f32 %v6888, %v6921
      %v6938 = vmul.f32 %v6922, 1.442695
      %v6939 = vpow.pop %v6938
      %v6940 = vmul.f32 %v6923, 1.442695
      %v6941 = vpow.pop %v6940
      %v6942 = vmul.f32 %v6924, 1.442695
      %v6943 = vpow.pop %v6942
      %v6944 = vmul.f32 %v6925, 1.442695
      %v6945 = vpow.pop %v6944
      %v6946 = vmul.f32 %v6926, 1.442695
      %v6947 = vpow.pop %v6946
      %v6948 = vmul.f32 %v6927, 1.442695
      %v6949 = vpow.pop %v6948
      %v6950 = vmul.f32 %v6928, 1.442695
      %v6951 = vpow.pop %v6950
      %v6952 = vmul.f32 %v6929, 1.442695
      %v6953 = vpow.pop %v6952
      %v6954 = vmul.f32 %v6930, 1.442695
      %v6955 = vpow.pop %v6954
      %v6956 = vmul.f32 %v6931, 1.442695
      %v6957 = vpow.pop %v6956
      %v6958 = vmul.f32 %v6932, 1.442695
      %v6959 = vpow.pop %v6958
      %v6960 = vmul.f32 %v6933, 1.442695
      %v6961 = vpow.pop %v6960
      %v6962 = vmul.f32 %v6934, 1.442695
      %v6963 = vpow.pop %v6962
      %v6964 = vmul.f32 %v6935, 1.442695
      %v6965 = vpow.pop %v6964
      %v6966 = vmul.f32 %v6936, 1.442695
      %v6967 = vpow.pop %v6966
      %v6968 = vmul.f32 %v6937, 1.442695
      %v6969 = vpow.pop %v6968
      %6970 = vadd.xlane.f32.xlu0 %v6939
      %v6971 = vpop.xlane.xlu0 %6970
      %6972 = vadd.xlane.f32.xlu0 %v6941
      %v6973 = vpop.xlane.xlu0 %6972
      %6974 = vadd.xlane.f32.xlu0 %v6943
      %v6975 = vpop.xlane.xlu0 %6974
      %6976 = vadd.xlane.f32.xlu0 %v6945
      %v6977 = vpop.xlane.xlu0 %6976
      %6978 = vadd.xlane.f32.xlu0 %v6947
      %v6979 = vpop.xlane.xlu0 %6978
      %6980 = vadd.xlane.f32.xlu0 %v6949
      %v6981 = vpop.xlane.xlu0 %6980
      %6982 = vadd.xlane.f32.xlu0 %v6951
      %v6983 = vpop.xlane.xlu0 %6982
      %6984 = vadd.xlane.f32.xlu0 %v6953
      %v6985 = vpop.xlane.xlu0 %6984
      %6986 = vadd.xlane.f32.xlu0 %v6955
      %v6987 = vpop.xlane.xlu0 %6986
      %6988 = vadd.xlane.f32.xlu0 %v6957
      %v6989 = vpop.xlane.xlu0 %6988
      %6990 = vadd.xlane.f32.xlu0 %v6959
      %v6991 = vpop.xlane.xlu0 %6990
      %6992 = vadd.xlane.f32.xlu0 %v6961
      %v6993 = vpop.xlane.xlu0 %6992
      %6994 = vadd.xlane.f32.xlu0 %v6963
      %v6995 = vpop.xlane.xlu0 %6994
      %6996 = vadd.xlane.f32.xlu0 %v6965
      %v6997 = vpop.xlane.xlu0 %6996
      %6998 = vadd.xlane.f32.xlu0 %v6967
      %v6999 = vpop.xlane.xlu0 %6998
      %7000 = vadd.xlane.f32.xlu0 %v6969
      %v7001 = vpop.xlane.xlu0 %7000
      %v7002 = vrcp.pop %v6971
      %v7003 = vrcp.pop %v6973
      %v7004 = vrcp.pop %v6975
      %v7005 = vrcp.pop %v6977
      %v7006 = vrcp.pop %v6979
      %v7007 = vrcp.pop %v6981
      %v7008 = vrcp.pop %v6983
      %v7009 = vrcp.pop %v6985
      %v7010 = vrcp.pop %v6987
      %v7011 = vrcp.pop %v6989
      %v7012 = vrcp.pop %v6991
      %v7013 = vrcp.pop %v6993
      %v7014 = vrcp.pop %v6995
      %v7015 = vrcp.pop %v6997
      %v7016 = vrcp.pop %v6999
      %v7017 = vrcp.pop %v7001
      %v7018 = vmul.f32 %v6939, %v7002
      %v7019 = vmul.f32 %v6941, %v7003
      %v7020 = vmul.f32 %v6943, %v7004
      %v7021 = vmul.f32 %v6945, %v7005
      %v7022 = vmul.f32 %v6947, %v7006
      %v7023 = vmul.f32 %v6949, %v7007
      %v7024 = vmul.f32 %v6951, %v7008
      %v7025 = vmul.f32 %v6953, %v7009
      %v7026 = vmul.f32 %v6955, %v7010
      %v7027 = vmul.f32 %v6957, %v7011
      %v7028 = vmul.f32 %v6959, %v7012
      %v7029 = vmul.f32 %v6961, %v7013
      %v7030 = vmul.f32 %v6963, %v7014
      %v7031 = vmul.f32 %v6965, %v7015
      %v7032 = vmul.f32 %v6967, %v7016
      %v7033 = vmul.f32 %v6969, %v7017
      %7034 = vmatpush.msra.mxu0 %v6727
      %7035 = vmatpush.msra.mxu0 %v6724
      %7036 = vmatpush.msra.mxu0 %v6721
      %7037 = vmatpush.msra.mxu0 %v6718
      %7038 = vmatpush.msra.mxu0 %v6715
      %7039 = vmatpush.msra.mxu0 %v6712
      %7040 = vmatpush.msra.mxu0 %v6709
      %7041 = vmatpush.msra.mxu0 %v6706
      %7042 = vmatpush.msra.mxu0 %v6703
      %7043 = vmatpush.msra.mxu0 %v6700
      %7044 = vmatpush.msra.mxu0 %v6697
      %7045 = vmatpush.msra.mxu0 %v6694
      %7046 = vmatpush.msra.mxu0 %v6691
      %7047 = vmatpush.msra.mxu0 %v6688
      %7048 = vmatpush.msra.mxu0 %v6685
      %7049 = vmatpush.msra.mxu0 %v6682
      %7050 = vmatmul.f32.gmra.mxu0 %v7018
      %v7051 = vpop.f32.mrf.mxu0
      %v7052 = vadd.f32 0.0, %v7051
      %7053 = vmatmul.f32.gmra.mxu0 %v7019
      %v7054 = vpop.f32.mrf.mxu0
      %v7055 = vadd.f32 0.0, %v7054
      %7056 = vmatmul.f32.gmra.mxu0 %v7020
      %v7057 = vpop.f32.mrf.mxu0
      %v7058 = vadd.f32 0.0, %v7057
      %7059 = vmatmul.f32.gmra.mxu0 %v7021
      %v7060 = vpop.f32.mrf.mxu0
      %v7061 = vadd.f32 0.0, %v7060
      %7062 = vmatmul.f32.gmra.mxu0 %v7022
      %v7063 = vpop.f32.mrf.mxu0
      %v7064 = vadd.f32 0.0, %v7063
      %7065 = vmatmul.f32.gmra.mxu0 %v7023
      %v7066 = vpop.f32.mrf.mxu0
      %v7067 = vadd.f32 0.0, %v7066
      %7068 = vmatmul.f32.gmra.mxu0 %v7024
      %v7069 = vpop.f32.mrf.mxu0
      %v7070 = vadd.f32 0.0, %v7069
      %7071 = vmatmul.f32.gmra.mxu0 %v7025
      %v7072 = vpop.f32.mrf.mxu0
      %v7073 = vadd.f32 0.0, %v7072
      %7074 = vmatmul.f32.gmra.mxu0 %v7026
      %v7075 = vpop.f32.mrf.mxu0
      %v7076 = vadd.f32 0.0, %v7075
      %7077 = vmatmul.f32.gmra.mxu0 %v7027
      %v7078 = vpop.f32.mrf.mxu0
      %v7079 = vadd.f32 0.0, %v7078
      %7080 = vmatmul.f32.gmra.mxu0 %v7028
      %v7081 = vpop.f32.mrf.mxu0
      %v7082 = vadd.f32 0.0, %v7081
      %7083 = vmatmul.f32.gmra.mxu0 %v7029
      %v7084 = vpop.f32.mrf.mxu0
      %v7085 = vadd.f32 0.0, %v7084
      %7086 = vmatmul.f32.gmra.mxu0 %v7030
      %v7087 = vpop.f32.mrf.mxu0
      %v7088 = vadd.f32 0.0, %v7087
      %7089 = vmatmul.f32.gmra.mxu0 %v7031
      %v7090 = vpop.f32.mrf.mxu0
      %v7091 = vadd.f32 0.0, %v7090
      %7092 = vmatmul.f32.gmra.mxu0 %v7032
      %v7093 = vpop.f32.mrf.mxu0
      %v7094 = vadd.f32 0.0, %v7093
      %7095 = vmatmul.f32.gmra.mxu0 %v7033
      %v7096 = vpop.f32.mrf.mxu0
      %v7097 = vadd.f32 0.0, %v7096
      %7098 = vdwg.mxu0
      %v7100 = vsel %vm624, %v7052, 0
      %v7103 = vsel %vm624, %v7055, 0
      %v7106 = vsel %vm624, %v7058, 0
      %v7109 = vsel %vm624, %v7061, 0
      %v7112 = vsel %vm624, %v7064, 0
      %v7115 = vsel %vm624, %v7067, 0
      %v7118 = vsel %vm624, %v7070, 0
      %v7121 = vsel %vm624, %v7073, 0
      %v7124 = vsel %vm624, %v7076, 0
      %v7127 = vsel %vm624, %v7079, 0
      %v7130 = vsel %vm624, %v7082, 0
      %v7133 = vsel %vm624, %v7085, 0
      %v7136 = vsel %vm624, %v7088, 0
      %v7139 = vsel %vm624, %v7091, 0
      %v7142 = vsel %vm624, %v7094, 0
      %v7145 = vsel %vm624, %v7097, 0
      %7147 = vmatpush.msra.mxu0 0.0
      %7148 = vmatpush.msra.mxu0 0.0
      %7149 = vmatpush.msra.mxu0 0.0
      %7150 = vmatpush.msra.mxu0 0.0
      %7151 = vmatpush.msra.mxu0 0.0
      %7152 = vmatpush.msra.mxu0 0.0
      %7153 = vmatpush.msra.mxu0 0.0
      %7154 = vmatpush.msra.mxu0 0.0
      %7155 = vmatpush.msra.mxu0 0.0
      %7156 = vmatpush.msra.mxu0 0.0
      %7157 = vmatpush.msra.mxu0 0.0
      %7158 = vmatpush.msra.mxu0 0.0
      %7159 = vmatpush.msra.mxu0 %v6531
      %7160 = vmatpush.msra.mxu0 %v6530
      %7161 = vmatpush.msra.mxu0 %v6529
      %7162 = vmatpush.msra.mxu0 %v6528
      %7163 = vmatmul.f32.gmra.mxu0 %v7100
      %v7164 = vpop.f32.mrf.mxu0
      %v7165 = vadd.f32 0.0, %v7164
      %7166 = vmatmul.f32.gmra.mxu0 %v7103
      %v7167 = vpop.f32.mrf.mxu0
      %v7168 = vadd.f32 0.0, %v7167
      %7169 = vmatmul.f32.gmra.mxu0 %v7106
      %v7170 = vpop.f32.mrf.mxu0
      %v7171 = vadd.f32 0.0, %v7170
      %7172 = vmatmul.f32.gmra.mxu0 %v7109
      %v7173 = vpop.f32.mrf.mxu0
      %v7174 = vadd.f32 0.0, %v7173
      %7175 = vmatmul.f32.gmra.mxu0 %v7112
      %v7176 = vpop.f32.mrf.mxu0
      %v7177 = vadd.f32 0.0, %v7176
      %7178 = vmatmul.f32.gmra.mxu0 %v7115
      %v7179 = vpop.f32.mrf.mxu0
      %v7180 = vadd.f32 0.0, %v7179
      %7181 = vmatmul.f32.gmra.mxu0 %v7118
      %v7182 = vpop.f32.mrf.mxu0
      %v7183 = vadd.f32 0.0, %v7182
      %7184 = vmatmul.f32.gmra.mxu0 %v7121
      %v7185 = vpop.f32.mrf.mxu0
      %v7186 = vadd.f32 0.0, %v7185
      %7187 = vmatmul.f32.gmra.mxu0 %v7124
      %v7188 = vpop.f32.mrf.mxu0
      %v7189 = vadd.f32 0.0, %v7188
      %7190 = vmatmul.f32.gmra.mxu0 %v7127
      %v7191 = vpop.f32.mrf.mxu0
      %v7192 = vadd.f32 0.0, %v7191
      %7193 = vmatmul.f32.gmra.mxu0 %v7130
      %v7194 = vpop.f32.mrf.mxu0
      %v7195 = vadd.f32 0.0, %v7194
      %7196 = vmatmul.f32.gmra.mxu0 %v7133
      %v7197 = vpop.f32.mrf.mxu0
      %v7198 = vadd.f32 0.0, %v7197
      %7199 = vmatmul.f32.gmra.mxu0 %v7136
      %v7200 = vpop.f32.mrf.mxu0
      %v7201 = vadd.f32 0.0, %v7200
      %7202 = vmatmul.f32.gmra.mxu0 %v7139
      %v7203 = vpop.f32.mrf.mxu0
      %v7204 = vadd.f32 0.0, %v7203
      %7205 = vmatmul.f32.gmra.mxu0 %v7142
      %v7206 = vpop.f32.mrf.mxu0
      %v7207 = vadd.f32 0.0, %v7206
      %7208 = vmatmul.f32.gmra.mxu0 %v7145
      %v7209 = vpop.f32.mrf.mxu0
      %v7210 = vadd.f32 0.0, %v7209
      %7211 = vdwg.mxu0
      %v7212 = vadd.f32 %v6500, %v7165
      %v7213 = vadd.f32 %v6501, %v7168
      %v7214 = vadd.f32 %v6502, %v7171
      %v7215 = vadd.f32 %v6503, %v7174
      %v7216 = vadd.f32 %v6504, %v7177
      %v7217 = vadd.f32 %v6505, %v7180
      %v7218 = vadd.f32 %v6506, %v7183
      %v7219 = vadd.f32 %v6507, %v7186
      %v7220 = vadd.f32 %v6508, %v7189
      %v7221 = vadd.f32 %v6509, %v7192
      %v7222 = vadd.f32 %v6510, %v7195
      %v7223 = vadd.f32 %v6511, %v7198
      %v7224 = vadd.f32 %v6512, %v7201
      %v7225 = vadd.f32 %v6513, %v7204
      %v7226 = vadd.f32 %v6514, %v7207
      %v7227 = vadd.f32 %v6515, %v7210
      %v7228 = vld [vmem:[%s6 + $0x10] sm:$0x1]
      %v7229 = vperm.slane %v7228, 0
      %v7230 = vadd.f32 %v7212, %v7229
      %v7231 = vadd.f32 %v7213, %v7229
      %v7232 = vadd.f32 %v7214, %v7229
      %v7233 = vadd.f32 %v7215, %v7229
      %v7234 = vadd.f32 %v7216, %v7229
      %v7235 = vadd.f32 %v7217, %v7229
      %v7236 = vadd.f32 %v7218, %v7229
      %v7237 = vadd.f32 %v7219, %v7229
      %v7238 = vadd.f32 %v7220, %v7229
      %v7239 = vadd.f32 %v7221, %v7229
      %v7240 = vadd.f32 %v7222, %v7229
      %v7241 = vadd.f32 %v7223, %v7229
      %v7242 = vadd.f32 %v7224, %v7229
      %v7243 = vadd.f32 %v7225, %v7229
      %v7244 = vadd.f32 %v7226, %v7229
      %v7245 = vadd.f32 %v7227, %v7229
      %v7246 = vadd.f32 %v7230, %v4348
      %v7247 = vadd.f32 %v7231, %v4349
      %v7248 = vadd.f32 %v7232, %v4350
      %v7249 = vadd.f32 %v7233, %v4351
      %v7250 = vadd.f32 %v7234, %v4352
      %v7251 = vadd.f32 %v7235, %v4353
      %v7252 = vadd.f32 %v7236, %v4354
      %v7253 = vadd.f32 %v7237, %v4355
      %v7254 = vadd.f32 %v7238, %v4356
      %v7255 = vadd.f32 %v7239, %v4357
      %v7256 = vadd.f32 %v7240, %v4358
      %v7257 = vadd.f32 %v7241, %v4359
      %v7258 = vadd.f32 %v7242, %v4360
      %v7259 = vadd.f32 %v7243, %v4361
      %v7260 = vadd.f32 %v7244, %v4362
      %v7261 = vadd.f32 %v7245, %v4363
      %v7262 = vld [vmem:[%s6 + $0x11] sm:$0x1]
      %v7263 = vld [vmem:[%s6 + $0x12] sm:$0x1]
      %7264 = vmatpush.msra.mxu0 %v7261
      %7265 = vmatpush.msra.mxu0 %v7260
      %7266 = vmatpush.msra.mxu0 %v7259
      %7267 = vmatpush.msra.mxu0 %v7258
      %7268 = vmatpush.msra.mxu0 %v7257
      %7269 = vmatpush.msra.mxu0 %v7256
      %7270 = vmatpush.msra.mxu0 %v7255
      %7271 = vmatpush.msra.mxu0 %v7254
      %7272 = vmatpush.msra.mxu0 %v7253
      %7273 = vmatpush.msra.mxu0 %v7252
      %7274 = vmatpush.msra.mxu0 %v7251
      %7275 = vmatpush.msra.mxu0 %v7250
      %7276 = vmatpush.msra.mxu0 %v7249
      %7277 = vmatpush.msra.mxu0 %v7248
      %7278 = vmatpush.msra.mxu0 %v7247
      %7279 = vmatpush.msra.mxu0 %v7246
      %7280 = vmatmul.f32.gmra.mxu0 %v329
      %v7281 = vpop.f32.mrf.mxu0
      %v7282 = vadd.f32 0.0, %v7281
      %7283 = vdwg.mxu0
      %v7284 = vmul.f32 %v7246, %v7246
      %v7285 = vmul.f32 %v7247, %v7247
      %v7286 = vmul.f32 %v7248, %v7248
      %v7287 = vmul.f32 %v7249, %v7249
      %v7288 = vmul.f32 %v7250, %v7250
      %v7289 = vmul.f32 %v7251, %v7251
      %v7290 = vmul.f32 %v7252, %v7252
      %v7291 = vmul.f32 %v7253, %v7253
      %v7292 = vmul.f32 %v7254, %v7254
      %v7293 = vmul.f32 %v7255, %v7255
      %v7294 = vmul.f32 %v7256, %v7256
      %v7295 = vmul.f32 %v7257, %v7257
      %v7296 = vmul.f32 %v7258, %v7258
      %v7297 = vmul.f32 %v7259, %v7259
      %v7298 = vmul.f32 %v7260, %v7260
      %v7299 = vmul.f32 %v7261, %v7261
      %7300 = vmatpush.msra.mxu0 %v7299
      %7301 = vmatpush.msra.mxu0 %v7298
      %7302 = vmatpush.msra.mxu0 %v7297
      %7303 = vmatpush.msra.mxu0 %v7296
      %7304 = vmatpush.msra.mxu0 %v7295
      %7305 = vmatpush.msra.mxu0 %v7294
      %7306 = vmatpush.msra.mxu0 %v7293
      %7307 = vmatpush.msra.mxu0 %v7292
      %7308 = vmatpush.msra.mxu0 %v7291
      %7309 = vmatpush.msra.mxu0 %v7290
      %7310 = vmatpush.msra.mxu0 %v7289
      %7311 = vmatpush.msra.mxu0 %v7288
      %7312 = vmatpush.msra.mxu0 %v7287
      %7313 = vmatpush.msra.mxu0 %v7286
      %7314 = vmatpush.msra.mxu0 %v7285
      %7315 = vmatpush.msra.mxu0 %v7284
      %7316 = vmatmul.f32.gmra.mxu0 %v329
      %v7317 = vpop.f32.mrf.mxu0
      %v7318 = vadd.f32 0.0, %v7317
      %7319 = vdwg.mxu0
      %v7320 = vmul.f32 %v7282, %v7282
      %v7321 = vsub.f32 %v7318, %v7320
      %v7322 = vmax.f32 %v7321, 0.0
      %v7323 = vadd.f32 %v7322, 1e-05
      %v7324 = vrsqrt.pop %v7323
      %v7325 = vmul.f32 %v7324, %v7323
      %v7326 = vmul.f32 %v7325, %v7324
      %v7327 = vmul.f32 0.5, %v7326
      %v7328 = vsub.f32 1.5, %v7327
      %v7329 = vmul.f32 %v7324, %v7328
      %vm7330 = vweird.f32 %v7323
      %vm7331 = vweird.f32 %v7324
      %vm7332 = vmor %vm7330, %vm7331
      %v7333 = vsel %vm7332, %v7324, %v7329
      %7334 = vmatpush.msra.mxu0 0.0
      %7335 = vmatpush.msra.mxu0 0.0
      %7336 = vmatpush.msra.mxu0 0.0
      %7337 = vmatpush.msra.mxu0 0.0
      %7338 = vmatpush.msra.mxu0 0.0
      %7339 = vmatpush.msra.mxu0 0.0
      %7340 = vmatpush.msra.mxu0 0.0
      %7341 = vmatpush.msra.mxu0 0.0
      %7342 = vmatpush.msra.mxu0 0.0
      %7343 = vmatpush.msra.mxu0 0.0
      %7344 = vmatpush.msra.mxu0 0.0
      %7345 = vmatpush.msra.mxu0 0.0
      %7346 = vmatpush.msra.mxu0 0.0
      %7347 = vmatpush.msra.mxu0 0.0
      %7348 = vmatpush.msra.mxu0 0.0
      %7349 = vmatpush.msra.mxu0 %v7282
      %7350 = vmatmul.f32.gmra.mxu0 %v3578
      %v7351 = vpop.f32.mrf.mxu0
      %v7352 = vadd.f32 0.0, %v7351
      %7353 = vmatmul.f32.gmra.mxu0 %v3581
      %v7354 = vpop.f32.mrf.mxu0
      %v7355 = vadd.f32 0.0, %v7354
      %7356 = vmatmul.f32.gmra.mxu0 %v3584
      %v7357 = vpop.f32.mrf.mxu0
      %v7358 = vadd.f32 0.0, %v7357
      %7359 = vmatmul.f32.gmra.mxu0 %v3587
      %v7360 = vpop.f32.mrf.mxu0
      %v7361 = vadd.f32 0.0, %v7360
      %7362 = vmatmul.f32.gmra.mxu0 %v3590
      %v7363 = vpop.f32.mrf.mxu0
      %v7364 = vadd.f32 0.0, %v7363
      %7365 = vmatmul.f32.gmra.mxu0 %v3593
      %v7366 = vpop.f32.mrf.mxu0
      %v7367 = vadd.f32 0.0, %v7366
      %7368 = vmatmul.f32.gmra.mxu0 %v3596
      %v7369 = vpop.f32.mrf.mxu0
      %v7370 = vadd.f32 0.0, %v7369
      %7371 = vmatmul.f32.gmra.mxu0 %v3599
      %v7372 = vpop.f32.mrf.mxu0
      %v7373 = vadd.f32 0.0, %v7372
      %7374 = vmatmul.f32.gmra.mxu0 %v3602
      %v7375 = vpop.f32.mrf.mxu0
      %v7376 = vadd.f32 0.0, %v7375
      %7377 = vmatmul.f32.gmra.mxu0 %v3605
      %v7378 = vpop.f32.mrf.mxu0
      %v7379 = vadd.f32 0.0, %v7378
      %7380 = vmatmul.f32.gmra.mxu0 %v3608
      %v7381 = vpop.f32.mrf.mxu0
      %v7382 = vadd.f32 0.0, %v7381
      %7383 = vmatmul.f32.gmra.mxu0 %v3611
      %v7384 = vpop.f32.mrf.mxu0
      %v7385 = vadd.f32 0.0, %v7384
      %7386 = vmatmul.f32.gmra.mxu0 %v3614
      %v7387 = vpop.f32.mrf.mxu0
      %v7388 = vadd.f32 0.0, %v7387
      %7389 = vmatmul.f32.gmra.mxu0 %v3617
      %v7390 = vpop.f32.mrf.mxu0
      %v7391 = vadd.f32 0.0, %v7390
      %7392 = vmatmul.f32.gmra.mxu0 %v3620
      %v7393 = vpop.f32.mrf.mxu0
      %v7394 = vadd.f32 0.0, %v7393
      %7395 = vmatmul.f32.gmra.mxu0 %v3623
      %v7396 = vpop.f32.mrf.mxu0
      %v7397 = vadd.f32 0.0, %v7396
      %7398 = vdwg.mxu0
      %7399 = vmatpush.msra.mxu0 0.0
      %7400 = vmatpush.msra.mxu0 0.0
      %7401 = vmatpush.msra.mxu0 0.0
      %7402 = vmatpush.msra.mxu0 0.0
      %7403 = vmatpush.msra.mxu0 0.0
      %7404 = vmatpush.msra.mxu0 0.0
      %7405 = vmatpush.msra.mxu0 0.0
      %7406 = vmatpush.msra.mxu0 0.0
      %7407 = vmatpush.msra.mxu0 0.0
      %7408 = vmatpush.msra.mxu0 0.0
      %7409 = vmatpush.msra.mxu0 0.0
      %7410 = vmatpush.msra.mxu0 0.0
      %7411 = vmatpush.msra.mxu0 0.0
      %7412 = vmatpush.msra.mxu0 0.0
      %7413 = vmatpush.msra.mxu0 0.0
      %7414 = vmatpush.msra.mxu0 %v7333
      %7415 = vmatmul.f32.gmra.mxu0 %v3578
      %v7416 = vpop.f32.mrf.mxu0
      %v7417 = vadd.f32 0.0, %v7416
      %7418 = vmatmul.f32.gmra.mxu0 %v3581
      %v7419 = vpop.f32.mrf.mxu0
      %v7420 = vadd.f32 0.0, %v7419
      %7421 = vmatmul.f32.gmra.mxu0 %v3584
      %v7422 = vpop.f32.mrf.mxu0
      %v7423 = vadd.f32 0.0, %v7422
      %7424 = vmatmul.f32.gmra.mxu0 %v3587
      %v7425 = vpop.f32.mrf.mxu0
      %v7426 = vadd.f32 0.0, %v7425
      %7427 = vmatmul.f32.gmra.mxu0 %v3590
      %v7428 = vpop.f32.mrf.mxu0
      %v7429 = vadd.f32 0.0, %v7428
      %7430 = vmatmul.f32.gmra.mxu0 %v3593
      %v7431 = vpop.f32.mrf.mxu0
      %v7432 = vadd.f32 0.0, %v7431
      %7433 = vmatmul.f32.gmra.mxu0 %v3596
      %v7434 = vpop.f32.mrf.mxu0
      %v7435 = vadd.f32 0.0, %v7434
      %7436 = vmatmul.f32.gmra.mxu0 %v3599
      %v7437 = vpop.f32.mrf.mxu0
      %v7438 = vadd.f32 0.0, %v7437
      %7439 = vmatmul.f32.gmra.mxu0 %v3602
      %v7440 = vpop.f32.mrf.mxu0
      %v7441 = vadd.f32 0.0, %v7440
      %7442 = vmatmul.f32.gmra.mxu0 %v3605
      %v7443 = vpop.f32.mrf.mxu0
      %v7444 = vadd.f32 0.0, %v7443
      %7445 = vmatmul.f32.gmra.mxu0 %v3608
      %v7446 = vpop.f32.mrf.mxu0
      %v7447 = vadd.f32 0.0, %v7446
      %7448 = vmatmul.f32.gmra.mxu0 %v3611
      %v7449 = vpop.f32.mrf.mxu0
      %v7450 = vadd.f32 0.0, %v7449
      %7451 = vmatmul.f32.gmra.mxu0 %v3614
      %v7452 = vpop.f32.mrf.mxu0
      %v7453 = vadd.f32 0.0, %v7452
      %7454 = vmatmul.f32.gmra.mxu0 %v3617
      %v7455 = vpop.f32.mrf.mxu0
      %v7456 = vadd.f32 0.0, %v7455
      %7457 = vmatmul.f32.gmra.mxu0 %v3620
      %v7458 = vpop.f32.mrf.mxu0
      %v7459 = vadd.f32 0.0, %v7458
      %7460 = vmatmul.f32.gmra.mxu0 %v3623
      %v7461 = vpop.f32.mrf.mxu0
      %v7462 = vadd.f32 0.0, %v7461
      %7463 = vdwg.mxu0
      %v7464 = vsub.f32 %v7246, %v7352
      %v7465 = vsub.f32 %v7247, %v7355
      %v7466 = vsub.f32 %v7248, %v7358
      %v7467 = vsub.f32 %v7249, %v7361
      %v7468 = vsub.f32 %v7250, %v7364
      %v7469 = vsub.f32 %v7251, %v7367
      %v7470 = vsub.f32 %v7252, %v7370
      %v7471 = vsub.f32 %v7253, %v7373
      %v7472 = vsub.f32 %v7254, %v7376
      %v7473 = vsub.f32 %v7255, %v7379
      %v7474 = vsub.f32 %v7256, %v7382
      %v7475 = vsub.f32 %v7257, %v7385
      %v7476 = vsub.f32 %v7258, %v7388
      %v7477 = vsub.f32 %v7259, %v7391
      %v7478 = vsub.f32 %v7260, %v7394
      %v7479 = vsub.f32 %v7261, %v7397
      %v7480 = vmul.f32 %v7464, %v7417
      %v7481 = vmul.f32 %v7465, %v7420
      %v7482 = vmul.f32 %v7466, %v7423
      %v7483 = vmul.f32 %v7467, %v7426
      %v7484 = vmul.f32 %v7468, %v7429
      %v7485 = vmul.f32 %v7469, %v7432
      %v7486 = vmul.f32 %v7470, %v7435
      %v7487 = vmul.f32 %v7471, %v7438
      %v7488 = vmul.f32 %v7472, %v7441
      %v7489 = vmul.f32 %v7473, %v7444
      %v7490 = vmul.f32 %v7474, %v7447
      %v7491 = vmul.f32 %v7475, %v7450
      %v7492 = vmul.f32 %v7476, %v7453
      %v7493 = vmul.f32 %v7477, %v7456
      %v7494 = vmul.f32 %v7478, %v7459
      %v7495 = vmul.f32 %v7479, %v7462
      %v7496 = vperm.slane %v7262, 0
      %v7497 = vmul.f32 %v7480, %v7496
      %v7498 = vmul.f32 %v7481, %v7496
      %v7499 = vmul.f32 %v7482, %v7496
      %v7500 = vmul.f32 %v7483, %v7496
      %v7501 = vmul.f32 %v7484, %v7496
      %v7502 = vmul.f32 %v7485, %v7496
      %v7503 = vmul.f32 %v7486, %v7496
      %v7504 = vmul.f32 %v7487, %v7496
      %v7505 = vmul.f32 %v7488, %v7496
      %v7506 = vmul.f32 %v7489, %v7496
      %v7507 = vmul.f32 %v7490, %v7496
      %v7508 = vmul.f32 %v7491, %v7496
      %v7509 = vmul.f32 %v7492, %v7496
      %v7510 = vmul.f32 %v7493, %v7496
      %v7511 = vmul.f32 %v7494, %v7496
      %v7512 = vmul.f32 %v7495, %v7496
      %v7513 = vperm.slane %v7263, 0
      %v7514 = vadd.f32 %v7497, %v7513
      %v7515 = vadd.f32 %v7498, %v7513
      %v7516 = vadd.f32 %v7499, %v7513
      %v7517 = vadd.f32 %v7500, %v7513
      %v7518 = vadd.f32 %v7501, %v7513
      %v7519 = vadd.f32 %v7502, %v7513
      %v7520 = vadd.f32 %v7503, %v7513
      %v7521 = vadd.f32 %v7504, %v7513
      %v7522 = vadd.f32 %v7505, %v7513
      %v7523 = vadd.f32 %v7506, %v7513
      %v7524 = vadd.f32 %v7507, %v7513
      %v7525 = vadd.f32 %v7508, %v7513
      %v7526 = vadd.f32 %v7509, %v7513
      %v7527 = vadd.f32 %v7510, %v7513
      %v7528 = vadd.f32 %v7511, %v7513
      %v7529 = vadd.f32 %v7512, %v7513
      %v7530 = vld [vmem:[%s4 + $0x20] sm:$0xff]
      %v7531 = vld [vmem:[%s4 + $0x28] sm:$0xff]
      %v7532 = vld [vmem:[%s4 + $0x30] sm:$0xff]
      %v7533 = vld [vmem:[%s4 + $0x38] sm:$0xff]
      %v7534 = vld [vmem:[%s3 + $0x448] sm:$0xff]
      %v7535 = vld [vmem:[%s3 + $0x450] sm:$0xff]
      %v7536 = vld [vmem:[%s3 + $0x458] sm:$0xff]
      %v7537 = vld [vmem:[%s3 + $0x460] sm:$0xff]
      %v7538 = vld [vmem:[%s3 + $0x468] sm:$0xff]
      %v7539 = vld [vmem:[%s3 + $0x470] sm:$0xff]
      %v7540 = vld [vmem:[%s3 + $0x478] sm:$0xff]
      %v7541 = vld [vmem:[%s3 + $0x480] sm:$0xff]
      %v7542 = vld [vmem:[%s6 + $0x13] sm:$0x1]
      %v7543 = vperm.slane %v7542, 0
      %v7545 = vsel %vm624, %v7514, 0
      %v7548 = vsel %vm624, %v7515, 0
      %v7551 = vsel %vm624, %v7516, 0
      %v7554 = vsel %vm624, %v7517, 0
      %v7557 = vsel %vm624, %v7518, 0
      %v7560 = vsel %vm624, %v7519, 0
      %v7563 = vsel %vm624, %v7520, 0
      %v7566 = vsel %vm624, %v7521, 0
      %v7569 = vsel %vm624, %v7522, 0
      %v7572 = vsel %vm624, %v7523, 0
      %v7575 = vsel %vm624, %v7524, 0
      %v7578 = vsel %vm624, %v7525, 0
      %v7581 = vsel %vm624, %v7526, 0
      %v7584 = vsel %vm624, %v7527, 0
      %v7587 = vsel %vm624, %v7528, 0
      %v7590 = vsel %vm624, %v7529, 0
      %7592 = vmatpush.msra.mxu0 0.0
      %7593 = vmatpush.msra.mxu0 0.0
      %7594 = vmatpush.msra.mxu0 0.0
      %7595 = vmatpush.msra.mxu0 0.0
      %7596 = vmatpush.msra.mxu0 0.0
      %7597 = vmatpush.msra.mxu0 0.0
      %7598 = vmatpush.msra.mxu0 0.0
      %7599 = vmatpush.msra.mxu0 0.0
      %7600 = vmatpush.msra.mxu0 0.0
      %7601 = vmatpush.msra.mxu0 0.0
      %7602 = vmatpush.msra.mxu0 0.0
      %7603 = vmatpush.msra.mxu0 0.0
      %7604 = vmatpush.msra.mxu0 %v7533
      %7605 = vmatpush.msra.mxu0 %v7532
      %7606 = vmatpush.msra.mxu0 %v7531
      %7607 = vmatpush.msra.mxu0 %v7530
      %7608 = vmatmul.f32.gmra.mxu0 %v7545
      %v7609 = vpop.f32.mrf.mxu0
      %v7610 = vadd.f32 %v7543, %v7609
      %7611 = vmatmul.f32.gmra.mxu0 %v7548
      %v7612 = vpop.f32.mrf.mxu0
      %v7613 = vadd.f32 %v7543, %v7612
      %7614 = vmatmul.f32.gmra.mxu0 %v7551
      %v7615 = vpop.f32.mrf.mxu0
      %v7616 = vadd.f32 %v7543, %v7615
      %7617 = vmatmul.f32.gmra.mxu0 %v7554
      %v7618 = vpop.f32.mrf.mxu0
      %v7619 = vadd.f32 %v7543, %v7618
      %7620 = vmatmul.f32.gmra.mxu0 %v7557
      %v7621 = vpop.f32.mrf.mxu0
      %v7622 = vadd.f32 %v7543, %v7621
      %7623 = vmatmul.f32.gmra.mxu0 %v7560
      %v7624 = vpop.f32.mrf.mxu0
      %v7625 = vadd.f32 %v7543, %v7624
      %7626 = vmatmul.f32.gmra.mxu0 %v7563
      %v7627 = vpop.f32.mrf.mxu0
      %v7628 = vadd.f32 %v7543, %v7627
      %7629 = vmatmul.f32.gmra.mxu0 %v7566
      %v7630 = vpop.f32.mrf.mxu0
      %v7631 = vadd.f32 %v7543, %v7630
      %7632 = vmatmul.f32.gmra.mxu0 %v7569
      %v7633 = vpop.f32.mrf.mxu0
      %v7634 = vadd.f32 %v7543, %v7633
      %7635 = vmatmul.f32.gmra.mxu0 %v7572
      %v7636 = vpop.f32.mrf.mxu0
      %v7637 = vadd.f32 %v7543, %v7636
      %7638 = vmatmul.f32.gmra.mxu0 %v7575
      %v7639 = vpop.f32.mrf.mxu0
      %v7640 = vadd.f32 %v7543, %v7639
      %7641 = vmatmul.f32.gmra.mxu0 %v7578
      %v7642 = vpop.f32.mrf.mxu0
      %v7643 = vadd.f32 %v7543, %v7642
      %7644 = vmatmul.f32.gmra.mxu0 %v7581
      %v7645 = vpop.f32.mrf.mxu0
      %v7646 = vadd.f32 %v7543, %v7645
      %7647 = vmatmul.f32.gmra.mxu0 %v7584
      %v7648 = vpop.f32.mrf.mxu0
      %v7649 = vadd.f32 %v7543, %v7648
      %7650 = vmatmul.f32.gmra.mxu0 %v7587
      %v7651 = vpop.f32.mrf.mxu0
      %v7652 = vadd.f32 %v7543, %v7651
      %7653 = vmatmul.f32.gmra.mxu0 %v7590
      %v7654 = vpop.f32.mrf.mxu0
      %v7655 = vadd.f32 %v7543, %v7654
      %7656 = vdwg.mxu0
      %v7657 = vmax.f32 %v7610, 0.0
      %v7658 = vmax.f32 %v7613, 0.0
      %v7659 = vmax.f32 %v7616, 0.0
      %v7660 = vmax.f32 %v7619, 0.0
      %v7661 = vmax.f32 %v7622, 0.0
      %v7662 = vmax.f32 %v7625, 0.0
      %v7663 = vmax.f32 %v7628, 0.0
      %v7664 = vmax.f32 %v7631, 0.0
      %v7665 = vmax.f32 %v7634, 0.0
      %v7666 = vmax.f32 %v7637, 0.0
      %v7667 = vmax.f32 %v7640, 0.0
      %v7668 = vmax.f32 %v7643, 0.0
      %v7669 = vmax.f32 %v7646, 0.0
      %v7670 = vmax.f32 %v7649, 0.0
      %v7671 = vmax.f32 %v7652, 0.0
      %v7672 = vmax.f32 %v7655, 0.0
      %v7673 = vld [vmem:[%s6 + $0x14] sm:$0x1]
      %v7674 = vperm.slane %v7673, 0
      %v7676 = vsel %vm3966, %v7657, 0
      %v7679 = vsel %vm3966, %v7658, 0
      %v7682 = vsel %vm3966, %v7659, 0
      %v7685 = vsel %vm3966, %v7660, 0
      %v7688 = vsel %vm3966, %v7661, 0
      %v7691 = vsel %vm3966, %v7662, 0
      %v7694 = vsel %vm3966, %v7663, 0
      %v7697 = vsel %vm3966, %v7664, 0
      %v7700 = vsel %vm3966, %v7665, 0
      %v7703 = vsel %vm3966, %v7666, 0
      %v7706 = vsel %vm3966, %v7667, 0
      %v7709 = vsel %vm3966, %v7668, 0
      %v7712 = vsel %vm3966, %v7669, 0
      %v7715 = vsel %vm3966, %v7670, 0
      %v7718 = vsel %vm3966, %v7671, 0
      %v7721 = vsel %vm3966, %v7672, 0
      %7723 = vmatpush.msra.mxu0 0.0
      %7724 = vmatpush.msra.mxu0 0.0
      %7725 = vmatpush.msra.mxu0 0.0
      %7726 = vmatpush.msra.mxu0 0.0
      %7727 = vmatpush.msra.mxu0 0.0
      %7728 = vmatpush.msra.mxu0 0.0
      %7729 = vmatpush.msra.mxu0 0.0
      %7730 = vmatpush.msra.mxu0 0.0
      %7731 = vmatpush.msra.mxu0 %v7541
      %7732 = vmatpush.msra.mxu0 %v7540
      %7733 = vmatpush.msra.mxu0 %v7539
      %7734 = vmatpush.msra.mxu0 %v7538
      %7735 = vmatpush.msra.mxu0 %v7537
      %7736 = vmatpush.msra.mxu0 %v7536
      %7737 = vmatpush.msra.mxu0 %v7535
      %7738 = vmatpush.msra.mxu0 %v7534
      %7739 = vmatmul.f32.gmra.mxu0 %v7676
      %v7740 = vpop.f32.mrf.mxu0
      %v7741 = vadd.f32 %v7674, %v7740
      %7742 = vmatmul.f32.gmra.mxu0 %v7679
      %v7743 = vpop.f32.mrf.mxu0
      %v7744 = vadd.f32 %v7674, %v7743
      %7745 = vmatmul.f32.gmra.mxu0 %v7682
      %v7746 = vpop.f32.mrf.mxu0
      %v7747 = vadd.f32 %v7674, %v7746
      %7748 = vmatmul.f32.gmra.mxu0 %v7685
      %v7749 = vpop.f32.mrf.mxu0
      %v7750 = vadd.f32 %v7674, %v7749
      %7751 = vmatmul.f32.gmra.mxu0 %v7688
      %v7752 = vpop.f32.mrf.mxu0
      %v7753 = vadd.f32 %v7674, %v7752
      %7754 = vmatmul.f32.gmra.mxu0 %v7691
      %v7755 = vpop.f32.mrf.mxu0
      %v7756 = vadd.f32 %v7674, %v7755
      %7757 = vmatmul.f32.gmra.mxu0 %v7694
      %v7758 = vpop.f32.mrf.mxu0
      %v7759 = vadd.f32 %v7674, %v7758
      %7760 = vmatmul.f32.gmra.mxu0 %v7697
      %v7761 = vpop.f32.mrf.mxu0
      %v7762 = vadd.f32 %v7674, %v7761
      %7763 = vmatmul.f32.gmra.mxu0 %v7700
      %v7764 = vpop.f32.mrf.mxu0
      %v7765 = vadd.f32 %v7674, %v7764
      %7766 = vmatmul.f32.gmra.mxu0 %v7703
      %v7767 = vpop.f32.mrf.mxu0
      %v7768 = vadd.f32 %v7674, %v7767
      %7769 = vmatmul.f32.gmra.mxu0 %v7706
      %v7770 = vpop.f32.mrf.mxu0
      %v7771 = vadd.f32 %v7674, %v7770
      %7772 = vmatmul.f32.gmra.mxu0 %v7709
      %v7773 = vpop.f32.mrf.mxu0
      %v7774 = vadd.f32 %v7674, %v7773
      %7775 = vmatmul.f32.gmra.mxu0 %v7712
      %v7776 = vpop.f32.mrf.mxu0
      %v7777 = vadd.f32 %v7674, %v7776
      %7778 = vmatmul.f32.gmra.mxu0 %v7715
      %v7779 = vpop.f32.mrf.mxu0
      %v7780 = vadd.f32 %v7674, %v7779
      %7781 = vmatmul.f32.gmra.mxu0 %v7718
      %v7782 = vpop.f32.mrf.mxu0
      %v7783 = vadd.f32 %v7674, %v7782
      %7784 = vmatmul.f32.gmra.mxu0 %v7721
      %v7785 = vpop.f32.mrf.mxu0
      %v7786 = vadd.f32 %v7674, %v7785
      %7787 = vdwg.mxu0
      %v7788 = vadd.f32 %v7514, %v7741
      %v7789 = vadd.f32 %v7515, %v7744
      %v7790 = vadd.f32 %v7516, %v7747
      %v7791 = vadd.f32 %v7517, %v7750
      %v7792 = vadd.f32 %v7518, %v7753
      %v7793 = vadd.f32 %v7519, %v7756
      %v7794 = vadd.f32 %v7520, %v7759
      %v7795 = vadd.f32 %v7521, %v7762
      %v7796 = vadd.f32 %v7522, %v7765
      %v7797 = vadd.f32 %v7523, %v7768
      %v7798 = vadd.f32 %v7524, %v7771
      %v7799 = vadd.f32 %v7525, %v7774
      %v7800 = vadd.f32 %v7526, %v7777
      %v7801 = vadd.f32 %v7527, %v7780
      %v7802 = vadd.f32 %v7528, %v7783
      %v7803 = vadd.f32 %v7529, %v7786
      %v7804 = vld [vmem:[%s6 + $0x15] sm:$0x1]
      %v7805 = vld [vmem:[%s6 + $0x16] sm:$0x1]
      %7806 = vmatpush.msra.mxu0 %v7803
      %7807 = vmatpush.msra.mxu0 %v7802
      %7808 = vmatpush.msra.mxu0 %v7801
      %7809 = vmatpush.msra.mxu0 %v7800
      %7810 = vmatpush.msra.mxu0 %v7799
      %7811 = vmatpush.msra.mxu0 %v7798
      %7812 = vmatpush.msra.mxu0 %v7797
      %7813 = vmatpush.msra.mxu0 %v7796
      %7814 = vmatpush.msra.mxu0 %v7795
      %7815 = vmatpush.msra.mxu0 %v7794
      %7816 = vmatpush.msra.mxu0 %v7793
      %7817 = vmatpush.msra.mxu0 %v7792
      %7818 = vmatpush.msra.mxu0 %v7791
      %7819 = vmatpush.msra.mxu0 %v7790
      %7820 = vmatpush.msra.mxu0 %v7789
      %7821 = vmatpush.msra.mxu0 %v7788
      %7822 = vmatmul.f32.gmra.mxu0 %v329
      %v7823 = vpop.f32.mrf.mxu0
      %v7824 = vadd.f32 0.0, %v7823
      %7825 = vdwg.mxu0
      %v7826 = vmul.f32 %v7788, %v7788
      %v7827 = vmul.f32 %v7789, %v7789
      %v7828 = vmul.f32 %v7790, %v7790
      %v7829 = vmul.f32 %v7791, %v7791
      %v7830 = vmul.f32 %v7792, %v7792
      %v7831 = vmul.f32 %v7793, %v7793
      %v7832 = vmul.f32 %v7794, %v7794
      %v7833 = vmul.f32 %v7795, %v7795
      %v7834 = vmul.f32 %v7796, %v7796
      %v7835 = vmul.f32 %v7797, %v7797
      %v7836 = vmul.f32 %v7798, %v7798
      %v7837 = vmul.f32 %v7799, %v7799
      %v7838 = vmul.f32 %v7800, %v7800
      %v7839 = vmul.f32 %v7801, %v7801
      %v7840 = vmul.f32 %v7802, %v7802
      %v7841 = vmul.f32 %v7803, %v7803
      %7842 = vmatpush.msra.mxu0 %v7841
      %7843 = vmatpush.msra.mxu0 %v7840
      %7844 = vmatpush.msra.mxu0 %v7839
      %7845 = vmatpush.msra.mxu0 %v7838
      %7846 = vmatpush.msra.mxu0 %v7837
      %7847 = vmatpush.msra.mxu0 %v7836
      %7848 = vmatpush.msra.mxu0 %v7835
      %7849 = vmatpush.msra.mxu0 %v7834
      %7850 = vmatpush.msra.mxu0 %v7833
      %7851 = vmatpush.msra.mxu0 %v7832
      %7852 = vmatpush.msra.mxu0 %v7831
      %7853 = vmatpush.msra.mxu0 %v7830
      %7854 = vmatpush.msra.mxu0 %v7829
      %7855 = vmatpush.msra.mxu0 %v7828
      %7856 = vmatpush.msra.mxu0 %v7827
      %7857 = vmatpush.msra.mxu0 %v7826
      %7858 = vmatmul.f32.gmra.mxu0 %v329
      %v7859 = vpop.f32.mrf.mxu0
      %v7860 = vadd.f32 0.0, %v7859
      %7861 = vdwg.mxu0
      %v7862 = vmul.f32 %v7824, %v7824
      %v7863 = vsub.f32 %v7860, %v7862
      %v7864 = vmax.f32 %v7863, 0.0
      %v7865 = vadd.f32 %v7864, 1e-05
      %v7866 = vrsqrt.pop %v7865
      %v7867 = vmul.f32 %v7866, %v7865
      %v7868 = vmul.f32 %v7867, %v7866
      %v7869 = vmul.f32 0.5, %v7868
      %v7870 = vsub.f32 1.5, %v7869
      %v7871 = vmul.f32 %v7866, %v7870
      %vm7872 = vweird.f32 %v7865
      %vm7873 = vweird.f32 %v7866
      %vm7874 = vmor %vm7872, %vm7873
      %v7875 = vsel %vm7874, %v7866, %v7871
      %7876 = vmatpush.msra.mxu0 0.0
      %7877 = vmatpush.msra.mxu0 0.0
      %7878 = vmatpush.msra.mxu0 0.0
      %7879 = vmatpush.msra.mxu0 0.0
      %7880 = vmatpush.msra.mxu0 0.0
      %7881 = vmatpush.msra.mxu0 0.0
      %7882 = vmatpush.msra.mxu0 0.0
      %7883 = vmatpush.msra.mxu0 0.0
      %7884 = vmatpush.msra.mxu0 0.0
      %7885 = vmatpush.msra.mxu0 0.0
      %7886 = vmatpush.msra.mxu0 0.0
      %7887 = vmatpush.msra.mxu0 0.0
      %7888 = vmatpush.msra.mxu0 0.0
      %7889 = vmatpush.msra.mxu0 0.0
      %7890 = vmatpush.msra.mxu0 0.0
      %7891 = vmatpush.msra.mxu0 %v7824
      %7892 = vmatmul.f32.gmra.mxu0 %v3578
      %v7893 = vpop.f32.mrf.mxu0
      %v7894 = vadd.f32 0.0, %v7893
      %7895 = vmatmul.f32.gmra.mxu0 %v3581
      %v7896 = vpop.f32.mrf.mxu0
      %v7897 = vadd.f32 0.0, %v7896
      %7898 = vmatmul.f32.gmra.mxu0 %v3584
      %v7899 = vpop.f32.mrf.mxu0
      %v7900 = vadd.f32 0.0, %v7899
      %7901 = vmatmul.f32.gmra.mxu0 %v3587
      %v7902 = vpop.f32.mrf.mxu0
      %v7903 = vadd.f32 0.0, %v7902
      %7904 = vmatmul.f32.gmra.mxu0 %v3590
      %v7905 = vpop.f32.mrf.mxu0
      %v7906 = vadd.f32 0.0, %v7905
      %7907 = vmatmul.f32.gmra.mxu0 %v3593
      %v7908 = vpop.f32.mrf.mxu0
      %v7909 = vadd.f32 0.0, %v7908
      %7910 = vmatmul.f32.gmra.mxu0 %v3596
      %v7911 = vpop.f32.mrf.mxu0
      %v7912 = vadd.f32 0.0, %v7911
      %7913 = vmatmul.f32.gmra.mxu0 %v3599
      %v7914 = vpop.f32.mrf.mxu0
      %v7915 = vadd.f32 0.0, %v7914
      %7916 = vmatmul.f32.gmra.mxu0 %v3602
      %v7917 = vpop.f32.mrf.mxu0
      %v7918 = vadd.f32 0.0, %v7917
      %7919 = vmatmul.f32.gmra.mxu0 %v3605
      %v7920 = vpop.f32.mrf.mxu0
      %v7921 = vadd.f32 0.0, %v7920
      %7922 = vmatmul.f32.gmra.mxu0 %v3608
      %v7923 = vpop.f32.mrf.mxu0
      %v7924 = vadd.f32 0.0, %v7923
      %7925 = vmatmul.f32.gmra.mxu0 %v3611
      %v7926 = vpop.f32.mrf.mxu0
      %v7927 = vadd.f32 0.0, %v7926
      %7928 = vmatmul.f32.gmra.mxu0 %v3614
      %v7929 = vpop.f32.mrf.mxu0
      %v7930 = vadd.f32 0.0, %v7929
      %7931 = vmatmul.f32.gmra.mxu0 %v3617
      %v7932 = vpop.f32.mrf.mxu0
      %v7933 = vadd.f32 0.0, %v7932
      %7934 = vmatmul.f32.gmra.mxu0 %v3620
      %v7935 = vpop.f32.mrf.mxu0
      %v7936 = vadd.f32 0.0, %v7935
      %7937 = vmatmul.f32.gmra.mxu0 %v3623
      %v7938 = vpop.f32.mrf.mxu0
      %v7939 = vadd.f32 0.0, %v7938
      %7940 = vdwg.mxu0
      %7941 = vmatpush.msra.mxu0 0.0
      %7942 = vmatpush.msra.mxu0 0.0
      %7943 = vmatpush.msra.mxu0 0.0
      %7944 = vmatpush.msra.mxu0 0.0
      %7945 = vmatpush.msra.mxu0 0.0
      %7946 = vmatpush.msra.mxu0 0.0
      %7947 = vmatpush.msra.mxu0 0.0
      %7948 = vmatpush.msra.mxu0 0.0
      %7949 = vmatpush.msra.mxu0 0.0
      %7950 = vmatpush.msra.mxu0 0.0
      %7951 = vmatpush.msra.mxu0 0.0
      %7952 = vmatpush.msra.mxu0 0.0
      %7953 = vmatpush.msra.mxu0 0.0
      %7954 = vmatpush.msra.mxu0 0.0
      %7955 = vmatpush.msra.mxu0 0.0
      %7956 = vmatpush.msra.mxu0 %v7875
      %7957 = vmatmul.f32.gmra.mxu0 %v3578
      %v7958 = vpop.f32.mrf.mxu0
      %v7959 = vadd.f32 0.0, %v7958
      %7960 = vmatmul.f32.gmra.mxu0 %v3581
      %v7961 = vpop.f32.mrf.mxu0
      %v7962 = vadd.f32 0.0, %v7961
      %7963 = vmatmul.f32.gmra.mxu0 %v3584
      %v7964 = vpop.f32.mrf.mxu0
      %v7965 = vadd.f32 0.0, %v7964
      %7966 = vmatmul.f32.gmra.mxu0 %v3587
      %v7967 = vpop.f32.mrf.mxu0
      %v7968 = vadd.f32 0.0, %v7967
      %7969 = vmatmul.f32.gmra.mxu0 %v3590
      %v7970 = vpop.f32.mrf.mxu0
      %v7971 = vadd.f32 0.0, %v7970
      %7972 = vmatmul.f32.gmra.mxu0 %v3593
      %v7973 = vpop.f32.mrf.mxu0
      %v7974 = vadd.f32 0.0, %v7973
      %7975 = vmatmul.f32.gmra.mxu0 %v3596
      %v7976 = vpop.f32.mrf.mxu0
      %v7977 = vadd.f32 0.0, %v7976
      %7978 = vmatmul.f32.gmra.mxu0 %v3599
      %v7979 = vpop.f32.mrf.mxu0
      %v7980 = vadd.f32 0.0, %v7979
      %7981 = vmatmul.f32.gmra.mxu0 %v3602
      %v7982 = vpop.f32.mrf.mxu0
      %v7983 = vadd.f32 0.0, %v7982
      %7984 = vmatmul.f32.gmra.mxu0 %v3605
      %v7985 = vpop.f32.mrf.mxu0
      %v7986 = vadd.f32 0.0, %v7985
      %7987 = vmatmul.f32.gmra.mxu0 %v3608
      %v7988 = vpop.f32.mrf.mxu0
      %v7989 = vadd.f32 0.0, %v7988
      %7990 = vmatmul.f32.gmra.mxu0 %v3611
      %v7991 = vpop.f32.mrf.mxu0
      %v7992 = vadd.f32 0.0, %v7991
      %7993 = vmatmul.f32.gmra.mxu0 %v3614
      %v7994 = vpop.f32.mrf.mxu0
      %v7995 = vadd.f32 0.0, %v7994
      %7996 = vmatmul.f32.gmra.mxu0 %v3617
      %v7997 = vpop.f32.mrf.mxu0
      %v7998 = vadd.f32 0.0, %v7997
      %7999 = vmatmul.f32.gmra.mxu0 %v3620
      %v8000 = vpop.f32.mrf.mxu0
      %v8001 = vadd.f32 0.0, %v8000
      %8002 = vmatmul.f32.gmra.mxu0 %v3623
      %v8003 = vpop.f32.mrf.mxu0
      %v8004 = vadd.f32 0.0, %v8003
      %8005 = vdwg.mxu0
      %v8006 = vsub.f32 %v7788, %v7894
      %v8007 = vsub.f32 %v7789, %v7897
      %v8008 = vsub.f32 %v7790, %v7900
      %v8009 = vsub.f32 %v7791, %v7903
      %v8010 = vsub.f32 %v7792, %v7906
      %v8011 = vsub.f32 %v7793, %v7909
      %v8012 = vsub.f32 %v7794, %v7912
      %v8013 = vsub.f32 %v7795, %v7915
      %v8014 = vsub.f32 %v7796, %v7918
      %v8015 = vsub.f32 %v7797, %v7921
      %v8016 = vsub.f32 %v7798, %v7924
      %v8017 = vsub.f32 %v7799, %v7927
      %v8018 = vsub.f32 %v7800, %v7930
      %v8019 = vsub.f32 %v7801, %v7933
      %v8020 = vsub.f32 %v7802, %v7936
      %v8021 = vsub.f32 %v7803, %v7939
      %v8022 = vmul.f32 %v8006, %v7959
      %v8023 = vmul.f32 %v8007, %v7962
      %v8024 = vmul.f32 %v8008, %v7965
      %v8025 = vmul.f32 %v8009, %v7968
      %v8026 = vmul.f32 %v8010, %v7971
      %v8027 = vmul.f32 %v8011, %v7974
      %v8028 = vmul.f32 %v8012, %v7977
      %v8029 = vmul.f32 %v8013, %v7980
      %v8030 = vmul.f32 %v8014, %v7983
      %v8031 = vmul.f32 %v8015, %v7986
      %v8032 = vmul.f32 %v8016, %v7989
      %v8033 = vmul.f32 %v8017, %v7992
      %v8034 = vmul.f32 %v8018, %v7995
      %v8035 = vmul.f32 %v8019, %v7998
      %v8036 = vmul.f32 %v8020, %v8001
      %v8037 = vmul.f32 %v8021, %v8004
      %v8038 = vperm.slane %v7804, 0
      %v8039 = vmul.f32 %v8022, %v8038
      %v8040 = vmul.f32 %v8023, %v8038
      %v8041 = vmul.f32 %v8024, %v8038
      %v8042 = vmul.f32 %v8025, %v8038
      %v8043 = vmul.f32 %v8026, %v8038
      %v8044 = vmul.f32 %v8027, %v8038
      %v8045 = vmul.f32 %v8028, %v8038
      %v8046 = vmul.f32 %v8029, %v8038
      %v8047 = vmul.f32 %v8030, %v8038
      %v8048 = vmul.f32 %v8031, %v8038
      %v8049 = vmul.f32 %v8032, %v8038
      %v8050 = vmul.f32 %v8033, %v8038
      %v8051 = vmul.f32 %v8034, %v8038
      %v8052 = vmul.f32 %v8035, %v8038
      %v8053 = vmul.f32 %v8036, %v8038
      %v8054 = vmul.f32 %v8037, %v8038
      %v8055 = vperm.slane %v7805, 0
      %v8056 = vadd.f32 %v8039, %v8055
      %v8057 = vadd.f32 %v8040, %v8055
      %v8058 = vadd.f32 %v8041, %v8055
      %v8059 = vadd.f32 %v8042, %v8055
      %v8060 = vadd.f32 %v8043, %v8055
      %v8061 = vadd.f32 %v8044, %v8055
      %v8062 = vadd.f32 %v8045, %v8055
      %v8063 = vadd.f32 %v8046, %v8055
      %v8064 = vadd.f32 %v8047, %v8055
      %v8065 = vadd.f32 %v8048, %v8055
      %v8066 = vadd.f32 %v8049, %v8055
      %v8067 = vadd.f32 %v8050, %v8055
      %v8068 = vadd.f32 %v8051, %v8055
      %v8069 = vadd.f32 %v8052, %v8055
      %v8070 = vadd.f32 %v8053, %v8055
      %v8071 = vadd.f32 %v8054, %v8055
      %8072 = vmatpush.msra.mxu0 %v8071
      %8073 = vmatpush.msra.mxu0 %v8070
      %8074 = vmatpush.msra.mxu0 %v8069
      %8075 = vmatpush.msra.mxu0 %v8068
      %8076 = vmatpush.msra.mxu0 %v8067
      %8077 = vmatpush.msra.mxu0 %v8066
      %8078 = vmatpush.msra.mxu0 %v8065
      %8079 = vmatpush.msra.mxu0 %v8064
      %8080 = vmatpush.msra.mxu0 %v8063
      %8081 = vmatpush.msra.mxu0 %v8062
      %8082 = vmatpush.msra.mxu0 %v8061
      %8083 = vmatpush.msra.mxu0 %v8060
      %8084 = vmatpush.msra.mxu0 %v8059
      %8085 = vmatpush.msra.mxu0 %v8058
      %8086 = vmatpush.msra.mxu0 %v8057
      %8087 = vmatpush.msra.mxu0 %v8056
      %8088 = vmatmul.f32.gmra.mxu0 %v328
      %v8089 = vpop.f32.mrf.mxu0
      %v8090 = vadd.f32 0.0, %v8089
      %8091 = vdwg.mxu0
      %v8092 = vld [vmem:[%s5] sm:$0xff]
      %v8093 = vld [vmem:[%s5 + $0x8] sm:$0xff]
      %v8094 = vld [vmem:[%s5 + $0x10] sm:$0xff]
      %v8095 = vld [vmem:[%s5 + $0x18] sm:$0xff]
      %v8096 = vld [vmem:[%s6 + $0x17] sm:$0x1]
      %v8097 = vperm.slane %v8096, 0
      %v8099 = vsel %vm624, %v8090, 0
      %8101 = vmatpush.msra.mxu0 0.0
      %8102 = vmatpush.msra.mxu0 0.0
      %8103 = vmatpush.msra.mxu0 0.0
      %8104 = vmatpush.msra.mxu0 0.0
      %8105 = vmatpush.msra.mxu0 0.0
      %8106 = vmatpush.msra.mxu0 0.0
      %8107 = vmatpush.msra.mxu0 0.0
      %8108 = vmatpush.msra.mxu0 0.0
      %8109 = vmatpush.msra.mxu0 0.0
      %8110 = vmatpush.msra.mxu0 0.0
      %8111 = vmatpush.msra.mxu0 0.0
      %8112 = vmatpush.msra.mxu0 0.0
      %8113 = vmatpush.msra.mxu0 %v8095
      %8114 = vmatpush.msra.mxu0 %v8094
      %8115 = vmatpush.msra.mxu0 %v8093
      %8116 = vmatpush.msra.mxu0 %v8092
      %8117 = vmatmul.f32.gmra.mxu0 %v8099
      %v8118 = vpop.f32.mrf.mxu0
      %v8119 = vadd.f32 %v8097, %v8118
      %8120 = vdwg.mxu0
      %v8121 = vmax.f32 %v8119, 0.0
      %v8122 = vld [vmem:[%s5 + $0x20] sm:$0xff]
      %v8123 = vld [vmem:[%s5 + $0x28] sm:$0xff]
      %v8124 = vld [vmem:[%s5 + $0x30] sm:$0xff]
      %v8125 = vld [vmem:[%s5 + $0x38] sm:$0xff]
      %v8126 = vld [vmem:[%s5 + $0x40] sm:$0xff]
      %v8127 = vld [vmem:[%s5 + $0x48] sm:$0xff]
      %v8128 = vld [vmem:[%s5 + $0x50] sm:$0xff]
      %v8129 = vld [vmem:[%s5 + $0x58] sm:$0xff]
      %v8130 = vld [vmem:[%s5 + $0x60] sm:$0xff]
      %v8131 = vld [vmem:[%s5 + $0x68] sm:$0xff]
      %v8132 = vld [vmem:[%s5 + $0x70] sm:$0xff]
      %v8133 = vld [vmem:[%s5 + $0x78] sm:$0xff]
      %v8134 = vld [vmem:[%s5 + $0x80] sm:$0xff]
      %v8135 = vld [vmem:[%s5 + $0x88] sm:$0xff]
      %v8136 = vld [vmem:[%s5 + $0x90] sm:$0xff]
      %v8137 = vld [vmem:[%s5 + $0x98] sm:$0xff]
      %v8138 = vld [vmem:[%s6 + $0x18] sm:$0x1]
      %v8139 = vperm.slane %v8138, 0
      %8140 = vmatpush.msra.mxu0 %v8137
      %8141 = vmatpush.msra.mxu0 %v8136
      %8142 = vmatpush.msra.mxu0 %v8135
      %8143 = vmatpush.msra.mxu0 %v8134
      %8144 = vmatpush.msra.mxu0 %v8133
      %8145 = vmatpush.msra.mxu0 %v8132
      %8146 = vmatpush.msra.mxu0 %v8131
      %8147 = vmatpush.msra.mxu0 %v8130
      %8148 = vmatpush.msra.mxu0 %v8129
      %8149 = vmatpush.msra.mxu0 %v8128
      %8150 = vmatpush.msra.mxu0 %v8127
      %8151 = vmatpush.msra.mxu0 %v8126
      %8152 = vmatpush.msra.mxu0 %v8125
      %8153 = vmatpush.msra.mxu0 %v8124
      %8154 = vmatpush.msra.mxu0 %v8123
      %8155 = vmatpush.msra.mxu0 %v8122
      %8156 = vmatmul.f32.gmra.mxu0 %v8121
      %v8157 = vpop.f32.mrf.mxu0
      %v8158 = vadd.f32 %v8139, %v8157
      %8159 = vdwg.mxu0
      %v8160 = vmax.f32 %v8158, 0.0
      %v8161 = vld [vmem:[%s5 + $0xa0] sm:$0xff]
      %v8162 = vld [vmem:[%s5 + $0xa8] sm:$0xff]
      %v8163 = vld [vmem:[%s5 + $0xb0] sm:$0xff]
      %v8164 = vld [vmem:[%s5 + $0xb8] sm:$0xff]
      %v8165 = vld [vmem:[%s5 + $0xc0] sm:$0xff]
      %v8166 = vld [vmem:[%s5 + $0xc8] sm:$0xff]
      %v8167 = vld [vmem:[%s5 + $0xd0] sm:$0xff]
      %v8168 = vld [vmem:[%s5 + $0xd8] sm:$0xff]
      %v8169 = vld [vmem:[%s5 + $0xe0] sm:$0xff]
      %v8170 = vld [vmem:[%s5 + $0xe8] sm:$0xff]
      %v8171 = vld [vmem:[%s5 + $0xf0] sm:$0xff]
      %v8172 = vld [vmem:[%s5 + $0xf8] sm:$0xff]
      %v8173 = vld [vmem:[%s5 + $0x100] sm:$0xff]
      %v8174 = vld [vmem:[%s5 + $0x108] sm:$0xff]
      %v8175 = vld [vmem:[%s5 + $0x110] sm:$0xff]
      %v8176 = vld [vmem:[%s5 + $0x118] sm:$0xff]
      %v8177 = vld [vmem:[%s6 + $0x19] sm:$0x1]
      %v8178 = vperm.slane %v8177, 0
      %8179 = vmatpush.msra.mxu0 %v8176
      %8180 = vmatpush.msra.mxu0 %v8175
      %8181 = vmatpush.msra.mxu0 %v8174
      %8182 = vmatpush.msra.mxu0 %v8173
      %8183 = vmatpush.msra.mxu0 %v8172
      %8184 = vmatpush.msra.mxu0 %v8171
      %8185 = vmatpush.msra.mxu0 %v8170
      %8186 = vmatpush.msra.mxu0 %v8169
      %8187 = vmatpush.msra.mxu0 %v8168
      %8188 = vmatpush.msra.mxu0 %v8167
      %8189 = vmatpush.msra.mxu0 %v8166
      %8190 = vmatpush.msra.mxu0 %v8165
      %8191 = vmatpush.msra.mxu0 %v8164
      %8192 = vmatpush.msra.mxu0 %v8163
      %8193 = vmatpush.msra.mxu0 %v8162
      %8194 = vmatpush.msra.mxu0 %v8161
      %8195 = vmatmul.f32.gmra.mxu0 %v8160
      %v8196 = vpop.f32.mrf.mxu0
      %v8197 = vadd.f32 %v8178, %v8196
      %8198 = vdwg.mxu0
      %8199 = vst [vmem:[%s320] sm:$0xff] %v8197
      %p8200 = scmp.lt.s32.totalorder %s18, 1
      %s8201 = scalar_select %p8200, %s18, 1
      %s8202 = smul.addr %s8201, 8
      %s8203 = scalar_lea.vmem %s7, %s8202
      // Predicated region
      $region49: #{gt_model_forward.1} parent=47 // pred_check
        %p8204 = pneg %p198
      $region50: #{gt_model_forward.1} parent=47 // pred_check_branch
        %8206 = sbr.rel (%p8204) target = $region52
      $region51: #{gt_model_forward.1} parent=47 // pred_region
        _
      $region52: #{gt_model_forward.1} parent=47 // pred_fallthru
        _
    $region48: #{gt_model_forward.1} parent=5 // pred_fallthru
      _
    %p8207 = scmp.le.s32.totalorder 2, %s13
    // Predicated region
    $region53: #{gt_model_forward.1} parent=5 // pred_check
      %p8208 = pneg %p8207
    $region54: #{gt_model_forward.1} parent=5 // pred_check_branch
      %8210 = sbr.rel (%p8208) target = $region56
    $region55: #{gt_model_forward.1} parent=5 // pred_region
      %s8211 = ssub.s32 %s13, 2
      // Predicated region
      $region57: #{gt_model_forward.1} parent=55 // pred_check
        %p8212 = pneg %p204
      $region58: #{gt_model_forward.1} parent=55 // pred_check_branch
        %8214 = sbr.rel (%p8212) target = $region60
      $region59: #{gt_model_forward.1} parent=55 // pred_region
        %p8215 = scmp.lt.s32.totalorder %s19, 1
        %s8216 = scalar_select %p8215, %s19, 1
        %s8217 = smul.addr %s8216, 8
        %s8218 = scalar_lea.vmem %s7, %s8217
      $region60: #{gt_model_forward.1} parent=55 // pred_fallthru
        _
    $region56: #{gt_model_forward.1} parent=5 // pred_fallthru
      _
  $region6: #{gt_model_forward.1} parent=0 // loop_footer
    %s17 = sadd.s32 1, %s13
  $region7: #{gt_model_forward.1} parent=0 // loop_footer_branch
    %12 = sbr.rel target = $region3
  $region8: #{gt_model_forward.1} parent=0 // loop_exit
    _

</llo_original>
